<compile_context>
chip_gen: v6e
topology: v6e:2x2x1
jax: 0.10.0
libtpu: 0.0.40
codegen_flags: <defaults>
</compile_context>

<pallas_src>
import functools

import jax
import jax.numpy as jnp
import numpy as np
from jax import lax
from jax.experimental import pallas as pl
from jax.experimental.pallas import tpu as pltpu


# ----------------------------------------------------------------------------
# Fused 3x3 same-pad conv + bias + ReLU + 2x2 maxpool (one image per program)
# ----------------------------------------------------------------------------
def _conv_relu_pool_kernel(x_ref, w_ref, b_ref, o_ref, *, H, Wo, Cout, R):
    """x_ref: (1, 2, H, Wo, 9*Cin) bf16 im2col patches; dim 1 is the conv-output
    column parity (even / odd).  w_ref: (9*Cin, Cout) bf16.  b_ref: (1, Cout) f32.
    o_ref: (1, H//2, Wo, Cout) bf16 -- conv output after bias, ReLU, 2x2 maxpool."""
    K9 = w_ref.shape[0]
    Rh = R // 2
    n_strips = H // R
    M = R * Wo

    def strip(s, carry):
        r0 = pl.multiple_of(s * R, R)
        # Both parities of one R-row strip as a single (2*M, K9) LHS.  Only
        # leading dims are merged (no lane/sublane relayout), and the single
        # fat-K dot per strip pushes the MXU weights once instead of twice.
        p = x_ref[0, :, pl.ds(r0, R), :, :].reshape(2 * M, K9)
        z = jnp.dot(p, w_ref[...], preferred_element_type=jnp.float32)   # (2M, Cout)
        zw = jnp.maximum(z[:M, :], z[M:, :])            # maxpool over W (even/odd cols)
        t = zw.reshape(Rh, 2 * Wo, Cout)                # sublane-only split of row pairs
        zp = jnp.maximum(t[:, :Wo, :], t[:, Wo:, :])    # maxpool over H (row pairs)
        # bias + ReLU commute with maxpool (monotone) -> applied to 1/4 of elems.
        out = jnp.maximum(zp + b_ref[...].reshape(1, 1, Cout), 0.0)
        o_ref[0, pl.ds(pl.multiple_of(s * Rh, Rh), Rh), :, :] = out.astype(o_ref.dtype)
        return carry

    # fori_loop (not an unrolled Python for) bounds vreg live ranges per strip.
    lax.fori_loop(0, n_strips, strip, 0)


def conv_relu_pool(x_nhwc, w, b, *, rows_per_strip=8):
    """x_nhwc: (B,H,W,Cin) f32/bf16; w: (3,3,Cin,Cout) HWIO; b: (Cout,).
    Returns (B, H//2, W//2, Cout) bf16."""
    B, H, W, Cin = x_nhwc.shape
    Cout = w.shape[-1]
    assert H % 2 == 0 and W % 2 == 0, "even spatial dims required for 2x2 pool"
    Ho, Wo = H // 2, W // 2
    R = rows_per_strip
    assert R % 2 == 0 and H % R == 0 and Wo % 8 == 0

    # im2col per conv-output-column parity (cheap XLA glue); bf16 halves the
    # 9x-amplified HBM stream.  Zero padding is exact in bf16.
    xp = jnp.pad(x_nhwc.astype(jnp.bfloat16), ((0, 0), (1, 1), (1, 1), (0, 0)))

    def parity_patches(q):
        # Hoist the relayout-heavy stride-2 W slice out of the 9-tap loop:
        # 3 strided slices per parity instead of 9, then contiguous ky slices.
        cols = [xp[:, :, (kx + q)::2, :][:, :, :Wo, :] for kx in range(3)]
        taps = [cols[kx][:, ky:ky + H, :, :] for ky in range(3) for kx in range(3)]
        return jnp.concatenate(taps, axis=-1)                # (B, H, Wo, 9*Cin)

    x_pat = jnp.stack([parity_patches(0), parity_patches(1)], axis=1)  # (B,2,H,Wo,9Cin)
    w9 = w.reshape(9 * Cin, Cout).astype(jnp.bfloat16)       # (ky,kx,Cin) -> K
    b2d = b.astype(jnp.float32).reshape(1, Cout)

    kern = functools.partial(_conv_relu_pool_kernel, H=H, Wo=Wo, Cout=Cout, R=R)
    return pl.pallas_call(
        kern,
        out_shape=jax.ShapeDtypeStruct((B, Ho, Wo, Cout), jnp.bfloat16),
        grid_spec=pltpu.PrefetchScalarGridSpec(
            num_scalar_prefetch=0,
            grid=(B,),
            in_specs=[
                pl.BlockSpec((1, 2, H, Wo, 9 * Cin), lambda i: (i, 0, 0, 0, 0)),
                pl.BlockSpec((9 * Cin, Cout), lambda i: (0, 0)),
                pl.BlockSpec((1, Cout), lambda i: (0, 0)),
            ],
            out_specs=pl.BlockSpec((1, Ho, Wo, Cout), lambda i: (i, 0, 0, 0)),
        ),
        compiler_params=pltpu.CompilerParams(dimension_semantics=("parallel",)),
    )(x_pat, w9, b2d)


# ----------------------------------------------------------------------------
# Fused MLP head: fc1 (bf16 weights, K-tiled) + ReLU + fc2
# ----------------------------------------------------------------------------
def _mlp_kernel(x_ref, w1_ref, b1_ref, w2_ref, o_ref, acc_ref):
    k = pl.program_id(1)        # reduction axis MUST stay innermost ("arbitrary")

    @pl.when(k == 0)
    def _():
        acc_ref[...] = jnp.zeros_like(acc_ref)

    # bf16 x bf16 MXU matmul, f32 accumulation; fc1 weight stream is bf16 in HBM.
    acc_ref[...] += jnp.dot(x_ref[...].astype(jnp.bfloat16), w1_ref[0],
                            preferred_element_type=jnp.float32)

    @pl.when(k == pl.num_programs(1) - 1)
    def _():
        h = jnp.maximum(acc_ref[...] + b1_ref[0], 0.0)   # fc1 bias + ReLU
        # Dropout(p=0.25) is identity in eval/inference mode.
        o_ref[0] = jnp.dot(h, w2_ref[...],               # partial fc2 (this N-chunk)
                           preferred_element_type=jnp.float32)


def mlp_head(x_flat, w1_split_bf16, b1, w2, b2, *, tk=8192):
    """x_flat: (B, K) f32/bf16.  w1_split_bf16: (n_split, K, Hdim/n_split) bf16.
    b1: (Hdim,), w2: (Hdim, NC), b2: (NC,).  Returns (B, NC) f32."""
    B, K = x_flat.shape
    n_split, Kw, Hs = w1_split_bf16.shape
    tk = min(tk, K)
    assert K == Kw and K % tk == 0
    NC = w2.shape[1]
    b1_split = b1.reshape(n_split, 1, Hs)

    partials = pl.pallas_call(
        _mlp_kernel,
        out_shape=jax.ShapeDtypeStruct((n_split, B, NC), jnp.float32),
        grid_spec=pltpu.PrefetchScalarGridSpec(
            num_scalar_prefetch=0,
            grid=(n_split, K // tk),                 # n: parallel chunks, k: reduction
            in_specs=[
                pl.BlockSpec((B, tk), lambda n, k: (0, k)),
                pl.BlockSpec((1, tk, Hs), lambda n, k: (n, k, 0)),
                pl.BlockSpec((1, 1, Hs), lambda n, k: (n, 0, 0)),
                pl.BlockSpec((Hs, NC), lambda n, k: (n, 0)),
            ],
            out_specs=pl.BlockSpec((1, B, NC), lambda n, k: (n, 0, 0)),
            scratch_shapes=[pltpu.VMEM((B, Hs), jnp.float32)],
        ),
        compiler_params=pltpu.CompilerParams(
            dimension_semantics=("parallel", "arbitrary")),
    )(x_flat, w1_split_bf16, b1_split, w2)
    return partials.sum(axis=0) + b2[None, :]


# ----------------------------------------------------------------------------
# Full forward (matches WasteClassifierCNN.forward, eval mode)
# ----------------------------------------------------------------------------
def _default_fc1_split():
    """fc1 output-dim split: 2 on dual-TensorCore v7x (each TC streams half the
    fc1 weights), 1 on single-TC v5e/v6e (a split there only adds serial grid
    steps, re-DMAs x, and underfills the MXU's 128-wide N)."""
    try:
        kind = jax.devices()[0].device_kind.lower()
    except Exception:
        return 1
    return 2 if "v7" in kind else 1


def prepare_params(params, n_split=None):
    """One-time param prep: fold torch's CHW-flatten into fw1's rows, split the
    fc1 output dim into contiguous chunks (generation-aware), cast fc1 weights
    to bf16.  Biases and fc2 stay f32."""
    if n_split is None:
        n_split = _default_fc1_split()
    cw1, cb1, cw2, cb2, fw1, fb1, fw2, fb2 = params
    Cf = cw2.shape[-1]
    hw = fw1.shape[0] // Cf
    side = int(round(hw ** 0.5))
    Hdim = fw1.shape[1]
    assert side * side == hw and Hdim % n_split == 0
    # torch row index c*side*side + h*side + w  ->  NHWC row index (h*side+w)*Cf + c
    fw1_nhwc = (fw1.reshape(Cf, side, side, Hdim)
                   .transpose(1, 2, 0, 3)
                   .reshape(Cf * side * side, Hdim))
    fw1_split = (fw1_nhwc.reshape(-1, n_split, Hdim // n_split)
                         .transpose(1, 0, 2)
                         .astype(jnp.bfloat16))       # (n_split, K, Hdim/n_split)
    return (cw1, cb1, cw2, cb2, fw1_split, fb1, fw2, fb2)


def waste_classifier_forward(x_nchw, prepared_params):
    cw1, cb1, cw2, cb2, fw1_split, fb1, fw2, fb2 = prepared_params
    x = jnp.transpose(x_nchw, (0, 2, 3, 1))        # NCHW -> NHWC (channels on lanes)
    x = conv_relu_pool(x, cw1, cb1)                # (B, 32, 32, 32) bf16
    x = conv_relu_pool(x, cw2, cb2)                # (B, 16, 16, 64) bf16
    x_flat = x.reshape(x.shape[0], -1)             # NHWC flatten; fw1 rows pre-permuted
    assert x_flat.shape[1] == fw1_split.shape[1]
    return mlp_head(x_flat, fw1_split, fb1, fw2, fb2)   # (B, num_classes) f32


def init_params(key, num_classes=22):
    ks = jax.random.split(key, 8)
    cw1 = jax.random.normal(ks[0], (3, 3, 3, 32), jnp.float32) * 0.10     # HWIO
    cb1 = jax.random.normal(ks[1], (32,), jnp.float32) * 0.10
    cw2 = jax.random.normal(ks[2], (3, 3, 32, 64), jnp.float32) * 0.05
    cb2 = jax.random.normal(ks[3], (64,), jnp.float32) * 0.05
    fw1 = jax.random.normal(ks[4], (64 * 16 * 16, 128), jnp.float32) * 0.01
    fb1 = jax.random.normal(ks[5], (128,), jnp.float32) * 0.01
    fw2 = jax.random.normal(ks[6], (128, num_classes), jnp.float32) * 0.05
    fb2 = jax.random.normal(ks[7], (num_classes,), jnp.float32) * 0.05
    return (cw1, cb1, cw2, cb2, fw1, fb1, fw2, fb2)


def reference_forward(x_nchw, params):
    """Pure-JAX f32 reference of the PyTorch module (eval mode), raw params."""
    cw1, cb1, cw2, cb2, fw1, fb1, fw2, fb2 = params
    hi = lax.Precision.HIGHEST

    def conv(x, w, b):
        y = lax.conv_general_dilated(x, w, (1, 1), "SAME",
                                     dimension_numbers=("NCHW", "HWIO", "NCHW"),
                                     precision=hi)
        return jnp.maximum(y + b.reshape(1, -1, 1, 1), 0.0)

    def pool(x):
        B, C, H, W = x.shape
        return x.reshape(B, C, H // 2, 2, W // 2, 2).max(axis=(3, 5))

    y = pool(conv(x_nchw, cw1, cb1))
    y = pool(conv(y, cw2, cb2))
    y = y.reshape(y.shape[0], -1)                                # torch CHW flatten
    y = jnp.maximum(jnp.dot(y, fw1, precision=hi) + fb1, 0.0)    # dropout = identity
    return jnp.dot(y, fw2, precision=hi) + fb2


if __name__ == "__main__":
    key = jax.random.PRNGKey(0)
    kx, kp = jax.random.split(key)
    # Input must be 64x64 spatial so two 2x2 pools give the 64*16*16 fc1 input.
    x = jax.random.normal(kx, (2, 3, 64, 64), jnp.float32)   # NCHW, like PyTorch
    params = init_params(kp, num_classes=22)
    prepared = prepare_params(params)

    fwd = jax.jit(waste_classifier_forward)
    out = jax.block_until_ready(fwd(x, prepared))
    assert out.shape == (2, 22) and out.dtype == jnp.float32

    ref = jax.block_until_ready(reference_forward(x, params))
    # bf16 conv/fc1 weight & activation streams are a deliberate inference-time
    # accuracy/bandwidth tradeoff; tolerance absorbs it.
    np.testing.assert_allclose(np.asarray(out), np.asarray(ref), rtol=5e-2, atol=5e-2)

    print("KERNEL_OK")
</pallas_src>

<mosaic_0001>
module attributes {stable_mosaic.version = 11 : i64} {
  func.func @_conv_relu_pool_kernel(%arg0: i32, %arg1: memref<1x2x64x32x27xbf16, #tpu.memory_space<vmem>>, %arg2: memref<27x32xbf16, #tpu.memory_space<vmem>>, %arg3: memref<1x32xf32, #tpu.memory_space<vmem>>, %arg4: memref<1x32x32x32xbf16, #tpu.memory_space<vmem>>) attributes {dimension_semantics = [#tpu.dimension_semantics<parallel>], iteration_bounds = array<i64: 2>, scalar_prefetch = 0 : i64, scratch_operands = 0 : i64, tpu.core_type = #tpu.core_type<tc>, window_params = [{transform_indices = @transform_0, window_bounds = array<i64: 1, 2, 64, 32, 27>}, {pipeline_mode = #tpu.pipeline_mode<synchronous>, transform_indices = @transform_1, window_bounds = array<i64: 27, 32>}, {pipeline_mode = #tpu.pipeline_mode<synchronous>, transform_indices = @transform_2, window_bounds = array<i64: 1, 32>}, {transform_indices = @transform_3, window_bounds = array<i64: 1, 32, 32, 32>}]} {
    %c0_i32 = arith.constant 0 : i32
    %c8_i32 = arith.constant 8 : i32
    %0 = arith.addi %c0_i32, %c8_i32 : i32
    %c1_i32 = arith.constant 1 : i32
    scf.for %arg5 = %c0_i32 to %0 step %c1_i32  : i32 {
      %c8_i32_1 = arith.constant 8 : i32
      %1 = arith.muli %arg5, %c8_i32_1 : i32
      %2 = tpu.assume_multiple %1, 8 : i32
      %c0 = arith.constant 0 : index
      %c0_2 = arith.constant 0 : index
      %3 = arith.index_cast %2 : i32 to index
      %c0_3 = arith.constant 0 : index
      %c0_4 = arith.constant 0 : index
      %4 = vector.load %arg1[%c0, %c0_2, %3, %c0_3, %c0_4] : memref<1x2x64x32x27xbf16, #tpu.memory_space<vmem>>, vector<1x2x8x32x27xbf16>
      %5 = vector.shape_cast %4 : vector<1x2x8x32x27xbf16> to vector<2x8x32x27xbf16>
      %6 = vector.shape_cast %5 : vector<2x8x32x27xbf16> to vector<512x27xbf16>
      %c0_5 = arith.constant 0 : index
      %c0_6 = arith.constant 0 : index
      %7 = vector.load %arg2[%c0_5, %c0_6] : memref<27x32xbf16, #tpu.memory_space<vmem>>, vector<27x32xbf16>
      %cst = arith.constant dense<0.000000e+00> : vector<512x32xf32>
      %8 = tpu.matmul %6, %7, %cst {dimension_numbers = #tpu.dot_dimension_numbers<[1], [0], [0], [1], [0, 0, 1, 1], [], []>} : vector<512x27xbf16>, vector<27x32xbf16>, vector<512x32xf32> -> vector<512x32xf32>
      %9 = vector.extract_strided_slice %8 {offsets = [0, 0], sizes = [256, 32], strides = [1, 1]} : vector<512x32xf32> to vector<256x32xf32>
      %10 = vector.extract_strided_slice %8 {offsets = [256, 0], sizes = [256, 32], strides = [1, 1]} : vector<512x32xf32> to vector<256x32xf32>
      %11 = arith.maximumf %9, %10 : vector<256x32xf32>
      %12 = vector.shape_cast %11 : vector<256x32xf32> to vector<4x64x32xf32>
      %13 = vector.extract_strided_slice %12 {offsets = [0, 0, 0], sizes = [4, 32, 32], strides = [1, 1, 1]} : vector<4x64x32xf32> to vector<4x32x32xf32>
      %14 = vector.extract_strided_slice %12 {offsets = [0, 32, 0], sizes = [4, 32, 32], strides = [1, 1, 1]} : vector<4x64x32xf32> to vector<4x32x32xf32>
      %15 = arith.maximumf %13, %14 : vector<4x32x32xf32>
      %c0_7 = arith.constant 0 : index
      %c0_8 = arith.constant 0 : index
      %16 = vector.load %arg3[%c0_7, %c0_8] : memref<1x32xf32, #tpu.memory_space<vmem>>, vector<1x32xf32>
      %17 = vector.shape_cast %16 : vector<1x32xf32> to vector<1x1x32xf32>
      %18 = vector.broadcast %17 : vector<1x1x32xf32> to vector<4x32x32xf32>
      %19 = arith.addf %15, %18 : vector<4x32x32xf32>
      %cst_9 = arith.constant 0.000000e+00 : f32
      %20 = vector.broadcast %cst_9 : f32 to vector<4x32x32xf32>
      %21 = arith.maximumf %19, %20 : vector<4x32x32xf32>
      %22 = arith.truncf %21 : vector<4x32x32xf32> to vector<4x32x32xbf16>
      %c4_i32 = arith.constant 4 : i32
      %23 = arith.muli %arg5, %c4_i32 : i32
      %24 = tpu.assume_multiple %23, 4 : i32
      %c0_10 = arith.constant 0 : index
      %25 = arith.index_cast %24 : i32 to index
      %c0_11 = arith.constant 0 : index
      %c0_12 = arith.constant 0 : index
      %26 = vector.load %arg4[%c0_10, %25, %c0_11, %c0_12] : memref<1x32x32x32xbf16, #tpu.memory_space<vmem>>, vector<1x4x32x32xbf16>
      %27 = vector.shape_cast %26 : vector<1x4x32x32xbf16> to vector<4x32x32xbf16>
      %28 = vector.shape_cast %22 : vector<4x32x32xbf16> to vector<1x4x32x32xbf16>
      tpu.vector_store %arg4[%c0_10, %25, %c0_11, %c0_12], %28 {strides = array<i32>} : memref<1x32x32x32xbf16, #tpu.memory_space<vmem>>, vector<1x4x32x32xbf16>,
    }
    %c8_i32_0 = arith.constant 8 : i32
    return
  }
  func.func @transform_0(%arg0: i32) -> (i32, i32, i32, i32, i32) {
    %c0_i32 = arith.constant 0 : i32
    %c0_i32_0 = arith.constant 0 : i32
    %c0_i32_1 = arith.constant 0 : i32
    %c0_i32_2 = arith.constant 0 : i32
    %c0_i32_3 = arith.constant 0 : i32
    return %arg0, %c0_i32, %c0_i32_0, %c0_i32_1, %c0_i32_2 : i32, i32, i32, i32, i32
  }
  func.func @transform_1(%arg0: i32) -> (i32, i32) {
    %c0_i32 = arith.constant 0 : i32
    %c0_i32_0 = arith.constant 0 : i32
    %c0_i32_1 = arith.constant 0 : i32
    return %c0_i32, %c0_i32_0 : i32, i32
  }
  func.func @transform_2(%arg0: i32) -> (i32, i32) {
    %c0_i32 = arith.constant 0 : i32
    %c0_i32_0 = arith.constant 0 : i32
    %c0_i32_1 = arith.constant 0 : i32
    return %c0_i32, %c0_i32_0 : i32, i32
  }
  func.func @transform_3(%arg0: i32) -> (i32, i32, i32, i32) {
    %c0_i32 = arith.constant 0 : i32
    %c0_i32_0 = arith.constant 0 : i32
    %c0_i32_1 = arith.constant 0 : i32
    %c0_i32_2 = arith.constant 0 : i32
    return %arg0, %c0_i32, %c0_i32_0, %c0_i32_1 : i32, i32, i32, i32
  }
}

module attributes {stable_mosaic.version = 11 : i64} {
  func.func @_conv_relu_pool_kernel(%arg0: i32, %arg1: memref<1x2x32x16x288xbf16, #tpu.memory_space<vmem>>, %arg2: memref<288x64xbf16, #tpu.memory_space<vmem>>, %arg3: memref<1x64xf32, #tpu.memory_space<vmem>>, %arg4: memref<1x16x16x64xbf16, #tpu.memory_space<vmem>>) attributes {dimension_semantics = [#tpu.dimension_semantics<parallel>], iteration_bounds = array<i64: 2>, scalar_prefetch = 0 : i64, scratch_operands = 0 : i64, tpu.core_type = #tpu.core_type<tc>, window_params = [{transform_indices = @transform_0, window_bounds = array<i64: 1, 2, 32, 16, 288>}, {pipeline_mode = #tpu.pipeline_mode<synchronous>, transform_indices = @transform_1, window_bounds = array<i64: 288, 64>}, {pipeline_mode = #tpu.pipeline_mode<synchronous>, transform_indices = @transform_2, window_bounds = array<i64: 1, 64>}, {transform_indices = @transform_3, window_bounds = array<i64: 1, 16, 16, 64>}]} {
    %c0_i32 = arith.constant 0 : i32
    %c4_i32 = arith.constant 4 : i32
    %0 = arith.addi %c0_i32, %c4_i32 : i32
    %c1_i32 = arith.constant 1 : i32
    scf.for %arg5 = %c0_i32 to %0 step %c1_i32  : i32 {
      %c8_i32 = arith.constant 8 : i32
      %1 = arith.muli %arg5, %c8_i32 : i32
      %2 = tpu.assume_multiple %1, 8 : i32
      %c0 = arith.constant 0 : index
      %c0_1 = arith.constant 0 : index
      %3 = arith.index_cast %2 : i32 to index
      %c0_2 = arith.constant 0 : index
      %c0_3 = arith.constant 0 : index
      %4 = vector.load %arg1[%c0, %c0_1, %3, %c0_2, %c0_3] : memref<1x2x32x16x288xbf16, #tpu.memory_space<vmem>>, vector<1x2x8x16x288xbf16>
      %5 = vector.shape_cast %4 : vector<1x2x8x16x288xbf16> to vector<2x8x16x288xbf16>
      %6 = vector.shape_cast %5 : vector<2x8x16x288xbf16> to vector<256x288xbf16>
      %c0_4 = arith.constant 0 : index
      %c0_5 = arith.constant 0 : index
      %7 = vector.load %arg2[%c0_4, %c0_5] : memref<288x64xbf16, #tpu.memory_space<vmem>>, vector<288x64xbf16>
      %cst = arith.constant dense<0.000000e+00> : vector<256x64xf32>
      %8 = tpu.matmul %6, %7, %cst {dimension_numbers = #tpu.dot_dimension_numbers<[1], [0], [0], [1], [0, 0, 1, 1], [], []>} : vector<256x288xbf16>, vector<288x64xbf16>, vector<256x64xf32> -> vector<256x64xf32>
      %9 = vector.extract_strided_slice %8 {offsets = [0, 0], sizes = [128, 64], strides = [1, 1]} : vector<256x64xf32> to vector<128x64xf32>
      %10 = vector.extract_strided_slice %8 {offsets = [128, 0], sizes = [128, 64], strides = [1, 1]} : vector<256x64xf32> to vector<128x64xf32>
      %11 = arith.maximumf %9, %10 : vector<128x64xf32>
      %12 = vector.shape_cast %11 : vector<128x64xf32> to vector<4x32x64xf32>
      %13 = vector.extract_strided_slice %12 {offsets = [0, 0, 0], sizes = [4, 16, 64], strides = [1, 1, 1]} : vector<4x32x64xf32> to vector<4x16x64xf32>
      %14 = vector.extract_strided_slice %12 {offsets = [0, 16, 0], sizes = [4, 16, 64], strides = [1, 1, 1]} : vector<4x32x64xf32> to vector<4x16x64xf32>
      %15 = arith.maximumf %13, %14 : vector<4x16x64xf32>
      %c0_6 = arith.constant 0 : index
      %c0_7 = arith.constant 0 : index
      %16 = vector.load %arg3[%c0_6, %c0_7] : memref<1x64xf32, #tpu.memory_space<vmem>>, vector<1x64xf32>
      %17 = vector.shape_cast %16 : vector<1x64xf32> to vector<1x1x64xf32>
      %18 = vector.broadcast %17 : vector<1x1x64xf32> to vector<4x16x64xf32>
      %19 = arith.addf %15, %18 : vector<4x16x64xf32>
      %cst_8 = arith.constant 0.000000e+00 : f32
      %20 = vector.broadcast %cst_8 : f32 to vector<4x16x64xf32>
      %21 = arith.maximumf %19, %20 : vector<4x16x64xf32>
      %22 = arith.truncf %21 : vector<4x16x64xf32> to vector<4x16x64xbf16>
      %c4_i32_9 = arith.constant 4 : i32
      %23 = arith.muli %arg5, %c4_i32_9 : i32
      %24 = tpu.assume_multiple %23, 4 : i32
      %c0_10 = arith.constant 0 : index
      %25 = arith.index_cast %24 : i32 to index
      %c0_11 = arith.constant 0 : index
      %c0_12 = arith.constant 0 : index
      %26 = vector.load %arg4[%c0_10, %25, %c0_11, %c0_12] : memref<1x16x16x64xbf16, #tpu.memory_space<vmem>>, vector<1x4x16x64xbf16>
      %27 = vector.shape_cast %26 : vector<1x4x16x64xbf16> to vector<4x16x64xbf16>
      %28 = vector.shape_cast %22 : vector<4x16x64xbf16> to vector<1x4x16x64xbf16>
      tpu.vector_store %arg4[%c0_10, %25, %c0_11, %c0_12], %28 {strides = array<i32>} : memref<1x16x16x64xbf16, #tpu.memory_space<vmem>>, vector<1x4x16x64xbf16>,
    }
    %c4_i32_0 = arith.constant 4 : i32
    return
  }
  func.func @transform_0(%arg0: i32) -> (i32, i32, i32, i32, i32) {
    %c0_i32 = arith.constant 0 : i32
    %c0_i32_0 = arith.constant 0 : i32
    %c0_i32_1 = arith.constant 0 : i32
    %c0_i32_2 = arith.constant 0 : i32
    %c0_i32_3 = arith.constant 0 : i32
    return %arg0, %c0_i32, %c0_i32_0, %c0_i32_1, %c0_i32_2 : i32, i32, i32, i32, i32
  }
  func.func @transform_1(%arg0: i32) -> (i32, i32) {
    %c0_i32 = arith.constant 0 : i32
    %c0_i32_0 = arith.constant 0 : i32
    %c0_i32_1 = arith.constant 0 : i32
    return %c0_i32, %c0_i32_0 : i32, i32
  }
  func.func @transform_2(%arg0: i32) -> (i32, i32) {
    %c0_i32 = arith.constant 0 : i32
    %c0_i32_0 = arith.constant 0 : i32
    %c0_i32_1 = arith.constant 0 : i32
    return %c0_i32, %c0_i32_0 : i32, i32
  }
  func.func @transform_3(%arg0: i32) -> (i32, i32, i32, i32) {
    %c0_i32 = arith.constant 0 : i32
    %c0_i32_0 = arith.constant 0 : i32
    %c0_i32_1 = arith.constant 0 : i32
    %c0_i32_2 = arith.constant 0 : i32
    return %arg0, %c0_i32, %c0_i32_0, %c0_i32_1 : i32, i32, i32, i32
  }
}

module attributes {stable_mosaic.version = 11 : i64} {
  func.func @_mlp_kernel(%arg0: i32, %arg1: i32, %arg2: memref<2x8192xbf16, #tpu.memory_space<vmem>>, %arg3: memref<1x8192x128xbf16, #tpu.memory_space<vmem>>, %arg4: memref<1x1x128xf32, #tpu.memory_space<vmem>>, %arg5: memref<128x22xf32, #tpu.memory_space<vmem>>, %arg6: memref<1x2x22xf32, #tpu.memory_space<vmem>>, %arg7: memref<2x128xf32, #tpu.memory_space<vmem>>) attributes {dimension_semantics = [#tpu.dimension_semantics<parallel>, #tpu.dimension_semantics<arbitrary>], iteration_bounds = array<i64: 1, 2>, scalar_prefetch = 0 : i64, scratch_operands = 1 : i64, tpu.core_type = #tpu.core_type<tc>, window_params = [{transform_indices = @transform_0, window_bounds = array<i64: 2, 8192>}, {transform_indices = @transform_1, window_bounds = array<i64: 1, 8192, 128>}, {transform_indices = @transform_2, window_bounds = array<i64: 1, 1, 128>}, {transform_indices = @transform_3, window_bounds = array<i64: 128, 22>}, {transform_indices = @transform_4, window_bounds = array<i64: 1, 2, 22>}]} {
    %c0_i32 = arith.constant 0 : i32
    %0 = arith.cmpi eq, %arg1, %c0_i32 : i32
    %1 = arith.extui %0 : i1 to i32
    %c0_i32_0 = arith.constant 0 : i32
    %2 = arith.cmpi ne, %1, %c0_i32_0 : i32
    scf.if %2 {
      %cst_10 = arith.constant 0.000000e+00 : f32
      %13 = vector.broadcast %cst_10 : f32 to vector<2x128xf32>
      %c0_11 = arith.constant 0 : index
      %c0_12 = arith.constant 0 : index
      %14 = vector.load %arg7[%c0_11, %c0_12] : memref<2x128xf32, #tpu.memory_space<vmem>>, vector<2x128xf32>
      tpu.vector_store %arg7[%c0_11, %c0_12], %13 {strides = array<i32>} : memref<2x128xf32, #tpu.memory_space<vmem>>, vector<2x128xf32>,
    } else {
    }
    %c0 = arith.constant 0 : index
    %c0_1 = arith.constant 0 : index
    %3 = vector.load %arg7[%c0, %c0_1] : memref<2x128xf32, #tpu.memory_space<vmem>>, vector<2x128xf32>
    %c0_2 = arith.constant 0 : index
    %c0_3 = arith.constant 0 : index
    %4 = vector.load %arg2[%c0_2, %c0_3] : memref<2x8192xbf16, #tpu.memory_space<vmem>>, vector<2x8192xbf16>
    %c0_4 = arith.constant 0 : index
    %c0_5 = arith.constant 0 : index
    %c0_6 = arith.constant 0 : index
    %5 = vector.load %arg3[%c0_4, %c0_5, %c0_6] : memref<1x8192x128xbf16, #tpu.memory_space<vmem>>, vector<1x8192x128xbf16>
    %6 = vector.shape_cast %5 : vector<1x8192x128xbf16> to vector<8192x128xbf16>
    %cst = arith.constant dense<0.000000e+00> : vector<2x128xf32>
    %7 = tpu.matmul %4, %6, %cst {dimension_numbers = #tpu.dot_dimension_numbers<[1], [0], [0], [1], [0, 0, 1, 1], [], []>} : vector<2x8192xbf16>, vector<8192x128xbf16>, vector<2x128xf32> -> vector<2x128xf32>
    %8 = arith.addf %3, %7 : vector<2x128xf32>
    %c0_7 = arith.constant 0 : index
    %c0_8 = arith.constant 0 : index
    %9 = vector.load %arg7[%c0_7, %c0_8] : memref<2x128xf32, #tpu.memory_space<vmem>>, vector<2x128xf32>
    tpu.vector_store %arg7[%c0_7, %c0_8], %8 {strides = array<i32>} : memref<2x128xf32, #tpu.memory_space<vmem>>, vector<2x128xf32>,
    %c1_i32 = arith.constant 1 : i32
    %10 = arith.cmpi eq, %arg1, %c1_i32 : i32
    %11 = arith.extui %10 : i1 to i32
    %c0_i32_9 = arith.constant 0 : i32
    %12 = arith.cmpi ne, %11, %c0_i32_9 : i32
    scf.if %12 {
      %c0_10 = arith.constant 0 : index
      %c0_11 = arith.constant 0 : index
      %13 = vector.load %arg7[%c0_10, %c0_11] : memref<2x128xf32, #tpu.memory_space<vmem>>, vector<2x128xf32>
      %c0_12 = arith.constant 0 : index
      %c0_13 = arith.constant 0 : index
      %c0_14 = arith.constant 0 : index
      %14 = vector.load %arg4[%c0_12, %c0_13, %c0_14] : memref<1x1x128xf32, #tpu.memory_space<vmem>>, vector<1x1x128xf32>
      %15 = vector.shape_cast %14 : vector<1x1x128xf32> to vector<1x128xf32>
      %16 = vector.broadcast %15 : vector<1x128xf32> to vector<2x128xf32>
      %17 = arith.addf %13, %16 : vector<2x128xf32>
      %cst_15 = arith.constant 0.000000e+00 : f32
      %18 = vector.broadcast %cst_15 : f32 to vector<2x128xf32>
      %19 = arith.maximumf %17, %18 : vector<2x128xf32>
      %c0_16 = arith.constant 0 : index
      %c0_17 = arith.constant 0 : index
      %20 = vector.load %arg5[%c0_16, %c0_17] : memref<128x22xf32, #tpu.memory_space<vmem>>, vector<128x22xf32>
      %cst_18 = arith.constant dense<0.000000e+00> : vector<2x22xf32>
      %21 = tpu.matmul %19, %20, %cst_18 {dimension_numbers = #tpu.dot_dimension_numbers<[1], [0], [0], [1], [0, 0, 1, 1], [], []>} : vector<2x128xf32>, vector<128x22xf32>, vector<2x22xf32> -> vector<2x22xf32>
      %c0_19 = arith.constant 0 : index
      %c0_20 = arith.constant 0 : index
      %c0_21 = arith.constant 0 : index
      %22 = vector.load %arg6[%c0_19, %c0_20, %c0_21] : memref<1x2x22xf32, #tpu.memory_space<vmem>>, vector<1x2x22xf32>
      %23 = vector.shape_cast %22 : vector<1x2x22xf32> to vector<2x22xf32>
      %24 = vector.shape_cast %21 : vector<2x22xf32> to vector<1x2x22xf32>
      tpu.vector_store %arg6[%c0_19, %c0_20, %c0_21], %24 {strides = array<i32>} : memref<1x2x22xf32, #tpu.memory_space<vmem>>, vector<1x2x22xf32>,
    } else {
    }
    return
  }
  func.func @transform_0(%arg0: i32, %arg1: i32) -> (i32, i32) {
    %c0_i32 = arith.constant 0 : i32
    %c0_i32_0 = arith.constant 0 : i32
    return %c0_i32, %arg1 : i32, i32
  }
  func.func @transform_1(%arg0: i32, %arg1: i32) -> (i32, i32, i32) {
    %c0_i32 = arith.constant 0 : i32
    %c0_i32_0 = arith.constant 0 : i32
    return %arg0, %arg1, %c0_i32 : i32, i32, i32
  }
  func.func @transform_2(%arg0: i32, %arg1: i32) -> (i32, i32, i32) {
    %c0_i32 = arith.constant 0 : i32
    %c0_i32_0 = arith.constant 0 : i32
    %c0_i32_1 = arith.constant 0 : i32
    return %arg0, %c0_i32, %c0_i32_0 : i32, i32, i32
  }
  func.func @transform_3(%arg0: i32, %arg1: i32) -> (i32, i32) {
    %c0_i32 = arith.constant 0 : i32
    %c0_i32_0 = arith.constant 0 : i32
    return %arg0, %c0_i32 : i32, i32
  }
  func.func @transform_4(%arg0: i32, %arg1: i32) -> (i32, i32, i32) {
    %c0_i32 = arith.constant 0 : i32
    %c0_i32_0 = arith.constant 0 : i32
    %c0_i32_1 = arith.constant 0 : i32
    return %arg0, %c0_i32, %c0_i32_0 : i32, i32, i32
  }
}

</mosaic_0001>

<llo_original>
// kernel: waste_classifier_forward.3
$region0: #{waste_classifier_forward.3}
  #allocation0 [shape = 'u32[]', space=smem, size = 0x4, offset = 0x4, fixed_abs, tag = 'smem constant byte address 0x4 - core index']
  #allocation1 [shape = 'u32[144,128]{1,0:T(1,128)}', space=vmem, size = 0x12000, scoped, tag = 'internal scratch']
  %s0 = inlined_call_operand.vmem [shape: bf16[2,2,64,32,27], index: 0, kind: input, shape index: {}]
  %s1 = inlined_call_operand.vmem [shape: bf16[27,32], index: 1, kind: input, shape index: {}]
  %s2 = inlined_call_operand.vmem [shape: f32[1,32], index: 2, kind: input, shape index: {}]
  %s3 = inlined_call_operand.vmem [shape: bf16[2,32,32,32], index: 3, kind: output, shape index: {}]
  %s4 = sld [smem:[#allocation0]]
  $region52: #{waste_classifier_forward.3} parent=0
    _
  %s6 = ssub.s32 1, %s4
  %s7 = scalar_select 0, %s6, %s4
  loop: start=0, step=1, limit=4
  $region2: #{waste_classifier_forward.3} parent=0 // loop_pre_header
    _
  $region3: #{waste_classifier_forward.3} parent=0 // loop_header
    %s9 = sphi 0, %s13
    %p10 = scmp.ge.s32.totalorder %s9, 4
    %s19 = sphi 0, %s21
    %s22 = sphi 0, %s19
    %s23 = sphi 0, %s22
    %s39 = sphi 0, %s23
    %s43 = sphi 0, %s43
    %s45 = sphi 0, %s43
    %s46 = sphi 0, %s45
    %s60 = sphi 0, %s46
    %s64 = sphi 0, %s64
    %s66 = sphi 0, %s64
    %s67 = sphi 0, %s66
    %s81 = sphi 0, %s67
    %s87 = sphi 0, %s89
    %s90 = sphi 0, %s87
    %s91 = sphi 0, %s90
    %s107 = sphi 0, %s91
  $region4: #{waste_classifier_forward.3} parent=0 // loop_header_branch
    %12 = sbr.rel (%p10) target = $region8
  $region5: #{waste_classifier_forward.3} parent=0 // loop_body
    %s14 = ssub.s32 %s9, 1
    %s15 = ssub.s32 %s9, 2
    %s16 = sadd.s32 %s9, 1
    %s17 = ssub.s32 %s9, %s16
    %p18 = scmp.eq.s32.totalorder %s17, 0
    %s20 = sadd.s32 %s19, 1
    %s21 = scalar_select %p18, %s19, %s20
    %p24 = pneg %p18
    %p25 = scmp.eq.s32.totalorder %s9, 1
    %p26 = por %p24, %p25
    %p27 = scmp.ne.s32.totalorder %s19, %s22
    %p28 = scmp.eq.s32.totalorder %s9, 0
    %p29 = por %p27, %p28
    %p30 = scmp.ne.s32.totalorder %s19, %s22
    %p31 = scmp.eq.s32.totalorder %s14, 1
    %p32 = por %p30, %p31
    %p33 = scmp.ne.s32.totalorder %s22, %s23
    %p34 = scmp.eq.s32.totalorder %s14, 0
    %p35 = por %p33, %p34
    %p36 = scmp.ne.s32.totalorder %s22, %s23
    %p37 = scmp.eq.s32.totalorder %s15, 1
    %p38 = por %p36, %p37
    %p40 = scmp.ne.s32.totalorder %s23, %s39
    %p41 = scmp.eq.s32.totalorder %s15, 0
    %p42 = por %p40, %p41
    %s44 = sadd.s32 %s43, 1
    %p47 = scmp.eq.s32.totalorder %s9, 1
    %p48 = scmp.ne.s32.totalorder %s43, %s45
    %p49 = scmp.eq.s32.totalorder %s9, 0
    %p50 = por %p48, %p49
    %p51 = scmp.ne.s32.totalorder %s43, %s45
    %p52 = scmp.eq.s32.totalorder %s14, 1
    %p53 = por %p51, %p52
    %p54 = scmp.ne.s32.totalorder %s45, %s46
    %p55 = scmp.eq.s32.totalorder %s14, 0
    %p56 = por %p54, %p55
    %p57 = scmp.ne.s32.totalorder %s45, %s46
    %p58 = scmp.eq.s32.totalorder %s15, 1
    %p59 = por %p57, %p58
    %p61 = scmp.ne.s32.totalorder %s46, %s60
    %p62 = scmp.eq.s32.totalorder %s15, 0
    %p63 = por %p61, %p62
    %s65 = sadd.s32 %s64, 1
    %p68 = scmp.eq.s32.totalorder %s9, 1
    %p69 = scmp.ne.s32.totalorder %s64, %s66
    %p70 = scmp.eq.s32.totalorder %s9, 0
    %p71 = por %p69, %p70
    %p72 = scmp.ne.s32.totalorder %s64, %s66
    %p73 = scmp.eq.s32.totalorder %s14, 1
    %p74 = por %p72, %p73
    %p75 = scmp.ne.s32.totalorder %s66, %s67
    %p76 = scmp.eq.s32.totalorder %s14, 0
    %p77 = por %p75, %p76
    %p78 = scmp.ne.s32.totalorder %s66, %s67
    %p79 = scmp.eq.s32.totalorder %s15, 1
    %p80 = por %p78, %p79
    %p82 = scmp.ne.s32.totalorder %s67, %s81
    %p83 = scmp.eq.s32.totalorder %s15, 0
    %p84 = por %p82, %p83
    %s85 = ssub.s32 %s9, %s16
    %p86 = scmp.eq.s32.totalorder %s85, 0
    %s88 = sadd.s32 %s87, 1
    %s89 = scalar_select %p86, %s87, %s88
    %p92 = pneg %p86
    %p93 = scmp.eq.s32.totalorder %s9, 1
    %p94 = por %p92, %p93
    %p95 = scmp.ne.s32.totalorder %s87, %s90
    %p96 = scmp.eq.s32.totalorder %s9, 0
    %p97 = por %p95, %p96
    %p98 = scmp.ne.s32.totalorder %s87, %s90
    %p99 = scmp.eq.s32.totalorder %s14, 1
    %p100 = por %p98, %p99
    %p101 = scmp.ne.s32.totalorder %s90, %s91
    %p102 = scmp.eq.s32.totalorder %s14, 0
    %p103 = por %p101, %p102
    %p104 = scmp.ne.s32.totalorder %s90, %s91
    %p105 = scmp.eq.s32.totalorder %s15, 1
    %p106 = por %p104, %p105
    %p108 = scmp.ne.s32.totalorder %s91, %s107
    %p109 = scmp.eq.s32.totalorder %s15, 0
    %p110 = por %p108, %p109
    %p111 = scmp.le.s32.totalorder 1, %s9
    %p112 = scmp.lt.s32.totalorder %s9, 3
    %p113 = pnand %p111, %p112
    %p114 = pneg %p113
    // Predicated region
    $region9: #{waste_classifier_forward.3} parent=5 // pred_check
      _
    $region10: #{waste_classifier_forward.3} parent=5 // pred_check_branch
      %116 = sbr.rel (%p113) target = $region12
    $region11: #{waste_classifier_forward.3} parent=5 // pred_region
      %s117 = ssub.s32 %s9, 1
      // Predicated region
      $region13: #{waste_classifier_forward.3} parent=11 // pred_check
        %p118 = pneg %p56
      $region14: #{waste_classifier_forward.3} parent=11 // pred_check_branch
        %120 = sbr.rel (%p118) target = $region16
      $region15: #{waste_classifier_forward.3} parent=11 // pred_region
        _
      $region16: #{waste_classifier_forward.3} parent=11 // pred_fallthru
        _
      // Predicated region
      $region17: #{waste_classifier_forward.3} parent=11 // pred_check
        %p121 = pneg %p77
      $region18: #{waste_classifier_forward.3} parent=11 // pred_check_branch
        %123 = sbr.rel (%p121) target = $region20
      $region19: #{waste_classifier_forward.3} parent=11 // pred_region
        _
      $region20: #{waste_classifier_forward.3} parent=11 // pred_fallthru
        _
    $region12: #{waste_classifier_forward.3} parent=5 // pred_fallthru
      _
    %p124 = scmp.lt.s32.totalorder %s9, 2
    // Predicated region
    $region21: #{waste_classifier_forward.3} parent=5 // pred_check
      %p125 = pneg %p124
    $region22: #{waste_classifier_forward.3} parent=5 // pred_check_branch
      %127 = sbr.rel (%p125) target = $region24
    $region23: #{waste_classifier_forward.3} parent=5 // pred_region
      // Predicated region
      $region25: #{waste_classifier_forward.3} parent=23 // pred_check
        %p128 = pneg %p29
      $region26: #{waste_classifier_forward.3} parent=23 // pred_check_branch
        %130 = sbr.rel (%p128) target = $region28
      $region27: #{waste_classifier_forward.3} parent=23 // pred_region
        %p131 = scmp.lt.s32.totalorder %s9, 1
        %s132 = scalar_select %p131, %s9, 1
        %s133 = smul.addr %s132, 512
        %s134 = smul.addr %s133, 4
        %s135 = scalar_lea.vmem %s0, %s134
      $region28: #{waste_classifier_forward.3} parent=23 // pred_fallthru
        _
    $region24: #{waste_classifier_forward.3} parent=5 // pred_fallthru
      _
    %p136 = scmp.le.s32.totalorder 1, %s9
    %p137 = scmp.lt.s32.totalorder %s9, 3
    %p138 = pnand %p136, %p137
    %p139 = pneg %p138
    // Predicated region
    $region29: #{waste_classifier_forward.3} parent=5 // pred_check
      _
    $region30: #{waste_classifier_forward.3} parent=5 // pred_check_branch
      %141 = sbr.rel (%p138) target = $region32
    $region31: #{waste_classifier_forward.3} parent=5 // pred_region
      %s142 = ssub.s32 %s9, 1
      %p143 = scmp.lt.s32.totalorder %s14, 1
      %s144 = scalar_select %p143, %s14, 1
      %s145 = smul.addr %s144, 512
      %s146 = smul.addr %s145, 4
      %s147 = scalar_lea.vmem %s0, %s146
      %p148 = pneg %p35
      %p149 = pneg %p32
      %p150 = pneg %p56
      %p151 = pneg %p53
      %p152 = pneg %p77
      %p153 = pneg %p74
      %p154 = pneg %p103
      %p155 = pneg %p100
      %p156 = scmp.lt.s32.totalorder %s14, 1
      %s157 = scalar_select %p156, %s14, 1
      %s158 = smul.addr %s157, 128
      %s159 = smul.addr %s158, 4
      %s160 = scalar_lea.vmem %s3, %s159
      %p161 = scmp.lt.s32.totalorder %s14, 1
      %s162 = scalar_select %p161, %s14, 1
      %s163 = smul.addr %s162, 512
      %s164 = smul.addr %s163, 4
      %s165 = scalar_lea.vmem %s0, %s164
      %p166 = scmp.lt.s32.totalorder %s14, 1
      %s167 = scalar_select %p166, %s14, 1
      %s168 = smul.addr %s167, 128
      %s169 = smul.addr %s168, 4
      %s170 = scalar_lea.vmem %s3, %s169
      loop: start=0, step=1, limit=8
      $region33: #{waste_classifier_forward.3} parent=31 // loop_pre_header
        _
      $region34: #{waste_classifier_forward.3} parent=31 // loop_header
        %s173 = sphi 0, %s177
        %p174 = scmp.ge.s32.totalorder %s173, 8
      $region35: #{waste_classifier_forward.3} parent=31 // loop_header_branch
        %176 = sbr.rel (%p174) target = $region39
      $region36: #{waste_classifier_forward.3} parent=31 // loop_body
        %s178 = smul.u32 %s173, 8
        %s179 = smul.u32 %s178, 4
        %s180 = smul.addr %s179, 4
        %s181 = scalar_lea.vmem %s165, %s180
        %v182 = vld [vmem:[%s181] sm:$0xf]
        %v183 = vld [vmem:[%s181 + $0x4] sm:$0xf]
        %v184 = vld [vmem:[%s181 + $0x8] sm:$0xf]
        %v185 = vld [vmem:[%s181 + $0xc] sm:$0xf]
        %v186 = vld [vmem:[%s181 + $0x10] sm:$0xf]
        %v187 = vld [vmem:[%s181 + $0x14] sm:$0xf]
        %v188 = vld [vmem:[%s181 + $0x18] sm:$0xf]
        %v189 = vld [vmem:[%s181 + $0x1c] sm:$0xf]
        %v190 = vld [vmem:[%s181 + $0x20] sm:$0xf]
        %v191 = vld [vmem:[%s181 + $0x24] sm:$0xf]
        %v192 = vld [vmem:[%s181 + $0x28] sm:$0xf]
        %v193 = vld [vmem:[%s181 + $0x2c] sm:$0xf]
        %v194 = vld [vmem:[%s181 + $0x30] sm:$0xf]
        %v195 = vld [vmem:[%s181 + $0x34] sm:$0xf]
        %v196 = vld [vmem:[%s181 + $0x38] sm:$0xf]
        %v197 = vld [vmem:[%s181 + $0x3c] sm:$0xf]
        %v198 = vld [vmem:[%s181 + $0x40] sm:$0xf]
        %v199 = vld [vmem:[%s181 + $0x44] sm:$0xf]
        %v200 = vld [vmem:[%s181 + $0x48] sm:$0xf]
        %v201 = vld [vmem:[%s181 + $0x4c] sm:$0xf]
        %v202 = vld [vmem:[%s181 + $0x50] sm:$0xf]
        %v203 = vld [vmem:[%s181 + $0x54] sm:$0xf]
        %v204 = vld [vmem:[%s181 + $0x58] sm:$0xf]
        %v205 = vld [vmem:[%s181 + $0x5c] sm:$0xf]
        %v206 = vld [vmem:[%s181 + $0x60] sm:$0xf]
        %v207 = vld [vmem:[%s181 + $0x64] sm:$0xf]
        %v208 = vld [vmem:[%s181 + $0x68] sm:$0xf]
        %v209 = vld [vmem:[%s181 + $0x6c] sm:$0xf]
        %v210 = vld [vmem:[%s181 + $0x70] sm:$0xf]
        %v211 = vld [vmem:[%s181 + $0x74] sm:$0xf]
        %v212 = vld [vmem:[%s181 + $0x78] sm:$0xf]
        %v213 = vld [vmem:[%s181 + $0x7c] sm:$0xf]
        %v214 = vld [vmem:[%s181 + $0x400] sm:$0xf]
        %v215 = vld [vmem:[%s181 + $0x404] sm:$0xf]
        %v216 = vld [vmem:[%s181 + $0x408] sm:$0xf]
        %v217 = vld [vmem:[%s181 + $0x40c] sm:$0xf]
        %v218 = vld [vmem:[%s181 + $0x410] sm:$0xf]
        %v219 = vld [vmem:[%s181 + $0x414] sm:$0xf]
        %v220 = vld [vmem:[%s181 + $0x418] sm:$0xf]
        %v221 = vld [vmem:[%s181 + $0x41c] sm:$0xf]
        %v222 = vld [vmem:[%s181 + $0x420] sm:$0xf]
        %v223 = vld [vmem:[%s181 + $0x424] sm:$0xf]
        %v224 = vld [vmem:[%s181 + $0x428] sm:$0xf]
        %v225 = vld [vmem:[%s181 + $0x42c] sm:$0xf]
        %v226 = vld [vmem:[%s181 + $0x430] sm:$0xf]
        %v227 = vld [vmem:[%s181 + $0x434] sm:$0xf]
        %v228 = vld [vmem:[%s181 + $0x438] sm:$0xf]
        %v229 = vld [vmem:[%s181 + $0x43c] sm:$0xf]
        %v230 = vld [vmem:[%s181 + $0x440] sm:$0xf]
        %v231 = vld [vmem:[%s181 + $0x444] sm:$0xf]
        %v232 = vld [vmem:[%s181 + $0x448] sm:$0xf]
        %v233 = vld [vmem:[%s181 + $0x44c] sm:$0xf]
        %v234 = vld [vmem:[%s181 + $0x450] sm:$0xf]
        %v235 = vld [vmem:[%s181 + $0x454] sm:$0xf]
        %v236 = vld [vmem:[%s181 + $0x458] sm:$0xf]
        %v237 = vld [vmem:[%s181 + $0x45c] sm:$0xf]
        %v238 = vld [vmem:[%s181 + $0x460] sm:$0xf]
        %v239 = vld [vmem:[%s181 + $0x464] sm:$0xf]
        %v240 = vld [vmem:[%s181 + $0x468] sm:$0xf]
        %v241 = vld [vmem:[%s181 + $0x46c] sm:$0xf]
        %v242 = vld [vmem:[%s181 + $0x470] sm:$0xf]
        %v243 = vld [vmem:[%s181 + $0x474] sm:$0xf]
        %v244 = vld [vmem:[%s181 + $0x478] sm:$0xf]
        %v245 = vld [vmem:[%s181 + $0x47c] sm:$0xf]
        %v246 = vld [vmem:[%s1] sm:$0xf]
        %v247 = vld [vmem:[%s1 + $0x4] sm:$0xf]
        %v248 = vld [vmem:[%s1 + $0x8] sm:$0xf]
        %v249 = vld [vmem:[%s1 + $0xc] sm:$0x3]
        %v314 = vunpack.c.l.b16 %v182
        %v315 = vunpack.c.l.b16 %v183
        %v316 = vunpack.c.l.b16 %v184
        %v317 = vunpack.c.l.b16 %v185
        %v318 = vunpack.c.l.b16 %v186
        %v319 = vunpack.c.l.b16 %v187
        %v320 = vunpack.c.l.b16 %v188
        %v321 = vunpack.c.l.b16 %v189
        %v322 = vunpack.c.l.b16 %v190
        %v323 = vunpack.c.l.b16 %v191
        %v324 = vunpack.c.l.b16 %v192
        %v325 = vunpack.c.l.b16 %v193
        %v326 = vunpack.c.l.b16 %v194
        %v327 = vunpack.c.l.b16 %v195
        %v328 = vunpack.c.l.b16 %v196
        %v329 = vunpack.c.l.b16 %v197
        %v330 = vunpack.c.l.b16 %v198
        %v331 = vunpack.c.l.b16 %v199
        %v332 = vunpack.c.l.b16 %v200
        %v333 = vunpack.c.l.b16 %v201
        %v334 = vunpack.c.l.b16 %v202
        %v335 = vunpack.c.l.b16 %v203
        %v336 = vunpack.c.l.b16 %v204
        %v337 = vunpack.c.l.b16 %v205
        %v338 = vunpack.c.l.b16 %v206
        %v339 = vunpack.c.l.b16 %v207
        %v340 = vunpack.c.l.b16 %v208
        %v341 = vunpack.c.l.b16 %v209
        %v342 = vunpack.c.l.b16 %v210
        %v343 = vunpack.c.l.b16 %v211
        %v344 = vunpack.c.l.b16 %v212
        %v345 = vunpack.c.l.b16 %v213
        %v346 = vunpack.c.l.b16 %v214
        %v347 = vunpack.c.l.b16 %v215
        %v348 = vunpack.c.l.b16 %v216
        %v349 = vunpack.c.l.b16 %v217
        %v350 = vunpack.c.l.b16 %v218
        %v351 = vunpack.c.l.b16 %v219
        %v352 = vunpack.c.l.b16 %v220
        %v353 = vunpack.c.l.b16 %v221
        %v354 = vunpack.c.l.b16 %v222
        %v355 = vunpack.c.l.b16 %v223
        %v356 = vunpack.c.l.b16 %v224
        %v357 = vunpack.c.l.b16 %v225
        %v358 = vunpack.c.l.b16 %v226
        %v359 = vunpack.c.l.b16 %v227
        %v360 = vunpack.c.l.b16 %v228
        %v361 = vunpack.c.l.b16 %v229
        %v362 = vunpack.c.l.b16 %v230
        %v363 = vunpack.c.l.b16 %v231
        %v364 = vunpack.c.l.b16 %v232
        %v365 = vunpack.c.l.b16 %v233
        %v366 = vunpack.c.l.b16 %v234
        %v367 = vunpack.c.l.b16 %v235
        %v368 = vunpack.c.l.b16 %v236
        %v369 = vunpack.c.l.b16 %v237
        %v370 = vunpack.c.l.b16 %v238
        %v371 = vunpack.c.l.b16 %v239
        %v372 = vunpack.c.l.b16 %v240
        %v373 = vunpack.c.l.b16 %v241
        %v374 = vunpack.c.l.b16 %v242
        %v375 = vunpack.c.l.b16 %v243
        %v376 = vunpack.c.l.b16 %v244
        %v377 = vunpack.c.l.b16 %v245
        %v378 = vpack.c.b16 %v315, %v314
        %v379 = vpack.c.b16 %v317, %v316
        %v380 = vpack.c.b16 %v319, %v318
        %v381 = vpack.c.b16 %v321, %v320
        %v382 = vpack.c.b16 %v323, %v322
        %v383 = vpack.c.b16 %v325, %v324
        %v384 = vpack.c.b16 %v327, %v326
        %v385 = vpack.c.b16 %v329, %v328
        %v386 = vpack.c.b16 %v331, %v330
        %v387 = vpack.c.b16 %v333, %v332
        %v388 = vpack.c.b16 %v335, %v334
        %v389 = vpack.c.b16 %v337, %v336
        %v390 = vpack.c.b16 %v339, %v338
        %v391 = vpack.c.b16 %v341, %v340
        %v392 = vpack.c.b16 %v343, %v342
        %v393 = vpack.c.b16 %v345, %v344
        %v394 = vpack.c.b16 %v347, %v346
        %v395 = vpack.c.b16 %v349, %v348
        %v396 = vpack.c.b16 %v351, %v350
        %v397 = vpack.c.b16 %v353, %v352
        %v398 = vpack.c.b16 %v355, %v354
        %v399 = vpack.c.b16 %v357, %v356
        %v400 = vpack.c.b16 %v359, %v358
        %v401 = vpack.c.b16 %v361, %v360
        %v402 = vpack.c.b16 %v363, %v362
        %v403 = vpack.c.b16 %v365, %v364
        %v404 = vpack.c.b16 %v367, %v366
        %v405 = vpack.c.b16 %v369, %v368
        %v406 = vpack.c.b16 %v371, %v370
        %v407 = vpack.c.b16 %v373, %v372
        %v408 = vpack.c.b16 %v375, %v374
        %v409 = vpack.c.b16 %v377, %v376
        %v414 = vunpack.c.l.b16 %v246
        %v415 = vunpack.c.l.b16 %v247
        %v416 = vunpack.c.l.b16 %v248
        %v417 = vunpack.c.l.b16 %v249
        %v418 = vpack.c.b16 %v415, %v414
        %v419 = vpack.c.b16 %v417, %v416
        %vm421 = vcmask 220160
        %v423 = vsel %vm421, %v378, 0
        %v426 = vsel %vm421, %v379, 0
        %v429 = vsel %vm421, %v380, 0
        %v432 = vsel %vm421, %v381, 0
        %v435 = vsel %vm421, %v382, 0
        %v438 = vsel %vm421, %v383, 0
        %v441 = vsel %vm421, %v384, 0
        %v444 = vsel %vm421, %v385, 0
        %v447 = vsel %vm421, %v386, 0
        %v450 = vsel %vm421, %v387, 0
        %v453 = vsel %vm421, %v388, 0
        %v456 = vsel %vm421, %v389, 0
        %v459 = vsel %vm421, %v390, 0
        %v462 = vsel %vm421, %v391, 0
        %v465 = vsel %vm421, %v392, 0
        %v468 = vsel %vm421, %v393, 0
        %v471 = vsel %vm421, %v394, 0
        %v474 = vsel %vm421, %v395, 0
        %v477 = vsel %vm421, %v396, 0
        %v480 = vsel %vm421, %v397, 0
        %v483 = vsel %vm421, %v398, 0
        %v486 = vsel %vm421, %v399, 0
        %v489 = vsel %vm421, %v400, 0
        %v492 = vsel %vm421, %v401, 0
        %v495 = vsel %vm421, %v402, 0
        %v498 = vsel %vm421, %v403, 0
        %v501 = vsel %vm421, %v404, 0
        %v504 = vsel %vm421, %v405, 0
        %v507 = vsel %vm421, %v406, 0
        %v510 = vsel %vm421, %v407, 0
        %v513 = vsel %vm421, %v408, 0
        %v516 = vsel %vm421, %v409, 0
        %vm518 = vcmask 1044480
        %vm519 = vcmask 1045504
        %v520 = vsel %vm518, 4294967295, 65535
        %v521 = vsel %vm519, %v520, 0
        %v523 = vand.u32 %v419, %v521
        %525 = vmatprep.subr.bf16.mxu0 0
        %526 = vmatpush1.bf16.msra.mxu0 0
        %527 = vmatprep.subr.bf16.mxu0 0
        %528 = vmatpush1.bf16.msra.mxu0 0
        %529 = vmatprep.subr.bf16.mxu0 0
        %530 = vmatpush1.bf16.msra.mxu0 0
        %531 = vmatprep.subr.bf16.mxu0 0
        %532 = vmatpush1.bf16.msra.mxu0 0
        %533 = vmatprep.subr.bf16.mxu0 0
        %534 = vmatpush1.bf16.msra.mxu0 0
        %535 = vmatprep.subr.bf16.mxu0 0
        %536 = vmatpush1.bf16.msra.mxu0 0
        %537 = vmatprep.subr.bf16.mxu0 0
        %538 = vmatpush1.bf16.msra.mxu0 %v523
        %539 = vmatprep.subr.bf16.mxu0 0
        %540 = vmatpush1.bf16.msra.mxu0 %v418
        %541 = vmatprep.subr.bf16.mxu0 0
        %542 = vmatpush2.bf16.msra.mxu0 0
        %543 = vmatprep.subr.bf16.mxu0 0
        %544 = vmatpush2.bf16.msra.mxu0 0
        %545 = vmatprep.subr.bf16.mxu0 0
        %546 = vmatpush2.bf16.msra.mxu0 0
        %547 = vmatprep.subr.bf16.mxu0 0
        %548 = vmatpush2.bf16.msra.mxu0 0
        %549 = vmatprep.subr.bf16.mxu0 0
        %550 = vmatpush2.bf16.msra.mxu0 0
        %551 = vmatprep.subr.bf16.mxu0 0
        %552 = vmatpush2.bf16.msra.mxu0 0
        %553 = vmatprep.subr.bf16.mxu0 0
        %554 = vmatpush2.bf16.msra.mxu0 0
        %555 = vmatprep.subr.bf16.mxu0 0
        %556 = vmatpush2.bf16.msra.mxu0 0
        %557 = vmatprep.mubr.bf16.mxu0 0
        %558 = vmatmul.mubr.bf16.gmra.mxu0 %v423
        %v559 = vpop.f32.mrf.mxu0
        %v560 = vadd.f32 0.0, %v559
        %v561 = vpop.f32.mrf.mxu0
        %v562 = vpop.f32.mrf.mxu0
        %v563 = vadd.f32 0.0, %v562
        %v564 = vpop.f32.mrf.mxu0
        %565 = vmatprep.mubr.bf16.mxu0 0
        %566 = vmatmul.mubr.bf16.gmra.mxu0 %v426
        %v567 = vpop.f32.mrf.mxu0
        %v568 = vadd.f32 0.0, %v567
        %v569 = vpop.f32.mrf.mxu0
        %v570 = vpop.f32.mrf.mxu0
        %v571 = vadd.f32 0.0, %v570
        %v572 = vpop.f32.mrf.mxu0
        %573 = vmatprep.mubr.bf16.mxu0 0
        %574 = vmatmul.mubr.bf16.gmra.mxu0 %v429
        %v575 = vpop.f32.mrf.mxu0
        %v576 = vadd.f32 0.0, %v575
        %v577 = vpop.f32.mrf.mxu0
        %v578 = vpop.f32.mrf.mxu0
        %v579 = vadd.f32 0.0, %v578
        %v580 = vpop.f32.mrf.mxu0
        %581 = vmatprep.mubr.bf16.mxu0 0
        %582 = vmatmul.mubr.bf16.gmra.mxu0 %v432
        %v583 = vpop.f32.mrf.mxu0
        %v584 = vadd.f32 0.0, %v583
        %v585 = vpop.f32.mrf.mxu0
        %v586 = vpop.f32.mrf.mxu0
        %v587 = vadd.f32 0.0, %v586
        %v588 = vpop.f32.mrf.mxu0
        %589 = vmatprep.mubr.bf16.mxu0 0
        %590 = vmatmul.mubr.bf16.gmra.mxu0 %v435
        %v591 = vpop.f32.mrf.mxu0
        %v592 = vadd.f32 0.0, %v591
        %v593 = vpop.f32.mrf.mxu0
        %v594 = vpop.f32.mrf.mxu0
        %v595 = vadd.f32 0.0, %v594
        %v596 = vpop.f32.mrf.mxu0
        %597 = vmatprep.mubr.bf16.mxu0 0
        %598 = vmatmul.mubr.bf16.gmra.mxu0 %v438
        %v599 = vpop.f32.mrf.mxu0
        %v600 = vadd.f32 0.0, %v599
        %v601 = vpop.f32.mrf.mxu0
        %v602 = vpop.f32.mrf.mxu0
        %v603 = vadd.f32 0.0, %v602
        %v604 = vpop.f32.mrf.mxu0
        %605 = vmatprep.mubr.bf16.mxu0 0
        %606 = vmatmul.mubr.bf16.gmra.mxu0 %v441
        %v607 = vpop.f32.mrf.mxu0
        %v608 = vadd.f32 0.0, %v607
        %v609 = vpop.f32.mrf.mxu0
        %v610 = vpop.f32.mrf.mxu0
        %v611 = vadd.f32 0.0, %v610
        %v612 = vpop.f32.mrf.mxu0
        %613 = vmatprep.mubr.bf16.mxu0 0
        %614 = vmatmul.mubr.bf16.gmra.mxu0 %v444
        %v615 = vpop.f32.mrf.mxu0
        %v616 = vadd.f32 0.0, %v615
        %v617 = vpop.f32.mrf.mxu0
        %v618 = vpop.f32.mrf.mxu0
        %v619 = vadd.f32 0.0, %v618
        %v620 = vpop.f32.mrf.mxu0
        %621 = vmatprep.mubr.bf16.mxu0 0
        %622 = vmatmul.mubr.bf16.gmra.mxu0 %v447
        %v623 = vpop.f32.mrf.mxu0
        %v624 = vadd.f32 0.0, %v623
        %v625 = vpop.f32.mrf.mxu0
        %v626 = vpop.f32.mrf.mxu0
        %v627 = vadd.f32 0.0, %v626
        %v628 = vpop.f32.mrf.mxu0
        %629 = vmatprep.mubr.bf16.mxu0 0
        %630 = vmatmul.mubr.bf16.gmra.mxu0 %v450
        %v631 = vpop.f32.mrf.mxu0
        %v632 = vadd.f32 0.0, %v631
        %v633 = vpop.f32.mrf.mxu0
        %v634 = vpop.f32.mrf.mxu0
        %v635 = vadd.f32 0.0, %v634
        %v636 = vpop.f32.mrf.mxu0
        %637 = vmatprep.mubr.bf16.mxu0 0
        %638 = vmatmul.mubr.bf16.gmra.mxu0 %v453
        %v639 = vpop.f32.mrf.mxu0
        %v640 = vadd.f32 0.0, %v639
        %v641 = vpop.f32.mrf.mxu0
        %v642 = vpop.f32.mrf.mxu0
        %v643 = vadd.f32 0.0, %v642
        %v644 = vpop.f32.mrf.mxu0
        %645 = vmatprep.mubr.bf16.mxu0 0
        %646 = vmatmul.mubr.bf16.gmra.mxu0 %v456
        %v647 = vpop.f32.mrf.mxu0
        %v648 = vadd.f32 0.0, %v647
        %v649 = vpop.f32.mrf.mxu0
        %v650 = vpop.f32.mrf.mxu0
        %v651 = vadd.f32 0.0, %v650
        %v652 = vpop.f32.mrf.mxu0
        %653 = vmatprep.mubr.bf16.mxu0 0
        %654 = vmatmul.mubr.bf16.gmra.mxu0 %v459
        %v655 = vpop.f32.mrf.mxu0
        %v656 = vadd.f32 0.0, %v655
        %v657 = vpop.f32.mrf.mxu0
        %v658 = vpop.f32.mrf.mxu0
        %v659 = vadd.f32 0.0, %v658
        %v660 = vpop.f32.mrf.mxu0
        %661 = vmatprep.mubr.bf16.mxu0 0
        %662 = vmatmul.mubr.bf16.gmra.mxu0 %v462
        %v663 = vpop.f32.mrf.mxu0
        %v664 = vadd.f32 0.0, %v663
        %v665 = vpop.f32.mrf.mxu0
        %v666 = vpop.f32.mrf.mxu0
        %v667 = vadd.f32 0.0, %v666
        %v668 = vpop.f32.mrf.mxu0
        %669 = vmatprep.mubr.bf16.mxu0 0
        %670 = vmatmul.mubr.bf16.gmra.mxu0 %v465
        %v671 = vpop.f32.mrf.mxu0
        %v672 = vadd.f32 0.0, %v671
        %v673 = vpop.f32.mrf.mxu0
        %v674 = vpop.f32.mrf.mxu0
        %v675 = vadd.f32 0.0, %v674
        %v676 = vpop.f32.mrf.mxu0
        %677 = vmatprep.mubr.bf16.mxu0 0
        %678 = vmatmul.mubr.bf16.gmra.mxu0 %v468
        %v679 = vpop.f32.mrf.mxu0
        %v680 = vadd.f32 0.0, %v679
        %v681 = vpop.f32.mrf.mxu0
        %v682 = vpop.f32.mrf.mxu0
        %v683 = vadd.f32 0.0, %v682
        %v684 = vpop.f32.mrf.mxu0
        %685 = vmatprep.mubr.bf16.mxu0 0
        %686 = vmatmul.mubr.bf16.gmra.mxu0 %v471
        %v687 = vpop.f32.mrf.mxu0
        %v688 = vadd.f32 0.0, %v687
        %v689 = vpop.f32.mrf.mxu0
        %v690 = vpop.f32.mrf.mxu0
        %v691 = vadd.f32 0.0, %v690
        %v692 = vpop.f32.mrf.mxu0
        %693 = vmatprep.mubr.bf16.mxu0 0
        %694 = vmatmul.mubr.bf16.gmra.mxu0 %v474
        %v695 = vpop.f32.mrf.mxu0
        %v696 = vadd.f32 0.0, %v695
        %v697 = vpop.f32.mrf.mxu0
        %v698 = vpop.f32.mrf.mxu0
        %v699 = vadd.f32 0.0, %v698
        %v700 = vpop.f32.mrf.mxu0
        %701 = vmatprep.mubr.bf16.mxu0 0
        %702 = vmatmul.mubr.bf16.gmra.mxu0 %v477
        %v703 = vpop.f32.mrf.mxu0
        %v704 = vadd.f32 0.0, %v703
        %v705 = vpop.f32.mrf.mxu0
        %v706 = vpop.f32.mrf.mxu0
        %v707 = vadd.f32 0.0, %v706
        %v708 = vpop.f32.mrf.mxu0
        %709 = vmatprep.mubr.bf16.mxu0 0
        %710 = vmatmul.mubr.bf16.gmra.mxu0 %v480
        %v711 = vpop.f32.mrf.mxu0
        %v712 = vadd.f32 0.0, %v711
        %v713 = vpop.f32.mrf.mxu0
        %v714 = vpop.f32.mrf.mxu0
        %v715 = vadd.f32 0.0, %v714
        %v716 = vpop.f32.mrf.mxu0
        %717 = vmatprep.mubr.bf16.mxu0 0
        %718 = vmatmul.mubr.bf16.gmra.mxu0 %v483
        %v719 = vpop.f32.mrf.mxu0
        %v720 = vadd.f32 0.0, %v719
        %v721 = vpop.f32.mrf.mxu0
        %v722 = vpop.f32.mrf.mxu0
        %v723 = vadd.f32 0.0, %v722
        %v724 = vpop.f32.mrf.mxu0
        %725 = vmatprep.mubr.bf16.mxu0 0
        %726 = vmatmul.mubr.bf16.gmra.mxu0 %v486
        %v727 = vpop.f32.mrf.mxu0
        %v728 = vadd.f32 0.0, %v727
        %v729 = vpop.f32.mrf.mxu0
        %v730 = vpop.f32.mrf.mxu0
        %v731 = vadd.f32 0.0, %v730
        %v732 = vpop.f32.mrf.mxu0
        %733 = vmatprep.mubr.bf16.mxu0 0
        %734 = vmatmul.mubr.bf16.gmra.mxu0 %v489
        %v735 = vpop.f32.mrf.mxu0
        %v736 = vadd.f32 0.0, %v735
        %v737 = vpop.f32.mrf.mxu0
        %v738 = vpop.f32.mrf.mxu0
        %v739 = vadd.f32 0.0, %v738
        %v740 = vpop.f32.mrf.mxu0
        %741 = vmatprep.mubr.bf16.mxu0 0
        %742 = vmatmul.mubr.bf16.gmra.mxu0 %v492
        %v743 = vpop.f32.mrf.mxu0
        %v744 = vadd.f32 0.0, %v743
        %v745 = vpop.f32.mrf.mxu0
        %v746 = vpop.f32.mrf.mxu0
        %v747 = vadd.f32 0.0, %v746
        %v748 = vpop.f32.mrf.mxu0
        %749 = vmatprep.mubr.bf16.mxu0 0
        %750 = vmatmul.mubr.bf16.gmra.mxu0 %v495
        %v751 = vpop.f32.mrf.mxu0
        %v752 = vadd.f32 0.0, %v751
        %v753 = vpop.f32.mrf.mxu0
        %v754 = vpop.f32.mrf.mxu0
        %v755 = vadd.f32 0.0, %v754
        %v756 = vpop.f32.mrf.mxu0
        %757 = vmatprep.mubr.bf16.mxu0 0
        %758 = vmatmul.mubr.bf16.gmra.mxu0 %v498
        %v759 = vpop.f32.mrf.mxu0
        %v760 = vadd.f32 0.0, %v759
        %v761 = vpop.f32.mrf.mxu0
        %v762 = vpop.f32.mrf.mxu0
        %v763 = vadd.f32 0.0, %v762
        %v764 = vpop.f32.mrf.mxu0
        %765 = vmatprep.mubr.bf16.mxu0 0
        %766 = vmatmul.mubr.bf16.gmra.mxu0 %v501
        %v767 = vpop.f32.mrf.mxu0
        %v768 = vadd.f32 0.0, %v767
        %v769 = vpop.f32.mrf.mxu0
        %v770 = vpop.f32.mrf.mxu0
        %v771 = vadd.f32 0.0, %v770
        %v772 = vpop.f32.mrf.mxu0
        %773 = vmatprep.mubr.bf16.mxu0 0
        %774 = vmatmul.mubr.bf16.gmra.mxu0 %v504
        %v775 = vpop.f32.mrf.mxu0
        %v776 = vadd.f32 0.0, %v775
        %v777 = vpop.f32.mrf.mxu0
        %v778 = vpop.f32.mrf.mxu0
        %v779 = vadd.f32 0.0, %v778
        %v780 = vpop.f32.mrf.mxu0
        %781 = vmatprep.mubr.bf16.mxu0 0
        %782 = vmatmul.mubr.bf16.gmra.mxu0 %v507
        %v783 = vpop.f32.mrf.mxu0
        %v784 = vadd.f32 0.0, %v783
        %v785 = vpop.f32.mrf.mxu0
        %v786 = vpop.f32.mrf.mxu0
        %v787 = vadd.f32 0.0, %v786
        %v788 = vpop.f32.mrf.mxu0
        %789 = vmatprep.mubr.bf16.mxu0 0
        %790 = vmatmul.mubr.bf16.gmra.mxu0 %v510
        %v791 = vpop.f32.mrf.mxu0
        %v792 = vadd.f32 0.0, %v791
        %v793 = vpop.f32.mrf.mxu0
        %v794 = vpop.f32.mrf.mxu0
        %v795 = vadd.f32 0.0, %v794
        %v796 = vpop.f32.mrf.mxu0
        %797 = vmatprep.mubr.bf16.mxu0 0
        %798 = vmatmul.mubr.bf16.gmra.mxu0 %v513
        %v799 = vpop.f32.mrf.mxu0
        %v800 = vadd.f32 0.0, %v799
        %v801 = vpop.f32.mrf.mxu0
        %v802 = vpop.f32.mrf.mxu0
        %v803 = vadd.f32 0.0, %v802
        %v804 = vpop.f32.mrf.mxu0
        %805 = vmatprep.mubr.bf16.mxu0 0
        %806 = vmatmul.mubr.bf16.gmra.mxu0 %v516
        %v807 = vpop.f32.mrf.mxu0
        %v808 = vadd.f32 0.0, %v807
        %v809 = vpop.f32.mrf.mxu0
        %v810 = vpop.f32.mrf.mxu0
        %v811 = vadd.f32 0.0, %v810
        %v812 = vpop.f32.mrf.mxu0
        %813 = vdwg.mxu0
        %v814 = vmax.f32 %v560, %v688
        %v815 = vmax.f32 %v563, %v691
        %v816 = vmax.f32 %v568, %v696
        %v817 = vmax.f32 %v571, %v699
        %v818 = vmax.f32 %v576, %v704
        %v819 = vmax.f32 %v579, %v707
        %v820 = vmax.f32 %v584, %v712
        %v821 = vmax.f32 %v587, %v715
        %v822 = vmax.f32 %v592, %v720
        %v823 = vmax.f32 %v595, %v723
        %v824 = vmax.f32 %v600, %v728
        %v825 = vmax.f32 %v603, %v731
        %v826 = vmax.f32 %v608, %v736
        %v827 = vmax.f32 %v611, %v739
        %v828 = vmax.f32 %v616, %v744
        %v829 = vmax.f32 %v619, %v747
        %v830 = vmax.f32 %v624, %v752
        %v831 = vmax.f32 %v627, %v755
        %v832 = vmax.f32 %v632, %v760
        %v833 = vmax.f32 %v635, %v763
        %v834 = vmax.f32 %v640, %v768
        %v835 = vmax.f32 %v643, %v771
        %v836 = vmax.f32 %v648, %v776
        %v837 = vmax.f32 %v651, %v779
        %v838 = vmax.f32 %v656, %v784
        %v839 = vmax.f32 %v659, %v787
        %v840 = vmax.f32 %v664, %v792
        %v841 = vmax.f32 %v667, %v795
        %v842 = vmax.f32 %v672, %v800
        %v843 = vmax.f32 %v675, %v803
        %v844 = vmax.f32 %v680, %v808
        %v845 = vmax.f32 %v683, %v811
        %v846 = vmax.f32 %v814, %v818
        %v847 = vmax.f32 %v815, %v819
        %v848 = vmax.f32 %v816, %v820
        %v849 = vmax.f32 %v817, %v821
        %v850 = vmax.f32 %v822, %v826
        %v851 = vmax.f32 %v823, %v827
        %v852 = vmax.f32 %v824, %v828
        %v853 = vmax.f32 %v825, %v829
        %v854 = vmax.f32 %v830, %v834
        %v855 = vmax.f32 %v831, %v835
        %v856 = vmax.f32 %v832, %v836
        %v857 = vmax.f32 %v833, %v837
        %v858 = vmax.f32 %v838, %v842
        %v859 = vmax.f32 %v839, %v843
        %v860 = vmax.f32 %v840, %v844
        %v861 = vmax.f32 %v841, %v845
        %v862 = vld [vmem:[%s2] sm:$0x1]
        %v864 = vlaneseq
        %v865 = vshrl.u32 %v864, 7
        %v866 = vsub.s32 0, %v865
        %v867 = vrot.slane %v862, %v866
        %v869 = vadd.f32 %v846, %v867
        %v870 = vadd.f32 %v847, %v867
        %v871 = vadd.f32 %v848, %v867
        %v872 = vadd.f32 %v849, %v867
        %v873 = vadd.f32 %v850, %v867
        %v874 = vadd.f32 %v851, %v867
        %v875 = vadd.f32 %v852, %v867
        %v876 = vadd.f32 %v853, %v867
        %v877 = vadd.f32 %v854, %v867
        %v878 = vadd.f32 %v855, %v867
        %v879 = vadd.f32 %v856, %v867
        %v880 = vadd.f32 %v857, %v867
        %v881 = vadd.f32 %v858, %v867
        %v882 = vadd.f32 %v859, %v867
        %v883 = vadd.f32 %v860, %v867
        %v884 = vadd.f32 %v861, %v867
        %v885 = vmax.f32 %v869, 0.0
        %v886 = vmax.f32 %v870, 0.0
        %v887 = vmax.f32 %v871, 0.0
        %v888 = vmax.f32 %v872, 0.0
        %v889 = vmax.f32 %v873, 0.0
        %v890 = vmax.f32 %v874, 0.0
        %v891 = vmax.f32 %v875, 0.0
        %v892 = vmax.f32 %v876, 0.0
        %v893 = vmax.f32 %v877, 0.0
        %v894 = vmax.f32 %v878, 0.0
        %v895 = vmax.f32 %v879, 0.0
        %v896 = vmax.f32 %v880, 0.0
        %v897 = vmax.f32 %v881, 0.0
        %v898 = vmax.f32 %v882, 0.0
        %v899 = vmax.f32 %v883, 0.0
        %v900 = vmax.f32 %v884, 0.0
        %v901 = vpack.c.bf16 %v886, %v885
        %v902 = vpack.c.bf16 %v888, %v887
        %v903 = vpack.c.bf16 %v890, %v889
        %v904 = vpack.c.bf16 %v892, %v891
        %v905 = vpack.c.bf16 %v894, %v893
        %v906 = vpack.c.bf16 %v896, %v895
        %v907 = vpack.c.bf16 %v898, %v897
        %v908 = vpack.c.bf16 %v900, %v899
        %s909 = smul.u32 %s173, 4
        %v918 = vunpack.c.l.b16 %v901
        %v919 = vunpack.c.h.b16 %v901
        %v920 = vunpack.c.l.b16 %v902
        %v921 = vunpack.c.h.b16 %v902
        %v922 = vunpack.c.l.b16 %v903
        %v923 = vunpack.c.h.b16 %v903
        %v924 = vunpack.c.l.b16 %v904
        %v925 = vunpack.c.h.b16 %v904
        %v926 = vunpack.c.l.b16 %v905
        %v927 = vunpack.c.h.b16 %v905
        %v928 = vunpack.c.l.b16 %v906
        %v929 = vunpack.c.h.b16 %v906
        %v930 = vunpack.c.l.b16 %v907
        %v931 = vunpack.c.h.b16 %v907
        %v932 = vunpack.c.l.b16 %v908
        %v933 = vunpack.c.h.b16 %v908
        %v934 = vpack.c.b16 %v918, %v918
        %v935 = vpack.c.b16 %v919, %v919
        %v936 = vpack.c.b16 %v920, %v920
        %v937 = vpack.c.b16 %v921, %v921
        %v938 = vpack.c.b16 %v922, %v922
        %v939 = vpack.c.b16 %v923, %v923
        %v940 = vpack.c.b16 %v924, %v924
        %v941 = vpack.c.b16 %v925, %v925
        %v942 = vpack.c.b16 %v926, %v926
        %v943 = vpack.c.b16 %v927, %v927
        %v944 = vpack.c.b16 %v928, %v928
        %v945 = vpack.c.b16 %v929, %v929
        %v946 = vpack.c.b16 %v930, %v930
        %v947 = vpack.c.b16 %v931, %v931
        %v948 = vpack.c.b16 %v932, %v932
        %v949 = vpack.c.b16 %v933, %v933
        %s966 = smul.u32 %s909, 4
        %s967 = smul.addr %s966, 4
        %s968 = scalar_lea.vmem %s170, %s967
        %vm969 = vcmask 257024
        %970 = vst.msk [vmem:[%s968] sm:$0xf] %vm969, %v934
        %971 = vst.msk [vmem:[%s968 + $0x4] sm:$0xf] %vm969, %v935
        %972 = vst.msk [vmem:[%s968 + $0x8] sm:$0xf] %vm969, %v936
        %973 = vst.msk [vmem:[%s968 + $0xc] sm:$0xf] %vm969, %v937
        %974 = vst.msk [vmem:[%s968 + $0x10] sm:$0xf] %vm969, %v938
        %975 = vst.msk [vmem:[%s968 + $0x14] sm:$0xf] %vm969, %v939
        %976 = vst.msk [vmem:[%s968 + $0x18] sm:$0xf] %vm969, %v940
        %977 = vst.msk [vmem:[%s968 + $0x1c] sm:$0xf] %vm969, %v941
        %978 = vst.msk [vmem:[%s968 + $0x20] sm:$0xf] %vm969, %v942
        %979 = vst.msk [vmem:[%s968 + $0x24] sm:$0xf] %vm969, %v943
        %980 = vst.msk [vmem:[%s968 + $0x28] sm:$0xf] %vm969, %v944
        %981 = vst.msk [vmem:[%s968 + $0x2c] sm:$0xf] %vm969, %v945
        %982 = vst.msk [vmem:[%s968 + $0x30] sm:$0xf] %vm969, %v946
        %983 = vst.msk [vmem:[%s968 + $0x34] sm:$0xf] %vm969, %v947
        %984 = vst.msk [vmem:[%s968 + $0x38] sm:$0xf] %vm969, %v948
        %985 = vst.msk [vmem:[%s968 + $0x3c] sm:$0xf] %vm969, %v949
      $region37: #{waste_classifier_forward.3} parent=31 // loop_footer
        %s177 = sadd.s32 1, %s173
      $region38: #{waste_classifier_forward.3} parent=31 // loop_footer_branch
        %172 = sbr.rel target = $region34
      $region39: #{waste_classifier_forward.3} parent=31 // loop_exit
        _
      %p986 = scmp.lt.s32.totalorder %s14, 1
      %s987 = scalar_select %p986, %s14, 1
      %s988 = smul.addr %s987, 128
      %s989 = smul.addr %s988, 4
      %s990 = scalar_lea.vmem %s3, %s989
      // Predicated region
      $region40: #{waste_classifier_forward.3} parent=31 // pred_check
        %p991 = pneg %p100
      $region41: #{waste_classifier_forward.3} parent=31 // pred_check_branch
        %993 = sbr.rel (%p991) target = $region43
      $region42: #{waste_classifier_forward.3} parent=31 // pred_region
        _
      $region43: #{waste_classifier_forward.3} parent=31 // pred_fallthru
        _
    $region32: #{waste_classifier_forward.3} parent=5 // pred_fallthru
      _
    %p994 = scmp.le.s32.totalorder 2, %s9
    // Predicated region
    $region44: #{waste_classifier_forward.3} parent=5 // pred_check
      %p995 = pneg %p994
    $region45: #{waste_classifier_forward.3} parent=5 // pred_check_branch
      %997 = sbr.rel (%p995) target = $region47
    $region46: #{waste_classifier_forward.3} parent=5 // pred_region
      %s998 = ssub.s32 %s9, 2
      // Predicated region
      $region48: #{waste_classifier_forward.3} parent=46 // pred_check
        %p999 = pneg %p106
      $region49: #{waste_classifier_forward.3} parent=46 // pred_check_branch
        %1001 = sbr.rel (%p999) target = $region51
      $region50: #{waste_classifier_forward.3} parent=46 // pred_region
        %p1002 = scmp.lt.s32.totalorder %s15, 1
        %s1003 = scalar_select %p1002, %s15, 1
        %s1004 = smul.addr %s1003, 128
        %s1005 = smul.addr %s1004, 4
        %s1006 = scalar_lea.vmem %s3, %s1005
      $region51: #{waste_classifier_forward.3} parent=46 // pred_fallthru
        _
    $region47: #{waste_classifier_forward.3} parent=5 // pred_fallthru
      _
  $region6: #{waste_classifier_forward.3} parent=0 // loop_footer
    %s13 = sadd.s32 1, %s9
  $region7: #{waste_classifier_forward.3} parent=0 // loop_footer_branch
    %8 = sbr.rel target = $region3
  $region8: #{waste_classifier_forward.3} parent=0 // loop_exit
    _

// kernel: waste_classifier_forward.4
$region0: #{waste_classifier_forward.4}
  #allocation0 [shape = 'u32[]', space=smem, size = 0x4, offset = 0x4, fixed_abs, tag = 'smem constant byte address 0x4 - core index']
  #allocation1 [shape = 'u32[144,128]{1,0:T(1,128)}', space=vmem, size = 0x12000, scoped, tag = 'internal scratch']
  %s0 = inlined_call_operand.vmem [shape: bf16[2,2,32,16,288], index: 0, kind: input, shape index: {}]
  %s1 = inlined_call_operand.vmem [shape: bf16[288,64], index: 1, kind: input, shape index: {}]
  %s2 = inlined_call_operand.vmem [shape: f32[1,64], index: 2, kind: input, shape index: {}]
  %s3 = inlined_call_operand.vmem [shape: bf16[2,16,16,64], index: 3, kind: output, shape index: {}]
  %s4 = sld [smem:[#allocation0]]
  $region52: #{waste_classifier_forward.4} parent=0
    _
  %s6 = ssub.s32 1, %s4
  %s7 = scalar_select 0, %s6, %s4
  loop: start=0, step=1, limit=4
  $region2: #{waste_classifier_forward.4} parent=0 // loop_pre_header
    _
  $region3: #{waste_classifier_forward.4} parent=0 // loop_header
    %s9 = sphi 0, %s13
    %p10 = scmp.ge.s32.totalorder %s9, 4
    %s19 = sphi 0, %s21
    %s22 = sphi 0, %s19
    %s23 = sphi 0, %s22
    %s39 = sphi 0, %s23
    %s43 = sphi 0, %s43
    %s45 = sphi 0, %s43
    %s46 = sphi 0, %s45
    %s60 = sphi 0, %s46
    %s64 = sphi 0, %s64
    %s66 = sphi 0, %s64
    %s67 = sphi 0, %s66
    %s81 = sphi 0, %s67
    %s87 = sphi 0, %s89
    %s90 = sphi 0, %s87
    %s91 = sphi 0, %s90
    %s107 = sphi 0, %s91
  $region4: #{waste_classifier_forward.4} parent=0 // loop_header_branch
    %12 = sbr.rel (%p10) target = $region8
  $region5: #{waste_classifier_forward.4} parent=0 // loop_body
    %s14 = ssub.s32 %s9, 1
    %s15 = ssub.s32 %s9, 2
    %s16 = sadd.s32 %s9, 1
    %s17 = ssub.s32 %s9, %s16
    %p18 = scmp.eq.s32.totalorder %s17, 0
    %s20 = sadd.s32 %s19, 1
    %s21 = scalar_select %p18, %s19, %s20
    %p24 = pneg %p18
    %p25 = scmp.eq.s32.totalorder %s9, 1
    %p26 = por %p24, %p25
    %p27 = scmp.ne.s32.totalorder %s19, %s22
    %p28 = scmp.eq.s32.totalorder %s9, 0
    %p29 = por %p27, %p28
    %p30 = scmp.ne.s32.totalorder %s19, %s22
    %p31 = scmp.eq.s32.totalorder %s14, 1
    %p32 = por %p30, %p31
    %p33 = scmp.ne.s32.totalorder %s22, %s23
    %p34 = scmp.eq.s32.totalorder %s14, 0
    %p35 = por %p33, %p34
    %p36 = scmp.ne.s32.totalorder %s22, %s23
    %p37 = scmp.eq.s32.totalorder %s15, 1
    %p38 = por %p36, %p37
    %p40 = scmp.ne.s32.totalorder %s23, %s39
    %p41 = scmp.eq.s32.totalorder %s15, 0
    %p42 = por %p40, %p41
    %s44 = sadd.s32 %s43, 1
    %p47 = scmp.eq.s32.totalorder %s9, 1
    %p48 = scmp.ne.s32.totalorder %s43, %s45
    %p49 = scmp.eq.s32.totalorder %s9, 0
    %p50 = por %p48, %p49
    %p51 = scmp.ne.s32.totalorder %s43, %s45
    %p52 = scmp.eq.s32.totalorder %s14, 1
    %p53 = por %p51, %p52
    %p54 = scmp.ne.s32.totalorder %s45, %s46
    %p55 = scmp.eq.s32.totalorder %s14, 0
    %p56 = por %p54, %p55
    %p57 = scmp.ne.s32.totalorder %s45, %s46
    %p58 = scmp.eq.s32.totalorder %s15, 1
    %p59 = por %p57, %p58
    %p61 = scmp.ne.s32.totalorder %s46, %s60
    %p62 = scmp.eq.s32.totalorder %s15, 0
    %p63 = por %p61, %p62
    %s65 = sadd.s32 %s64, 1
    %p68 = scmp.eq.s32.totalorder %s9, 1
    %p69 = scmp.ne.s32.totalorder %s64, %s66
    %p70 = scmp.eq.s32.totalorder %s9, 0
    %p71 = por %p69, %p70
    %p72 = scmp.ne.s32.totalorder %s64, %s66
    %p73 = scmp.eq.s32.totalorder %s14, 1
    %p74 = por %p72, %p73
    %p75 = scmp.ne.s32.totalorder %s66, %s67
    %p76 = scmp.eq.s32.totalorder %s14, 0
    %p77 = por %p75, %p76
    %p78 = scmp.ne.s32.totalorder %s66, %s67
    %p79 = scmp.eq.s32.totalorder %s15, 1
    %p80 = por %p78, %p79
    %p82 = scmp.ne.s32.totalorder %s67, %s81
    %p83 = scmp.eq.s32.totalorder %s15, 0
    %p84 = por %p82, %p83
    %s85 = ssub.s32 %s9, %s16
    %p86 = scmp.eq.s32.totalorder %s85, 0
    %s88 = sadd.s32 %s87, 1
    %s89 = scalar_select %p86, %s87, %s88
    %p92 = pneg %p86
    %p93 = scmp.eq.s32.totalorder %s9, 1
    %p94 = por %p92, %p93
    %p95 = scmp.ne.s32.totalorder %s87, %s90
    %p96 = scmp.eq.s32.totalorder %s9, 0
    %p97 = por %p95, %p96
    %p98 = scmp.ne.s32.totalorder %s87, %s90
    %p99 = scmp.eq.s32.totalorder %s14, 1
    %p100 = por %p98, %p99
    %p101 = scmp.ne.s32.totalorder %s90, %s91
    %p102 = scmp.eq.s32.totalorder %s14, 0
    %p103 = por %p101, %p102
    %p104 = scmp.ne.s32.totalorder %s90, %s91
    %p105 = scmp.eq.s32.totalorder %s15, 1
    %p106 = por %p104, %p105
    %p108 = scmp.ne.s32.totalorder %s91, %s107
    %p109 = scmp.eq.s32.totalorder %s15, 0
    %p110 = por %p108, %p109
    %p111 = scmp.le.s32.totalorder 1, %s9
    %p112 = scmp.lt.s32.totalorder %s9, 3
    %p113 = pnand %p111, %p112
    %p114 = pneg %p113
    // Predicated region
    $region9: #{waste_classifier_forward.4} parent=5 // pred_check
      _
    $region10: #{waste_classifier_forward.4} parent=5 // pred_check_branch
      %116 = sbr.rel (%p113) target = $region12
    $region11: #{waste_classifier_forward.4} parent=5 // pred_region
      %s117 = ssub.s32 %s9, 1
      // Predicated region
      $region13: #{waste_classifier_forward.4} parent=11 // pred_check
        %p118 = pneg %p56
      $region14: #{waste_classifier_forward.4} parent=11 // pred_check_branch
        %120 = sbr.rel (%p118) target = $region16
      $region15: #{waste_classifier_forward.4} parent=11 // pred_region
        _
      $region16: #{waste_classifier_forward.4} parent=11 // pred_fallthru
        _
      // Predicated region
      $region17: #{waste_classifier_forward.4} parent=11 // pred_check
        %p121 = pneg %p77
      $region18: #{waste_classifier_forward.4} parent=11 // pred_check_branch
        %123 = sbr.rel (%p121) target = $region20
      $region19: #{waste_classifier_forward.4} parent=11 // pred_region
        _
      $region20: #{waste_classifier_forward.4} parent=11 // pred_fallthru
        _
    $region12: #{waste_classifier_forward.4} parent=5 // pred_fallthru
      _
    %p124 = scmp.lt.s32.totalorder %s9, 2
    // Predicated region
    $region21: #{waste_classifier_forward.4} parent=5 // pred_check
      %p125 = pneg %p124
    $region22: #{waste_classifier_forward.4} parent=5 // pred_check_branch
      %127 = sbr.rel (%p125) target = $region24
    $region23: #{waste_classifier_forward.4} parent=5 // pred_region
      // Predicated region
      $region25: #{waste_classifier_forward.4} parent=23 // pred_check
        %p128 = pneg %p29
      $region26: #{waste_classifier_forward.4} parent=23 // pred_check_branch
        %130 = sbr.rel (%p128) target = $region28
      $region27: #{waste_classifier_forward.4} parent=23 // pred_region
        %p131 = scmp.lt.s32.totalorder %s9, 1
        %s132 = scalar_select %p131, %s9, 1
        %s133 = smul.addr %s132, 384
        %s134 = smul.addr %s133, 4
        %s135 = scalar_lea.vmem %s0, %s134
      $region28: #{waste_classifier_forward.4} parent=23 // pred_fallthru
        _
    $region24: #{waste_classifier_forward.4} parent=5 // pred_fallthru
      _
    %p136 = scmp.le.s32.totalorder 1, %s9
    %p137 = scmp.lt.s32.totalorder %s9, 3
    %p138 = pnand %p136, %p137
    %p139 = pneg %p138
    // Predicated region
    $region29: #{waste_classifier_forward.4} parent=5 // pred_check
      _
    $region30: #{waste_classifier_forward.4} parent=5 // pred_check_branch
      %141 = sbr.rel (%p138) target = $region32
    $region31: #{waste_classifier_forward.4} parent=5 // pred_region
      %s142 = ssub.s32 %s9, 1
      %p143 = scmp.lt.s32.totalorder %s14, 1
      %s144 = scalar_select %p143, %s14, 1
      %s145 = smul.addr %s144, 384
      %s146 = smul.addr %s145, 4
      %s147 = scalar_lea.vmem %s0, %s146
      %p148 = pneg %p35
      %p149 = pneg %p32
      %p150 = pneg %p56
      %p151 = pneg %p53
      %p152 = pneg %p77
      %p153 = pneg %p74
      %p154 = pneg %p103
      %p155 = pneg %p100
      %p156 = scmp.lt.s32.totalorder %s14, 1
      %s157 = scalar_select %p156, %s14, 1
      %s158 = smul.addr %s157, 32
      %s159 = smul.addr %s158, 4
      %s160 = scalar_lea.vmem %s3, %s159
      %p161 = scmp.lt.s32.totalorder %s14, 1
      %s162 = scalar_select %p161, %s14, 1
      %s163 = smul.addr %s162, 384
      %s164 = smul.addr %s163, 4
      %s165 = scalar_lea.vmem %s0, %s164
      %p166 = scmp.lt.s32.totalorder %s14, 1
      %s167 = scalar_select %p166, %s14, 1
      %s168 = smul.addr %s167, 32
      %s169 = smul.addr %s168, 4
      %s170 = scalar_lea.vmem %s3, %s169
      loop: start=0, step=1, limit=4
      $region33: #{waste_classifier_forward.4} parent=31 // loop_pre_header
        _
      $region34: #{waste_classifier_forward.4} parent=31 // loop_header
        %s173 = sphi 0, %s177
        %p174 = scmp.ge.s32.totalorder %s173, 4
      $region35: #{waste_classifier_forward.4} parent=31 // loop_header_branch
        %176 = sbr.rel (%p174) target = $region39
      $region36: #{waste_classifier_forward.4} parent=31 // loop_body
        %s178 = smul.u32 %s173, 8
        %s179 = smul.u32 %s178, 6
        %s180 = smul.addr %s179, 4
        %s181 = scalar_lea.vmem %s165, %s180
        %v182 = vld [vmem:[%s181] sm:$0xff]
        %v183 = vld [vmem:[%s181 + $0x8] sm:$0xf]
        %v184 = vld [vmem:[%s181 + $0xc] sm:$0xff]
        %v185 = vld [vmem:[%s181 + $0x14] sm:$0xf]
        %v186 = vld [vmem:[%s181 + $0x18] sm:$0xff]
        %v187 = vld [vmem:[%s181 + $0x20] sm:$0xf]
        %v188 = vld [vmem:[%s181 + $0x24] sm:$0xff]
        %v189 = vld [vmem:[%s181 + $0x2c] sm:$0xf]
        %v190 = vld [vmem:[%s181 + $0x30] sm:$0xff]
        %v191 = vld [vmem:[%s181 + $0x38] sm:$0xf]
        %v192 = vld [vmem:[%s181 + $0x3c] sm:$0xff]
        %v193 = vld [vmem:[%s181 + $0x44] sm:$0xf]
        %v194 = vld [vmem:[%s181 + $0x48] sm:$0xff]
        %v195 = vld [vmem:[%s181 + $0x50] sm:$0xf]
        %v196 = vld [vmem:[%s181 + $0x54] sm:$0xff]
        %v197 = vld [vmem:[%s181 + $0x5c] sm:$0xf]
        %v198 = vld [vmem:[%s181 + $0x60] sm:$0xff]
        %v199 = vld [vmem:[%s181 + $0x68] sm:$0xf]
        %v200 = vld [vmem:[%s181 + $0x6c] sm:$0xff]
        %v201 = vld [vmem:[%s181 + $0x74] sm:$0xf]
        %v202 = vld [vmem:[%s181 + $0x78] sm:$0xff]
        %v203 = vld [vmem:[%s181 + $0x80] sm:$0xf]
        %v204 = vld [vmem:[%s181 + $0x84] sm:$0xff]
        %v205 = vld [vmem:[%s181 + $0x8c] sm:$0xf]
        %v206 = vld [vmem:[%s181 + $0x90] sm:$0xff]
        %v207 = vld [vmem:[%s181 + $0x98] sm:$0xf]
        %v208 = vld [vmem:[%s181 + $0x9c] sm:$0xff]
        %v209 = vld [vmem:[%s181 + $0xa4] sm:$0xf]
        %v210 = vld [vmem:[%s181 + $0xa8] sm:$0xff]
        %v211 = vld [vmem:[%s181 + $0xb0] sm:$0xf]
        %v212 = vld [vmem:[%s181 + $0xb4] sm:$0xff]
        %v213 = vld [vmem:[%s181 + $0xbc] sm:$0xf]
        %v214 = vld [vmem:[%s181 + $0x300] sm:$0xff]
        %v215 = vld [vmem:[%s181 + $0x308] sm:$0xf]
        %v216 = vld [vmem:[%s181 + $0x30c] sm:$0xff]
        %v217 = vld [vmem:[%s181 + $0x314] sm:$0xf]
        %v218 = vld [vmem:[%s181 + $0x318] sm:$0xff]
        %v219 = vld [vmem:[%s181 + $0x320] sm:$0xf]
        %v220 = vld [vmem:[%s181 + $0x324] sm:$0xff]
        %v221 = vld [vmem:[%s181 + $0x32c] sm:$0xf]
        %v222 = vld [vmem:[%s181 + $0x330] sm:$0xff]
        %v223 = vld [vmem:[%s181 + $0x338] sm:$0xf]
        %v224 = vld [vmem:[%s181 + $0x33c] sm:$0xff]
        %v225 = vld [vmem:[%s181 + $0x344] sm:$0xf]
        %v226 = vld [vmem:[%s181 + $0x348] sm:$0xff]
        %v227 = vld [vmem:[%s181 + $0x350] sm:$0xf]
        %v228 = vld [vmem:[%s181 + $0x354] sm:$0xff]
        %v229 = vld [vmem:[%s181 + $0x35c] sm:$0xf]
        %v230 = vld [vmem:[%s181 + $0x360] sm:$0xff]
        %v231 = vld [vmem:[%s181 + $0x368] sm:$0xf]
        %v232 = vld [vmem:[%s181 + $0x36c] sm:$0xff]
        %v233 = vld [vmem:[%s181 + $0x374] sm:$0xf]
        %v234 = vld [vmem:[%s181 + $0x378] sm:$0xff]
        %v235 = vld [vmem:[%s181 + $0x380] sm:$0xf]
        %v236 = vld [vmem:[%s181 + $0x384] sm:$0xff]
        %v237 = vld [vmem:[%s181 + $0x38c] sm:$0xf]
        %v238 = vld [vmem:[%s181 + $0x390] sm:$0xff]
        %v239 = vld [vmem:[%s181 + $0x398] sm:$0xf]
        %v240 = vld [vmem:[%s181 + $0x39c] sm:$0xff]
        %v241 = vld [vmem:[%s181 + $0x3a4] sm:$0xf]
        %v242 = vld [vmem:[%s181 + $0x3a8] sm:$0xff]
        %v243 = vld [vmem:[%s181 + $0x3b0] sm:$0xf]
        %v244 = vld [vmem:[%s181 + $0x3b4] sm:$0xff]
        %v245 = vld [vmem:[%s181 + $0x3bc] sm:$0xf]
        %v246 = vld [vmem:[%s1] sm:$0xf]
        %v247 = vld [vmem:[%s1 + $0x4] sm:$0xf]
        %v248 = vld [vmem:[%s1 + $0x8] sm:$0xf]
        %v249 = vld [vmem:[%s1 + $0xc] sm:$0xf]
        %v250 = vld [vmem:[%s1 + $0x10] sm:$0xf]
        %v251 = vld [vmem:[%s1 + $0x14] sm:$0xf]
        %v252 = vld [vmem:[%s1 + $0x18] sm:$0xf]
        %v253 = vld [vmem:[%s1 + $0x1c] sm:$0xf]
        %v254 = vld [vmem:[%s1 + $0x20] sm:$0xf]
        %v255 = vld [vmem:[%s1 + $0x24] sm:$0xf]
        %v256 = vld [vmem:[%s1 + $0x28] sm:$0xf]
        %v257 = vld [vmem:[%s1 + $0x2c] sm:$0xf]
        %v258 = vld [vmem:[%s1 + $0x30] sm:$0xf]
        %v259 = vld [vmem:[%s1 + $0x34] sm:$0xf]
        %v260 = vld [vmem:[%s1 + $0x38] sm:$0xf]
        %v261 = vld [vmem:[%s1 + $0x3c] sm:$0xf]
        %v262 = vld [vmem:[%s1 + $0x40] sm:$0xf]
        %v263 = vld [vmem:[%s1 + $0x44] sm:$0xf]
        %v264 = vld [vmem:[%s1 + $0x48] sm:$0xf]
        %v265 = vld [vmem:[%s1 + $0x4c] sm:$0xf]
        %v266 = vld [vmem:[%s1 + $0x50] sm:$0xf]
        %v267 = vld [vmem:[%s1 + $0x54] sm:$0xf]
        %v268 = vld [vmem:[%s1 + $0x58] sm:$0xf]
        %v269 = vld [vmem:[%s1 + $0x5c] sm:$0xf]
        %v270 = vld [vmem:[%s1 + $0x60] sm:$0xf]
        %v271 = vld [vmem:[%s1 + $0x64] sm:$0xf]
        %v272 = vld [vmem:[%s1 + $0x68] sm:$0xf]
        %v273 = vld [vmem:[%s1 + $0x6c] sm:$0xf]
        %v274 = vld [vmem:[%s1 + $0x70] sm:$0xf]
        %v275 = vld [vmem:[%s1 + $0x74] sm:$0xf]
        %v276 = vld [vmem:[%s1 + $0x78] sm:$0xf]
        %v277 = vld [vmem:[%s1 + $0x7c] sm:$0xf]
        %v278 = vld [vmem:[%s1 + $0x80] sm:$0xf]
        %v279 = vld [vmem:[%s1 + $0x84] sm:$0xf]
        %v280 = vld [vmem:[%s1 + $0x88] sm:$0xf]
        %v281 = vld [vmem:[%s1 + $0x8c] sm:$0xf]
        %v346 = vunpack.c.l.b16 %v182
        %v347 = vunpack.c.h.b16 %v182
        %v348 = vunpack.c.l.b16 %v183
        %v349 = vunpack.c.l.b16 %v184
        %v350 = vunpack.c.h.b16 %v184
        %v351 = vunpack.c.l.b16 %v185
        %v352 = vunpack.c.l.b16 %v186
        %v353 = vunpack.c.h.b16 %v186
        %v354 = vunpack.c.l.b16 %v187
        %v355 = vunpack.c.l.b16 %v188
        %v356 = vunpack.c.h.b16 %v188
        %v357 = vunpack.c.l.b16 %v189
        %v358 = vunpack.c.l.b16 %v190
        %v359 = vunpack.c.h.b16 %v190
        %v360 = vunpack.c.l.b16 %v191
        %v361 = vunpack.c.l.b16 %v192
        %v362 = vunpack.c.h.b16 %v192
        %v363 = vunpack.c.l.b16 %v193
        %v364 = vunpack.c.l.b16 %v194
        %v365 = vunpack.c.h.b16 %v194
        %v366 = vunpack.c.l.b16 %v195
        %v367 = vunpack.c.l.b16 %v196
        %v368 = vunpack.c.h.b16 %v196
        %v369 = vunpack.c.l.b16 %v197
        %v370 = vunpack.c.l.b16 %v198
        %v371 = vunpack.c.h.b16 %v198
        %v372 = vunpack.c.l.b16 %v199
        %v373 = vunpack.c.l.b16 %v200
        %v374 = vunpack.c.h.b16 %v200
        %v375 = vunpack.c.l.b16 %v201
        %v376 = vunpack.c.l.b16 %v202
        %v377 = vunpack.c.h.b16 %v202
        %v378 = vunpack.c.l.b16 %v203
        %v379 = vunpack.c.l.b16 %v204
        %v380 = vunpack.c.h.b16 %v204
        %v381 = vunpack.c.l.b16 %v205
        %v382 = vunpack.c.l.b16 %v206
        %v383 = vunpack.c.h.b16 %v206
        %v384 = vunpack.c.l.b16 %v207
        %v385 = vunpack.c.l.b16 %v208
        %v386 = vunpack.c.h.b16 %v208
        %v387 = vunpack.c.l.b16 %v209
        %v388 = vunpack.c.l.b16 %v210
        %v389 = vunpack.c.h.b16 %v210
        %v390 = vunpack.c.l.b16 %v211
        %v391 = vunpack.c.l.b16 %v212
        %v392 = vunpack.c.h.b16 %v212
        %v393 = vunpack.c.l.b16 %v213
        %v394 = vunpack.c.l.b16 %v214
        %v395 = vunpack.c.h.b16 %v214
        %v396 = vunpack.c.l.b16 %v215
        %v397 = vunpack.c.l.b16 %v216
        %v398 = vunpack.c.h.b16 %v216
        %v399 = vunpack.c.l.b16 %v217
        %v400 = vunpack.c.l.b16 %v218
        %v401 = vunpack.c.h.b16 %v218
        %v402 = vunpack.c.l.b16 %v219
        %v403 = vunpack.c.l.b16 %v220
        %v404 = vunpack.c.h.b16 %v220
        %v405 = vunpack.c.l.b16 %v221
        %v406 = vunpack.c.l.b16 %v222
        %v407 = vunpack.c.h.b16 %v222
        %v408 = vunpack.c.l.b16 %v223
        %v409 = vunpack.c.l.b16 %v224
        %v410 = vunpack.c.h.b16 %v224
        %v411 = vunpack.c.l.b16 %v225
        %v412 = vunpack.c.l.b16 %v226
        %v413 = vunpack.c.h.b16 %v226
        %v414 = vunpack.c.l.b16 %v227
        %v415 = vunpack.c.l.b16 %v228
        %v416 = vunpack.c.h.b16 %v228
        %v417 = vunpack.c.l.b16 %v229
        %v418 = vunpack.c.l.b16 %v230
        %v419 = vunpack.c.h.b16 %v230
        %v420 = vunpack.c.l.b16 %v231
        %v421 = vunpack.c.l.b16 %v232
        %v422 = vunpack.c.h.b16 %v232
        %v423 = vunpack.c.l.b16 %v233
        %v424 = vunpack.c.l.b16 %v234
        %v425 = vunpack.c.h.b16 %v234
        %v426 = vunpack.c.l.b16 %v235
        %v427 = vunpack.c.l.b16 %v236
        %v428 = vunpack.c.h.b16 %v236
        %v429 = vunpack.c.l.b16 %v237
        %v430 = vunpack.c.l.b16 %v238
        %v431 = vunpack.c.h.b16 %v238
        %v432 = vunpack.c.l.b16 %v239
        %v433 = vunpack.c.l.b16 %v240
        %v434 = vunpack.c.h.b16 %v240
        %v435 = vunpack.c.l.b16 %v241
        %v436 = vunpack.c.l.b16 %v242
        %v437 = vunpack.c.h.b16 %v242
        %v438 = vunpack.c.l.b16 %v243
        %v439 = vunpack.c.l.b16 %v244
        %v440 = vunpack.c.h.b16 %v244
        %v441 = vunpack.c.l.b16 %v245
        %v442 = vpack.c.b16 %v349, %v346
        %v443 = vpack.c.b16 %v350, %v347
        %v444 = vpack.c.b16 %v351, %v348
        %v445 = vpack.c.b16 %v355, %v352
        %v446 = vpack.c.b16 %v356, %v353
        %v447 = vpack.c.b16 %v357, %v354
        %v448 = vpack.c.b16 %v361, %v358
        %v449 = vpack.c.b16 %v362, %v359
        %v450 = vpack.c.b16 %v363, %v360
        %v451 = vpack.c.b16 %v367, %v364
        %v452 = vpack.c.b16 %v368, %v365
        %v453 = vpack.c.b16 %v369, %v366
        %v454 = vpack.c.b16 %v373, %v370
        %v455 = vpack.c.b16 %v374, %v371
        %v456 = vpack.c.b16 %v375, %v372
        %v457 = vpack.c.b16 %v379, %v376
        %v458 = vpack.c.b16 %v380, %v377
        %v459 = vpack.c.b16 %v381, %v378
        %v460 = vpack.c.b16 %v385, %v382
        %v461 = vpack.c.b16 %v386, %v383
        %v462 = vpack.c.b16 %v387, %v384
        %v463 = vpack.c.b16 %v391, %v388
        %v464 = vpack.c.b16 %v392, %v389
        %v465 = vpack.c.b16 %v393, %v390
        %v466 = vpack.c.b16 %v397, %v394
        %v467 = vpack.c.b16 %v398, %v395
        %v468 = vpack.c.b16 %v399, %v396
        %v469 = vpack.c.b16 %v403, %v400
        %v470 = vpack.c.b16 %v404, %v401
        %v471 = vpack.c.b16 %v405, %v402
        %v472 = vpack.c.b16 %v409, %v406
        %v473 = vpack.c.b16 %v410, %v407
        %v474 = vpack.c.b16 %v411, %v408
        %v475 = vpack.c.b16 %v415, %v412
        %v476 = vpack.c.b16 %v416, %v413
        %v477 = vpack.c.b16 %v417, %v414
        %v478 = vpack.c.b16 %v421, %v418
        %v479 = vpack.c.b16 %v422, %v419
        %v480 = vpack.c.b16 %v423, %v420
        %v481 = vpack.c.b16 %v427, %v424
        %v482 = vpack.c.b16 %v428, %v425
        %v483 = vpack.c.b16 %v429, %v426
        %v484 = vpack.c.b16 %v433, %v430
        %v485 = vpack.c.b16 %v434, %v431
        %v486 = vpack.c.b16 %v435, %v432
        %v487 = vpack.c.b16 %v439, %v436
        %v488 = vpack.c.b16 %v440, %v437
        %v489 = vpack.c.b16 %v441, %v438
        %v558 = vunpack.c.l.b16 %v246
        %v559 = vunpack.c.l.b16 %v247
        %v560 = vunpack.c.l.b16 %v248
        %v561 = vunpack.c.l.b16 %v249
        %v562 = vunpack.c.l.b16 %v250
        %v563 = vunpack.c.l.b16 %v251
        %v564 = vunpack.c.l.b16 %v252
        %v565 = vunpack.c.l.b16 %v253
        %v566 = vunpack.c.l.b16 %v254
        %v567 = vunpack.c.l.b16 %v255
        %v568 = vunpack.c.l.b16 %v256
        %v569 = vunpack.c.l.b16 %v257
        %v570 = vunpack.c.l.b16 %v258
        %v571 = vunpack.c.l.b16 %v259
        %v572 = vunpack.c.l.b16 %v260
        %v573 = vunpack.c.l.b16 %v261
        %v574 = vunpack.c.l.b16 %v262
        %v575 = vunpack.c.l.b16 %v263
        %v576 = vunpack.c.l.b16 %v264
        %v577 = vunpack.c.l.b16 %v265
        %v578 = vunpack.c.l.b16 %v266
        %v579 = vunpack.c.l.b16 %v267
        %v580 = vunpack.c.l.b16 %v268
        %v581 = vunpack.c.l.b16 %v269
        %v582 = vunpack.c.l.b16 %v270
        %v583 = vunpack.c.l.b16 %v271
        %v584 = vunpack.c.l.b16 %v272
        %v585 = vunpack.c.l.b16 %v273
        %v586 = vunpack.c.l.b16 %v274
        %v587 = vunpack.c.l.b16 %v275
        %v588 = vunpack.c.l.b16 %v276
        %v589 = vunpack.c.l.b16 %v277
        %v590 = vunpack.c.l.b16 %v278
        %v591 = vunpack.c.l.b16 %v279
        %v592 = vunpack.c.l.b16 %v280
        %v593 = vunpack.c.l.b16 %v281
        %v594 = vpack.c.b16 %v559, %v558
        %v595 = vpack.c.b16 %v561, %v560
        %v596 = vpack.c.b16 %v563, %v562
        %v597 = vpack.c.b16 %v565, %v564
        %v598 = vpack.c.b16 %v567, %v566
        %v599 = vpack.c.b16 %v569, %v568
        %v600 = vpack.c.b16 %v571, %v570
        %v601 = vpack.c.b16 %v573, %v572
        %v602 = vpack.c.b16 %v575, %v574
        %v603 = vpack.c.b16 %v577, %v576
        %v604 = vpack.c.b16 %v579, %v578
        %v605 = vpack.c.b16 %v581, %v580
        %v606 = vpack.c.b16 %v583, %v582
        %v607 = vpack.c.b16 %v585, %v584
        %v608 = vpack.c.b16 %v587, %v586
        %v609 = vpack.c.b16 %v589, %v588
        %v610 = vpack.c.b16 %v591, %v590
        %v611 = vpack.c.b16 %v593, %v592
        %vm630 = vcmask 261120
        %v632 = vsel %vm630, %v444, 0
        %v635 = vsel %vm630, %v447, 0
        %v638 = vsel %vm630, %v450, 0
        %v641 = vsel %vm630, %v453, 0
        %v644 = vsel %vm630, %v456, 0
        %v647 = vsel %vm630, %v459, 0
        %v650 = vsel %vm630, %v462, 0
        %v653 = vsel %vm630, %v465, 0
        %v656 = vsel %vm630, %v468, 0
        %v659 = vsel %vm630, %v471, 0
        %v662 = vsel %vm630, %v474, 0
        %v665 = vsel %vm630, %v477, 0
        %v668 = vsel %vm630, %v480, 0
        %v671 = vsel %vm630, %v483, 0
        %v674 = vsel %vm630, %v486, 0
        %v677 = vsel %vm630, %v489, 0
        %679 = vmatprep.subr.bf16.mxu0 0
        %680 = vmatpush1.bf16.msra.mxu0 %v601
        %681 = vmatprep.subr.bf16.mxu0 0
        %682 = vmatpush1.bf16.msra.mxu0 %v600
        %683 = vmatprep.subr.bf16.mxu0 0
        %684 = vmatpush1.bf16.msra.mxu0 %v599
        %685 = vmatprep.subr.bf16.mxu0 0
        %686 = vmatpush1.bf16.msra.mxu0 %v598
        %687 = vmatprep.subr.bf16.mxu0 0
        %688 = vmatpush1.bf16.msra.mxu0 %v597
        %689 = vmatprep.subr.bf16.mxu0 0
        %690 = vmatpush1.bf16.msra.mxu0 %v596
        %691 = vmatprep.subr.bf16.mxu0 0
        %692 = vmatpush1.bf16.msra.mxu0 %v595
        %693 = vmatprep.subr.bf16.mxu0 0
        %694 = vmatpush1.bf16.msra.mxu0 %v594
        %695 = vmatprep.subr.bf16.mxu0 0
        %696 = vmatpush2.bf16.msra.mxu0 %v609
        %697 = vmatprep.subr.bf16.mxu0 0
        %698 = vmatpush2.bf16.msra.mxu0 %v608
        %699 = vmatprep.subr.bf16.mxu0 0
        %700 = vmatpush2.bf16.msra.mxu0 %v607
        %701 = vmatprep.subr.bf16.mxu0 0
        %702 = vmatpush2.bf16.msra.mxu0 %v606
        %703 = vmatprep.subr.bf16.mxu0 0
        %704 = vmatpush2.bf16.msra.mxu0 %v605
        %705 = vmatprep.subr.bf16.mxu0 0
        %706 = vmatpush2.bf16.msra.mxu0 %v604
        %707 = vmatprep.subr.bf16.mxu0 0
        %708 = vmatpush2.bf16.msra.mxu0 %v603
        %709 = vmatprep.subr.bf16.mxu0 0
        %710 = vmatpush2.bf16.msra.mxu0 %v602
        %711 = vmatprep.mubr.bf16.mxu0 %v443
        %712 = vmatmul.mubr.bf16.gmra.mxu0 %v442
        %v713 = vpop.f32.mrf.mxu0
        %v714 = vadd.f32 0.0, %v713
        %v715 = vpop.f32.mrf.mxu0
        %v716 = vpop.f32.mrf.mxu0
        %v717 = vadd.f32 0.0, %v716
        %v718 = vpop.f32.mrf.mxu0
        %719 = vmatprep.mubr.bf16.mxu0 %v446
        %720 = vmatmul.mubr.bf16.gmra.mxu0 %v445
        %v721 = vpop.f32.mrf.mxu0
        %v722 = vadd.f32 0.0, %v721
        %v723 = vpop.f32.mrf.mxu0
        %v724 = vpop.f32.mrf.mxu0
        %v725 = vadd.f32 0.0, %v724
        %v726 = vpop.f32.mrf.mxu0
        %727 = vmatprep.mubr.bf16.mxu0 %v449
        %728 = vmatmul.mubr.bf16.gmra.mxu0 %v448
        %v729 = vpop.f32.mrf.mxu0
        %v730 = vadd.f32 0.0, %v729
        %v731 = vpop.f32.mrf.mxu0
        %v732 = vpop.f32.mrf.mxu0
        %v733 = vadd.f32 0.0, %v732
        %v734 = vpop.f32.mrf.mxu0
        %735 = vmatprep.mubr.bf16.mxu0 %v452
        %736 = vmatmul.mubr.bf16.gmra.mxu0 %v451
        %v737 = vpop.f32.mrf.mxu0
        %v738 = vadd.f32 0.0, %v737
        %v739 = vpop.f32.mrf.mxu0
        %v740 = vpop.f32.mrf.mxu0
        %v741 = vadd.f32 0.0, %v740
        %v742 = vpop.f32.mrf.mxu0
        %743 = vmatprep.mubr.bf16.mxu0 %v455
        %744 = vmatmul.mubr.bf16.gmra.mxu0 %v454
        %v745 = vpop.f32.mrf.mxu0
        %v746 = vadd.f32 0.0, %v745
        %v747 = vpop.f32.mrf.mxu0
        %v748 = vpop.f32.mrf.mxu0
        %v749 = vadd.f32 0.0, %v748
        %v750 = vpop.f32.mrf.mxu0
        %751 = vmatprep.mubr.bf16.mxu0 %v458
        %752 = vmatmul.mubr.bf16.gmra.mxu0 %v457
        %v753 = vpop.f32.mrf.mxu0
        %v754 = vadd.f32 0.0, %v753
        %v755 = vpop.f32.mrf.mxu0
        %v756 = vpop.f32.mrf.mxu0
        %v757 = vadd.f32 0.0, %v756
        %v758 = vpop.f32.mrf.mxu0
        %759 = vmatprep.mubr.bf16.mxu0 %v461
        %760 = vmatmul.mubr.bf16.gmra.mxu0 %v460
        %v761 = vpop.f32.mrf.mxu0
        %v762 = vadd.f32 0.0, %v761
        %v763 = vpop.f32.mrf.mxu0
        %v764 = vpop.f32.mrf.mxu0
        %v765 = vadd.f32 0.0, %v764
        %v766 = vpop.f32.mrf.mxu0
        %767 = vmatprep.mubr.bf16.mxu0 %v464
        %768 = vmatmul.mubr.bf16.gmra.mxu0 %v463
        %v769 = vpop.f32.mrf.mxu0
        %v770 = vadd.f32 0.0, %v769
        %v771 = vpop.f32.mrf.mxu0
        %v772 = vpop.f32.mrf.mxu0
        %v773 = vadd.f32 0.0, %v772
        %v774 = vpop.f32.mrf.mxu0
        %775 = vmatprep.mubr.bf16.mxu0 %v467
        %776 = vmatmul.mubr.bf16.gmra.mxu0 %v466
        %v777 = vpop.f32.mrf.mxu0
        %v778 = vadd.f32 0.0, %v777
        %v779 = vpop.f32.mrf.mxu0
        %v780 = vpop.f32.mrf.mxu0
        %v781 = vadd.f32 0.0, %v780
        %v782 = vpop.f32.mrf.mxu0
        %783 = vmatprep.mubr.bf16.mxu0 %v470
        %784 = vmatmul.mubr.bf16.gmra.mxu0 %v469
        %v785 = vpop.f32.mrf.mxu0
        %v786 = vadd.f32 0.0, %v785
        %v787 = vpop.f32.mrf.mxu0
        %v788 = vpop.f32.mrf.mxu0
        %v789 = vadd.f32 0.0, %v788
        %v790 = vpop.f32.mrf.mxu0
        %791 = vmatprep.mubr.bf16.mxu0 %v473
        %792 = vmatmul.mubr.bf16.gmra.mxu0 %v472
        %v793 = vpop.f32.mrf.mxu0
        %v794 = vadd.f32 0.0, %v793
        %v795 = vpop.f32.mrf.mxu0
        %v796 = vpop.f32.mrf.mxu0
        %v797 = vadd.f32 0.0, %v796
        %v798 = vpop.f32.mrf.mxu0
        %799 = vmatprep.mubr.bf16.mxu0 %v476
        %800 = vmatmul.mubr.bf16.gmra.mxu0 %v475
        %v801 = vpop.f32.mrf.mxu0
        %v802 = vadd.f32 0.0, %v801
        %v803 = vpop.f32.mrf.mxu0
        %v804 = vpop.f32.mrf.mxu0
        %v805 = vadd.f32 0.0, %v804
        %v806 = vpop.f32.mrf.mxu0
        %807 = vmatprep.mubr.bf16.mxu0 %v479
        %808 = vmatmul.mubr.bf16.gmra.mxu0 %v478
        %v809 = vpop.f32.mrf.mxu0
        %v810 = vadd.f32 0.0, %v809
        %v811 = vpop.f32.mrf.mxu0
        %v812 = vpop.f32.mrf.mxu0
        %v813 = vadd.f32 0.0, %v812
        %v814 = vpop.f32.mrf.mxu0
        %815 = vmatprep.mubr.bf16.mxu0 %v482
        %816 = vmatmul.mubr.bf16.gmra.mxu0 %v481
        %v817 = vpop.f32.mrf.mxu0
        %v818 = vadd.f32 0.0, %v817
        %v819 = vpop.f32.mrf.mxu0
        %v820 = vpop.f32.mrf.mxu0
        %v821 = vadd.f32 0.0, %v820
        %v822 = vpop.f32.mrf.mxu0
        %823 = vmatprep.mubr.bf16.mxu0 %v485
        %824 = vmatmul.mubr.bf16.gmra.mxu0 %v484
        %v825 = vpop.f32.mrf.mxu0
        %v826 = vadd.f32 0.0, %v825
        %v827 = vpop.f32.mrf.mxu0
        %v828 = vpop.f32.mrf.mxu0
        %v829 = vadd.f32 0.0, %v828
        %v830 = vpop.f32.mrf.mxu0
        %831 = vmatprep.mubr.bf16.mxu0 %v488
        %832 = vmatmul.mubr.bf16.gmra.mxu0 %v487
        %v833 = vpop.f32.mrf.mxu0
        %v834 = vadd.f32 0.0, %v833
        %v835 = vpop.f32.mrf.mxu0
        %v836 = vpop.f32.mrf.mxu0
        %v837 = vadd.f32 0.0, %v836
        %v838 = vpop.f32.mrf.mxu0
        %839 = vdwg.mxu0
        %840 = vmatprep.subr.bf16.mxu0 0
        %841 = vmatpush1.bf16.msra.mxu0 0
        %842 = vmatprep.subr.bf16.mxu0 0
        %843 = vmatpush1.bf16.msra.mxu0 0
        %844 = vmatprep.subr.bf16.mxu0 0
        %845 = vmatpush1.bf16.msra.mxu0 0
        %846 = vmatprep.subr.bf16.mxu0 0
        %847 = vmatpush1.bf16.msra.mxu0 0
        %848 = vmatprep.subr.bf16.mxu0 0
        %849 = vmatpush1.bf16.msra.mxu0 0
        %850 = vmatprep.subr.bf16.mxu0 0
        %851 = vmatpush1.bf16.msra.mxu0 0
        %852 = vmatprep.subr.bf16.mxu0 0
        %853 = vmatpush1.bf16.msra.mxu0 %v611
        %854 = vmatprep.subr.bf16.mxu0 0
        %855 = vmatpush1.bf16.msra.mxu0 %v610
        %856 = vmatprep.subr.bf16.mxu0 0
        %857 = vmatpush2.bf16.msra.mxu0 0
        %858 = vmatprep.subr.bf16.mxu0 0
        %859 = vmatpush2.bf16.msra.mxu0 0
        %860 = vmatprep.subr.bf16.mxu0 0
        %861 = vmatpush2.bf16.msra.mxu0 0
        %862 = vmatprep.subr.bf16.mxu0 0
        %863 = vmatpush2.bf16.msra.mxu0 0
        %864 = vmatprep.subr.bf16.mxu0 0
        %865 = vmatpush2.bf16.msra.mxu0 0
        %866 = vmatprep.subr.bf16.mxu0 0
        %867 = vmatpush2.bf16.msra.mxu0 0
        %868 = vmatprep.subr.bf16.mxu0 0
        %869 = vmatpush2.bf16.msra.mxu0 0
        %870 = vmatprep.subr.bf16.mxu0 0
        %871 = vmatpush2.bf16.msra.mxu0 0
        %872 = vmatprep.mubr.bf16.mxu0 0
        %873 = vmatmul.mubr.bf16.gmra.mxu0 %v632
        %v874 = vpop.f32.mrf.mxu0
        %v875 = vadd.f32 %v714, %v874
        %v876 = vpop.f32.mrf.mxu0
        %v877 = vpop.f32.mrf.mxu0
        %v878 = vadd.f32 %v717, %v877
        %v879 = vpop.f32.mrf.mxu0
        %880 = vmatprep.mubr.bf16.mxu0 0
        %881 = vmatmul.mubr.bf16.gmra.mxu0 %v635
        %v882 = vpop.f32.mrf.mxu0
        %v883 = vadd.f32 %v722, %v882
        %v884 = vpop.f32.mrf.mxu0
        %v885 = vpop.f32.mrf.mxu0
        %v886 = vadd.f32 %v725, %v885
        %v887 = vpop.f32.mrf.mxu0
        %888 = vmatprep.mubr.bf16.mxu0 0
        %889 = vmatmul.mubr.bf16.gmra.mxu0 %v638
        %v890 = vpop.f32.mrf.mxu0
        %v891 = vadd.f32 %v730, %v890
        %v892 = vpop.f32.mrf.mxu0
        %v893 = vpop.f32.mrf.mxu0
        %v894 = vadd.f32 %v733, %v893
        %v895 = vpop.f32.mrf.mxu0
        %896 = vmatprep.mubr.bf16.mxu0 0
        %897 = vmatmul.mubr.bf16.gmra.mxu0 %v641
        %v898 = vpop.f32.mrf.mxu0
        %v899 = vadd.f32 %v738, %v898
        %v900 = vpop.f32.mrf.mxu0
        %v901 = vpop.f32.mrf.mxu0
        %v902 = vadd.f32 %v741, %v901
        %v903 = vpop.f32.mrf.mxu0
        %904 = vmatprep.mubr.bf16.mxu0 0
        %905 = vmatmul.mubr.bf16.gmra.mxu0 %v644
        %v906 = vpop.f32.mrf.mxu0
        %v907 = vadd.f32 %v746, %v906
        %v908 = vpop.f32.mrf.mxu0
        %v909 = vpop.f32.mrf.mxu0
        %v910 = vadd.f32 %v749, %v909
        %v911 = vpop.f32.mrf.mxu0
        %912 = vmatprep.mubr.bf16.mxu0 0
        %913 = vmatmul.mubr.bf16.gmra.mxu0 %v647
        %v914 = vpop.f32.mrf.mxu0
        %v915 = vadd.f32 %v754, %v914
        %v916 = vpop.f32.mrf.mxu0
        %v917 = vpop.f32.mrf.mxu0
        %v918 = vadd.f32 %v757, %v917
        %v919 = vpop.f32.mrf.mxu0
        %920 = vmatprep.mubr.bf16.mxu0 0
        %921 = vmatmul.mubr.bf16.gmra.mxu0 %v650
        %v922 = vpop.f32.mrf.mxu0
        %v923 = vadd.f32 %v762, %v922
        %v924 = vpop.f32.mrf.mxu0
        %v925 = vpop.f32.mrf.mxu0
        %v926 = vadd.f32 %v765, %v925
        %v927 = vpop.f32.mrf.mxu0
        %928 = vmatprep.mubr.bf16.mxu0 0
        %929 = vmatmul.mubr.bf16.gmra.mxu0 %v653
        %v930 = vpop.f32.mrf.mxu0
        %v931 = vadd.f32 %v770, %v930
        %v932 = vpop.f32.mrf.mxu0
        %v933 = vpop.f32.mrf.mxu0
        %v934 = vadd.f32 %v773, %v933
        %v935 = vpop.f32.mrf.mxu0
        %936 = vmatprep.mubr.bf16.mxu0 0
        %937 = vmatmul.mubr.bf16.gmra.mxu0 %v656
        %v938 = vpop.f32.mrf.mxu0
        %v939 = vadd.f32 %v778, %v938
        %v940 = vpop.f32.mrf.mxu0
        %v941 = vpop.f32.mrf.mxu0
        %v942 = vadd.f32 %v781, %v941
        %v943 = vpop.f32.mrf.mxu0
        %944 = vmatprep.mubr.bf16.mxu0 0
        %945 = vmatmul.mubr.bf16.gmra.mxu0 %v659
        %v946 = vpop.f32.mrf.mxu0
        %v947 = vadd.f32 %v786, %v946
        %v948 = vpop.f32.mrf.mxu0
        %v949 = vpop.f32.mrf.mxu0
        %v950 = vadd.f32 %v789, %v949
        %v951 = vpop.f32.mrf.mxu0
        %952 = vmatprep.mubr.bf16.mxu0 0
        %953 = vmatmul.mubr.bf16.gmra.mxu0 %v662
        %v954 = vpop.f32.mrf.mxu0
        %v955 = vadd.f32 %v794, %v954
        %v956 = vpop.f32.mrf.mxu0
        %v957 = vpop.f32.mrf.mxu0
        %v958 = vadd.f32 %v797, %v957
        %v959 = vpop.f32.mrf.mxu0
        %960 = vmatprep.mubr.bf16.mxu0 0
        %961 = vmatmul.mubr.bf16.gmra.mxu0 %v665
        %v962 = vpop.f32.mrf.mxu0
        %v963 = vadd.f32 %v802, %v962
        %v964 = vpop.f32.mrf.mxu0
        %v965 = vpop.f32.mrf.mxu0
        %v966 = vadd.f32 %v805, %v965
        %v967 = vpop.f32.mrf.mxu0
        %968 = vmatprep.mubr.bf16.mxu0 0
        %969 = vmatmul.mubr.bf16.gmra.mxu0 %v668
        %v970 = vpop.f32.mrf.mxu0
        %v971 = vadd.f32 %v810, %v970
        %v972 = vpop.f32.mrf.mxu0
        %v973 = vpop.f32.mrf.mxu0
        %v974 = vadd.f32 %v813, %v973
        %v975 = vpop.f32.mrf.mxu0
        %976 = vmatprep.mubr.bf16.mxu0 0
        %977 = vmatmul.mubr.bf16.gmra.mxu0 %v671
        %v978 = vpop.f32.mrf.mxu0
        %v979 = vadd.f32 %v818, %v978
        %v980 = vpop.f32.mrf.mxu0
        %v981 = vpop.f32.mrf.mxu0
        %v982 = vadd.f32 %v821, %v981
        %v983 = vpop.f32.mrf.mxu0
        %984 = vmatprep.mubr.bf16.mxu0 0
        %985 = vmatmul.mubr.bf16.gmra.mxu0 %v674
        %v986 = vpop.f32.mrf.mxu0
        %v987 = vadd.f32 %v826, %v986
        %v988 = vpop.f32.mrf.mxu0
        %v989 = vpop.f32.mrf.mxu0
        %v990 = vadd.f32 %v829, %v989
        %v991 = vpop.f32.mrf.mxu0
        %992 = vmatprep.mubr.bf16.mxu0 0
        %993 = vmatmul.mubr.bf16.gmra.mxu0 %v677
        %v994 = vpop.f32.mrf.mxu0
        %v995 = vadd.f32 %v834, %v994
        %v996 = vpop.f32.mrf.mxu0
        %v997 = vpop.f32.mrf.mxu0
        %v998 = vadd.f32 %v837, %v997
        %v999 = vpop.f32.mrf.mxu0
        %1000 = vdwg.mxu0
        %v1001 = vmax.f32 %v875, %v939
        %v1002 = vmax.f32 %v878, %v942
        %v1003 = vmax.f32 %v883, %v947
        %v1004 = vmax.f32 %v886, %v950
        %v1005 = vmax.f32 %v891, %v955
        %v1006 = vmax.f32 %v894, %v958
        %v1007 = vmax.f32 %v899, %v963
        %v1008 = vmax.f32 %v902, %v966
        %v1009 = vmax.f32 %v907, %v971
        %v1010 = vmax.f32 %v910, %v974
        %v1011 = vmax.f32 %v915, %v979
        %v1012 = vmax.f32 %v918, %v982
        %v1013 = vmax.f32 %v923, %v987
        %v1014 = vmax.f32 %v926, %v990
        %v1015 = vmax.f32 %v931, %v995
        %v1016 = vmax.f32 %v934, %v998
        %v1017 = vmax.f32 %v1001, %v1003
        %v1018 = vmax.f32 %v1002, %v1004
        %v1019 = vmax.f32 %v1005, %v1007
        %v1020 = vmax.f32 %v1006, %v1008
        %v1021 = vmax.f32 %v1009, %v1011
        %v1022 = vmax.f32 %v1010, %v1012
        %v1023 = vmax.f32 %v1013, %v1015
        %v1024 = vmax.f32 %v1014, %v1016
        %v1025 = vld [vmem:[%s2] sm:$0x1]
        %v1027 = vlaneseq
        %v1028 = vshrl.u32 %v1027, 7
        %v1029 = vsub.s32 0, %v1028
        %v1030 = vrot.slane %v1025, %v1029
        %v1032 = vadd.f32 %v1017, %v1030
        %v1033 = vadd.f32 %v1018, %v1030
        %v1034 = vadd.f32 %v1019, %v1030
        %v1035 = vadd.f32 %v1020, %v1030
        %v1036 = vadd.f32 %v1021, %v1030
        %v1037 = vadd.f32 %v1022, %v1030
        %v1038 = vadd.f32 %v1023, %v1030
        %v1039 = vadd.f32 %v1024, %v1030
        %v1040 = vmax.f32 %v1032, 0.0
        %v1041 = vmax.f32 %v1033, 0.0
        %v1042 = vmax.f32 %v1034, 0.0
        %v1043 = vmax.f32 %v1035, 0.0
        %v1044 = vmax.f32 %v1036, 0.0
        %v1045 = vmax.f32 %v1037, 0.0
        %v1046 = vmax.f32 %v1038, 0.0
        %v1047 = vmax.f32 %v1039, 0.0
        %v1048 = vpack.c.bf16 %v1041, %v1040
        %v1049 = vpack.c.bf16 %v1043, %v1042
        %v1050 = vpack.c.bf16 %v1045, %v1044
        %v1051 = vpack.c.bf16 %v1047, %v1046
        %s1052 = smul.u32 %s173, 4
        %v1057 = vunpack.c.l.b16 %v1048
        %v1058 = vunpack.c.h.b16 %v1048
        %v1059 = vunpack.c.l.b16 %v1049
        %v1060 = vunpack.c.h.b16 %v1049
        %v1061 = vunpack.c.l.b16 %v1050
        %v1062 = vunpack.c.h.b16 %v1050
        %v1063 = vunpack.c.l.b16 %v1051
        %v1064 = vunpack.c.h.b16 %v1051
        %v1065 = vpack.c.b16 %v1057, %v1057
        %v1066 = vpack.c.b16 %v1058, %v1058
        %v1067 = vpack.c.b16 %v1059, %v1059
        %v1068 = vpack.c.b16 %v1060, %v1060
        %v1069 = vpack.c.b16 %v1061, %v1061
        %v1070 = vpack.c.b16 %v1062, %v1062
        %v1071 = vpack.c.b16 %v1063, %v1063
        %v1072 = vpack.c.b16 %v1064, %v1064
        %s1081 = smul.u32 %s1052, 2
        %s1082 = smul.addr %s1081, 4
        %s1083 = scalar_lea.vmem %s170, %s1082
        %vm1084 = vcmask 519168
        %1085 = vst.msk [vmem:[%s1083] sm:$0xf] %vm1084, %v1065
        %1086 = vst.msk [vmem:[%s1083 + $0x4] sm:$0xf] %vm1084, %v1066
        %1087 = vst.msk [vmem:[%s1083 + $0x8] sm:$0xf] %vm1084, %v1067
        %1088 = vst.msk [vmem:[%s1083 + $0xc] sm:$0xf] %vm1084, %v1068
        %1089 = vst.msk [vmem:[%s1083 + $0x10] sm:$0xf] %vm1084, %v1069
        %1090 = vst.msk [vmem:[%s1083 + $0x14] sm:$0xf] %vm1084, %v1070
        %1091 = vst.msk [vmem:[%s1083 + $0x18] sm:$0xf] %vm1084, %v1071
        %1092 = vst.msk [vmem:[%s1083 + $0x1c] sm:$0xf] %vm1084, %v1072
      $region37: #{waste_classifier_forward.4} parent=31 // loop_footer
        %s177 = sadd.s32 1, %s173
      $region38: #{waste_classifier_forward.4} parent=31 // loop_footer_branch
        %172 = sbr.rel target = $region34
      $region39: #{waste_classifier_forward.4} parent=31 // loop_exit
        _
      %p1093 = scmp.lt.s32.totalorder %s14, 1
      %s1094 = scalar_select %p1093, %s14, 1
      %s1095 = smul.addr %s1094, 32
      %s1096 = smul.addr %s1095, 4
      %s1097 = scalar_lea.vmem %s3, %s1096
      // Predicated region
      $region40: #{waste_classifier_forward.4} parent=31 // pred_check
        %p1098 = pneg %p100
      $region41: #{waste_classifier_forward.4} parent=31 // pred_check_branch
        %1100 = sbr.rel (%p1098) target = $region43
      $region42: #{waste_classifier_forward.4} parent=31 // pred_region
        _
      $region43: #{waste_classifier_forward.4} parent=31 // pred_fallthru
        _
    $region32: #{waste_classifier_forward.4} parent=5 // pred_fallthru
      _
    %p1101 = scmp.le.s32.totalorder 2, %s9
    // Predicated region
    $region44: #{waste_classifier_forward.4} parent=5 // pred_check
      %p1102 = pneg %p1101
    $region45: #{waste_classifier_forward.4} parent=5 // pred_check_branch
      %1104 = sbr.rel (%p1102) target = $region47
    $region46: #{waste_classifier_forward.4} parent=5 // pred_region
      %s1105 = ssub.s32 %s9, 2
      // Predicated region
      $region48: #{waste_classifier_forward.4} parent=46 // pred_check
        %p1106 = pneg %p106
      $region49: #{waste_classifier_forward.4} parent=46 // pred_check_branch
        %1108 = sbr.rel (%p1106) target = $region51
      $region50: #{waste_classifier_forward.4} parent=46 // pred_region
        %p1109 = scmp.lt.s32.totalorder %s15, 1
        %s1110 = scalar_select %p1109, %s15, 1
        %s1111 = smul.addr %s1110, 32
        %s1112 = smul.addr %s1111, 4
        %s1113 = scalar_lea.vmem %s3, %s1112
      $region51: #{waste_classifier_forward.4} parent=46 // pred_fallthru
        _
    $region47: #{waste_classifier_forward.4} parent=5 // pred_fallthru
      _
  $region6: #{waste_classifier_forward.4} parent=0 // loop_footer
    %s13 = sadd.s32 1, %s9
  $region7: #{waste_classifier_forward.4} parent=0 // loop_footer_branch
    %8 = sbr.rel target = $region3
  $region8: #{waste_classifier_forward.4} parent=0 // loop_exit
    _

// kernel: waste_classifier_forward.5
$region0: #{waste_classifier_forward.5}
  #allocation0 [shape = 'u32[]', space=smem, size = 0x4, offset = 0x4, fixed_abs, tag = 'smem constant byte address 0x4 - core index']
  #allocation1 [shape = 'u32[144,128]{1,0:T(1,128)}', space=vmem, size = 0x12000, scoped, tag = 'internal scratch']
  #allocation2 [shape = 'f32[2,128]{1,0:T(2,128)}', space=vmem, size = 0x400, scoped, tag = 'scratch operand']
  %s0 = inlined_call_operand.vmem [shape: bf16[2,16384], index: 0, kind: input, shape index: {}]
  %s1 = inlined_call_operand.vmem [shape: bf16[1,16384,128], index: 1, kind: input, shape index: {}]
  %s2 = inlined_call_operand.vmem [shape: f32[1,1,128], index: 2, kind: input, shape index: {}]
  %s3 = inlined_call_operand.vmem [shape: f32[128,22], index: 3, kind: input, shape index: {}]
  %s4 = inlined_call_operand.vmem [shape: f32[1,2,22], index: 4, kind: output, shape index: {}]
  %s5 = sld [smem:[#allocation0]]
  $region57: #{waste_classifier_forward.5} parent=0
    _
  %s7 = ssub.s32 1, %s5
  %s8 = scalar_select 0, %s7, %s5
  loop: start=0, step=1, limit=4
  $region2: #{waste_classifier_forward.5} parent=0 // loop_pre_header
    _
  $region3: #{waste_classifier_forward.5} parent=0 // loop_header
    %s10 = sphi 0, %s14
    %p11 = scmp.ge.s32.totalorder %s10, 4
    %s17 = sphi 0, %s29
    %s18 = sphi 0, %s25
    %s19 = sphi 0, %s17
    %s20 = sphi 0, %s18
    %s21 = sphi 0, %s19
    %s22 = sphi 0, %s20
    %s32 = sphi 0, %s34
    %s35 = sphi 0, %s32
    %s36 = sphi 0, %s35
    %s52 = sphi 0, %s36
    %s60 = sphi 0, %s62
    %s63 = sphi 0, %s60
    %s64 = sphi 0, %s63
    %s80 = sphi 0, %s64
    %s86 = sphi 0, %s88
    %s89 = sphi 0, %s86
    %s90 = sphi 0, %s89
    %s106 = sphi 0, %s90
    %s112 = sphi 0, %s114
    %s115 = sphi 0, %s112
    %s116 = sphi 0, %s115
    %s132 = sphi 0, %s116
    %s138 = sphi 0, %s140
    %s141 = sphi 0, %s138
    %s142 = sphi 0, %s141
    %s158 = sphi 0, %s142
  $region4: #{waste_classifier_forward.5} parent=0 // loop_header_branch
    %13 = sbr.rel (%p11) target = $region8
  $region5: #{waste_classifier_forward.5} parent=0 // loop_body
    %s15 = ssub.s32 %s10, 1
    %s16 = ssub.s32 %s10, 2
    %s23 = sadd.s32 1, %s18
    %p24 = scmp.ge.s32.totalorder %s23, 2
    %s25 = scalar_select %p24, 0, %s23
    %s26 = sadd.s32 1, %s17
    %s27 = scalar_select %p24, %s26, %s17
    %p28 = scmp.ge.s32.totalorder %s27, 1
    %s29 = scalar_select %p28, 0, %s27
    %s30 = ssub.s32 %s18, %s25
    %p31 = scmp.eq.s32.totalorder %s30, 0
    %s33 = sadd.s32 %s32, 1
    %s34 = scalar_select %p31, %s32, %s33
    %p37 = pneg %p31
    %p38 = scmp.eq.s32.totalorder %s10, 1
    %p39 = por %p37, %p38
    %p40 = scmp.ne.s32.totalorder %s32, %s35
    %p41 = scmp.eq.s32.totalorder %s10, 0
    %p42 = por %p40, %p41
    %p43 = scmp.ne.s32.totalorder %s32, %s35
    %p44 = scmp.eq.s32.totalorder %s15, 1
    %p45 = por %p43, %p44
    %p46 = scmp.ne.s32.totalorder %s35, %s36
    %p47 = scmp.eq.s32.totalorder %s15, 0
    %p48 = por %p46, %p47
    %p49 = scmp.ne.s32.totalorder %s35, %s36
    %p50 = scmp.eq.s32.totalorder %s16, 1
    %p51 = por %p49, %p50
    %p53 = scmp.ne.s32.totalorder %s36, %s52
    %p54 = scmp.eq.s32.totalorder %s16, 0
    %p55 = por %p53, %p54
    %s56 = ssub.s32 %s17, %s29
    %s57 = ssub.s32 %s18, %s25
    %s58 = sor.u32 %s56, %s57
    %p59 = scmp.eq.s32.totalorder %s58, 0
    %s61 = sadd.s32 %s60, 1
    %s62 = scalar_select %p59, %s60, %s61
    %p65 = pneg %p59
    %p66 = scmp.eq.s32.totalorder %s10, 1
    %p67 = por %p65, %p66
    %p68 = scmp.ne.s32.totalorder %s60, %s63
    %p69 = scmp.eq.s32.totalorder %s10, 0
    %p70 = por %p68, %p69
    %p71 = scmp.ne.s32.totalorder %s60, %s63
    %p72 = scmp.eq.s32.totalorder %s15, 1
    %p73 = por %p71, %p72
    %p74 = scmp.ne.s32.totalorder %s63, %s64
    %p75 = scmp.eq.s32.totalorder %s15, 0
    %p76 = por %p74, %p75
    %p77 = scmp.ne.s32.totalorder %s63, %s64
    %p78 = scmp.eq.s32.totalorder %s16, 1
    %p79 = por %p77, %p78
    %p81 = scmp.ne.s32.totalorder %s64, %s80
    %p82 = scmp.eq.s32.totalorder %s16, 0
    %p83 = por %p81, %p82
    %s84 = ssub.s32 %s17, %s29
    %p85 = scmp.eq.s32.totalorder %s84, 0
    %s87 = sadd.s32 %s86, 1
    %s88 = scalar_select %p85, %s86, %s87
    %p91 = pneg %p85
    %p92 = scmp.eq.s32.totalorder %s10, 1
    %p93 = por %p91, %p92
    %p94 = scmp.ne.s32.totalorder %s86, %s89
    %p95 = scmp.eq.s32.totalorder %s10, 0
    %p96 = por %p94, %p95
    %p97 = scmp.ne.s32.totalorder %s86, %s89
    %p98 = scmp.eq.s32.totalorder %s15, 1
    %p99 = por %p97, %p98
    %p100 = scmp.ne.s32.totalorder %s89, %s90
    %p101 = scmp.eq.s32.totalorder %s15, 0
    %p102 = por %p100, %p101
    %p103 = scmp.ne.s32.totalorder %s89, %s90
    %p104 = scmp.eq.s32.totalorder %s16, 1
    %p105 = por %p103, %p104
    %p107 = scmp.ne.s32.totalorder %s90, %s106
    %p108 = scmp.eq.s32.totalorder %s16, 0
    %p109 = por %p107, %p108
    %s110 = ssub.s32 %s17, %s29
    %p111 = scmp.eq.s32.totalorder %s110, 0
    %s113 = sadd.s32 %s112, 1
    %s114 = scalar_select %p111, %s112, %s113
    %p117 = pneg %p111
    %p118 = scmp.eq.s32.totalorder %s10, 1
    %p119 = por %p117, %p118
    %p120 = scmp.ne.s32.totalorder %s112, %s115
    %p121 = scmp.eq.s32.totalorder %s10, 0
    %p122 = por %p120, %p121
    %p123 = scmp.ne.s32.totalorder %s112, %s115
    %p124 = scmp.eq.s32.totalorder %s15, 1
    %p125 = por %p123, %p124
    %p126 = scmp.ne.s32.totalorder %s115, %s116
    %p127 = scmp.eq.s32.totalorder %s15, 0
    %p128 = por %p126, %p127
    %p129 = scmp.ne.s32.totalorder %s115, %s116
    %p130 = scmp.eq.s32.totalorder %s16, 1
    %p131 = por %p129, %p130
    %p133 = scmp.ne.s32.totalorder %s116, %s132
    %p134 = scmp.eq.s32.totalorder %s16, 0
    %p135 = por %p133, %p134
    %s136 = ssub.s32 %s17, %s29
    %p137 = scmp.eq.s32.totalorder %s136, 0
    %s139 = sadd.s32 %s138, 1
    %s140 = scalar_select %p137, %s138, %s139
    %p143 = pneg %p137
    %p144 = scmp.eq.s32.totalorder %s10, 1
    %p145 = por %p143, %p144
    %p146 = scmp.ne.s32.totalorder %s138, %s141
    %p147 = scmp.eq.s32.totalorder %s10, 0
    %p148 = por %p146, %p147
    %p149 = scmp.ne.s32.totalorder %s138, %s141
    %p150 = scmp.eq.s32.totalorder %s15, 1
    %p151 = por %p149, %p150
    %p152 = scmp.ne.s32.totalorder %s141, %s142
    %p153 = scmp.eq.s32.totalorder %s15, 0
    %p154 = por %p152, %p153
    %p155 = scmp.ne.s32.totalorder %s141, %s142
    %p156 = scmp.eq.s32.totalorder %s16, 1
    %p157 = por %p155, %p156
    %p159 = scmp.ne.s32.totalorder %s142, %s158
    %p160 = scmp.eq.s32.totalorder %s16, 0
    %p161 = por %p159, %p160
    %p162 = scmp.le.s32.totalorder 1, %s10
    %p163 = scmp.lt.s32.totalorder %s10, 3
    %p164 = pnand %p162, %p163
    %p165 = pneg %p164
    // Predicated region
    $region9: #{waste_classifier_forward.5} parent=5 // pred_check
      _
    $region10: #{waste_classifier_forward.5} parent=5 // pred_check_branch
      %167 = sbr.rel (%p164) target = $region12
    $region11: #{waste_classifier_forward.5} parent=5 // pred_region
      %s168 = ssub.s32 %s10, 1
      // Predicated region
      $region13: #{waste_classifier_forward.5} parent=11 // pred_check
        %p169 = pneg %p102
      $region14: #{waste_classifier_forward.5} parent=11 // pred_check_branch
        %171 = sbr.rel (%p169) target = $region16
      $region15: #{waste_classifier_forward.5} parent=11 // pred_region
        %p172 = scmp.lt.s32.totalorder %s19, 0
        %s173 = scalar_select %p172, %s19, 0
        %s174 = scalar_lea.vmem %s2, %s173
      $region16: #{waste_classifier_forward.5} parent=11 // pred_fallthru
        _
      // Predicated region
      $region17: #{waste_classifier_forward.5} parent=11 // pred_check
        %p175 = pneg %p128
      $region18: #{waste_classifier_forward.5} parent=11 // pred_check_branch
        %177 = sbr.rel (%p175) target = $region20
      $region19: #{waste_classifier_forward.5} parent=11 // pred_region
        %s178 = smul.u32 16, %s19
        %p179 = scmp.lt.s32.totalorder %s178, 15
        %s180 = scalar_select %p179, %s178, 15
        %s181 = smul.addr %s180, 8
        %s182 = scalar_lea.vmem %s3, %s181
        %s183 = smul.u32 16, %s19
      $region20: #{waste_classifier_forward.5} parent=11 // pred_fallthru
        _
    $region12: #{waste_classifier_forward.5} parent=5 // pred_fallthru
      _
    %p184 = scmp.lt.s32.totalorder %s10, 2
    // Predicated region
    $region21: #{waste_classifier_forward.5} parent=5 // pred_check
      %p185 = pneg %p184
    $region22: #{waste_classifier_forward.5} parent=5 // pred_check_branch
      %187 = sbr.rel (%p185) target = $region24
    $region23: #{waste_classifier_forward.5} parent=5 // pred_region
      // Predicated region
      $region25: #{waste_classifier_forward.5} parent=23 // pred_check
        %p188 = pneg %p42
      $region26: #{waste_classifier_forward.5} parent=23 // pred_check_branch
        %190 = sbr.rel (%p188) target = $region28
      $region27: #{waste_classifier_forward.5} parent=23 // pred_region
        %s191 = smul.u32 64, %s18
        %p192 = scmp.lt.s32.totalorder %s191, 127
        %s193 = scalar_select %p192, %s191, 127
        %s194 = scalar_lea.vmem %s0, %s193
        %s195 = smul.u32 64, %s18
      $region28: #{waste_classifier_forward.5} parent=23 // pred_fallthru
        _
      // Predicated region
      $region29: #{waste_classifier_forward.5} parent=23 // pred_check
        %p196 = pneg %p70
      $region30: #{waste_classifier_forward.5} parent=23 // pred_check_branch
        %198 = sbr.rel (%p196) target = $region32
      $region31: #{waste_classifier_forward.5} parent=23 // pred_region
        %s199 = smul.u32 1024, %s18
        %p200 = scmp.lt.s32.totalorder %s17, 0
        %s201 = scalar_select %p200, %s17, 0
        %p202 = scmp.lt.s32.totalorder %s199, 2047
        %s203 = scalar_select %p202, %s199, 2047
        %s204 = smul.addr %s201, 2048
        %s205 = sadd.s32 %s203, %s204
        %s206 = smul.addr %s205, 4
        %s207 = scalar_lea.vmem %s1, %s206
        %s208 = smul.u32 1024, %s18
      $region32: #{waste_classifier_forward.5} parent=23 // pred_fallthru
        _
    $region24: #{waste_classifier_forward.5} parent=5 // pred_fallthru
      _
    %p209 = scmp.le.s32.totalorder 1, %s10
    %p210 = scmp.lt.s32.totalorder %s10, 3
    %p211 = pnand %p209, %p210
    %p212 = pneg %p211
    // Predicated region
    $region33: #{waste_classifier_forward.5} parent=5 // pred_check
      _
    $region34: #{waste_classifier_forward.5} parent=5 // pred_check_branch
      %214 = sbr.rel (%p211) target = $region36
    $region35: #{waste_classifier_forward.5} parent=5 // pred_region
      %s215 = ssub.s32 %s10, 1
      %s216 = smul.u32 64, %s20
      %p217 = scmp.lt.s32.totalorder %s216, 127
      %s218 = scalar_select %p217, %s216, 127
      %s219 = scalar_lea.vmem %s0, %s218
      %p220 = pneg %p48
      %p221 = pneg %p45
      %s222 = smul.u32 1024, %s20
      %p223 = scmp.lt.s32.totalorder %s19, 0
      %s224 = scalar_select %p223, %s19, 0
      %p225 = scmp.lt.s32.totalorder %s222, 2047
      %s226 = scalar_select %p225, %s222, 2047
      %s227 = smul.addr %s224, 2048
      %s228 = sadd.s32 %s226, %s227
      %s229 = smul.addr %s228, 4
      %s230 = scalar_lea.vmem %s1, %s229
      %p231 = pneg %p76
      %p232 = pneg %p73
      %p233 = scmp.lt.s32.totalorder %s19, 0
      %s234 = scalar_select %p233, %s19, 0
      %s235 = scalar_lea.vmem %s2, %s234
      %p236 = pneg %p102
      %p237 = pneg %p99
      %s238 = smul.u32 16, %s19
      %p239 = scmp.lt.s32.totalorder %s238, 15
      %s240 = scalar_select %p239, %s238, 15
      %s241 = smul.addr %s240, 8
      %s242 = scalar_lea.vmem %s3, %s241
      %p243 = pneg %p128
      %p244 = pneg %p125
      %p245 = pneg %p154
      %p246 = pneg %p151
      %p247 = scmp.lt.s32.totalorder %s19, 0
      %s248 = scalar_select %p247, %s19, 0
      %s249 = smul.addr %s248, 2
      %s250 = scalar_lea.vmem %s4, %s249
      %s251 = smul.u32 64, %s20
      %p252 = scmp.lt.s32.totalorder %s251, 127
      %s253 = scalar_select %p252, %s251, 127
      %s254 = scalar_lea.vmem %s0, %s253
      %s255 = smul.u32 64, %s20
      %s256 = smul.u32 1024, %s20
      %p257 = scmp.lt.s32.totalorder %s19, 0
      %s258 = scalar_select %p257, %s19, 0
      %p259 = scmp.lt.s32.totalorder %s256, 2047
      %s260 = scalar_select %p259, %s256, 2047
      %s261 = smul.addr %s258, 2048
      %s262 = sadd.s32 %s260, %s261
      %s263 = smul.addr %s262, 4
      %s264 = scalar_lea.vmem %s1, %s263
      %s265 = smul.u32 1024, %s20
      %p266 = scmp.lt.s32.totalorder %s19, 0
      %s267 = scalar_select %p266, %s19, 0
      %s268 = scalar_lea.vmem %s2, %s267
      %s269 = smul.u32 16, %s19
      %p270 = scmp.lt.s32.totalorder %s269, 15
      %s271 = scalar_select %p270, %s269, 15
      %s272 = smul.addr %s271, 8
      %s273 = scalar_lea.vmem %s3, %s272
      %s274 = smul.u32 16, %s19
      %p275 = scmp.lt.s32.totalorder %s19, 0
      %s276 = scalar_select %p275, %s19, 0
      %s277 = smul.addr %s276, 2
      %s278 = scalar_lea.vmem %s4, %s277
      %p280 = scmp.eq.s32.totalorder %s20, 0
      // Predicated region
      $region37: #{waste_classifier_forward.5} parent=35 // pred_check
        %p281 = pneg %p280
      $region38: #{waste_classifier_forward.5} parent=35 // pred_check_branch
        %283 = sbr.rel (%p281) target = $region40
      $region39: #{waste_classifier_forward.5} parent=35 // pred_region
        %284 = vst [vmem:[#allocation2] sm:$0x3] 0.0
      $region40: #{waste_classifier_forward.5} parent=35 // pred_fallthru
        _
      %v285 = vld [vmem:[#allocation2] sm:$0x3]
      %v286 = vld [vmem:[%s254] sm:$0xff]
      %v287 = vld [vmem:[%s254 + $0x8] sm:$0xff]
      %v288 = vld [vmem:[%s254 + $0x10] sm:$0xff]
      %v289 = vld [vmem:[%s254 + $0x18] sm:$0xff]
      %v290 = vld [vmem:[%s254 + $0x20] sm:$0xff]
      %v291 = vld [vmem:[%s254 + $0x28] sm:$0xff]
      %v292 = vld [vmem:[%s254 + $0x30] sm:$0xff]
      %v293 = vld [vmem:[%s254 + $0x38] sm:$0xff]
      %v294 = vld [vmem:[%s264] sm:$0xf]
      %v295 = vld [vmem:[%s264 + $0x4] sm:$0xf]
      %v296 = vld [vmem:[%s264 + $0x8] sm:$0xf]
      %v297 = vld [vmem:[%s264 + $0xc] sm:$0xf]
      %v298 = vld [vmem:[%s264 + $0x10] sm:$0xf]
      %v299 = vld [vmem:[%s264 + $0x14] sm:$0xf]
      %v300 = vld [vmem:[%s264 + $0x18] sm:$0xf]
      %v301 = vld [vmem:[%s264 + $0x1c] sm:$0xf]
      %v302 = vld [vmem:[%s264 + $0x20] sm:$0xf]
      %v303 = vld [vmem:[%s264 + $0x24] sm:$0xf]
      %v304 = vld [vmem:[%s264 + $0x28] sm:$0xf]
      %v305 = vld [vmem:[%s264 + $0x2c] sm:$0xf]
      %v306 = vld [vmem:[%s264 + $0x30] sm:$0xf]
      %v307 = vld [vmem:[%s264 + $0x34] sm:$0xf]
      %v308 = vld [vmem:[%s264 + $0x38] sm:$0xf]
      %v309 = vld [vmem:[%s264 + $0x3c] sm:$0xf]
      %v310 = vld [vmem:[%s264 + $0x40] sm:$0xf]
      %v311 = vld [vmem:[%s264 + $0x44] sm:$0xf]
      %v312 = vld [vmem:[%s264 + $0x48] sm:$0xf]
      %v313 = vld [vmem:[%s264 + $0x4c] sm:$0xf]
      %v314 = vld [vmem:[%s264 + $0x50] sm:$0xf]
      %v315 = vld [vmem:[%s264 + $0x54] sm:$0xf]
      %v316 = vld [vmem:[%s264 + $0x58] sm:$0xf]
      %v317 = vld [vmem:[%s264 + $0x5c] sm:$0xf]
      %v318 = vld [vmem:[%s264 + $0x60] sm:$0xf]
      %v319 = vld [vmem:[%s264 + $0x64] sm:$0xf]
      %v320 = vld [vmem:[%s264 + $0x68] sm:$0xf]
      %v321 = vld [vmem:[%s264 + $0x6c] sm:$0xf]
      %v322 = vld [vmem:[%s264 + $0x70] sm:$0xf]
      %v323 = vld [vmem:[%s264 + $0x74] sm:$0xf]
      %v324 = vld [vmem:[%s264 + $0x78] sm:$0xf]
      %v325 = vld [vmem:[%s264 + $0x7c] sm:$0xf]
      %v326 = vld [vmem:[%s264 + $0x80] sm:$0xf]
      %v327 = vld [vmem:[%s264 + $0x84] sm:$0xf]
      %v328 = vld [vmem:[%s264 + $0x88] sm:$0xf]
      %v329 = vld [vmem:[%s264 + $0x8c] sm:$0xf]
      %v330 = vld [vmem:[%s264 + $0x90] sm:$0xf]
      %v331 = vld [vmem:[%s264 + $0x94] sm:$0xf]
      %v332 = vld [vmem:[%s264 + $0x98] sm:$0xf]
      %v333 = vld [vmem:[%s264 + $0x9c] sm:$0xf]
      %v334 = vld [vmem:[%s264 + $0xa0] sm:$0xf]
      %v335 = vld [vmem:[%s264 + $0xa4] sm:$0xf]
      %v336 = vld [vmem:[%s264 + $0xa8] sm:$0xf]
      %v337 = vld [vmem:[%s264 + $0xac] sm:$0xf]
      %v338 = vld [vmem:[%s264 + $0xb0] sm:$0xf]
      %v339 = vld [vmem:[%s264 + $0xb4] sm:$0xf]
      %v340 = vld [vmem:[%s264 + $0xb8] sm:$0xf]
      %v341 = vld [vmem:[%s264 + $0xbc] sm:$0xf]
      %v342 = vld [vmem:[%s264 + $0xc0] sm:$0xf]
      %v343 = vld [vmem:[%s264 + $0xc4] sm:$0xf]
      %v344 = vld [vmem:[%s264 + $0xc8] sm:$0xf]
      %v345 = vld [vmem:[%s264 + $0xcc] sm:$0xf]
      %v346 = vld [vmem:[%s264 + $0xd0] sm:$0xf]
      %v347 = vld [vmem:[%s264 + $0xd4] sm:$0xf]
      %v348 = vld [vmem:[%s264 + $0xd8] sm:$0xf]
      %v349 = vld [vmem:[%s264 + $0xdc] sm:$0xf]
      %v350 = vld [vmem:[%s264 + $0xe0] sm:$0xf]
      %v351 = vld [vmem:[%s264 + $0xe4] sm:$0xf]
      %v352 = vld [vmem:[%s264 + $0xe8] sm:$0xf]
      %v353 = vld [vmem:[%s264 + $0xec] sm:$0xf]
      %v354 = vld [vmem:[%s264 + $0xf0] sm:$0xf]
      %v355 = vld [vmem:[%s264 + $0xf4] sm:$0xf]
      %v356 = vld [vmem:[%s264 + $0xf8] sm:$0xf]
      %v357 = vld [vmem:[%s264 + $0xfc] sm:$0xf]
      %v358 = vld [vmem:[%s264 + $0x100] sm:$0xf]
      %v359 = vld [vmem:[%s264 + $0x104] sm:$0xf]
      %v360 = vld [vmem:[%s264 + $0x108] sm:$0xf]
      %v361 = vld [vmem:[%s264 + $0x10c] sm:$0xf]
      %v362 = vld [vmem:[%s264 + $0x110] sm:$0xf]
      %v363 = vld [vmem:[%s264 + $0x114] sm:$0xf]
      %v364 = vld [vmem:[%s264 + $0x118] sm:$0xf]
      %v365 = vld [vmem:[%s264 + $0x11c] sm:$0xf]
      %v366 = vld [vmem:[%s264 + $0x120] sm:$0xf]
      %v367 = vld [vmem:[%s264 + $0x124] sm:$0xf]
      %v368 = vld [vmem:[%s264 + $0x128] sm:$0xf]
      %v369 = vld [vmem:[%s264 + $0x12c] sm:$0xf]
      %v370 = vld [vmem:[%s264 + $0x130] sm:$0xf]
      %v371 = vld [vmem:[%s264 + $0x134] sm:$0xf]
      %v372 = vld [vmem:[%s264 + $0x138] sm:$0xf]
      %v373 = vld [vmem:[%s264 + $0x13c] sm:$0xf]
      %v374 = vld [vmem:[%s264 + $0x140] sm:$0xf]
      %v375 = vld [vmem:[%s264 + $0x144] sm:$0xf]
      %v376 = vld [vmem:[%s264 + $0x148] sm:$0xf]
      %v377 = vld [vmem:[%s264 + $0x14c] sm:$0xf]
      %v378 = vld [vmem:[%s264 + $0x150] sm:$0xf]
      %v379 = vld [vmem:[%s264 + $0x154] sm:$0xf]
      %v380 = vld [vmem:[%s264 + $0x158] sm:$0xf]
      %v381 = vld [vmem:[%s264 + $0x15c] sm:$0xf]
      %v382 = vld [vmem:[%s264 + $0x160] sm:$0xf]
      %v383 = vld [vmem:[%s264 + $0x164] sm:$0xf]
      %v384 = vld [vmem:[%s264 + $0x168] sm:$0xf]
      %v385 = vld [vmem:[%s264 + $0x16c] sm:$0xf]
      %v386 = vld [vmem:[%s264 + $0x170] sm:$0xf]
      %v387 = vld [vmem:[%s264 + $0x174] sm:$0xf]
      %v388 = vld [vmem:[%s264 + $0x178] sm:$0xf]
      %v389 = vld [vmem:[%s264 + $0x17c] sm:$0xf]
      %v390 = vld [vmem:[%s264 + $0x180] sm:$0xf]
      %v391 = vld [vmem:[%s264 + $0x184] sm:$0xf]
      %v392 = vld [vmem:[%s264 + $0x188] sm:$0xf]
      %v393 = vld [vmem:[%s264 + $0x18c] sm:$0xf]
      %v394 = vld [vmem:[%s264 + $0x190] sm:$0xf]
      %v395 = vld [vmem:[%s264 + $0x194] sm:$0xf]
      %v396 = vld [vmem:[%s264 + $0x198] sm:$0xf]
      %v397 = vld [vmem:[%s264 + $0x19c] sm:$0xf]
      %v398 = vld [vmem:[%s264 + $0x1a0] sm:$0xf]
      %v399 = vld [vmem:[%s264 + $0x1a4] sm:$0xf]
      %v400 = vld [vmem:[%s264 + $0x1a8] sm:$0xf]
      %v401 = vld [vmem:[%s264 + $0x1ac] sm:$0xf]
      %v402 = vld [vmem:[%s264 + $0x1b0] sm:$0xf]
      %v403 = vld [vmem:[%s264 + $0x1b4] sm:$0xf]
      %v404 = vld [vmem:[%s264 + $0x1b8] sm:$0xf]
      %v405 = vld [vmem:[%s264 + $0x1bc] sm:$0xf]
      %v406 = vld [vmem:[%s264 + $0x1c0] sm:$0xf]
      %v407 = vld [vmem:[%s264 + $0x1c4] sm:$0xf]
      %v408 = vld [vmem:[%s264 + $0x1c8] sm:$0xf]
      %v409 = vld [vmem:[%s264 + $0x1cc] sm:$0xf]
      %v410 = vld [vmem:[%s264 + $0x1d0] sm:$0xf]
      %v411 = vld [vmem:[%s264 + $0x1d4] sm:$0xf]
      %v412 = vld [vmem:[%s264 + $0x1d8] sm:$0xf]
      %v413 = vld [vmem:[%s264 + $0x1dc] sm:$0xf]
      %v414 = vld [vmem:[%s264 + $0x1e0] sm:$0xf]
      %v415 = vld [vmem:[%s264 + $0x1e4] sm:$0xf]
      %v416 = vld [vmem:[%s264 + $0x1e8] sm:$0xf]
      %v417 = vld [vmem:[%s264 + $0x1ec] sm:$0xf]
      %v418 = vld [vmem:[%s264 + $0x1f0] sm:$0xf]
      %v419 = vld [vmem:[%s264 + $0x1f4] sm:$0xf]
      %v420 = vld [vmem:[%s264 + $0x1f8] sm:$0xf]
      %v421 = vld [vmem:[%s264 + $0x1fc] sm:$0xf]
      %v422 = vld [vmem:[%s264 + $0x200] sm:$0xf]
      %v423 = vld [vmem:[%s264 + $0x204] sm:$0xf]
      %v424 = vld [vmem:[%s264 + $0x208] sm:$0xf]
      %v425 = vld [vmem:[%s264 + $0x20c] sm:$0xf]
      %v426 = vld [vmem:[%s264 + $0x210] sm:$0xf]
      %v427 = vld [vmem:[%s264 + $0x214] sm:$0xf]
      %v428 = vld [vmem:[%s264 + $0x218] sm:$0xf]
      %v429 = vld [vmem:[%s264 + $0x21c] sm:$0xf]
      %v430 = vld [vmem:[%s264 + $0x220] sm:$0xf]
      %v431 = vld [vmem:[%s264 + $0x224] sm:$0xf]
      %v432 = vld [vmem:[%s264 + $0x228] sm:$0xf]
      %v433 = vld [vmem:[%s264 + $0x22c] sm:$0xf]
      %v434 = vld [vmem:[%s264 + $0x230] sm:$0xf]
      %v435 = vld [vmem:[%s264 + $0x234] sm:$0xf]
      %v436 = vld [vmem:[%s264 + $0x238] sm:$0xf]
      %v437 = vld [vmem:[%s264 + $0x23c] sm:$0xf]
      %v438 = vld [vmem:[%s264 + $0x240] sm:$0xf]
      %v439 = vld [vmem:[%s264 + $0x244] sm:$0xf]
      %v440 = vld [vmem:[%s264 + $0x248] sm:$0xf]
      %v441 = vld [vmem:[%s264 + $0x24c] sm:$0xf]
      %v442 = vld [vmem:[%s264 + $0x250] sm:$0xf]
      %v443 = vld [vmem:[%s264 + $0x254] sm:$0xf]
      %v444 = vld [vmem:[%s264 + $0x258] sm:$0xf]
      %v445 = vld [vmem:[%s264 + $0x25c] sm:$0xf]
      %v446 = vld [vmem:[%s264 + $0x260] sm:$0xf]
      %v447 = vld [vmem:[%s264 + $0x264] sm:$0xf]
      %v448 = vld [vmem:[%s264 + $0x268] sm:$0xf]
      %v449 = vld [vmem:[%s264 + $0x26c] sm:$0xf]
      %v450 = vld [vmem:[%s264 + $0x270] sm:$0xf]
      %v451 = vld [vmem:[%s264 + $0x274] sm:$0xf]
      %v452 = vld [vmem:[%s264 + $0x278] sm:$0xf]
      %v453 = vld [vmem:[%s264 + $0x27c] sm:$0xf]
      %v454 = vld [vmem:[%s264 + $0x280] sm:$0xf]
      %v455 = vld [vmem:[%s264 + $0x284] sm:$0xf]
      %v456 = vld [vmem:[%s264 + $0x288] sm:$0xf]
      %v457 = vld [vmem:[%s264 + $0x28c] sm:$0xf]
      %v458 = vld [vmem:[%s264 + $0x290] sm:$0xf]
      %v459 = vld [vmem:[%s264 + $0x294] sm:$0xf]
      %v460 = vld [vmem:[%s264 + $0x298] sm:$0xf]
      %v461 = vld [vmem:[%s264 + $0x29c] sm:$0xf]
      %v462 = vld [vmem:[%s264 + $0x2a0] sm:$0xf]
      %v463 = vld [vmem:[%s264 + $0x2a4] sm:$0xf]
      %v464 = vld [vmem:[%s264 + $0x2a8] sm:$0xf]
      %v465 = vld [vmem:[%s264 + $0x2ac] sm:$0xf]
      %v466 = vld [vmem:[%s264 + $0x2b0] sm:$0xf]
      %v467 = vld [vmem:[%s264 + $0x2b4] sm:$0xf]
      %v468 = vld [vmem:[%s264 + $0x2b8] sm:$0xf]
      %v469 = vld [vmem:[%s264 + $0x2bc] sm:$0xf]
      %v470 = vld [vmem:[%s264 + $0x2c0] sm:$0xf]
      %v471 = vld [vmem:[%s264 + $0x2c4] sm:$0xf]
      %v472 = vld [vmem:[%s264 + $0x2c8] sm:$0xf]
      %v473 = vld [vmem:[%s264 + $0x2cc] sm:$0xf]
      %v474 = vld [vmem:[%s264 + $0x2d0] sm:$0xf]
      %v475 = vld [vmem:[%s264 + $0x2d4] sm:$0xf]
      %v476 = vld [vmem:[%s264 + $0x2d8] sm:$0xf]
      %v477 = vld [vmem:[%s264 + $0x2dc] sm:$0xf]
      %v478 = vld [vmem:[%s264 + $0x2e0] sm:$0xf]
      %v479 = vld [vmem:[%s264 + $0x2e4] sm:$0xf]
      %v480 = vld [vmem:[%s264 + $0x2e8] sm:$0xf]
      %v481 = vld [vmem:[%s264 + $0x2ec] sm:$0xf]
      %v482 = vld [vmem:[%s264 + $0x2f0] sm:$0xf]
      %v483 = vld [vmem:[%s264 + $0x2f4] sm:$0xf]
      %v484 = vld [vmem:[%s264 + $0x2f8] sm:$0xf]
      %v485 = vld [vmem:[%s264 + $0x2fc] sm:$0xf]
      %v486 = vld [vmem:[%s264 + $0x300] sm:$0xf]
      %v487 = vld [vmem:[%s264 + $0x304] sm:$0xf]
      %v488 = vld [vmem:[%s264 + $0x308] sm:$0xf]
      %v489 = vld [vmem:[%s264 + $0x30c] sm:$0xf]
      %v490 = vld [vmem:[%s264 + $0x310] sm:$0xf]
      %v491 = vld [vmem:[%s264 + $0x314] sm:$0xf]
      %v492 = vld [vmem:[%s264 + $0x318] sm:$0xf]
      %v493 = vld [vmem:[%s264 + $0x31c] sm:$0xf]
      %v494 = vld [vmem:[%s264 + $0x320] sm:$0xf]
      %v495 = vld [vmem:[%s264 + $0x324] sm:$0xf]
      %v496 = vld [vmem:[%s264 + $0x328] sm:$0xf]
      %v497 = vld [vmem:[%s264 + $0x32c] sm:$0xf]
      %v498 = vld [vmem:[%s264 + $0x330] sm:$0xf]
      %v499 = vld [vmem:[%s264 + $0x334] sm:$0xf]
      %v500 = vld [vmem:[%s264 + $0x338] sm:$0xf]
      %v501 = vld [vmem:[%s264 + $0x33c] sm:$0xf]
      %v502 = vld [vmem:[%s264 + $0x340] sm:$0xf]
      %v503 = vld [vmem:[%s264 + $0x344] sm:$0xf]
      %v504 = vld [vmem:[%s264 + $0x348] sm:$0xf]
      %v505 = vld [vmem:[%s264 + $0x34c] sm:$0xf]
      %v506 = vld [vmem:[%s264 + $0x350] sm:$0xf]
      %v507 = vld [vmem:[%s264 + $0x354] sm:$0xf]
      %v508 = vld [vmem:[%s264 + $0x358] sm:$0xf]
      %v509 = vld [vmem:[%s264 + $0x35c] sm:$0xf]
      %v510 = vld [vmem:[%s264 + $0x360] sm:$0xf]
      %v511 = vld [vmem:[%s264 + $0x364] sm:$0xf]
      %v512 = vld [vmem:[%s264 + $0x368] sm:$0xf]
      %v513 = vld [vmem:[%s264 + $0x36c] sm:$0xf]
      %v514 = vld [vmem:[%s264 + $0x370] sm:$0xf]
      %v515 = vld [vmem:[%s264 + $0x374] sm:$0xf]
      %v516 = vld [vmem:[%s264 + $0x378] sm:$0xf]
      %v517 = vld [vmem:[%s264 + $0x37c] sm:$0xf]
      %v518 = vld [vmem:[%s264 + $0x380] sm:$0xf]
      %v519 = vld [vmem:[%s264 + $0x384] sm:$0xf]
      %v520 = vld [vmem:[%s264 + $0x388] sm:$0xf]
      %v521 = vld [vmem:[%s264 + $0x38c] sm:$0xf]
      %v522 = vld [vmem:[%s264 + $0x390] sm:$0xf]
      %v523 = vld [vmem:[%s264 + $0x394] sm:$0xf]
      %v524 = vld [vmem:[%s264 + $0x398] sm:$0xf]
      %v525 = vld [vmem:[%s264 + $0x39c] sm:$0xf]
      %v526 = vld [vmem:[%s264 + $0x3a0] sm:$0xf]
      %v527 = vld [vmem:[%s264 + $0x3a4] sm:$0xf]
      %v528 = vld [vmem:[%s264 + $0x3a8] sm:$0xf]
      %v529 = vld [vmem:[%s264 + $0x3ac] sm:$0xf]
      %v530 = vld [vmem:[%s264 + $0x3b0] sm:$0xf]
      %v531 = vld [vmem:[%s264 + $0x3b4] sm:$0xf]
      %v532 = vld [vmem:[%s264 + $0x3b8] sm:$0xf]
      %v533 = vld [vmem:[%s264 + $0x3bc] sm:$0xf]
      %v534 = vld [vmem:[%s264 + $0x3c0] sm:$0xf]
      %v535 = vld [vmem:[%s264 + $0x3c4] sm:$0xf]
      %v536 = vld [vmem:[%s264 + $0x3c8] sm:$0xf]
      %v537 = vld [vmem:[%s264 + $0x3cc] sm:$0xf]
      %v538 = vld [vmem:[%s264 + $0x3d0] sm:$0xf]
      %v539 = vld [vmem:[%s264 + $0x3d4] sm:$0xf]
      %v540 = vld [vmem:[%s264 + $0x3d8] sm:$0xf]
      %v541 = vld [vmem:[%s264 + $0x3dc] sm:$0xf]
      %v542 = vld [vmem:[%s264 + $0x3e0] sm:$0xf]
      %v543 = vld [vmem:[%s264 + $0x3e4] sm:$0xf]
      %v544 = vld [vmem:[%s264 + $0x3e8] sm:$0xf]
      %v545 = vld [vmem:[%s264 + $0x3ec] sm:$0xf]
      %v546 = vld [vmem:[%s264 + $0x3f0] sm:$0xf]
      %v547 = vld [vmem:[%s264 + $0x3f4] sm:$0xf]
      %v548 = vld [vmem:[%s264 + $0x3f8] sm:$0xf]
      %v549 = vld [vmem:[%s264 + $0x3fc] sm:$0xf]
      %v550 = vld [vmem:[%s264 + $0x400] sm:$0xf]
      %v551 = vld [vmem:[%s264 + $0x404] sm:$0xf]
      %v552 = vld [vmem:[%s264 + $0x408] sm:$0xf]
      %v553 = vld [vmem:[%s264 + $0x40c] sm:$0xf]
      %v554 = vld [vmem:[%s264 + $0x410] sm:$0xf]
      %v555 = vld [vmem:[%s264 + $0x414] sm:$0xf]
      %v556 = vld [vmem:[%s264 + $0x418] sm:$0xf]
      %v557 = vld [vmem:[%s264 + $0x41c] sm:$0xf]
      %v558 = vld [vmem:[%s264 + $0x420] sm:$0xf]
      %v559 = vld [vmem:[%s264 + $0x424] sm:$0xf]
      %v560 = vld [vmem:[%s264 + $0x428] sm:$0xf]
      %v561 = vld [vmem:[%s264 + $0x42c] sm:$0xf]
      %v562 = vld [vmem:[%s264 + $0x430] sm:$0xf]
      %v563 = vld [vmem:[%s264 + $0x434] sm:$0xf]
      %v564 = vld [vmem:[%s264 + $0x438] sm:$0xf]
      %v565 = vld [vmem:[%s264 + $0x43c] sm:$0xf]
      %v566 = vld [vmem:[%s264 + $0x440] sm:$0xf]
      %v567 = vld [vmem:[%s264 + $0x444] sm:$0xf]
      %v568 = vld [vmem:[%s264 + $0x448] sm:$0xf]
      %v569 = vld [vmem:[%s264 + $0x44c] sm:$0xf]
      %v570 = vld [vmem:[%s264 + $0x450] sm:$0xf]
      %v571 = vld [vmem:[%s264 + $0x454] sm:$0xf]
      %v572 = vld [vmem:[%s264 + $0x458] sm:$0xf]
      %v573 = vld [vmem:[%s264 + $0x45c] sm:$0xf]
      %v574 = vld [vmem:[%s264 + $0x460] sm:$0xf]
      %v575 = vld [vmem:[%s264 + $0x464] sm:$0xf]
      %v576 = vld [vmem:[%s264 + $0x468] sm:$0xf]
      %v577 = vld [vmem:[%s264 + $0x46c] sm:$0xf]
      %v578 = vld [vmem:[%s264 + $0x470] sm:$0xf]
      %v579 = vld [vmem:[%s264 + $0x474] sm:$0xf]
      %v580 = vld [vmem:[%s264 + $0x478] sm:$0xf]
      %v581 = vld [vmem:[%s264 + $0x47c] sm:$0xf]
      %v582 = vld [vmem:[%s264 + $0x480] sm:$0xf]
      %v583 = vld [vmem:[%s264 + $0x484] sm:$0xf]
      %v584 = vld [vmem:[%s264 + $0x488] sm:$0xf]
      %v585 = vld [vmem:[%s264 + $0x48c] sm:$0xf]
      %v586 = vld [vmem:[%s264 + $0x490] sm:$0xf]
      %v587 = vld [vmem:[%s264 + $0x494] sm:$0xf]
      %v588 = vld [vmem:[%s264 + $0x498] sm:$0xf]
      %v589 = vld [vmem:[%s264 + $0x49c] sm:$0xf]
      %v590 = vld [vmem:[%s264 + $0x4a0] sm:$0xf]
      %v591 = vld [vmem:[%s264 + $0x4a4] sm:$0xf]
      %v592 = vld [vmem:[%s264 + $0x4a8] sm:$0xf]
      %v593 = vld [vmem:[%s264 + $0x4ac] sm:$0xf]
      %v594 = vld [vmem:[%s264 + $0x4b0] sm:$0xf]
      %v595 = vld [vmem:[%s264 + $0x4b4] sm:$0xf]
      %v596 = vld [vmem:[%s264 + $0x4b8] sm:$0xf]
      %v597 = vld [vmem:[%s264 + $0x4bc] sm:$0xf]
      %v598 = vld [vmem:[%s264 + $0x4c0] sm:$0xf]
      %v599 = vld [vmem:[%s264 + $0x4c4] sm:$0xf]
      %v600 = vld [vmem:[%s264 + $0x4c8] sm:$0xf]
      %v601 = vld [vmem:[%s264 + $0x4cc] sm:$0xf]
      %v602 = vld [vmem:[%s264 + $0x4d0] sm:$0xf]
      %v603 = vld [vmem:[%s264 + $0x4d4] sm:$0xf]
      %v604 = vld [vmem:[%s264 + $0x4d8] sm:$0xf]
      %v605 = vld [vmem:[%s264 + $0x4dc] sm:$0xf]
      %v606 = vld [vmem:[%s264 + $0x4e0] sm:$0xf]
      %v607 = vld [vmem:[%s264 + $0x4e4] sm:$0xf]
      %v608 = vld [vmem:[%s264 + $0x4e8] sm:$0xf]
      %v609 = vld [vmem:[%s264 + $0x4ec] sm:$0xf]
      %v610 = vld [vmem:[%s264 + $0x4f0] sm:$0xf]
      %v611 = vld [vmem:[%s264 + $0x4f4] sm:$0xf]
      %v612 = vld [vmem:[%s264 + $0x4f8] sm:$0xf]
      %v613 = vld [vmem:[%s264 + $0x4fc] sm:$0xf]
      %v614 = vld [vmem:[%s264 + $0x500] sm:$0xf]
      %v615 = vld [vmem:[%s264 + $0x504] sm:$0xf]
      %v616 = vld [vmem:[%s264 + $0x508] sm:$0xf]
      %v617 = vld [vmem:[%s264 + $0x50c] sm:$0xf]
      %v618 = vld [vmem:[%s264 + $0x510] sm:$0xf]
      %v619 = vld [vmem:[%s264 + $0x514] sm:$0xf]
      %v620 = vld [vmem:[%s264 + $0x518] sm:$0xf]
      %v621 = vld [vmem:[%s264 + $0x51c] sm:$0xf]
      %v622 = vld [vmem:[%s264 + $0x520] sm:$0xf]
      %v623 = vld [vmem:[%s264 + $0x524] sm:$0xf]
      %v624 = vld [vmem:[%s264 + $0x528] sm:$0xf]
      %v625 = vld [vmem:[%s264 + $0x52c] sm:$0xf]
      %v626 = vld [vmem:[%s264 + $0x530] sm:$0xf]
      %v627 = vld [vmem:[%s264 + $0x534] sm:$0xf]
      %v628 = vld [vmem:[%s264 + $0x538] sm:$0xf]
      %v629 = vld [vmem:[%s264 + $0x53c] sm:$0xf]
      %v630 = vld [vmem:[%s264 + $0x540] sm:$0xf]
      %v631 = vld [vmem:[%s264 + $0x544] sm:$0xf]
      %v632 = vld [vmem:[%s264 + $0x548] sm:$0xf]
      %v633 = vld [vmem:[%s264 + $0x54c] sm:$0xf]
      %v634 = vld [vmem:[%s264 + $0x550] sm:$0xf]
      %v635 = vld [vmem:[%s264 + $0x554] sm:$0xf]
      %v636 = vld [vmem:[%s264 + $0x558] sm:$0xf]
      %v637 = vld [vmem:[%s264 + $0x55c] sm:$0xf]
      %v638 = vld [vmem:[%s264 + $0x560] sm:$0xf]
      %v639 = vld [vmem:[%s264 + $0x564] sm:$0xf]
      %v640 = vld [vmem:[%s264 + $0x568] sm:$0xf]
      %v641 = vld [vmem:[%s264 + $0x56c] sm:$0xf]
      %v642 = vld [vmem:[%s264 + $0x570] sm:$0xf]
      %v643 = vld [vmem:[%s264 + $0x574] sm:$0xf]
      %v644 = vld [vmem:[%s264 + $0x578] sm:$0xf]
      %v645 = vld [vmem:[%s264 + $0x57c] sm:$0xf]
      %v646 = vld [vmem:[%s264 + $0x580] sm:$0xf]
      %v647 = vld [vmem:[%s264 + $0x584] sm:$0xf]
      %v648 = vld [vmem:[%s264 + $0x588] sm:$0xf]
      %v649 = vld [vmem:[%s264 + $0x58c] sm:$0xf]
      %v650 = vld [vmem:[%s264 + $0x590] sm:$0xf]
      %v651 = vld [vmem:[%s264 + $0x594] sm:$0xf]
      %v652 = vld [vmem:[%s264 + $0x598] sm:$0xf]
      %v653 = vld [vmem:[%s264 + $0x59c] sm:$0xf]
      %v654 = vld [vmem:[%s264 + $0x5a0] sm:$0xf]
      %v655 = vld [vmem:[%s264 + $0x5a4] sm:$0xf]
      %v656 = vld [vmem:[%s264 + $0x5a8] sm:$0xf]
      %v657 = vld [vmem:[%s264 + $0x5ac] sm:$0xf]
      %v658 = vld [vmem:[%s264 + $0x5b0] sm:$0xf]
      %v659 = vld [vmem:[%s264 + $0x5b4] sm:$0xf]
      %v660 = vld [vmem:[%s264 + $0x5b8] sm:$0xf]
      %v661 = vld [vmem:[%s264 + $0x5bc] sm:$0xf]
      %v662 = vld [vmem:[%s264 + $0x5c0] sm:$0xf]
      %v663 = vld [vmem:[%s264 + $0x5c4] sm:$0xf]
      %v664 = vld [vmem:[%s264 + $0x5c8] sm:$0xf]
      %v665 = vld [vmem:[%s264 + $0x5cc] sm:$0xf]
      %v666 = vld [vmem:[%s264 + $0x5d0] sm:$0xf]
      %v667 = vld [vmem:[%s264 + $0x5d4] sm:$0xf]
      %v668 = vld [vmem:[%s264 + $0x5d8] sm:$0xf]
      %v669 = vld [vmem:[%s264 + $0x5dc] sm:$0xf]
      %v670 = vld [vmem:[%s264 + $0x5e0] sm:$0xf]
      %v671 = vld [vmem:[%s264 + $0x5e4] sm:$0xf]
      %v672 = vld [vmem:[%s264 + $0x5e8] sm:$0xf]
      %v673 = vld [vmem:[%s264 + $0x5ec] sm:$0xf]
      %v674 = vld [vmem:[%s264 + $0x5f0] sm:$0xf]
      %v675 = vld [vmem:[%s264 + $0x5f4] sm:$0xf]
      %v676 = vld [vmem:[%s264 + $0x5f8] sm:$0xf]
      %v677 = vld [vmem:[%s264 + $0x5fc] sm:$0xf]
      %v678 = vld [vmem:[%s264 + $0x600] sm:$0xf]
      %v679 = vld [vmem:[%s264 + $0x604] sm:$0xf]
      %v680 = vld [vmem:[%s264 + $0x608] sm:$0xf]
      %v681 = vld [vmem:[%s264 + $0x60c] sm:$0xf]
      %v682 = vld [vmem:[%s264 + $0x610] sm:$0xf]
      %v683 = vld [vmem:[%s264 + $0x614] sm:$0xf]
      %v684 = vld [vmem:[%s264 + $0x618] sm:$0xf]
      %v685 = vld [vmem:[%s264 + $0x61c] sm:$0xf]
      %v686 = vld [vmem:[%s264 + $0x620] sm:$0xf]
      %v687 = vld [vmem:[%s264 + $0x624] sm:$0xf]
      %v688 = vld [vmem:[%s264 + $0x628] sm:$0xf]
      %v689 = vld [vmem:[%s264 + $0x62c] sm:$0xf]
      %v690 = vld [vmem:[%s264 + $0x630] sm:$0xf]
      %v691 = vld [vmem:[%s264 + $0x634] sm:$0xf]
      %v692 = vld [vmem:[%s264 + $0x638] sm:$0xf]
      %v693 = vld [vmem:[%s264 + $0x63c] sm:$0xf]
      %v694 = vld [vmem:[%s264 + $0x640] sm:$0xf]
      %v695 = vld [vmem:[%s264 + $0x644] sm:$0xf]
      %v696 = vld [vmem:[%s264 + $0x648] sm:$0xf]
      %v697 = vld [vmem:[%s264 + $0x64c] sm:$0xf]
      %v698 = vld [vmem:[%s264 + $0x650] sm:$0xf]
      %v699 = vld [vmem:[%s264 + $0x654] sm:$0xf]
      %v700 = vld [vmem:[%s264 + $0x658] sm:$0xf]
      %v701 = vld [vmem:[%s264 + $0x65c] sm:$0xf]
      %v702 = vld [vmem:[%s264 + $0x660] sm:$0xf]
      %v703 = vld [vmem:[%s264 + $0x664] sm:$0xf]
      %v704 = vld [vmem:[%s264 + $0x668] sm:$0xf]
      %v705 = vld [vmem:[%s264 + $0x66c] sm:$0xf]
      %v706 = vld [vmem:[%s264 + $0x670] sm:$0xf]
      %v707 = vld [vmem:[%s264 + $0x674] sm:$0xf]
      %v708 = vld [vmem:[%s264 + $0x678] sm:$0xf]
      %v709 = vld [vmem:[%s264 + $0x67c] sm:$0xf]
      %v710 = vld [vmem:[%s264 + $0x680] sm:$0xf]
      %v711 = vld [vmem:[%s264 + $0x684] sm:$0xf]
      %v712 = vld [vmem:[%s264 + $0x688] sm:$0xf]
      %v713 = vld [vmem:[%s264 + $0x68c] sm:$0xf]
      %v714 = vld [vmem:[%s264 + $0x690] sm:$0xf]
      %v715 = vld [vmem:[%s264 + $0x694] sm:$0xf]
      %v716 = vld [vmem:[%s264 + $0x698] sm:$0xf]
      %v717 = vld [vmem:[%s264 + $0x69c] sm:$0xf]
      %v718 = vld [vmem:[%s264 + $0x6a0] sm:$0xf]
      %v719 = vld [vmem:[%s264 + $0x6a4] sm:$0xf]
      %v720 = vld [vmem:[%s264 + $0x6a8] sm:$0xf]
      %v721 = vld [vmem:[%s264 + $0x6ac] sm:$0xf]
      %v722 = vld [vmem:[%s264 + $0x6b0] sm:$0xf]
      %v723 = vld [vmem:[%s264 + $0x6b4] sm:$0xf]
      %v724 = vld [vmem:[%s264 + $0x6b8] sm:$0xf]
      %v725 = vld [vmem:[%s264 + $0x6bc] sm:$0xf]
      %v726 = vld [vmem:[%s264 + $0x6c0] sm:$0xf]
      %v727 = vld [vmem:[%s264 + $0x6c4] sm:$0xf]
      %v728 = vld [vmem:[%s264 + $0x6c8] sm:$0xf]
      %v729 = vld [vmem:[%s264 + $0x6cc] sm:$0xf]
      %v730 = vld [vmem:[%s264 + $0x6d0] sm:$0xf]
      %v731 = vld [vmem:[%s264 + $0x6d4] sm:$0xf]
      %v732 = vld [vmem:[%s264 + $0x6d8] sm:$0xf]
      %v733 = vld [vmem:[%s264 + $0x6dc] sm:$0xf]
      %v734 = vld [vmem:[%s264 + $0x6e0] sm:$0xf]
      %v735 = vld [vmem:[%s264 + $0x6e4] sm:$0xf]
      %v736 = vld [vmem:[%s264 + $0x6e8] sm:$0xf]
      %v737 = vld [vmem:[%s264 + $0x6ec] sm:$0xf]
      %v738 = vld [vmem:[%s264 + $0x6f0] sm:$0xf]
      %v739 = vld [vmem:[%s264 + $0x6f4] sm:$0xf]
      %v740 = vld [vmem:[%s264 + $0x6f8] sm:$0xf]
      %v741 = vld [vmem:[%s264 + $0x6fc] sm:$0xf]
      %v742 = vld [vmem:[%s264 + $0x700] sm:$0xf]
      %v743 = vld [vmem:[%s264 + $0x704] sm:$0xf]
      %v744 = vld [vmem:[%s264 + $0x708] sm:$0xf]
      %v745 = vld [vmem:[%s264 + $0x70c] sm:$0xf]
      %v746 = vld [vmem:[%s264 + $0x710] sm:$0xf]
      %v747 = vld [vmem:[%s264 + $0x714] sm:$0xf]
      %v748 = vld [vmem:[%s264 + $0x718] sm:$0xf]
      %v749 = vld [vmem:[%s264 + $0x71c] sm:$0xf]
      %v750 = vld [vmem:[%s264 + $0x720] sm:$0xf]
      %v751 = vld [vmem:[%s264 + $0x724] sm:$0xf]
      %v752 = vld [vmem:[%s264 + $0x728] sm:$0xf]
      %v753 = vld [vmem:[%s264 + $0x72c] sm:$0xf]
      %v754 = vld [vmem:[%s264 + $0x730] sm:$0xf]
      %v755 = vld [vmem:[%s264 + $0x734] sm:$0xf]
      %v756 = vld [vmem:[%s264 + $0x738] sm:$0xf]
      %v757 = vld [vmem:[%s264 + $0x73c] sm:$0xf]
      %v758 = vld [vmem:[%s264 + $0x740] sm:$0xf]
      %v759 = vld [vmem:[%s264 + $0x744] sm:$0xf]
      %v760 = vld [vmem:[%s264 + $0x748] sm:$0xf]
      %v761 = vld [vmem:[%s264 + $0x74c] sm:$0xf]
      %v762 = vld [vmem:[%s264 + $0x750] sm:$0xf]
      %v763 = vld [vmem:[%s264 + $0x754] sm:$0xf]
      %v764 = vld [vmem:[%s264 + $0x758] sm:$0xf]
      %v765 = vld [vmem:[%s264 + $0x75c] sm:$0xf]
      %v766 = vld [vmem:[%s264 + $0x760] sm:$0xf]
      %v767 = vld [vmem:[%s264 + $0x764] sm:$0xf]
      %v768 = vld [vmem:[%s264 + $0x768] sm:$0xf]
      %v769 = vld [vmem:[%s264 + $0x76c] sm:$0xf]
      %v770 = vld [vmem:[%s264 + $0x770] sm:$0xf]
      %v771 = vld [vmem:[%s264 + $0x774] sm:$0xf]
      %v772 = vld [vmem:[%s264 + $0x778] sm:$0xf]
      %v773 = vld [vmem:[%s264 + $0x77c] sm:$0xf]
      %v774 = vld [vmem:[%s264 + $0x780] sm:$0xf]
      %v775 = vld [vmem:[%s264 + $0x784] sm:$0xf]
      %v776 = vld [vmem:[%s264 + $0x788] sm:$0xf]
      %v777 = vld [vmem:[%s264 + $0x78c] sm:$0xf]
      %v778 = vld [vmem:[%s264 + $0x790] sm:$0xf]
      %v779 = vld [vmem:[%s264 + $0x794] sm:$0xf]
      %v780 = vld [vmem:[%s264 + $0x798] sm:$0xf]
      %v781 = vld [vmem:[%s264 + $0x79c] sm:$0xf]
      %v782 = vld [vmem:[%s264 + $0x7a0] sm:$0xf]
      %v783 = vld [vmem:[%s264 + $0x7a4] sm:$0xf]
      %v784 = vld [vmem:[%s264 + $0x7a8] sm:$0xf]
      %v785 = vld [vmem:[%s264 + $0x7ac] sm:$0xf]
      %v786 = vld [vmem:[%s264 + $0x7b0] sm:$0xf]
      %v787 = vld [vmem:[%s264 + $0x7b4] sm:$0xf]
      %v788 = vld [vmem:[%s264 + $0x7b8] sm:$0xf]
      %v789 = vld [vmem:[%s264 + $0x7bc] sm:$0xf]
      %v790 = vld [vmem:[%s264 + $0x7c0] sm:$0xf]
      %v791 = vld [vmem:[%s264 + $0x7c4] sm:$0xf]
      %v792 = vld [vmem:[%s264 + $0x7c8] sm:$0xf]
      %v793 = vld [vmem:[%s264 + $0x7cc] sm:$0xf]
      %v794 = vld [vmem:[%s264 + $0x7d0] sm:$0xf]
      %v795 = vld [vmem:[%s264 + $0x7d4] sm:$0xf]
      %v796 = vld [vmem:[%s264 + $0x7d8] sm:$0xf]
      %v797 = vld [vmem:[%s264 + $0x7dc] sm:$0xf]
      %v798 = vld [vmem:[%s264 + $0x7e0] sm:$0xf]
      %v799 = vld [vmem:[%s264 + $0x7e4] sm:$0xf]
      %v800 = vld [vmem:[%s264 + $0x7e8] sm:$0xf]
      %v801 = vld [vmem:[%s264 + $0x7ec] sm:$0xf]
      %v802 = vld [vmem:[%s264 + $0x7f0] sm:$0xf]
      %v803 = vld [vmem:[%s264 + $0x7f4] sm:$0xf]
      %v804 = vld [vmem:[%s264 + $0x7f8] sm:$0xf]
      %v805 = vld [vmem:[%s264 + $0x7fc] sm:$0xf]
      %v806 = vld [vmem:[%s264 + $0x800] sm:$0xf]
      %v807 = vld [vmem:[%s264 + $0x804] sm:$0xf]
      %v808 = vld [vmem:[%s264 + $0x808] sm:$0xf]
      %v809 = vld [vmem:[%s264 + $0x80c] sm:$0xf]
      %v810 = vld [vmem:[%s264 + $0x810] sm:$0xf]
      %v811 = vld [vmem:[%s264 + $0x814] sm:$0xf]
      %v812 = vld [vmem:[%s264 + $0x818] sm:$0xf]
      %v813 = vld [vmem:[%s264 + $0x81c] sm:$0xf]
      %v814 = vld [vmem:[%s264 + $0x820] sm:$0xf]
      %v815 = vld [vmem:[%s264 + $0x824] sm:$0xf]
      %v816 = vld [vmem:[%s264 + $0x828] sm:$0xf]
      %v817 = vld [vmem:[%s264 + $0x82c] sm:$0xf]
      %v818 = vld [vmem:[%s264 + $0x830] sm:$0xf]
      %v819 = vld [vmem:[%s264 + $0x834] sm:$0xf]
      %v820 = vld [vmem:[%s264 + $0x838] sm:$0xf]
      %v821 = vld [vmem:[%s264 + $0x83c] sm:$0xf]
      %v822 = vld [vmem:[%s264 + $0x840] sm:$0xf]
      %v823 = vld [vmem:[%s264 + $0x844] sm:$0xf]
      %v824 = vld [vmem:[%s264 + $0x848] sm:$0xf]
      %v825 = vld [vmem:[%s264 + $0x84c] sm:$0xf]
      %v826 = vld [vmem:[%s264 + $0x850] sm:$0xf]
      %v827 = vld [vmem:[%s264 + $0x854] sm:$0xf]
      %v828 = vld [vmem:[%s264 + $0x858] sm:$0xf]
      %v829 = vld [vmem:[%s264 + $0x85c] sm:$0xf]
      %v830 = vld [vmem:[%s264 + $0x860] sm:$0xf]
      %v831 = vld [vmem:[%s264 + $0x864] sm:$0xf]
      %v832 = vld [vmem:[%s264 + $0x868] sm:$0xf]
      %v833 = vld [vmem:[%s264 + $0x86c] sm:$0xf]
      %v834 = vld [vmem:[%s264 + $0x870] sm:$0xf]
      %v835 = vld [vmem:[%s264 + $0x874] sm:$0xf]
      %v836 = vld [vmem:[%s264 + $0x878] sm:$0xf]
      %v837 = vld [vmem:[%s264 + $0x87c] sm:$0xf]
      %v838 = vld [vmem:[%s264 + $0x880] sm:$0xf]
      %v839 = vld [vmem:[%s264 + $0x884] sm:$0xf]
      %v840 = vld [vmem:[%s264 + $0x888] sm:$0xf]
      %v841 = vld [vmem:[%s264 + $0x88c] sm:$0xf]
      %v842 = vld [vmem:[%s264 + $0x890] sm:$0xf]
      %v843 = vld [vmem:[%s264 + $0x894] sm:$0xf]
      %v844 = vld [vmem:[%s264 + $0x898] sm:$0xf]
      %v845 = vld [vmem:[%s264 + $0x89c] sm:$0xf]
      %v846 = vld [vmem:[%s264 + $0x8a0] sm:$0xf]
      %v847 = vld [vmem:[%s264 + $0x8a4] sm:$0xf]
      %v848 = vld [vmem:[%s264 + $0x8a8] sm:$0xf]
      %v849 = vld [vmem:[%s264 + $0x8ac] sm:$0xf]
      %v850 = vld [vmem:[%s264 + $0x8b0] sm:$0xf]
      %v851 = vld [vmem:[%s264 + $0x8b4] sm:$0xf]
      %v852 = vld [vmem:[%s264 + $0x8b8] sm:$0xf]
      %v853 = vld [vmem:[%s264 + $0x8bc] sm:$0xf]
      %v854 = vld [vmem:[%s264 + $0x8c0] sm:$0xf]
      %v855 = vld [vmem:[%s264 + $0x8c4] sm:$0xf]
      %v856 = vld [vmem:[%s264 + $0x8c8] sm:$0xf]
      %v857 = vld [vmem:[%s264 + $0x8cc] sm:$0xf]
      %v858 = vld [vmem:[%s264 + $0x8d0] sm:$0xf]
      %v859 = vld [vmem:[%s264 + $0x8d4] sm:$0xf]
      %v860 = vld [vmem:[%s264 + $0x8d8] sm:$0xf]
      %v861 = vld [vmem:[%s264 + $0x8dc] sm:$0xf]
      %v862 = vld [vmem:[%s264 + $0x8e0] sm:$0xf]
      %v863 = vld [vmem:[%s264 + $0x8e4] sm:$0xf]
      %v864 = vld [vmem:[%s264 + $0x8e8] sm:$0xf]
      %v865 = vld [vmem:[%s264 + $0x8ec] sm:$0xf]
      %v866 = vld [vmem:[%s264 + $0x8f0] sm:$0xf]
      %v867 = vld [vmem:[%s264 + $0x8f4] sm:$0xf]
      %v868 = vld [vmem:[%s264 + $0x8f8] sm:$0xf]
      %v869 = vld [vmem:[%s264 + $0x8fc] sm:$0xf]
      %v870 = vld [vmem:[%s264 + $0x900] sm:$0xf]
      %v871 = vld [vmem:[%s264 + $0x904] sm:$0xf]
      %v872 = vld [vmem:[%s264 + $0x908] sm:$0xf]
      %v873 = vld [vmem:[%s264 + $0x90c] sm:$0xf]
      %v874 = vld [vmem:[%s264 + $0x910] sm:$0xf]
      %v875 = vld [vmem:[%s264 + $0x914] sm:$0xf]
      %v876 = vld [vmem:[%s264 + $0x918] sm:$0xf]
      %v877 = vld [vmem:[%s264 + $0x91c] sm:$0xf]
      %v878 = vld [vmem:[%s264 + $0x920] sm:$0xf]
      %v879 = vld [vmem:[%s264 + $0x924] sm:$0xf]
      %v880 = vld [vmem:[%s264 + $0x928] sm:$0xf]
      %v881 = vld [vmem:[%s264 + $0x92c] sm:$0xf]
      %v882 = vld [vmem:[%s264 + $0x930] sm:$0xf]
      %v883 = vld [vmem:[%s264 + $0x934] sm:$0xf]
      %v884 = vld [vmem:[%s264 + $0x938] sm:$0xf]
      %v885 = vld [vmem:[%s264 + $0x93c] sm:$0xf]
      %v886 = vld [vmem:[%s264 + $0x940] sm:$0xf]
      %v887 = vld [vmem:[%s264 + $0x944] sm:$0xf]
      %v888 = vld [vmem:[%s264 + $0x948] sm:$0xf]
      %v889 = vld [vmem:[%s264 + $0x94c] sm:$0xf]
      %v890 = vld [vmem:[%s264 + $0x950] sm:$0xf]
      %v891 = vld [vmem:[%s264 + $0x954] sm:$0xf]
      %v892 = vld [vmem:[%s264 + $0x958] sm:$0xf]
      %v893 = vld [vmem:[%s264 + $0x95c] sm:$0xf]
      %v894 = vld [vmem:[%s264 + $0x960] sm:$0xf]
      %v895 = vld [vmem:[%s264 + $0x964] sm:$0xf]
      %v896 = vld [vmem:[%s264 + $0x968] sm:$0xf]
      %v897 = vld [vmem:[%s264 + $0x96c] sm:$0xf]
      %v898 = vld [vmem:[%s264 + $0x970] sm:$0xf]
      %v899 = vld [vmem:[%s264 + $0x974] sm:$0xf]
      %v900 = vld [vmem:[%s264 + $0x978] sm:$0xf]
      %v901 = vld [vmem:[%s264 + $0x97c] sm:$0xf]
      %v902 = vld [vmem:[%s264 + $0x980] sm:$0xf]
      %v903 = vld [vmem:[%s264 + $0x984] sm:$0xf]
      %v904 = vld [vmem:[%s264 + $0x988] sm:$0xf]
      %v905 = vld [vmem:[%s264 + $0x98c] sm:$0xf]
      %v906 = vld [vmem:[%s264 + $0x990] sm:$0xf]
      %v907 = vld [vmem:[%s264 + $0x994] sm:$0xf]
      %v908 = vld [vmem:[%s264 + $0x998] sm:$0xf]
      %v909 = vld [vmem:[%s264 + $0x99c] sm:$0xf]
      %v910 = vld [vmem:[%s264 + $0x9a0] sm:$0xf]
      %v911 = vld [vmem:[%s264 + $0x9a4] sm:$0xf]
      %v912 = vld [vmem:[%s264 + $0x9a8] sm:$0xf]
      %v913 = vld [vmem:[%s264 + $0x9ac] sm:$0xf]
      %v914 = vld [vmem:[%s264 + $0x9b0] sm:$0xf]
      %v915 = vld [vmem:[%s264 + $0x9b4] sm:$0xf]
      %v916 = vld [vmem:[%s264 + $0x9b8] sm:$0xf]
      %v917 = vld [vmem:[%s264 + $0x9bc] sm:$0xf]
      %v918 = vld [vmem:[%s264 + $0x9c0] sm:$0xf]
      %v919 = vld [vmem:[%s264 + $0x9c4] sm:$0xf]
      %v920 = vld [vmem:[%s264 + $0x9c8] sm:$0xf]
      %v921 = vld [vmem:[%s264 + $0x9cc] sm:$0xf]
      %v922 = vld [vmem:[%s264 + $0x9d0] sm:$0xf]
      %v923 = vld [vmem:[%s264 + $0x9d4] sm:$0xf]
      %v924 = vld [vmem:[%s264 + $0x9d8] sm:$0xf]
      %v925 = vld [vmem:[%s264 + $0x9dc] sm:$0xf]
      %v926 = vld [vmem:[%s264 + $0x9e0] sm:$0xf]
      %v927 = vld [vmem:[%s264 + $0x9e4] sm:$0xf]
      %v928 = vld [vmem:[%s264 + $0x9e8] sm:$0xf]
      %v929 = vld [vmem:[%s264 + $0x9ec] sm:$0xf]
      %v930 = vld [vmem:[%s264 + $0x9f0] sm:$0xf]
      %v931 = vld [vmem:[%s264 + $0x9f4] sm:$0xf]
      %v932 = vld [vmem:[%s264 + $0x9f8] sm:$0xf]
      %v933 = vld [vmem:[%s264 + $0x9fc] sm:$0xf]
      %v934 = vld [vmem:[%s264 + $0xa00] sm:$0xf]
      %v935 = vld [vmem:[%s264 + $0xa04] sm:$0xf]
      %v936 = vld [vmem:[%s264 + $0xa08] sm:$0xf]
      %v937 = vld [vmem:[%s264 + $0xa0c] sm:$0xf]
      %v938 = vld [vmem:[%s264 + $0xa10] sm:$0xf]
      %v939 = vld [vmem:[%s264 + $0xa14] sm:$0xf]
      %v940 = vld [vmem:[%s264 + $0xa18] sm:$0xf]
      %v941 = vld [vmem:[%s264 + $0xa1c] sm:$0xf]
      %v942 = vld [vmem:[%s264 + $0xa20] sm:$0xf]
      %v943 = vld [vmem:[%s264 + $0xa24] sm:$0xf]
      %v944 = vld [vmem:[%s264 + $0xa28] sm:$0xf]
      %v945 = vld [vmem:[%s264 + $0xa2c] sm:$0xf]
      %v946 = vld [vmem:[%s264 + $0xa30] sm:$0xf]
      %v947 = vld [vmem:[%s264 + $0xa34] sm:$0xf]
      %v948 = vld [vmem:[%s264 + $0xa38] sm:$0xf]
      %v949 = vld [vmem:[%s264 + $0xa3c] sm:$0xf]
      %v950 = vld [vmem:[%s264 + $0xa40] sm:$0xf]
      %v951 = vld [vmem:[%s264 + $0xa44] sm:$0xf]
      %v952 = vld [vmem:[%s264 + $0xa48] sm:$0xf]
      %v953 = vld [vmem:[%s264 + $0xa4c] sm:$0xf]
      %v954 = vld [vmem:[%s264 + $0xa50] sm:$0xf]
      %v955 = vld [vmem:[%s264 + $0xa54] sm:$0xf]
      %v956 = vld [vmem:[%s264 + $0xa58] sm:$0xf]
      %v957 = vld [vmem:[%s264 + $0xa5c] sm:$0xf]
      %v958 = vld [vmem:[%s264 + $0xa60] sm:$0xf]
      %v959 = vld [vmem:[%s264 + $0xa64] sm:$0xf]
      %v960 = vld [vmem:[%s264 + $0xa68] sm:$0xf]
      %v961 = vld [vmem:[%s264 + $0xa6c] sm:$0xf]
      %v962 = vld [vmem:[%s264 + $0xa70] sm:$0xf]
      %v963 = vld [vmem:[%s264 + $0xa74] sm:$0xf]
      %v964 = vld [vmem:[%s264 + $0xa78] sm:$0xf]
      %v965 = vld [vmem:[%s264 + $0xa7c] sm:$0xf]
      %v966 = vld [vmem:[%s264 + $0xa80] sm:$0xf]
      %v967 = vld [vmem:[%s264 + $0xa84] sm:$0xf]
      %v968 = vld [vmem:[%s264 + $0xa88] sm:$0xf]
      %v969 = vld [vmem:[%s264 + $0xa8c] sm:$0xf]
      %v970 = vld [vmem:[%s264 + $0xa90] sm:$0xf]
      %v971 = vld [vmem:[%s264 + $0xa94] sm:$0xf]
      %v972 = vld [vmem:[%s264 + $0xa98] sm:$0xf]
      %v973 = vld [vmem:[%s264 + $0xa9c] sm:$0xf]
      %v974 = vld [vmem:[%s264 + $0xaa0] sm:$0xf]
      %v975 = vld [vmem:[%s264 + $0xaa4] sm:$0xf]
      %v976 = vld [vmem:[%s264 + $0xaa8] sm:$0xf]
      %v977 = vld [vmem:[%s264 + $0xaac] sm:$0xf]
      %v978 = vld [vmem:[%s264 + $0xab0] sm:$0xf]
      %v979 = vld [vmem:[%s264 + $0xab4] sm:$0xf]
      %v980 = vld [vmem:[%s264 + $0xab8] sm:$0xf]
      %v981 = vld [vmem:[%s264 + $0xabc] sm:$0xf]
      %v982 = vld [vmem:[%s264 + $0xac0] sm:$0xf]
      %v983 = vld [vmem:[%s264 + $0xac4] sm:$0xf]
      %v984 = vld [vmem:[%s264 + $0xac8] sm:$0xf]
      %v985 = vld [vmem:[%s264 + $0xacc] sm:$0xf]
      %v986 = vld [vmem:[%s264 + $0xad0] sm:$0xf]
      %v987 = vld [vmem:[%s264 + $0xad4] sm:$0xf]
      %v988 = vld [vmem:[%s264 + $0xad8] sm:$0xf]
      %v989 = vld [vmem:[%s264 + $0xadc] sm:$0xf]
      %v990 = vld [vmem:[%s264 + $0xae0] sm:$0xf]
      %v991 = vld [vmem:[%s264 + $0xae4] sm:$0xf]
      %v992 = vld [vmem:[%s264 + $0xae8] sm:$0xf]
      %v993 = vld [vmem:[%s264 + $0xaec] sm:$0xf]
      %v994 = vld [vmem:[%s264 + $0xaf0] sm:$0xf]
      %v995 = vld [vmem:[%s264 + $0xaf4] sm:$0xf]
      %v996 = vld [vmem:[%s264 + $0xaf8] sm:$0xf]
      %v997 = vld [vmem:[%s264 + $0xafc] sm:$0xf]
      %v998 = vld [vmem:[%s264 + $0xb00] sm:$0xf]
      %v999 = vld [vmem:[%s264 + $0xb04] sm:$0xf]
      %v1000 = vld [vmem:[%s264 + $0xb08] sm:$0xf]
      %v1001 = vld [vmem:[%s264 + $0xb0c] sm:$0xf]
      %v1002 = vld [vmem:[%s264 + $0xb10] sm:$0xf]
      %v1003 = vld [vmem:[%s264 + $0xb14] sm:$0xf]
      %v1004 = vld [vmem:[%s264 + $0xb18] sm:$0xf]
      %v1005 = vld [vmem:[%s264 + $0xb1c] sm:$0xf]
      %v1006 = vld [vmem:[%s264 + $0xb20] sm:$0xf]
      %v1007 = vld [vmem:[%s264 + $0xb24] sm:$0xf]
      %v1008 = vld [vmem:[%s264 + $0xb28] sm:$0xf]
      %v1009 = vld [vmem:[%s264 + $0xb2c] sm:$0xf]
      %v1010 = vld [vmem:[%s264 + $0xb30] sm:$0xf]
      %v1011 = vld [vmem:[%s264 + $0xb34] sm:$0xf]
      %v1012 = vld [vmem:[%s264 + $0xb38] sm:$0xf]
      %v1013 = vld [vmem:[%s264 + $0xb3c] sm:$0xf]
      %v1014 = vld [vmem:[%s264 + $0xb40] sm:$0xf]
      %v1015 = vld [vmem:[%s264 + $0xb44] sm:$0xf]
      %v1016 = vld [vmem:[%s264 + $0xb48] sm:$0xf]
      %v1017 = vld [vmem:[%s264 + $0xb4c] sm:$0xf]
      %v1018 = vld [vmem:[%s264 + $0xb50] sm:$0xf]
      %v1019 = vld [vmem:[%s264 + $0xb54] sm:$0xf]
      %v1020 = vld [vmem:[%s264 + $0xb58] sm:$0xf]
      %v1021 = vld [vmem:[%s264 + $0xb5c] sm:$0xf]
      %v1022 = vld [vmem:[%s264 + $0xb60] sm:$0xf]
      %v1023 = vld [vmem:[%s264 + $0xb64] sm:$0xf]
      %v1024 = vld [vmem:[%s264 + $0xb68] sm:$0xf]
      %v1025 = vld [vmem:[%s264 + $0xb6c] sm:$0xf]
      %v1026 = vld [vmem:[%s264 + $0xb70] sm:$0xf]
      %v1027 = vld [vmem:[%s264 + $0xb74] sm:$0xf]
      %v1028 = vld [vmem:[%s264 + $0xb78] sm:$0xf]
      %v1029 = vld [vmem:[%s264 + $0xb7c] sm:$0xf]
      %v1030 = vld [vmem:[%s264 + $0xb80] sm:$0xf]
      %v1031 = vld [vmem:[%s264 + $0xb84] sm:$0xf]
      %v1032 = vld [vmem:[%s264 + $0xb88] sm:$0xf]
      %v1033 = vld [vmem:[%s264 + $0xb8c] sm:$0xf]
      %v1034 = vld [vmem:[%s264 + $0xb90] sm:$0xf]
      %v1035 = vld [vmem:[%s264 + $0xb94] sm:$0xf]
      %v1036 = vld [vmem:[%s264 + $0xb98] sm:$0xf]
      %v1037 = vld [vmem:[%s264 + $0xb9c] sm:$0xf]
      %v1038 = vld [vmem:[%s264 + $0xba0] sm:$0xf]
      %v1039 = vld [vmem:[%s264 + $0xba4] sm:$0xf]
      %v1040 = vld [vmem:[%s264 + $0xba8] sm:$0xf]
      %v1041 = vld [vmem:[%s264 + $0xbac] sm:$0xf]
      %v1042 = vld [vmem:[%s264 + $0xbb0] sm:$0xf]
      %v1043 = vld [vmem:[%s264 + $0xbb4] sm:$0xf]
      %v1044 = vld [vmem:[%s264 + $0xbb8] sm:$0xf]
      %v1045 = vld [vmem:[%s264 + $0xbbc] sm:$0xf]
      %v1046 = vld [vmem:[%s264 + $0xbc0] sm:$0xf]
      %v1047 = vld [vmem:[%s264 + $0xbc4] sm:$0xf]
      %v1048 = vld [vmem:[%s264 + $0xbc8] sm:$0xf]
      %v1049 = vld [vmem:[%s264 + $0xbcc] sm:$0xf]
      %v1050 = vld [vmem:[%s264 + $0xbd0] sm:$0xf]
      %v1051 = vld [vmem:[%s264 + $0xbd4] sm:$0xf]
      %v1052 = vld [vmem:[%s264 + $0xbd8] sm:$0xf]
      %v1053 = vld [vmem:[%s264 + $0xbdc] sm:$0xf]
      %v1054 = vld [vmem:[%s264 + $0xbe0] sm:$0xf]
      %v1055 = vld [vmem:[%s264 + $0xbe4] sm:$0xf]
      %v1056 = vld [vmem:[%s264 + $0xbe8] sm:$0xf]
      %v1057 = vld [vmem:[%s264 + $0xbec] sm:$0xf]
      %v1058 = vld [vmem:[%s264 + $0xbf0] sm:$0xf]
      %v1059 = vld [vmem:[%s264 + $0xbf4] sm:$0xf]
      %v1060 = vld [vmem:[%s264 + $0xbf8] sm:$0xf]
      %v1061 = vld [vmem:[%s264 + $0xbfc] sm:$0xf]
      %v1062 = vld [vmem:[%s264 + $0xc00] sm:$0xf]
      %v1063 = vld [vmem:[%s264 + $0xc04] sm:$0xf]
      %v1064 = vld [vmem:[%s264 + $0xc08] sm:$0xf]
      %v1065 = vld [vmem:[%s264 + $0xc0c] sm:$0xf]
      %v1066 = vld [vmem:[%s264 + $0xc10] sm:$0xf]
      %v1067 = vld [vmem:[%s264 + $0xc14] sm:$0xf]
      %v1068 = vld [vmem:[%s264 + $0xc18] sm:$0xf]
      %v1069 = vld [vmem:[%s264 + $0xc1c] sm:$0xf]
      %v1070 = vld [vmem:[%s264 + $0xc20] sm:$0xf]
      %v1071 = vld [vmem:[%s264 + $0xc24] sm:$0xf]
      %v1072 = vld [vmem:[%s264 + $0xc28] sm:$0xf]
      %v1073 = vld [vmem:[%s264 + $0xc2c] sm:$0xf]
      %v1074 = vld [vmem:[%s264 + $0xc30] sm:$0xf]
      %v1075 = vld [vmem:[%s264 + $0xc34] sm:$0xf]
      %v1076 = vld [vmem:[%s264 + $0xc38] sm:$0xf]
      %v1077 = vld [vmem:[%s264 + $0xc3c] sm:$0xf]
      %v1078 = vld [vmem:[%s264 + $0xc40] sm:$0xf]
      %v1079 = vld [vmem:[%s264 + $0xc44] sm:$0xf]
      %v1080 = vld [vmem:[%s264 + $0xc48] sm:$0xf]
      %v1081 = vld [vmem:[%s264 + $0xc4c] sm:$0xf]
      %v1082 = vld [vmem:[%s264 + $0xc50] sm:$0xf]
      %v1083 = vld [vmem:[%s264 + $0xc54] sm:$0xf]
      %v1084 = vld [vmem:[%s264 + $0xc58] sm:$0xf]
      %v1085 = vld [vmem:[%s264 + $0xc5c] sm:$0xf]
      %v1086 = vld [vmem:[%s264 + $0xc60] sm:$0xf]
      %v1087 = vld [vmem:[%s264 + $0xc64] sm:$0xf]
      %v1088 = vld [vmem:[%s264 + $0xc68] sm:$0xf]
      %v1089 = vld [vmem:[%s264 + $0xc6c] sm:$0xf]
      %v1090 = vld [vmem:[%s264 + $0xc70] sm:$0xf]
      %v1091 = vld [vmem:[%s264 + $0xc74] sm:$0xf]
      %v1092 = vld [vmem:[%s264 + $0xc78] sm:$0xf]
      %v1093 = vld [vmem:[%s264 + $0xc7c] sm:$0xf]
      %v1094 = vld [vmem:[%s264 + $0xc80] sm:$0xf]
      %v1095 = vld [vmem:[%s264 + $0xc84] sm:$0xf]
      %v1096 = vld [vmem:[%s264 + $0xc88] sm:$0xf]
      %v1097 = vld [vmem:[%s264 + $0xc8c] sm:$0xf]
      %v1098 = vld [vmem:[%s264 + $0xc90] sm:$0xf]
      %v1099 = vld [vmem:[%s264 + $0xc94] sm:$0xf]
      %v1100 = vld [vmem:[%s264 + $0xc98] sm:$0xf]
      %v1101 = vld [vmem:[%s264 + $0xc9c] sm:$0xf]
      %v1102 = vld [vmem:[%s264 + $0xca0] sm:$0xf]
      %v1103 = vld [vmem:[%s264 + $0xca4] sm:$0xf]
      %v1104 = vld [vmem:[%s264 + $0xca8] sm:$0xf]
      %v1105 = vld [vmem:[%s264 + $0xcac] sm:$0xf]
      %v1106 = vld [vmem:[%s264 + $0xcb0] sm:$0xf]
      %v1107 = vld [vmem:[%s264 + $0xcb4] sm:$0xf]
      %v1108 = vld [vmem:[%s264 + $0xcb8] sm:$0xf]
      %v1109 = vld [vmem:[%s264 + $0xcbc] sm:$0xf]
      %v1110 = vld [vmem:[%s264 + $0xcc0] sm:$0xf]
      %v1111 = vld [vmem:[%s264 + $0xcc4] sm:$0xf]
      %v1112 = vld [vmem:[%s264 + $0xcc8] sm:$0xf]
      %v1113 = vld [vmem:[%s264 + $0xccc] sm:$0xf]
      %v1114 = vld [vmem:[%s264 + $0xcd0] sm:$0xf]
      %v1115 = vld [vmem:[%s264 + $0xcd4] sm:$0xf]
      %v1116 = vld [vmem:[%s264 + $0xcd8] sm:$0xf]
      %v1117 = vld [vmem:[%s264 + $0xcdc] sm:$0xf]
      %v1118 = vld [vmem:[%s264 + $0xce0] sm:$0xf]
      %v1119 = vld [vmem:[%s264 + $0xce4] sm:$0xf]
      %v1120 = vld [vmem:[%s264 + $0xce8] sm:$0xf]
      %v1121 = vld [vmem:[%s264 + $0xcec] sm:$0xf]
      %v1122 = vld [vmem:[%s264 + $0xcf0] sm:$0xf]
      %v1123 = vld [vmem:[%s264 + $0xcf4] sm:$0xf]
      %v1124 = vld [vmem:[%s264 + $0xcf8] sm:$0xf]
      %v1125 = vld [vmem:[%s264 + $0xcfc] sm:$0xf]
      %v1126 = vld [vmem:[%s264 + $0xd00] sm:$0xf]
      %v1127 = vld [vmem:[%s264 + $0xd04] sm:$0xf]
      %v1128 = vld [vmem:[%s264 + $0xd08] sm:$0xf]
      %v1129 = vld [vmem:[%s264 + $0xd0c] sm:$0xf]
      %v1130 = vld [vmem:[%s264 + $0xd10] sm:$0xf]
      %v1131 = vld [vmem:[%s264 + $0xd14] sm:$0xf]
      %v1132 = vld [vmem:[%s264 + $0xd18] sm:$0xf]
      %v1133 = vld [vmem:[%s264 + $0xd1c] sm:$0xf]
      %v1134 = vld [vmem:[%s264 + $0xd20] sm:$0xf]
      %v1135 = vld [vmem:[%s264 + $0xd24] sm:$0xf]
      %v1136 = vld [vmem:[%s264 + $0xd28] sm:$0xf]
      %v1137 = vld [vmem:[%s264 + $0xd2c] sm:$0xf]
      %v1138 = vld [vmem:[%s264 + $0xd30] sm:$0xf]
      %v1139 = vld [vmem:[%s264 + $0xd34] sm:$0xf]
      %v1140 = vld [vmem:[%s264 + $0xd38] sm:$0xf]
      %v1141 = vld [vmem:[%s264 + $0xd3c] sm:$0xf]
      %v1142 = vld [vmem:[%s264 + $0xd40] sm:$0xf]
      %v1143 = vld [vmem:[%s264 + $0xd44] sm:$0xf]
      %v1144 = vld [vmem:[%s264 + $0xd48] sm:$0xf]
      %v1145 = vld [vmem:[%s264 + $0xd4c] sm:$0xf]
      %v1146 = vld [vmem:[%s264 + $0xd50] sm:$0xf]
      %v1147 = vld [vmem:[%s264 + $0xd54] sm:$0xf]
      %v1148 = vld [vmem:[%s264 + $0xd58] sm:$0xf]
      %v1149 = vld [vmem:[%s264 + $0xd5c] sm:$0xf]
      %v1150 = vld [vmem:[%s264 + $0xd60] sm:$0xf]
      %v1151 = vld [vmem:[%s264 + $0xd64] sm:$0xf]
      %v1152 = vld [vmem:[%s264 + $0xd68] sm:$0xf]
      %v1153 = vld [vmem:[%s264 + $0xd6c] sm:$0xf]
      %v1154 = vld [vmem:[%s264 + $0xd70] sm:$0xf]
      %v1155 = vld [vmem:[%s264 + $0xd74] sm:$0xf]
      %v1156 = vld [vmem:[%s264 + $0xd78] sm:$0xf]
      %v1157 = vld [vmem:[%s264 + $0xd7c] sm:$0xf]
      %v1158 = vld [vmem:[%s264 + $0xd80] sm:$0xf]
      %v1159 = vld [vmem:[%s264 + $0xd84] sm:$0xf]
      %v1160 = vld [vmem:[%s264 + $0xd88] sm:$0xf]
      %v1161 = vld [vmem:[%s264 + $0xd8c] sm:$0xf]
      %v1162 = vld [vmem:[%s264 + $0xd90] sm:$0xf]
      %v1163 = vld [vmem:[%s264 + $0xd94] sm:$0xf]
      %v1164 = vld [vmem:[%s264 + $0xd98] sm:$0xf]
      %v1165 = vld [vmem:[%s264 + $0xd9c] sm:$0xf]
      %v1166 = vld [vmem:[%s264 + $0xda0] sm:$0xf]
      %v1167 = vld [vmem:[%s264 + $0xda4] sm:$0xf]
      %v1168 = vld [vmem:[%s264 + $0xda8] sm:$0xf]
      %v1169 = vld [vmem:[%s264 + $0xdac] sm:$0xf]
      %v1170 = vld [vmem:[%s264 + $0xdb0] sm:$0xf]
      %v1171 = vld [vmem:[%s264 + $0xdb4] sm:$0xf]
      %v1172 = vld [vmem:[%s264 + $0xdb8] sm:$0xf]
      %v1173 = vld [vmem:[%s264 + $0xdbc] sm:$0xf]
      %v1174 = vld [vmem:[%s264 + $0xdc0] sm:$0xf]
      %v1175 = vld [vmem:[%s264 + $0xdc4] sm:$0xf]
      %v1176 = vld [vmem:[%s264 + $0xdc8] sm:$0xf]
      %v1177 = vld [vmem:[%s264 + $0xdcc] sm:$0xf]
      %v1178 = vld [vmem:[%s264 + $0xdd0] sm:$0xf]
      %v1179 = vld [vmem:[%s264 + $0xdd4] sm:$0xf]
      %v1180 = vld [vmem:[%s264 + $0xdd8] sm:$0xf]
      %v1181 = vld [vmem:[%s264 + $0xddc] sm:$0xf]
      %v1182 = vld [vmem:[%s264 + $0xde0] sm:$0xf]
      %v1183 = vld [vmem:[%s264 + $0xde4] sm:$0xf]
      %v1184 = vld [vmem:[%s264 + $0xde8] sm:$0xf]
      %v1185 = vld [vmem:[%s264 + $0xdec] sm:$0xf]
      %v1186 = vld [vmem:[%s264 + $0xdf0] sm:$0xf]
      %v1187 = vld [vmem:[%s264 + $0xdf4] sm:$0xf]
      %v1188 = vld [vmem:[%s264 + $0xdf8] sm:$0xf]
      %v1189 = vld [vmem:[%s264 + $0xdfc] sm:$0xf]
      %v1190 = vld [vmem:[%s264 + $0xe00] sm:$0xf]
      %v1191 = vld [vmem:[%s264 + $0xe04] sm:$0xf]
      %v1192 = vld [vmem:[%s264 + $0xe08] sm:$0xf]
      %v1193 = vld [vmem:[%s264 + $0xe0c] sm:$0xf]
      %v1194 = vld [vmem:[%s264 + $0xe10] sm:$0xf]
      %v1195 = vld [vmem:[%s264 + $0xe14] sm:$0xf]
      %v1196 = vld [vmem:[%s264 + $0xe18] sm:$0xf]
      %v1197 = vld [vmem:[%s264 + $0xe1c] sm:$0xf]
      %v1198 = vld [vmem:[%s264 + $0xe20] sm:$0xf]
      %v1199 = vld [vmem:[%s264 + $0xe24] sm:$0xf]
      %v1200 = vld [vmem:[%s264 + $0xe28] sm:$0xf]
      %v1201 = vld [vmem:[%s264 + $0xe2c] sm:$0xf]
      %v1202 = vld [vmem:[%s264 + $0xe30] sm:$0xf]
      %v1203 = vld [vmem:[%s264 + $0xe34] sm:$0xf]
      %v1204 = vld [vmem:[%s264 + $0xe38] sm:$0xf]
      %v1205 = vld [vmem:[%s264 + $0xe3c] sm:$0xf]
      %v1206 = vld [vmem:[%s264 + $0xe40] sm:$0xf]
      %v1207 = vld [vmem:[%s264 + $0xe44] sm:$0xf]
      %v1208 = vld [vmem:[%s264 + $0xe48] sm:$0xf]
      %v1209 = vld [vmem:[%s264 + $0xe4c] sm:$0xf]
      %v1210 = vld [vmem:[%s264 + $0xe50] sm:$0xf]
      %v1211 = vld [vmem:[%s264 + $0xe54] sm:$0xf]
      %v1212 = vld [vmem:[%s264 + $0xe58] sm:$0xf]
      %v1213 = vld [vmem:[%s264 + $0xe5c] sm:$0xf]
      %v1214 = vld [vmem:[%s264 + $0xe60] sm:$0xf]
      %v1215 = vld [vmem:[%s264 + $0xe64] sm:$0xf]
      %v1216 = vld [vmem:[%s264 + $0xe68] sm:$0xf]
      %v1217 = vld [vmem:[%s264 + $0xe6c] sm:$0xf]
      %v1218 = vld [vmem:[%s264 + $0xe70] sm:$0xf]
      %v1219 = vld [vmem:[%s264 + $0xe74] sm:$0xf]
      %v1220 = vld [vmem:[%s264 + $0xe78] sm:$0xf]
      %v1221 = vld [vmem:[%s264 + $0xe7c] sm:$0xf]
      %v1222 = vld [vmem:[%s264 + $0xe80] sm:$0xf]
      %v1223 = vld [vmem:[%s264 + $0xe84] sm:$0xf]
      %v1224 = vld [vmem:[%s264 + $0xe88] sm:$0xf]
      %v1225 = vld [vmem:[%s264 + $0xe8c] sm:$0xf]
      %v1226 = vld [vmem:[%s264 + $0xe90] sm:$0xf]
      %v1227 = vld [vmem:[%s264 + $0xe94] sm:$0xf]
      %v1228 = vld [vmem:[%s264 + $0xe98] sm:$0xf]
      %v1229 = vld [vmem:[%s264 + $0xe9c] sm:$0xf]
      %v1230 = vld [vmem:[%s264 + $0xea0] sm:$0xf]
      %v1231 = vld [vmem:[%s264 + $0xea4] sm:$0xf]
      %v1232 = vld [vmem:[%s264 + $0xea8] sm:$0xf]
      %v1233 = vld [vmem:[%s264 + $0xeac] sm:$0xf]
      %v1234 = vld [vmem:[%s264 + $0xeb0] sm:$0xf]
      %v1235 = vld [vmem:[%s264 + $0xeb4] sm:$0xf]
      %v1236 = vld [vmem:[%s264 + $0xeb8] sm:$0xf]
      %v1237 = vld [vmem:[%s264 + $0xebc] sm:$0xf]
      %v1238 = vld [vmem:[%s264 + $0xec0] sm:$0xf]
      %v1239 = vld [vmem:[%s264 + $0xec4] sm:$0xf]
      %v1240 = vld [vmem:[%s264 + $0xec8] sm:$0xf]
      %v1241 = vld [vmem:[%s264 + $0xecc] sm:$0xf]
      %v1242 = vld [vmem:[%s264 + $0xed0] sm:$0xf]
      %v1243 = vld [vmem:[%s264 + $0xed4] sm:$0xf]
      %v1244 = vld [vmem:[%s264 + $0xed8] sm:$0xf]
      %v1245 = vld [vmem:[%s264 + $0xedc] sm:$0xf]
      %v1246 = vld [vmem:[%s264 + $0xee0] sm:$0xf]
      %v1247 = vld [vmem:[%s264 + $0xee4] sm:$0xf]
      %v1248 = vld [vmem:[%s264 + $0xee8] sm:$0xf]
      %v1249 = vld [vmem:[%s264 + $0xeec] sm:$0xf]
      %v1250 = vld [vmem:[%s264 + $0xef0] sm:$0xf]
      %v1251 = vld [vmem:[%s264 + $0xef4] sm:$0xf]
      %v1252 = vld [vmem:[%s264 + $0xef8] sm:$0xf]
      %v1253 = vld [vmem:[%s264 + $0xefc] sm:$0xf]
      %v1254 = vld [vmem:[%s264 + $0xf00] sm:$0xf]
      %v1255 = vld [vmem:[%s264 + $0xf04] sm:$0xf]
      %v1256 = vld [vmem:[%s264 + $0xf08] sm:$0xf]
      %v1257 = vld [vmem:[%s264 + $0xf0c] sm:$0xf]
      %v1258 = vld [vmem:[%s264 + $0xf10] sm:$0xf]
      %v1259 = vld [vmem:[%s264 + $0xf14] sm:$0xf]
      %v1260 = vld [vmem:[%s264 + $0xf18] sm:$0xf]
      %v1261 = vld [vmem:[%s264 + $0xf1c] sm:$0xf]
      %v1262 = vld [vmem:[%s264 + $0xf20] sm:$0xf]
      %v1263 = vld [vmem:[%s264 + $0xf24] sm:$0xf]
      %v1264 = vld [vmem:[%s264 + $0xf28] sm:$0xf]
      %v1265 = vld [vmem:[%s264 + $0xf2c] sm:$0xf]
      %v1266 = vld [vmem:[%s264 + $0xf30] sm:$0xf]
      %v1267 = vld [vmem:[%s264 + $0xf34] sm:$0xf]
      %v1268 = vld [vmem:[%s264 + $0xf38] sm:$0xf]
      %v1269 = vld [vmem:[%s264 + $0xf3c] sm:$0xf]
      %v1270 = vld [vmem:[%s264 + $0xf40] sm:$0xf]
      %v1271 = vld [vmem:[%s264 + $0xf44] sm:$0xf]
      %v1272 = vld [vmem:[%s264 + $0xf48] sm:$0xf]
      %v1273 = vld [vmem:[%s264 + $0xf4c] sm:$0xf]
      %v1274 = vld [vmem:[%s264 + $0xf50] sm:$0xf]
      %v1275 = vld [vmem:[%s264 + $0xf54] sm:$0xf]
      %v1276 = vld [vmem:[%s264 + $0xf58] sm:$0xf]
      %v1277 = vld [vmem:[%s264 + $0xf5c] sm:$0xf]
      %v1278 = vld [vmem:[%s264 + $0xf60] sm:$0xf]
      %v1279 = vld [vmem:[%s264 + $0xf64] sm:$0xf]
      %v1280 = vld [vmem:[%s264 + $0xf68] sm:$0xf]
      %v1281 = vld [vmem:[%s264 + $0xf6c] sm:$0xf]
      %v1282 = vld [vmem:[%s264 + $0xf70] sm:$0xf]
      %v1283 = vld [vmem:[%s264 + $0xf74] sm:$0xf]
      %v1284 = vld [vmem:[%s264 + $0xf78] sm:$0xf]
      %v1285 = vld [vmem:[%s264 + $0xf7c] sm:$0xf]
      %v1286 = vld [vmem:[%s264 + $0xf80] sm:$0xf]
      %v1287 = vld [vmem:[%s264 + $0xf84] sm:$0xf]
      %v1288 = vld [vmem:[%s264 + $0xf88] sm:$0xf]
      %v1289 = vld [vmem:[%s264 + $0xf8c] sm:$0xf]
      %v1290 = vld [vmem:[%s264 + $0xf90] sm:$0xf]
      %v1291 = vld [vmem:[%s264 + $0xf94] sm:$0xf]
      %v1292 = vld [vmem:[%s264 + $0xf98] sm:$0xf]
      %v1293 = vld [vmem:[%s264 + $0xf9c] sm:$0xf]
      %v1294 = vld [vmem:[%s264 + $0xfa0] sm:$0xf]
      %v1295 = vld [vmem:[%s264 + $0xfa4] sm:$0xf]
      %v1296 = vld [vmem:[%s264 + $0xfa8] sm:$0xf]
      %v1297 = vld [vmem:[%s264 + $0xfac] sm:$0xf]
      %v1298 = vld [vmem:[%s264 + $0xfb0] sm:$0xf]
      %v1299 = vld [vmem:[%s264 + $0xfb4] sm:$0xf]
      %v1300 = vld [vmem:[%s264 + $0xfb8] sm:$0xf]
      %v1301 = vld [vmem:[%s264 + $0xfbc] sm:$0xf]
      %v1302 = vld [vmem:[%s264 + $0xfc0] sm:$0xf]
      %v1303 = vld [vmem:[%s264 + $0xfc4] sm:$0xf]
      %v1304 = vld [vmem:[%s264 + $0xfc8] sm:$0xf]
      %v1305 = vld [vmem:[%s264 + $0xfcc] sm:$0xf]
      %v1306 = vld [vmem:[%s264 + $0xfd0] sm:$0xf]
      %v1307 = vld [vmem:[%s264 + $0xfd4] sm:$0xf]
      %v1308 = vld [vmem:[%s264 + $0xfd8] sm:$0xf]
      %v1309 = vld [vmem:[%s264 + $0xfdc] sm:$0xf]
      %v1310 = vld [vmem:[%s264 + $0xfe0] sm:$0xf]
      %v1311 = vld [vmem:[%s264 + $0xfe4] sm:$0xf]
      %v1312 = vld [vmem:[%s264 + $0xfe8] sm:$0xf]
      %v1313 = vld [vmem:[%s264 + $0xfec] sm:$0xf]
      %v1314 = vld [vmem:[%s264 + $0xff0] sm:$0xf]
      %v1315 = vld [vmem:[%s264 + $0xff4] sm:$0xf]
      %v1316 = vld [vmem:[%s264 + $0xff8] sm:$0xf]
      %v1317 = vld [vmem:[%s264 + $0xffc] sm:$0xf]
      %v1326 = vcombine.high %v286, %v286
      %v1328 = vunpack.c.l.s4 1966171168
      %v1329 = vunpack.c.0.s8 %v1328
      %v1330 = vlaneseq
      %v1331 = vshrl.u32 %v1330, 7
      %v1332 = vsub.s32 %v1329, %v1331
      %v1333 = vrot.slane %v286, %v1332
      %v1335 = vunpack.c.l.s4 1966171168
      %v1336 = vunpack.c.0.s8 %v1335
      %v1337 = vlaneseq
      %v1338 = vshrl.u32 %v1337, 7
      %v1339 = vsub.s32 %v1336, %v1338
      %v1340 = vrot.slane %v1326, %v1339
      %v1341 = vcombine.high %v1333, %v1333
      %v1342 = vcombine.high %v1340, %v1340
      %v1344 = vunpack.c.l.s4 1966171168
      %v1345 = vunpack.c.0.s8 %v1344
      %v1346 = vlaneseq
      %v1347 = vshrl.u32 %v1346, 7
      %v1348 = vsub.s32 %v1345, %v1347
      %v1349 = vrot.slane %v1333, %v1348
      %v1351 = vunpack.c.l.s4 1966171168
      %v1352 = vunpack.c.0.s8 %v1351
      %v1353 = vlaneseq
      %v1354 = vshrl.u32 %v1353, 7
      %v1355 = vsub.s32 %v1352, %v1354
      %v1356 = vrot.slane %v1340, %v1355
      %v1358 = vunpack.c.l.s4 1966171168
      %v1359 = vunpack.c.0.s8 %v1358
      %v1360 = vlaneseq
      %v1361 = vshrl.u32 %v1360, 7
      %v1362 = vsub.s32 %v1359, %v1361
      %v1363 = vrot.slane %v1341, %v1362
      %v1365 = vunpack.c.l.s4 1966171168
      %v1366 = vunpack.c.0.s8 %v1365
      %v1367 = vlaneseq
      %v1368 = vshrl.u32 %v1367, 7
      %v1369 = vsub.s32 %v1366, %v1368
      %v1370 = vrot.slane %v1342, %v1369
      %v1371 = vcombine.high %v1349, %v1349
      %v1372 = vcombine.high %v1356, %v1356
      %v1373 = vcombine.high %v1363, %v1363
      %v1374 = vcombine.high %v1370, %v1370
      %v1375 = vcombine.high %v287, %v287
      %v1377 = vunpack.c.l.s4 1966171168
      %v1378 = vunpack.c.0.s8 %v1377
      %v1379 = vlaneseq
      %v1380 = vshrl.u32 %v1379, 7
      %v1381 = vsub.s32 %v1378, %v1380
      %v1382 = vrot.slane %v287, %v1381
      %v1384 = vunpack.c.l.s4 1966171168
      %v1385 = vunpack.c.0.s8 %v1384
      %v1386 = vlaneseq
      %v1387 = vshrl.u32 %v1386, 7
      %v1388 = vsub.s32 %v1385, %v1387
      %v1389 = vrot.slane %v1375, %v1388
      %v1390 = vcombine.high %v1382, %v1382
      %v1391 = vcombine.high %v1389, %v1389
      %v1393 = vunpack.c.l.s4 1966171168
      %v1394 = vunpack.c.0.s8 %v1393
      %v1395 = vlaneseq
      %v1396 = vshrl.u32 %v1395, 7
      %v1397 = vsub.s32 %v1394, %v1396
      %v1398 = vrot.slane %v1382, %v1397
      %v1400 = vunpack.c.l.s4 1966171168
      %v1401 = vunpack.c.0.s8 %v1400
      %v1402 = vlaneseq
      %v1403 = vshrl.u32 %v1402, 7
      %v1404 = vsub.s32 %v1401, %v1403
      %v1405 = vrot.slane %v1389, %v1404
      %v1407 = vunpack.c.l.s4 1966171168
      %v1408 = vunpack.c.0.s8 %v1407
      %v1409 = vlaneseq
      %v1410 = vshrl.u32 %v1409, 7
      %v1411 = vsub.s32 %v1408, %v1410
      %v1412 = vrot.slane %v1390, %v1411
      %v1414 = vunpack.c.l.s4 1966171168
      %v1415 = vunpack.c.0.s8 %v1414
      %v1416 = vlaneseq
      %v1417 = vshrl.u32 %v1416, 7
      %v1418 = vsub.s32 %v1415, %v1417
      %v1419 = vrot.slane %v1391, %v1418
      %v1420 = vcombine.high %v1398, %v1398
      %v1421 = vcombine.high %v1405, %v1405
      %v1422 = vcombine.high %v1412, %v1412
      %v1423 = vcombine.high %v1419, %v1419
      %v1424 = vcombine.high %v288, %v288
      %v1426 = vunpack.c.l.s4 1966171168
      %v1427 = vunpack.c.0.s8 %v1426
      %v1428 = vlaneseq
      %v1429 = vshrl.u32 %v1428, 7
      %v1430 = vsub.s32 %v1427, %v1429
      %v1431 = vrot.slane %v288, %v1430
      %v1433 = vunpack.c.l.s4 1966171168
      %v1434 = vunpack.c.0.s8 %v1433
      %v1435 = vlaneseq
      %v1436 = vshrl.u32 %v1435, 7
      %v1437 = vsub.s32 %v1434, %v1436
      %v1438 = vrot.slane %v1424, %v1437
      %v1439 = vcombine.high %v1431, %v1431
      %v1440 = vcombine.high %v1438, %v1438
      %v1442 = vunpack.c.l.s4 1966171168
      %v1443 = vunpack.c.0.s8 %v1442
      %v1444 = vlaneseq
      %v1445 = vshrl.u32 %v1444, 7
      %v1446 = vsub.s32 %v1443, %v1445
      %v1447 = vrot.slane %v1431, %v1446
      %v1449 = vunpack.c.l.s4 1966171168
      %v1450 = vunpack.c.0.s8 %v1449
      %v1451 = vlaneseq
      %v1452 = vshrl.u32 %v1451, 7
      %v1453 = vsub.s32 %v1450, %v1452
      %v1454 = vrot.slane %v1438, %v1453
      %v1456 = vunpack.c.l.s4 1966171168
      %v1457 = vunpack.c.0.s8 %v1456
      %v1458 = vlaneseq
      %v1459 = vshrl.u32 %v1458, 7
      %v1460 = vsub.s32 %v1457, %v1459
      %v1461 = vrot.slane %v1439, %v1460
      %v1463 = vunpack.c.l.s4 1966171168
      %v1464 = vunpack.c.0.s8 %v1463
      %v1465 = vlaneseq
      %v1466 = vshrl.u32 %v1465, 7
      %v1467 = vsub.s32 %v1464, %v1466
      %v1468 = vrot.slane %v1440, %v1467
      %v1469 = vcombine.high %v1447, %v1447
      %v1470 = vcombine.high %v1454, %v1454
      %v1471 = vcombine.high %v1461, %v1461
      %v1472 = vcombine.high %v1468, %v1468
      %v1473 = vcombine.high %v289, %v289
      %v1475 = vunpack.c.l.s4 1966171168
      %v1476 = vunpack.c.0.s8 %v1475
      %v1477 = vlaneseq
      %v1478 = vshrl.u32 %v1477, 7
      %v1479 = vsub.s32 %v1476, %v1478
      %v1480 = vrot.slane %v289, %v1479
      %v1482 = vunpack.c.l.s4 1966171168
      %v1483 = vunpack.c.0.s8 %v1482
      %v1484 = vlaneseq
      %v1485 = vshrl.u32 %v1484, 7
      %v1486 = vsub.s32 %v1483, %v1485
      %v1487 = vrot.slane %v1473, %v1486
      %v1488 = vcombine.high %v1480, %v1480
      %v1489 = vcombine.high %v1487, %v1487
      %v1491 = vunpack.c.l.s4 1966171168
      %v1492 = vunpack.c.0.s8 %v1491
      %v1493 = vlaneseq
      %v1494 = vshrl.u32 %v1493, 7
      %v1495 = vsub.s32 %v1492, %v1494
      %v1496 = vrot.slane %v1480, %v1495
      %v1498 = vunpack.c.l.s4 1966171168
      %v1499 = vunpack.c.0.s8 %v1498
      %v1500 = vlaneseq
      %v1501 = vshrl.u32 %v1500, 7
      %v1502 = vsub.s32 %v1499, %v1501
      %v1503 = vrot.slane %v1487, %v1502
      %v1505 = vunpack.c.l.s4 1966171168
      %v1506 = vunpack.c.0.s8 %v1505
      %v1507 = vlaneseq
      %v1508 = vshrl.u32 %v1507, 7
      %v1509 = vsub.s32 %v1506, %v1508
      %v1510 = vrot.slane %v1488, %v1509
      %v1512 = vunpack.c.l.s4 1966171168
      %v1513 = vunpack.c.0.s8 %v1512
      %v1514 = vlaneseq
      %v1515 = vshrl.u32 %v1514, 7
      %v1516 = vsub.s32 %v1513, %v1515
      %v1517 = vrot.slane %v1489, %v1516
      %v1518 = vcombine.high %v1496, %v1496
      %v1519 = vcombine.high %v1503, %v1503
      %v1520 = vcombine.high %v1510, %v1510
      %v1521 = vcombine.high %v1517, %v1517
      %v1522 = vcombine.high %v290, %v290
      %v1524 = vunpack.c.l.s4 1966171168
      %v1525 = vunpack.c.0.s8 %v1524
      %v1526 = vlaneseq
      %v1527 = vshrl.u32 %v1526, 7
      %v1528 = vsub.s32 %v1525, %v1527
      %v1529 = vrot.slane %v290, %v1528
      %v1531 = vunpack.c.l.s4 1966171168
      %v1532 = vunpack.c.0.s8 %v1531
      %v1533 = vlaneseq
      %v1534 = vshrl.u32 %v1533, 7
      %v1535 = vsub.s32 %v1532, %v1534
      %v1536 = vrot.slane %v1522, %v1535
      %v1537 = vcombine.high %v1529, %v1529
      %v1538 = vcombine.high %v1536, %v1536
      %v1540 = vunpack.c.l.s4 1966171168
      %v1541 = vunpack.c.0.s8 %v1540
      %v1542 = vlaneseq
      %v1543 = vshrl.u32 %v1542, 7
      %v1544 = vsub.s32 %v1541, %v1543
      %v1545 = vrot.slane %v1529, %v1544
      %v1547 = vunpack.c.l.s4 1966171168
      %v1548 = vunpack.c.0.s8 %v1547
      %v1549 = vlaneseq
      %v1550 = vshrl.u32 %v1549, 7
      %v1551 = vsub.s32 %v1548, %v1550
      %v1552 = vrot.slane %v1536, %v1551
      %v1554 = vunpack.c.l.s4 1966171168
      %v1555 = vunpack.c.0.s8 %v1554
      %v1556 = vlaneseq
      %v1557 = vshrl.u32 %v1556, 7
      %v1558 = vsub.s32 %v1555, %v1557
      %v1559 = vrot.slane %v1537, %v1558
      %v1561 = vunpack.c.l.s4 1966171168
      %v1562 = vunpack.c.0.s8 %v1561
      %v1563 = vlaneseq
      %v1564 = vshrl.u32 %v1563, 7
      %v1565 = vsub.s32 %v1562, %v1564
      %v1566 = vrot.slane %v1538, %v1565
      %v1567 = vcombine.high %v1545, %v1545
      %v1568 = vcombine.high %v1552, %v1552
      %v1569 = vcombine.high %v1559, %v1559
      %v1570 = vcombine.high %v1566, %v1566
      %v1571 = vcombine.high %v291, %v291
      %v1573 = vunpack.c.l.s4 1966171168
      %v1574 = vunpack.c.0.s8 %v1573
      %v1575 = vlaneseq
      %v1576 = vshrl.u32 %v1575, 7
      %v1577 = vsub.s32 %v1574, %v1576
      %v1578 = vrot.slane %v291, %v1577
      %v1580 = vunpack.c.l.s4 1966171168
      %v1581 = vunpack.c.0.s8 %v1580
      %v1582 = vlaneseq
      %v1583 = vshrl.u32 %v1582, 7
      %v1584 = vsub.s32 %v1581, %v1583
      %v1585 = vrot.slane %v1571, %v1584
      %v1586 = vcombine.high %v1578, %v1578
      %v1587 = vcombine.high %v1585, %v1585
      %v1589 = vunpack.c.l.s4 1966171168
      %v1590 = vunpack.c.0.s8 %v1589
      %v1591 = vlaneseq
      %v1592 = vshrl.u32 %v1591, 7
      %v1593 = vsub.s32 %v1590, %v1592
      %v1594 = vrot.slane %v1578, %v1593
      %v1596 = vunpack.c.l.s4 1966171168
      %v1597 = vunpack.c.0.s8 %v1596
      %v1598 = vlaneseq
      %v1599 = vshrl.u32 %v1598, 7
      %v1600 = vsub.s32 %v1597, %v1599
      %v1601 = vrot.slane %v1585, %v1600
      %v1603 = vunpack.c.l.s4 1966171168
      %v1604 = vunpack.c.0.s8 %v1603
      %v1605 = vlaneseq
      %v1606 = vshrl.u32 %v1605, 7
      %v1607 = vsub.s32 %v1604, %v1606
      %v1608 = vrot.slane %v1586, %v1607
      %v1610 = vunpack.c.l.s4 1966171168
      %v1611 = vunpack.c.0.s8 %v1610
      %v1612 = vlaneseq
      %v1613 = vshrl.u32 %v1612, 7
      %v1614 = vsub.s32 %v1611, %v1613
      %v1615 = vrot.slane %v1587, %v1614
      %v1616 = vcombine.high %v1594, %v1594
      %v1617 = vcombine.high %v1601, %v1601
      %v1618 = vcombine.high %v1608, %v1608
      %v1619 = vcombine.high %v1615, %v1615
      %v1620 = vcombine.high %v292, %v292
      %v1622 = vunpack.c.l.s4 1966171168
      %v1623 = vunpack.c.0.s8 %v1622
      %v1624 = vlaneseq
      %v1625 = vshrl.u32 %v1624, 7
      %v1626 = vsub.s32 %v1623, %v1625
      %v1627 = vrot.slane %v292, %v1626
      %v1629 = vunpack.c.l.s4 1966171168
      %v1630 = vunpack.c.0.s8 %v1629
      %v1631 = vlaneseq
      %v1632 = vshrl.u32 %v1631, 7
      %v1633 = vsub.s32 %v1630, %v1632
      %v1634 = vrot.slane %v1620, %v1633
      %v1635 = vcombine.high %v1627, %v1627
      %v1636 = vcombine.high %v1634, %v1634
      %v1638 = vunpack.c.l.s4 1966171168
      %v1639 = vunpack.c.0.s8 %v1638
      %v1640 = vlaneseq
      %v1641 = vshrl.u32 %v1640, 7
      %v1642 = vsub.s32 %v1639, %v1641
      %v1643 = vrot.slane %v1627, %v1642
      %v1645 = vunpack.c.l.s4 1966171168
      %v1646 = vunpack.c.0.s8 %v1645
      %v1647 = vlaneseq
      %v1648 = vshrl.u32 %v1647, 7
      %v1649 = vsub.s32 %v1646, %v1648
      %v1650 = vrot.slane %v1634, %v1649
      %v1652 = vunpack.c.l.s4 1966171168
      %v1653 = vunpack.c.0.s8 %v1652
      %v1654 = vlaneseq
      %v1655 = vshrl.u32 %v1654, 7
      %v1656 = vsub.s32 %v1653, %v1655
      %v1657 = vrot.slane %v1635, %v1656
      %v1659 = vunpack.c.l.s4 1966171168
      %v1660 = vunpack.c.0.s8 %v1659
      %v1661 = vlaneseq
      %v1662 = vshrl.u32 %v1661, 7
      %v1663 = vsub.s32 %v1660, %v1662
      %v1664 = vrot.slane %v1636, %v1663
      %v1665 = vcombine.high %v1643, %v1643
      %v1666 = vcombine.high %v1650, %v1650
      %v1667 = vcombine.high %v1657, %v1657
      %v1668 = vcombine.high %v1664, %v1664
      %v1669 = vcombine.high %v293, %v293
      %v1671 = vunpack.c.l.s4 1966171168
      %v1672 = vunpack.c.0.s8 %v1671
      %v1673 = vlaneseq
      %v1674 = vshrl.u32 %v1673, 7
      %v1675 = vsub.s32 %v1672, %v1674
      %v1676 = vrot.slane %v293, %v1675
      %v1678 = vunpack.c.l.s4 1966171168
      %v1679 = vunpack.c.0.s8 %v1678
      %v1680 = vlaneseq
      %v1681 = vshrl.u32 %v1680, 7
      %v1682 = vsub.s32 %v1679, %v1681
      %v1683 = vrot.slane %v1669, %v1682
      %v1684 = vcombine.high %v1676, %v1676
      %v1685 = vcombine.high %v1683, %v1683
      %v1687 = vunpack.c.l.s4 1966171168
      %v1688 = vunpack.c.0.s8 %v1687
      %v1689 = vlaneseq
      %v1690 = vshrl.u32 %v1689, 7
      %v1691 = vsub.s32 %v1688, %v1690
      %v1692 = vrot.slane %v1676, %v1691
      %v1694 = vunpack.c.l.s4 1966171168
      %v1695 = vunpack.c.0.s8 %v1694
      %v1696 = vlaneseq
      %v1697 = vshrl.u32 %v1696, 7
      %v1698 = vsub.s32 %v1695, %v1697
      %v1699 = vrot.slane %v1683, %v1698
      %v1701 = vunpack.c.l.s4 1966171168
      %v1702 = vunpack.c.0.s8 %v1701
      %v1703 = vlaneseq
      %v1704 = vshrl.u32 %v1703, 7
      %v1705 = vsub.s32 %v1702, %v1704
      %v1706 = vrot.slane %v1684, %v1705
      %v1708 = vunpack.c.l.s4 1966171168
      %v1709 = vunpack.c.0.s8 %v1708
      %v1710 = vlaneseq
      %v1711 = vshrl.u32 %v1710, 7
      %v1712 = vsub.s32 %v1709, %v1711
      %v1713 = vrot.slane %v1685, %v1712
      %v1714 = vcombine.high %v1692, %v1692
      %v1715 = vcombine.high %v1699, %v1699
      %v1716 = vcombine.high %v1706, %v1706
      %v1717 = vcombine.high %v1713, %v1713
      %v2806 = vunpack.c.l.b16 %v294
      %v2807 = vunpack.c.l.b16 %v295
      %v2808 = vunpack.c.l.b16 %v296
      %v2809 = vunpack.c.l.b16 %v297
      %v2810 = vunpack.c.l.b16 %v298
      %v2811 = vunpack.c.l.b16 %v299
      %v2812 = vunpack.c.l.b16 %v300
      %v2813 = vunpack.c.l.b16 %v301
      %v2814 = vunpack.c.l.b16 %v302
      %v2815 = vunpack.c.l.b16 %v303
      %v2816 = vunpack.c.l.b16 %v304
      %v2817 = vunpack.c.l.b16 %v305
      %v2818 = vunpack.c.l.b16 %v306
      %v2819 = vunpack.c.l.b16 %v307
      %v2820 = vunpack.c.l.b16 %v308
      %v2821 = vunpack.c.l.b16 %v309
      %v2822 = vunpack.c.l.b16 %v310
      %v2823 = vunpack.c.l.b16 %v311
      %v2824 = vunpack.c.l.b16 %v312
      %v2825 = vunpack.c.l.b16 %v313
      %v2826 = vunpack.c.l.b16 %v314
      %v2827 = vunpack.c.l.b16 %v315
      %v2828 = vunpack.c.l.b16 %v316
      %v2829 = vunpack.c.l.b16 %v317
      %v2830 = vunpack.c.l.b16 %v318
      %v2831 = vunpack.c.l.b16 %v319
      %v2832 = vunpack.c.l.b16 %v320
      %v2833 = vunpack.c.l.b16 %v321
      %v2834 = vunpack.c.l.b16 %v322
      %v2835 = vunpack.c.l.b16 %v323
      %v2836 = vunpack.c.l.b16 %v324
      %v2837 = vunpack.c.l.b16 %v325
      %v2838 = vunpack.c.l.b16 %v326
      %v2839 = vunpack.c.l.b16 %v327
      %v2840 = vunpack.c.l.b16 %v328
      %v2841 = vunpack.c.l.b16 %v329
      %v2842 = vunpack.c.l.b16 %v330
      %v2843 = vunpack.c.l.b16 %v331
      %v2844 = vunpack.c.l.b16 %v332
      %v2845 = vunpack.c.l.b16 %v333
      %v2846 = vunpack.c.l.b16 %v334
      %v2847 = vunpack.c.l.b16 %v335
      %v2848 = vunpack.c.l.b16 %v336
      %v2849 = vunpack.c.l.b16 %v337
      %v2850 = vunpack.c.l.b16 %v338
      %v2851 = vunpack.c.l.b16 %v339
      %v2852 = vunpack.c.l.b16 %v340
      %v2853 = vunpack.c.l.b16 %v341
      %v2854 = vunpack.c.l.b16 %v342
      %v2855 = vunpack.c.l.b16 %v343
      %v2856 = vunpack.c.l.b16 %v344
      %v2857 = vunpack.c.l.b16 %v345
      %v2858 = vunpack.c.l.b16 %v346
      %v2859 = vunpack.c.l.b16 %v347
      %v2860 = vunpack.c.l.b16 %v348
      %v2861 = vunpack.c.l.b16 %v349
      %v2862 = vunpack.c.l.b16 %v350
      %v2863 = vunpack.c.l.b16 %v351
      %v2864 = vunpack.c.l.b16 %v352
      %v2865 = vunpack.c.l.b16 %v353
      %v2866 = vunpack.c.l.b16 %v354
      %v2867 = vunpack.c.l.b16 %v355
      %v2868 = vunpack.c.l.b16 %v356
      %v2869 = vunpack.c.l.b16 %v357
      %v2870 = vunpack.c.l.b16 %v358
      %v2871 = vunpack.c.l.b16 %v359
      %v2872 = vunpack.c.l.b16 %v360
      %v2873 = vunpack.c.l.b16 %v361
      %v2874 = vunpack.c.l.b16 %v362
      %v2875 = vunpack.c.l.b16 %v363
      %v2876 = vunpack.c.l.b16 %v364
      %v2877 = vunpack.c.l.b16 %v365
      %v2878 = vunpack.c.l.b16 %v366
      %v2879 = vunpack.c.l.b16 %v367
      %v2880 = vunpack.c.l.b16 %v368
      %v2881 = vunpack.c.l.b16 %v369
      %v2882 = vunpack.c.l.b16 %v370
      %v2883 = vunpack.c.l.b16 %v371
      %v2884 = vunpack.c.l.b16 %v372
      %v2885 = vunpack.c.l.b16 %v373
      %v2886 = vunpack.c.l.b16 %v374
      %v2887 = vunpack.c.l.b16 %v375
      %v2888 = vunpack.c.l.b16 %v376
      %v2889 = vunpack.c.l.b16 %v377
      %v2890 = vunpack.c.l.b16 %v378
      %v2891 = vunpack.c.l.b16 %v379
      %v2892 = vunpack.c.l.b16 %v380
      %v2893 = vunpack.c.l.b16 %v381
      %v2894 = vunpack.c.l.b16 %v382
      %v2895 = vunpack.c.l.b16 %v383
      %v2896 = vunpack.c.l.b16 %v384
      %v2897 = vunpack.c.l.b16 %v385
      %v2898 = vunpack.c.l.b16 %v386
      %v2899 = vunpack.c.l.b16 %v387
      %v2900 = vunpack.c.l.b16 %v388
      %v2901 = vunpack.c.l.b16 %v389
      %v2902 = vunpack.c.l.b16 %v390
      %v2903 = vunpack.c.l.b16 %v391
      %v2904 = vunpack.c.l.b16 %v392
      %v2905 = vunpack.c.l.b16 %v393
      %v2906 = vunpack.c.l.b16 %v394
      %v2907 = vunpack.c.l.b16 %v395
      %v2908 = vunpack.c.l.b16 %v396
      %v2909 = vunpack.c.l.b16 %v397
      %v2910 = vunpack.c.l.b16 %v398
      %v2911 = vunpack.c.l.b16 %v399
      %v2912 = vunpack.c.l.b16 %v400
      %v2913 = vunpack.c.l.b16 %v401
      %v2914 = vunpack.c.l.b16 %v402
      %v2915 = vunpack.c.l.b16 %v403
      %v2916 = vunpack.c.l.b16 %v404
      %v2917 = vunpack.c.l.b16 %v405
      %v2918 = vunpack.c.l.b16 %v406
      %v2919 = vunpack.c.l.b16 %v407
      %v2920 = vunpack.c.l.b16 %v408
      %v2921 = vunpack.c.l.b16 %v409
      %v2922 = vunpack.c.l.b16 %v410
      %v2923 = vunpack.c.l.b16 %v411
      %v2924 = vunpack.c.l.b16 %v412
      %v2925 = vunpack.c.l.b16 %v413
      %v2926 = vunpack.c.l.b16 %v414
      %v2927 = vunpack.c.l.b16 %v415
      %v2928 = vunpack.c.l.b16 %v416
      %v2929 = vunpack.c.l.b16 %v417
      %v2930 = vunpack.c.l.b16 %v418
      %v2931 = vunpack.c.l.b16 %v419
      %v2932 = vunpack.c.l.b16 %v420
      %v2933 = vunpack.c.l.b16 %v421
      %v2934 = vunpack.c.l.b16 %v422
      %v2935 = vunpack.c.l.b16 %v423
      %v2936 = vunpack.c.l.b16 %v424
      %v2937 = vunpack.c.l.b16 %v425
      %v2938 = vunpack.c.l.b16 %v426
      %v2939 = vunpack.c.l.b16 %v427
      %v2940 = vunpack.c.l.b16 %v428
      %v2941 = vunpack.c.l.b16 %v429
      %v2942 = vunpack.c.l.b16 %v430
      %v2943 = vunpack.c.l.b16 %v431
      %v2944 = vunpack.c.l.b16 %v432
      %v2945 = vunpack.c.l.b16 %v433
      %v2946 = vunpack.c.l.b16 %v434
      %v2947 = vunpack.c.l.b16 %v435
      %v2948 = vunpack.c.l.b16 %v436
      %v2949 = vunpack.c.l.b16 %v437
      %v2950 = vunpack.c.l.b16 %v438
      %v2951 = vunpack.c.l.b16 %v439
      %v2952 = vunpack.c.l.b16 %v440
      %v2953 = vunpack.c.l.b16 %v441
      %v2954 = vunpack.c.l.b16 %v442
      %v2955 = vunpack.c.l.b16 %v443
      %v2956 = vunpack.c.l.b16 %v444
      %v2957 = vunpack.c.l.b16 %v445
      %v2958 = vunpack.c.l.b16 %v446
      %v2959 = vunpack.c.l.b16 %v447
      %v2960 = vunpack.c.l.b16 %v448
      %v2961 = vunpack.c.l.b16 %v449
      %v2962 = vunpack.c.l.b16 %v450
      %v2963 = vunpack.c.l.b16 %v451
      %v2964 = vunpack.c.l.b16 %v452
      %v2965 = vunpack.c.l.b16 %v453
      %v2966 = vunpack.c.l.b16 %v454
      %v2967 = vunpack.c.l.b16 %v455
      %v2968 = vunpack.c.l.b16 %v456
      %v2969 = vunpack.c.l.b16 %v457
      %v2970 = vunpack.c.l.b16 %v458
      %v2971 = vunpack.c.l.b16 %v459
      %v2972 = vunpack.c.l.b16 %v460
      %v2973 = vunpack.c.l.b16 %v461
      %v2974 = vunpack.c.l.b16 %v462
      %v2975 = vunpack.c.l.b16 %v463
      %v2976 = vunpack.c.l.b16 %v464
      %v2977 = vunpack.c.l.b16 %v465
      %v2978 = vunpack.c.l.b16 %v466
      %v2979 = vunpack.c.l.b16 %v467
      %v2980 = vunpack.c.l.b16 %v468
      %v2981 = vunpack.c.l.b16 %v469
      %v2982 = vunpack.c.l.b16 %v470
      %v2983 = vunpack.c.l.b16 %v471
      %v2984 = vunpack.c.l.b16 %v472
      %v2985 = vunpack.c.l.b16 %v473
      %v2986 = vunpack.c.l.b16 %v474
      %v2987 = vunpack.c.l.b16 %v475
      %v2988 = vunpack.c.l.b16 %v476
      %v2989 = vunpack.c.l.b16 %v477
      %v2990 = vunpack.c.l.b16 %v478
      %v2991 = vunpack.c.l.b16 %v479
      %v2992 = vunpack.c.l.b16 %v480
      %v2993 = vunpack.c.l.b16 %v481
      %v2994 = vunpack.c.l.b16 %v482
      %v2995 = vunpack.c.l.b16 %v483
      %v2996 = vunpack.c.l.b16 %v484
      %v2997 = vunpack.c.l.b16 %v485
      %v2998 = vunpack.c.l.b16 %v486
      %v2999 = vunpack.c.l.b16 %v487
      %v3000 = vunpack.c.l.b16 %v488
      %v3001 = vunpack.c.l.b16 %v489
      %v3002 = vunpack.c.l.b16 %v490
      %v3003 = vunpack.c.l.b16 %v491
      %v3004 = vunpack.c.l.b16 %v492
      %v3005 = vunpack.c.l.b16 %v493
      %v3006 = vunpack.c.l.b16 %v494
      %v3007 = vunpack.c.l.b16 %v495
      %v3008 = vunpack.c.l.b16 %v496
      %v3009 = vunpack.c.l.b16 %v497
      %v3010 = vunpack.c.l.b16 %v498
      %v3011 = vunpack.c.l.b16 %v499
      %v3012 = vunpack.c.l.b16 %v500
      %v3013 = vunpack.c.l.b16 %v501
      %v3014 = vunpack.c.l.b16 %v502
      %v3015 = vunpack.c.l.b16 %v503
      %v3016 = vunpack.c.l.b16 %v504
      %v3017 = vunpack.c.l.b16 %v505
      %v3018 = vunpack.c.l.b16 %v506
      %v3019 = vunpack.c.l.b16 %v507
      %v3020 = vunpack.c.l.b16 %v508
      %v3021 = vunpack.c.l.b16 %v509
      %v3022 = vunpack.c.l.b16 %v510
      %v3023 = vunpack.c.l.b16 %v511
      %v3024 = vunpack.c.l.b16 %v512
      %v3025 = vunpack.c.l.b16 %v513
      %v3026 = vunpack.c.l.b16 %v514
      %v3027 = vunpack.c.l.b16 %v515
      %v3028 = vunpack.c.l.b16 %v516
      %v3029 = vunpack.c.l.b16 %v517
      %v3030 = vunpack.c.l.b16 %v518
      %v3031 = vunpack.c.l.b16 %v519
      %v3032 = vunpack.c.l.b16 %v520
      %v3033 = vunpack.c.l.b16 %v521
      %v3034 = vunpack.c.l.b16 %v522
      %v3035 = vunpack.c.l.b16 %v523
      %v3036 = vunpack.c.l.b16 %v524
      %v3037 = vunpack.c.l.b16 %v525
      %v3038 = vunpack.c.l.b16 %v526
      %v3039 = vunpack.c.l.b16 %v527
      %v3040 = vunpack.c.l.b16 %v528
      %v3041 = vunpack.c.l.b16 %v529
      %v3042 = vunpack.c.l.b16 %v530
      %v3043 = vunpack.c.l.b16 %v531
      %v3044 = vunpack.c.l.b16 %v532
      %v3045 = vunpack.c.l.b16 %v533
      %v3046 = vunpack.c.l.b16 %v534
      %v3047 = vunpack.c.l.b16 %v535
      %v3048 = vunpack.c.l.b16 %v536
      %v3049 = vunpack.c.l.b16 %v537
      %v3050 = vunpack.c.l.b16 %v538
      %v3051 = vunpack.c.l.b16 %v539
      %v3052 = vunpack.c.l.b16 %v540
      %v3053 = vunpack.c.l.b16 %v541
      %v3054 = vunpack.c.l.b16 %v542
      %v3055 = vunpack.c.l.b16 %v543
      %v3056 = vunpack.c.l.b16 %v544
      %v3057 = vunpack.c.l.b16 %v545
      %v3058 = vunpack.c.l.b16 %v546
      %v3059 = vunpack.c.l.b16 %v547
      %v3060 = vunpack.c.l.b16 %v548
      %v3061 = vunpack.c.l.b16 %v549
      %v3062 = vunpack.c.l.b16 %v550
      %v3063 = vunpack.c.l.b16 %v551
      %v3064 = vunpack.c.l.b16 %v552
      %v3065 = vunpack.c.l.b16 %v553
      %v3066 = vunpack.c.l.b16 %v554
      %v3067 = vunpack.c.l.b16 %v555
      %v3068 = vunpack.c.l.b16 %v556
      %v3069 = vunpack.c.l.b16 %v557
      %v3070 = vunpack.c.l.b16 %v558
      %v3071 = vunpack.c.l.b16 %v559
      %v3072 = vunpack.c.l.b16 %v560
      %v3073 = vunpack.c.l.b16 %v561
      %v3074 = vunpack.c.l.b16 %v562
      %v3075 = vunpack.c.l.b16 %v563
      %v3076 = vunpack.c.l.b16 %v564
      %v3077 = vunpack.c.l.b16 %v565
      %v3078 = vunpack.c.l.b16 %v566
      %v3079 = vunpack.c.l.b16 %v567
      %v3080 = vunpack.c.l.b16 %v568
      %v3081 = vunpack.c.l.b16 %v569
      %v3082 = vunpack.c.l.b16 %v570
      %v3083 = vunpack.c.l.b16 %v571
      %v3084 = vunpack.c.l.b16 %v572
      %v3085 = vunpack.c.l.b16 %v573
      %v3086 = vunpack.c.l.b16 %v574
      %v3087 = vunpack.c.l.b16 %v575
      %v3088 = vunpack.c.l.b16 %v576
      %v3089 = vunpack.c.l.b16 %v577
      %v3090 = vunpack.c.l.b16 %v578
      %v3091 = vunpack.c.l.b16 %v579
      %v3092 = vunpack.c.l.b16 %v580
      %v3093 = vunpack.c.l.b16 %v581
      %v3094 = vunpack.c.l.b16 %v582
      %v3095 = vunpack.c.l.b16 %v583
      %v3096 = vunpack.c.l.b16 %v584
      %v3097 = vunpack.c.l.b16 %v585
      %v3098 = vunpack.c.l.b16 %v586
      %v3099 = vunpack.c.l.b16 %v587
      %v3100 = vunpack.c.l.b16 %v588
      %v3101 = vunpack.c.l.b16 %v589
      %v3102 = vunpack.c.l.b16 %v590
      %v3103 = vunpack.c.l.b16 %v591
      %v3104 = vunpack.c.l.b16 %v592
      %v3105 = vunpack.c.l.b16 %v593
      %v3106 = vunpack.c.l.b16 %v594
      %v3107 = vunpack.c.l.b16 %v595
      %v3108 = vunpack.c.l.b16 %v596
      %v3109 = vunpack.c.l.b16 %v597
      %v3110 = vunpack.c.l.b16 %v598
      %v3111 = vunpack.c.l.b16 %v599
      %v3112 = vunpack.c.l.b16 %v600
      %v3113 = vunpack.c.l.b16 %v601
      %v3114 = vunpack.c.l.b16 %v602
      %v3115 = vunpack.c.l.b16 %v603
      %v3116 = vunpack.c.l.b16 %v604
      %v3117 = vunpack.c.l.b16 %v605
      %v3118 = vunpack.c.l.b16 %v606
      %v3119 = vunpack.c.l.b16 %v607
      %v3120 = vunpack.c.l.b16 %v608
      %v3121 = vunpack.c.l.b16 %v609
      %v3122 = vunpack.c.l.b16 %v610
      %v3123 = vunpack.c.l.b16 %v611
      %v3124 = vunpack.c.l.b16 %v612
      %v3125 = vunpack.c.l.b16 %v613
      %v3126 = vunpack.c.l.b16 %v614
      %v3127 = vunpack.c.l.b16 %v615
      %v3128 = vunpack.c.l.b16 %v616
      %v3129 = vunpack.c.l.b16 %v617
      %v3130 = vunpack.c.l.b16 %v618
      %v3131 = vunpack.c.l.b16 %v619
      %v3132 = vunpack.c.l.b16 %v620
      %v3133 = vunpack.c.l.b16 %v621
      %v3134 = vunpack.c.l.b16 %v622
      %v3135 = vunpack.c.l.b16 %v623
      %v3136 = vunpack.c.l.b16 %v624
      %v3137 = vunpack.c.l.b16 %v625
      %v3138 = vunpack.c.l.b16 %v626
      %v3139 = vunpack.c.l.b16 %v627
      %v3140 = vunpack.c.l.b16 %v628
      %v3141 = vunpack.c.l.b16 %v629
      %v3142 = vunpack.c.l.b16 %v630
      %v3143 = vunpack.c.l.b16 %v631
      %v3144 = vunpack.c.l.b16 %v632
      %v3145 = vunpack.c.l.b16 %v633
      %v3146 = vunpack.c.l.b16 %v634
      %v3147 = vunpack.c.l.b16 %v635
      %v3148 = vunpack.c.l.b16 %v636
      %v3149 = vunpack.c.l.b16 %v637
      %v3150 = vunpack.c.l.b16 %v638
      %v3151 = vunpack.c.l.b16 %v639
      %v3152 = vunpack.c.l.b16 %v640
      %v3153 = vunpack.c.l.b16 %v641
      %v3154 = vunpack.c.l.b16 %v642
      %v3155 = vunpack.c.l.b16 %v643
      %v3156 = vunpack.c.l.b16 %v644
      %v3157 = vunpack.c.l.b16 %v645
      %v3158 = vunpack.c.l.b16 %v646
      %v3159 = vunpack.c.l.b16 %v647
      %v3160 = vunpack.c.l.b16 %v648
      %v3161 = vunpack.c.l.b16 %v649
      %v3162 = vunpack.c.l.b16 %v650
      %v3163 = vunpack.c.l.b16 %v651
      %v3164 = vunpack.c.l.b16 %v652
      %v3165 = vunpack.c.l.b16 %v653
      %v3166 = vunpack.c.l.b16 %v654
      %v3167 = vunpack.c.l.b16 %v655
      %v3168 = vunpack.c.l.b16 %v656
      %v3169 = vunpack.c.l.b16 %v657
      %v3170 = vunpack.c.l.b16 %v658
      %v3171 = vunpack.c.l.b16 %v659
      %v3172 = vunpack.c.l.b16 %v660
      %v3173 = vunpack.c.l.b16 %v661
      %v3174 = vunpack.c.l.b16 %v662
      %v3175 = vunpack.c.l.b16 %v663
      %v3176 = vunpack.c.l.b16 %v664
      %v3177 = vunpack.c.l.b16 %v665
      %v3178 = vunpack.c.l.b16 %v666
      %v3179 = vunpack.c.l.b16 %v667
      %v3180 = vunpack.c.l.b16 %v668
      %v3181 = vunpack.c.l.b16 %v669
      %v3182 = vunpack.c.l.b16 %v670
      %v3183 = vunpack.c.l.b16 %v671
      %v3184 = vunpack.c.l.b16 %v672
      %v3185 = vunpack.c.l.b16 %v673
      %v3186 = vunpack.c.l.b16 %v674
      %v3187 = vunpack.c.l.b16 %v675
      %v3188 = vunpack.c.l.b16 %v676
      %v3189 = vunpack.c.l.b16 %v677
      %v3190 = vunpack.c.l.b16 %v678
      %v3191 = vunpack.c.l.b16 %v679
      %v3192 = vunpack.c.l.b16 %v680
      %v3193 = vunpack.c.l.b16 %v681
      %v3194 = vunpack.c.l.b16 %v682
      %v3195 = vunpack.c.l.b16 %v683
      %v3196 = vunpack.c.l.b16 %v684
      %v3197 = vunpack.c.l.b16 %v685
      %v3198 = vunpack.c.l.b16 %v686
      %v3199 = vunpack.c.l.b16 %v687
      %v3200 = vunpack.c.l.b16 %v688
      %v3201 = vunpack.c.l.b16 %v689
      %v3202 = vunpack.c.l.b16 %v690
      %v3203 = vunpack.c.l.b16 %v691
      %v3204 = vunpack.c.l.b16 %v692
      %v3205 = vunpack.c.l.b16 %v693
      %v3206 = vunpack.c.l.b16 %v694
      %v3207 = vunpack.c.l.b16 %v695
      %v3208 = vunpack.c.l.b16 %v696
      %v3209 = vunpack.c.l.b16 %v697
      %v3210 = vunpack.c.l.b16 %v698
      %v3211 = vunpack.c.l.b16 %v699
      %v3212 = vunpack.c.l.b16 %v700
      %v3213 = vunpack.c.l.b16 %v701
      %v3214 = vunpack.c.l.b16 %v702
      %v3215 = vunpack.c.l.b16 %v703
      %v3216 = vunpack.c.l.b16 %v704
      %v3217 = vunpack.c.l.b16 %v705
      %v3218 = vunpack.c.l.b16 %v706
      %v3219 = vunpack.c.l.b16 %v707
      %v3220 = vunpack.c.l.b16 %v708
      %v3221 = vunpack.c.l.b16 %v709
      %v3222 = vunpack.c.l.b16 %v710
      %v3223 = vunpack.c.l.b16 %v711
      %v3224 = vunpack.c.l.b16 %v712
      %v3225 = vunpack.c.l.b16 %v713
      %v3226 = vunpack.c.l.b16 %v714
      %v3227 = vunpack.c.l.b16 %v715
      %v3228 = vunpack.c.l.b16 %v716
      %v3229 = vunpack.c.l.b16 %v717
      %v3230 = vunpack.c.l.b16 %v718
      %v3231 = vunpack.c.l.b16 %v719
      %v3232 = vunpack.c.l.b16 %v720
      %v3233 = vunpack.c.l.b16 %v721
      %v3234 = vunpack.c.l.b16 %v722
      %v3235 = vunpack.c.l.b16 %v723
      %v3236 = vunpack.c.l.b16 %v724
      %v3237 = vunpack.c.l.b16 %v725
      %v3238 = vunpack.c.l.b16 %v726
      %v3239 = vunpack.c.l.b16 %v727
      %v3240 = vunpack.c.l.b16 %v728
      %v3241 = vunpack.c.l.b16 %v729
      %v3242 = vunpack.c.l.b16 %v730
      %v3243 = vunpack.c.l.b16 %v731
      %v3244 = vunpack.c.l.b16 %v732
      %v3245 = vunpack.c.l.b16 %v733
      %v3246 = vunpack.c.l.b16 %v734
      %v3247 = vunpack.c.l.b16 %v735
      %v3248 = vunpack.c.l.b16 %v736
      %v3249 = vunpack.c.l.b16 %v737
      %v3250 = vunpack.c.l.b16 %v738
      %v3251 = vunpack.c.l.b16 %v739
      %v3252 = vunpack.c.l.b16 %v740
      %v3253 = vunpack.c.l.b16 %v741
      %v3254 = vunpack.c.l.b16 %v742
      %v3255 = vunpack.c.l.b16 %v743
      %v3256 = vunpack.c.l.b16 %v744
      %v3257 = vunpack.c.l.b16 %v745
      %v3258 = vunpack.c.l.b16 %v746
      %v3259 = vunpack.c.l.b16 %v747
      %v3260 = vunpack.c.l.b16 %v748
      %v3261 = vunpack.c.l.b16 %v749
      %v3262 = vunpack.c.l.b16 %v750
      %v3263 = vunpack.c.l.b16 %v751
      %v3264 = vunpack.c.l.b16 %v752
      %v3265 = vunpack.c.l.b16 %v753
      %v3266 = vunpack.c.l.b16 %v754
      %v3267 = vunpack.c.l.b16 %v755
      %v3268 = vunpack.c.l.b16 %v756
      %v3269 = vunpack.c.l.b16 %v757
      %v3270 = vunpack.c.l.b16 %v758
      %v3271 = vunpack.c.l.b16 %v759
      %v3272 = vunpack.c.l.b16 %v760
      %v3273 = vunpack.c.l.b16 %v761
      %v3274 = vunpack.c.l.b16 %v762
      %v3275 = vunpack.c.l.b16 %v763
      %v3276 = vunpack.c.l.b16 %v764
      %v3277 = vunpack.c.l.b16 %v765
      %v3278 = vunpack.c.l.b16 %v766
      %v3279 = vunpack.c.l.b16 %v767
      %v3280 = vunpack.c.l.b16 %v768
      %v3281 = vunpack.c.l.b16 %v769
      %v3282 = vunpack.c.l.b16 %v770
      %v3283 = vunpack.c.l.b16 %v771
      %v3284 = vunpack.c.l.b16 %v772
      %v3285 = vunpack.c.l.b16 %v773
      %v3286 = vunpack.c.l.b16 %v774
      %v3287 = vunpack.c.l.b16 %v775
      %v3288 = vunpack.c.l.b16 %v776
      %v3289 = vunpack.c.l.b16 %v777
      %v3290 = vunpack.c.l.b16 %v778
      %v3291 = vunpack.c.l.b16 %v779
      %v3292 = vunpack.c.l.b16 %v780
      %v3293 = vunpack.c.l.b16 %v781
      %v3294 = vunpack.c.l.b16 %v782
      %v3295 = vunpack.c.l.b16 %v783
      %v3296 = vunpack.c.l.b16 %v784
      %v3297 = vunpack.c.l.b16 %v785
      %v3298 = vunpack.c.l.b16 %v786
      %v3299 = vunpack.c.l.b16 %v787
      %v3300 = vunpack.c.l.b16 %v788
      %v3301 = vunpack.c.l.b16 %v789
      %v3302 = vunpack.c.l.b16 %v790
      %v3303 = vunpack.c.l.b16 %v791
      %v3304 = vunpack.c.l.b16 %v792
      %v3305 = vunpack.c.l.b16 %v793
      %v3306 = vunpack.c.l.b16 %v794
      %v3307 = vunpack.c.l.b16 %v795
      %v3308 = vunpack.c.l.b16 %v796
      %v3309 = vunpack.c.l.b16 %v797
      %v3310 = vunpack.c.l.b16 %v798
      %v3311 = vunpack.c.l.b16 %v799
      %v3312 = vunpack.c.l.b16 %v800
      %v3313 = vunpack.c.l.b16 %v801
      %v3314 = vunpack.c.l.b16 %v802
      %v3315 = vunpack.c.l.b16 %v803
      %v3316 = vunpack.c.l.b16 %v804
      %v3317 = vunpack.c.l.b16 %v805
      %v3318 = vunpack.c.l.b16 %v806
      %v3319 = vunpack.c.l.b16 %v807
      %v3320 = vunpack.c.l.b16 %v808
      %v3321 = vunpack.c.l.b16 %v809
      %v3322 = vunpack.c.l.b16 %v810
      %v3323 = vunpack.c.l.b16 %v811
      %v3324 = vunpack.c.l.b16 %v812
      %v3325 = vunpack.c.l.b16 %v813
      %v3326 = vunpack.c.l.b16 %v814
      %v3327 = vunpack.c.l.b16 %v815
      %v3328 = vunpack.c.l.b16 %v816
      %v3329 = vunpack.c.l.b16 %v817
      %v3330 = vunpack.c.l.b16 %v818
      %v3331 = vunpack.c.l.b16 %v819
      %v3332 = vunpack.c.l.b16 %v820
      %v3333 = vunpack.c.l.b16 %v821
      %v3334 = vunpack.c.l.b16 %v822
      %v3335 = vunpack.c.l.b16 %v823
      %v3336 = vunpack.c.l.b16 %v824
      %v3337 = vunpack.c.l.b16 %v825
      %v3338 = vunpack.c.l.b16 %v826
      %v3339 = vunpack.c.l.b16 %v827
      %v3340 = vunpack.c.l.b16 %v828
      %v3341 = vunpack.c.l.b16 %v829
      %v3342 = vunpack.c.l.b16 %v830
      %v3343 = vunpack.c.l.b16 %v831
      %v3344 = vunpack.c.l.b16 %v832
      %v3345 = vunpack.c.l.b16 %v833
      %v3346 = vunpack.c.l.b16 %v834
      %v3347 = vunpack.c.l.b16 %v835
      %v3348 = vunpack.c.l.b16 %v836
      %v3349 = vunpack.c.l.b16 %v837
      %v3350 = vunpack.c.l.b16 %v838
      %v3351 = vunpack.c.l.b16 %v839
      %v3352 = vunpack.c.l.b16 %v840
      %v3353 = vunpack.c.l.b16 %v841
      %v3354 = vunpack.c.l.b16 %v842
      %v3355 = vunpack.c.l.b16 %v843
      %v3356 = vunpack.c.l.b16 %v844
      %v3357 = vunpack.c.l.b16 %v845
      %v3358 = vunpack.c.l.b16 %v846
      %v3359 = vunpack.c.l.b16 %v847
      %v3360 = vunpack.c.l.b16 %v848
      %v3361 = vunpack.c.l.b16 %v849
      %v3362 = vunpack.c.l.b16 %v850
      %v3363 = vunpack.c.l.b16 %v851
      %v3364 = vunpack.c.l.b16 %v852
      %v3365 = vunpack.c.l.b16 %v853
      %v3366 = vunpack.c.l.b16 %v854
      %v3367 = vunpack.c.l.b16 %v855
      %v3368 = vunpack.c.l.b16 %v856
      %v3369 = vunpack.c.l.b16 %v857
      %v3370 = vunpack.c.l.b16 %v858
      %v3371 = vunpack.c.l.b16 %v859
      %v3372 = vunpack.c.l.b16 %v860
      %v3373 = vunpack.c.l.b16 %v861
      %v3374 = vunpack.c.l.b16 %v862
      %v3375 = vunpack.c.l.b16 %v863
      %v3376 = vunpack.c.l.b16 %v864
      %v3377 = vunpack.c.l.b16 %v865
      %v3378 = vunpack.c.l.b16 %v866
      %v3379 = vunpack.c.l.b16 %v867
      %v3380 = vunpack.c.l.b16 %v868
      %v3381 = vunpack.c.l.b16 %v869
      %v3382 = vunpack.c.l.b16 %v870
      %v3383 = vunpack.c.l.b16 %v871
      %v3384 = vunpack.c.l.b16 %v872
      %v3385 = vunpack.c.l.b16 %v873
      %v3386 = vunpack.c.l.b16 %v874
      %v3387 = vunpack.c.l.b16 %v875
      %v3388 = vunpack.c.l.b16 %v876
      %v3389 = vunpack.c.l.b16 %v877
      %v3390 = vunpack.c.l.b16 %v878
      %v3391 = vunpack.c.l.b16 %v879
      %v3392 = vunpack.c.l.b16 %v880
      %v3393 = vunpack.c.l.b16 %v881
      %v3394 = vunpack.c.l.b16 %v882
      %v3395 = vunpack.c.l.b16 %v883
      %v3396 = vunpack.c.l.b16 %v884
      %v3397 = vunpack.c.l.b16 %v885
      %v3398 = vunpack.c.l.b16 %v886
      %v3399 = vunpack.c.l.b16 %v887
      %v3400 = vunpack.c.l.b16 %v888
      %v3401 = vunpack.c.l.b16 %v889
      %v3402 = vunpack.c.l.b16 %v890
      %v3403 = vunpack.c.l.b16 %v891
      %v3404 = vunpack.c.l.b16 %v892
      %v3405 = vunpack.c.l.b16 %v893
      %v3406 = vunpack.c.l.b16 %v894
      %v3407 = vunpack.c.l.b16 %v895
      %v3408 = vunpack.c.l.b16 %v896
      %v3409 = vunpack.c.l.b16 %v897
      %v3410 = vunpack.c.l.b16 %v898
      %v3411 = vunpack.c.l.b16 %v899
      %v3412 = vunpack.c.l.b16 %v900
      %v3413 = vunpack.c.l.b16 %v901
      %v3414 = vunpack.c.l.b16 %v902
      %v3415 = vunpack.c.l.b16 %v903
      %v3416 = vunpack.c.l.b16 %v904
      %v3417 = vunpack.c.l.b16 %v905
      %v3418 = vunpack.c.l.b16 %v906
      %v3419 = vunpack.c.l.b16 %v907
      %v3420 = vunpack.c.l.b16 %v908
      %v3421 = vunpack.c.l.b16 %v909
      %v3422 = vunpack.c.l.b16 %v910
      %v3423 = vunpack.c.l.b16 %v911
      %v3424 = vunpack.c.l.b16 %v912
      %v3425 = vunpack.c.l.b16 %v913
      %v3426 = vunpack.c.l.b16 %v914
      %v3427 = vunpack.c.l.b16 %v915
      %v3428 = vunpack.c.l.b16 %v916
      %v3429 = vunpack.c.l.b16 %v917
      %v3430 = vunpack.c.l.b16 %v918
      %v3431 = vunpack.c.l.b16 %v919
      %v3432 = vunpack.c.l.b16 %v920
      %v3433 = vunpack.c.l.b16 %v921
      %v3434 = vunpack.c.l.b16 %v922
      %v3435 = vunpack.c.l.b16 %v923
      %v3436 = vunpack.c.l.b16 %v924
      %v3437 = vunpack.c.l.b16 %v925
      %v3438 = vunpack.c.l.b16 %v926
      %v3439 = vunpack.c.l.b16 %v927
      %v3440 = vunpack.c.l.b16 %v928
      %v3441 = vunpack.c.l.b16 %v929
      %v3442 = vunpack.c.l.b16 %v930
      %v3443 = vunpack.c.l.b16 %v931
      %v3444 = vunpack.c.l.b16 %v932
      %v3445 = vunpack.c.l.b16 %v933
      %v3446 = vunpack.c.l.b16 %v934
      %v3447 = vunpack.c.l.b16 %v935
      %v3448 = vunpack.c.l.b16 %v936
      %v3449 = vunpack.c.l.b16 %v937
      %v3450 = vunpack.c.l.b16 %v938
      %v3451 = vunpack.c.l.b16 %v939
      %v3452 = vunpack.c.l.b16 %v940
      %v3453 = vunpack.c.l.b16 %v941
      %v3454 = vunpack.c.l.b16 %v942
      %v3455 = vunpack.c.l.b16 %v943
      %v3456 = vunpack.c.l.b16 %v944
      %v3457 = vunpack.c.l.b16 %v945
      %v3458 = vunpack.c.l.b16 %v946
      %v3459 = vunpack.c.l.b16 %v947
      %v3460 = vunpack.c.l.b16 %v948
      %v3461 = vunpack.c.l.b16 %v949
      %v3462 = vunpack.c.l.b16 %v950
      %v3463 = vunpack.c.l.b16 %v951
      %v3464 = vunpack.c.l.b16 %v952
      %v3465 = vunpack.c.l.b16 %v953
      %v3466 = vunpack.c.l.b16 %v954
      %v3467 = vunpack.c.l.b16 %v955
      %v3468 = vunpack.c.l.b16 %v956
      %v3469 = vunpack.c.l.b16 %v957
      %v3470 = vunpack.c.l.b16 %v958
      %v3471 = vunpack.c.l.b16 %v959
      %v3472 = vunpack.c.l.b16 %v960
      %v3473 = vunpack.c.l.b16 %v961
      %v3474 = vunpack.c.l.b16 %v962
      %v3475 = vunpack.c.l.b16 %v963
      %v3476 = vunpack.c.l.b16 %v964
      %v3477 = vunpack.c.l.b16 %v965
      %v3478 = vunpack.c.l.b16 %v966
      %v3479 = vunpack.c.l.b16 %v967
      %v3480 = vunpack.c.l.b16 %v968
      %v3481 = vunpack.c.l.b16 %v969
      %v3482 = vunpack.c.l.b16 %v970
      %v3483 = vunpack.c.l.b16 %v971
      %v3484 = vunpack.c.l.b16 %v972
      %v3485 = vunpack.c.l.b16 %v973
      %v3486 = vunpack.c.l.b16 %v974
      %v3487 = vunpack.c.l.b16 %v975
      %v3488 = vunpack.c.l.b16 %v976
      %v3489 = vunpack.c.l.b16 %v977
      %v3490 = vunpack.c.l.b16 %v978
      %v3491 = vunpack.c.l.b16 %v979
      %v3492 = vunpack.c.l.b16 %v980
      %v3493 = vunpack.c.l.b16 %v981
      %v3494 = vunpack.c.l.b16 %v982
      %v3495 = vunpack.c.l.b16 %v983
      %v3496 = vunpack.c.l.b16 %v984
      %v3497 = vunpack.c.l.b16 %v985
      %v3498 = vunpack.c.l.b16 %v986
      %v3499 = vunpack.c.l.b16 %v987
      %v3500 = vunpack.c.l.b16 %v988
      %v3501 = vunpack.c.l.b16 %v989
      %v3502 = vunpack.c.l.b16 %v990
      %v3503 = vunpack.c.l.b16 %v991
      %v3504 = vunpack.c.l.b16 %v992
      %v3505 = vunpack.c.l.b16 %v993
      %v3506 = vunpack.c.l.b16 %v994
      %v3507 = vunpack.c.l.b16 %v995
      %v3508 = vunpack.c.l.b16 %v996
      %v3509 = vunpack.c.l.b16 %v997
      %v3510 = vunpack.c.l.b16 %v998
      %v3511 = vunpack.c.l.b16 %v999
      %v3512 = vunpack.c.l.b16 %v1000
      %v3513 = vunpack.c.l.b16 %v1001
      %v3514 = vunpack.c.l.b16 %v1002
      %v3515 = vunpack.c.l.b16 %v1003
      %v3516 = vunpack.c.l.b16 %v1004
      %v3517 = vunpack.c.l.b16 %v1005
      %v3518 = vunpack.c.l.b16 %v1006
      %v3519 = vunpack.c.l.b16 %v1007
      %v3520 = vunpack.c.l.b16 %v1008
      %v3521 = vunpack.c.l.b16 %v1009
      %v3522 = vunpack.c.l.b16 %v1010
      %v3523 = vunpack.c.l.b16 %v1011
      %v3524 = vunpack.c.l.b16 %v1012
      %v3525 = vunpack.c.l.b16 %v1013
      %v3526 = vunpack.c.l.b16 %v1014
      %v3527 = vunpack.c.l.b16 %v1015
      %v3528 = vunpack.c.l.b16 %v1016
      %v3529 = vunpack.c.l.b16 %v1017
      %v3530 = vunpack.c.l.b16 %v1018
      %v3531 = vunpack.c.l.b16 %v1019
      %v3532 = vunpack.c.l.b16 %v1020
      %v3533 = vunpack.c.l.b16 %v1021
      %v3534 = vunpack.c.l.b16 %v1022
      %v3535 = vunpack.c.l.b16 %v1023
      %v3536 = vunpack.c.l.b16 %v1024
      %v3537 = vunpack.c.l.b16 %v1025
      %v3538 = vunpack.c.l.b16 %v1026
      %v3539 = vunpack.c.l.b16 %v1027
      %v3540 = vunpack.c.l.b16 %v1028
      %v3541 = vunpack.c.l.b16 %v1029
      %v3542 = vunpack.c.l.b16 %v1030
      %v3543 = vunpack.c.l.b16 %v1031
      %v3544 = vunpack.c.l.b16 %v1032
      %v3545 = vunpack.c.l.b16 %v1033
      %v3546 = vunpack.c.l.b16 %v1034
      %v3547 = vunpack.c.l.b16 %v1035
      %v3548 = vunpack.c.l.b16 %v1036
      %v3549 = vunpack.c.l.b16 %v1037
      %v3550 = vunpack.c.l.b16 %v1038
      %v3551 = vunpack.c.l.b16 %v1039
      %v3552 = vunpack.c.l.b16 %v1040
      %v3553 = vunpack.c.l.b16 %v1041
      %v3554 = vunpack.c.l.b16 %v1042
      %v3555 = vunpack.c.l.b16 %v1043
      %v3556 = vunpack.c.l.b16 %v1044
      %v3557 = vunpack.c.l.b16 %v1045
      %v3558 = vunpack.c.l.b16 %v1046
      %v3559 = vunpack.c.l.b16 %v1047
      %v3560 = vunpack.c.l.b16 %v1048
      %v3561 = vunpack.c.l.b16 %v1049
      %v3562 = vunpack.c.l.b16 %v1050
      %v3563 = vunpack.c.l.b16 %v1051
      %v3564 = vunpack.c.l.b16 %v1052
      %v3565 = vunpack.c.l.b16 %v1053
      %v3566 = vunpack.c.l.b16 %v1054
      %v3567 = vunpack.c.l.b16 %v1055
      %v3568 = vunpack.c.l.b16 %v1056
      %v3569 = vunpack.c.l.b16 %v1057
      %v3570 = vunpack.c.l.b16 %v1058
      %v3571 = vunpack.c.l.b16 %v1059
      %v3572 = vunpack.c.l.b16 %v1060
      %v3573 = vunpack.c.l.b16 %v1061
      %v3574 = vunpack.c.l.b16 %v1062
      %v3575 = vunpack.c.l.b16 %v1063
      %v3576 = vunpack.c.l.b16 %v1064
      %v3577 = vunpack.c.l.b16 %v1065
      %v3578 = vunpack.c.l.b16 %v1066
      %v3579 = vunpack.c.l.b16 %v1067
      %v3580 = vunpack.c.l.b16 %v1068
      %v3581 = vunpack.c.l.b16 %v1069
      %v3582 = vunpack.c.l.b16 %v1070
      %v3583 = vunpack.c.l.b16 %v1071
      %v3584 = vunpack.c.l.b16 %v1072
      %v3585 = vunpack.c.l.b16 %v1073
      %v3586 = vunpack.c.l.b16 %v1074
      %v3587 = vunpack.c.l.b16 %v1075
      %v3588 = vunpack.c.l.b16 %v1076
      %v3589 = vunpack.c.l.b16 %v1077
      %v3590 = vunpack.c.l.b16 %v1078
      %v3591 = vunpack.c.l.b16 %v1079
      %v3592 = vunpack.c.l.b16 %v1080
      %v3593 = vunpack.c.l.b16 %v1081
      %v3594 = vunpack.c.l.b16 %v1082
      %v3595 = vunpack.c.l.b16 %v1083
      %v3596 = vunpack.c.l.b16 %v1084
      %v3597 = vunpack.c.l.b16 %v1085
      %v3598 = vunpack.c.l.b16 %v1086
      %v3599 = vunpack.c.l.b16 %v1087
      %v3600 = vunpack.c.l.b16 %v1088
      %v3601 = vunpack.c.l.b16 %v1089
      %v3602 = vunpack.c.l.b16 %v1090
      %v3603 = vunpack.c.l.b16 %v1091
      %v3604 = vunpack.c.l.b16 %v1092
      %v3605 = vunpack.c.l.b16 %v1093
      %v3606 = vunpack.c.l.b16 %v1094
      %v3607 = vunpack.c.l.b16 %v1095
      %v3608 = vunpack.c.l.b16 %v1096
      %v3609 = vunpack.c.l.b16 %v1097
      %v3610 = vunpack.c.l.b16 %v1098
      %v3611 = vunpack.c.l.b16 %v1099
      %v3612 = vunpack.c.l.b16 %v1100
      %v3613 = vunpack.c.l.b16 %v1101
      %v3614 = vunpack.c.l.b16 %v1102
      %v3615 = vunpack.c.l.b16 %v1103
      %v3616 = vunpack.c.l.b16 %v1104
      %v3617 = vunpack.c.l.b16 %v1105
      %v3618 = vunpack.c.l.b16 %v1106
      %v3619 = vunpack.c.l.b16 %v1107
      %v3620 = vunpack.c.l.b16 %v1108
      %v3621 = vunpack.c.l.b16 %v1109
      %v3622 = vunpack.c.l.b16 %v1110
      %v3623 = vunpack.c.l.b16 %v1111
      %v3624 = vunpack.c.l.b16 %v1112
      %v3625 = vunpack.c.l.b16 %v1113
      %v3626 = vunpack.c.l.b16 %v1114
      %v3627 = vunpack.c.l.b16 %v1115
      %v3628 = vunpack.c.l.b16 %v1116
      %v3629 = vunpack.c.l.b16 %v1117
      %v3630 = vunpack.c.l.b16 %v1118
      %v3631 = vunpack.c.l.b16 %v1119
      %v3632 = vunpack.c.l.b16 %v1120
      %v3633 = vunpack.c.l.b16 %v1121
      %v3634 = vunpack.c.l.b16 %v1122
      %v3635 = vunpack.c.l.b16 %v1123
      %v3636 = vunpack.c.l.b16 %v1124
      %v3637 = vunpack.c.l.b16 %v1125
      %v3638 = vunpack.c.l.b16 %v1126
      %v3639 = vunpack.c.l.b16 %v1127
      %v3640 = vunpack.c.l.b16 %v1128
      %v3641 = vunpack.c.l.b16 %v1129
      %v3642 = vunpack.c.l.b16 %v1130
      %v3643 = vunpack.c.l.b16 %v1131
      %v3644 = vunpack.c.l.b16 %v1132
      %v3645 = vunpack.c.l.b16 %v1133
      %v3646 = vunpack.c.l.b16 %v1134
      %v3647 = vunpack.c.l.b16 %v1135
      %v3648 = vunpack.c.l.b16 %v1136
      %v3649 = vunpack.c.l.b16 %v1137
      %v3650 = vunpack.c.l.b16 %v1138
      %v3651 = vunpack.c.l.b16 %v1139
      %v3652 = vunpack.c.l.b16 %v1140
      %v3653 = vunpack.c.l.b16 %v1141
      %v3654 = vunpack.c.l.b16 %v1142
      %v3655 = vunpack.c.l.b16 %v1143
      %v3656 = vunpack.c.l.b16 %v1144
      %v3657 = vunpack.c.l.b16 %v1145
      %v3658 = vunpack.c.l.b16 %v1146
      %v3659 = vunpack.c.l.b16 %v1147
      %v3660 = vunpack.c.l.b16 %v1148
      %v3661 = vunpack.c.l.b16 %v1149
      %v3662 = vunpack.c.l.b16 %v1150
      %v3663 = vunpack.c.l.b16 %v1151
      %v3664 = vunpack.c.l.b16 %v1152
      %v3665 = vunpack.c.l.b16 %v1153
      %v3666 = vunpack.c.l.b16 %v1154
      %v3667 = vunpack.c.l.b16 %v1155
      %v3668 = vunpack.c.l.b16 %v1156
      %v3669 = vunpack.c.l.b16 %v1157
      %v3670 = vunpack.c.l.b16 %v1158
      %v3671 = vunpack.c.l.b16 %v1159
      %v3672 = vunpack.c.l.b16 %v1160
      %v3673 = vunpack.c.l.b16 %v1161
      %v3674 = vunpack.c.l.b16 %v1162
      %v3675 = vunpack.c.l.b16 %v1163
      %v3676 = vunpack.c.l.b16 %v1164
      %v3677 = vunpack.c.l.b16 %v1165
      %v3678 = vunpack.c.l.b16 %v1166
      %v3679 = vunpack.c.l.b16 %v1167
      %v3680 = vunpack.c.l.b16 %v1168
      %v3681 = vunpack.c.l.b16 %v1169
      %v3682 = vunpack.c.l.b16 %v1170
      %v3683 = vunpack.c.l.b16 %v1171
      %v3684 = vunpack.c.l.b16 %v1172
      %v3685 = vunpack.c.l.b16 %v1173
      %v3686 = vunpack.c.l.b16 %v1174
      %v3687 = vunpack.c.l.b16 %v1175
      %v3688 = vunpack.c.l.b16 %v1176
      %v3689 = vunpack.c.l.b16 %v1177
      %v3690 = vunpack.c.l.b16 %v1178
      %v3691 = vunpack.c.l.b16 %v1179
      %v3692 = vunpack.c.l.b16 %v1180
      %v3693 = vunpack.c.l.b16 %v1181
      %v3694 = vunpack.c.l.b16 %v1182
      %v3695 = vunpack.c.l.b16 %v1183
      %v3696 = vunpack.c.l.b16 %v1184
      %v3697 = vunpack.c.l.b16 %v1185
      %v3698 = vunpack.c.l.b16 %v1186
      %v3699 = vunpack.c.l.b16 %v1187
      %v3700 = vunpack.c.l.b16 %v1188
      %v3701 = vunpack.c.l.b16 %v1189
      %v3702 = vunpack.c.l.b16 %v1190
      %v3703 = vunpack.c.l.b16 %v1191
      %v3704 = vunpack.c.l.b16 %v1192
      %v3705 = vunpack.c.l.b16 %v1193
      %v3706 = vunpack.c.l.b16 %v1194
      %v3707 = vunpack.c.l.b16 %v1195
      %v3708 = vunpack.c.l.b16 %v1196
      %v3709 = vunpack.c.l.b16 %v1197
      %v3710 = vunpack.c.l.b16 %v1198
      %v3711 = vunpack.c.l.b16 %v1199
      %v3712 = vunpack.c.l.b16 %v1200
      %v3713 = vunpack.c.l.b16 %v1201
      %v3714 = vunpack.c.l.b16 %v1202
      %v3715 = vunpack.c.l.b16 %v1203
      %v3716 = vunpack.c.l.b16 %v1204
      %v3717 = vunpack.c.l.b16 %v1205
      %v3718 = vunpack.c.l.b16 %v1206
      %v3719 = vunpack.c.l.b16 %v1207
      %v3720 = vunpack.c.l.b16 %v1208
      %v3721 = vunpack.c.l.b16 %v1209
      %v3722 = vunpack.c.l.b16 %v1210
      %v3723 = vunpack.c.l.b16 %v1211
      %v3724 = vunpack.c.l.b16 %v1212
      %v3725 = vunpack.c.l.b16 %v1213
      %v3726 = vunpack.c.l.b16 %v1214
      %v3727 = vunpack.c.l.b16 %v1215
      %v3728 = vunpack.c.l.b16 %v1216
      %v3729 = vunpack.c.l.b16 %v1217
      %v3730 = vunpack.c.l.b16 %v1218
      %v3731 = vunpack.c.l.b16 %v1219
      %v3732 = vunpack.c.l.b16 %v1220
      %v3733 = vunpack.c.l.b16 %v1221
      %v3734 = vunpack.c.l.b16 %v1222
      %v3735 = vunpack.c.l.b16 %v1223
      %v3736 = vunpack.c.l.b16 %v1224
      %v3737 = vunpack.c.l.b16 %v1225
      %v3738 = vunpack.c.l.b16 %v1226
      %v3739 = vunpack.c.l.b16 %v1227
      %v3740 = vunpack.c.l.b16 %v1228
      %v3741 = vunpack.c.l.b16 %v1229
      %v3742 = vunpack.c.l.b16 %v1230
      %v3743 = vunpack.c.l.b16 %v1231
      %v3744 = vunpack.c.l.b16 %v1232
      %v3745 = vunpack.c.l.b16 %v1233
      %v3746 = vunpack.c.l.b16 %v1234
      %v3747 = vunpack.c.l.b16 %v1235
      %v3748 = vunpack.c.l.b16 %v1236
      %v3749 = vunpack.c.l.b16 %v1237
      %v3750 = vunpack.c.l.b16 %v1238
      %v3751 = vunpack.c.l.b16 %v1239
      %v3752 = vunpack.c.l.b16 %v1240
      %v3753 = vunpack.c.l.b16 %v1241
      %v3754 = vunpack.c.l.b16 %v1242
      %v3755 = vunpack.c.l.b16 %v1243
      %v3756 = vunpack.c.l.b16 %v1244
      %v3757 = vunpack.c.l.b16 %v1245
      %v3758 = vunpack.c.l.b16 %v1246
      %v3759 = vunpack.c.l.b16 %v1247
      %v3760 = vunpack.c.l.b16 %v1248
      %v3761 = vunpack.c.l.b16 %v1249
      %v3762 = vunpack.c.l.b16 %v1250
      %v3763 = vunpack.c.l.b16 %v1251
      %v3764 = vunpack.c.l.b16 %v1252
      %v3765 = vunpack.c.l.b16 %v1253
      %v3766 = vunpack.c.l.b16 %v1254
      %v3767 = vunpack.c.l.b16 %v1255
      %v3768 = vunpack.c.l.b16 %v1256
      %v3769 = vunpack.c.l.b16 %v1257
      %v3770 = vunpack.c.l.b16 %v1258
      %v3771 = vunpack.c.l.b16 %v1259
      %v3772 = vunpack.c.l.b16 %v1260
      %v3773 = vunpack.c.l.b16 %v1261
      %v3774 = vunpack.c.l.b16 %v1262
      %v3775 = vunpack.c.l.b16 %v1263
      %v3776 = vunpack.c.l.b16 %v1264
      %v3777 = vunpack.c.l.b16 %v1265
      %v3778 = vunpack.c.l.b16 %v1266
      %v3779 = vunpack.c.l.b16 %v1267
      %v3780 = vunpack.c.l.b16 %v1268
      %v3781 = vunpack.c.l.b16 %v1269
      %v3782 = vunpack.c.l.b16 %v1270
      %v3783 = vunpack.c.l.b16 %v1271
      %v3784 = vunpack.c.l.b16 %v1272
      %v3785 = vunpack.c.l.b16 %v1273
      %v3786 = vunpack.c.l.b16 %v1274
      %v3787 = vunpack.c.l.b16 %v1275
      %v3788 = vunpack.c.l.b16 %v1276
      %v3789 = vunpack.c.l.b16 %v1277
      %v3790 = vunpack.c.l.b16 %v1278
      %v3791 = vunpack.c.l.b16 %v1279
      %v3792 = vunpack.c.l.b16 %v1280
      %v3793 = vunpack.c.l.b16 %v1281
      %v3794 = vunpack.c.l.b16 %v1282
      %v3795 = vunpack.c.l.b16 %v1283
      %v3796 = vunpack.c.l.b16 %v1284
      %v3797 = vunpack.c.l.b16 %v1285
      %v3798 = vunpack.c.l.b16 %v1286
      %v3799 = vunpack.c.l.b16 %v1287
      %v3800 = vunpack.c.l.b16 %v1288
      %v3801 = vunpack.c.l.b16 %v1289
      %v3802 = vunpack.c.l.b16 %v1290
      %v3803 = vunpack.c.l.b16 %v1291
      %v3804 = vunpack.c.l.b16 %v1292
      %v3805 = vunpack.c.l.b16 %v1293
      %v3806 = vunpack.c.l.b16 %v1294
      %v3807 = vunpack.c.l.b16 %v1295
      %v3808 = vunpack.c.l.b16 %v1296
      %v3809 = vunpack.c.l.b16 %v1297
      %v3810 = vunpack.c.l.b16 %v1298
      %v3811 = vunpack.c.l.b16 %v1299
      %v3812 = vunpack.c.l.b16 %v1300
      %v3813 = vunpack.c.l.b16 %v1301
      %v3814 = vunpack.c.l.b16 %v1302
      %v3815 = vunpack.c.l.b16 %v1303
      %v3816 = vunpack.c.l.b16 %v1304
      %v3817 = vunpack.c.l.b16 %v1305
      %v3818 = vunpack.c.l.b16 %v1306
      %v3819 = vunpack.c.l.b16 %v1307
      %v3820 = vunpack.c.l.b16 %v1308
      %v3821 = vunpack.c.l.b16 %v1309
      %v3822 = vunpack.c.l.b16 %v1310
      %v3823 = vunpack.c.l.b16 %v1311
      %v3824 = vunpack.c.l.b16 %v1312
      %v3825 = vunpack.c.l.b16 %v1313
      %v3826 = vunpack.c.l.b16 %v1314
      %v3827 = vunpack.c.l.b16 %v1315
      %v3828 = vunpack.c.l.b16 %v1316
      %v3829 = vunpack.c.l.b16 %v1317
      %v3830 = vpack.c.b16 %v2807, %v2806
      %v3831 = vpack.c.b16 %v2809, %v2808
      %v3832 = vpack.c.b16 %v2811, %v2810
      %v3833 = vpack.c.b16 %v2813, %v2812
      %v3834 = vpack.c.b16 %v2815, %v2814
      %v3835 = vpack.c.b16 %v2817, %v2816
      %v3836 = vpack.c.b16 %v2819, %v2818
      %v3837 = vpack.c.b16 %v2821, %v2820
      %v3838 = vpack.c.b16 %v2823, %v2822
      %v3839 = vpack.c.b16 %v2825, %v2824
      %v3840 = vpack.c.b16 %v2827, %v2826
      %v3841 = vpack.c.b16 %v2829, %v2828
      %v3842 = vpack.c.b16 %v2831, %v2830
      %v3843 = vpack.c.b16 %v2833, %v2832
      %v3844 = vpack.c.b16 %v2835, %v2834
      %v3845 = vpack.c.b16 %v2837, %v2836
      %v3846 = vpack.c.b16 %v2839, %v2838
      %v3847 = vpack.c.b16 %v2841, %v2840
      %v3848 = vpack.c.b16 %v2843, %v2842
      %v3849 = vpack.c.b16 %v2845, %v2844
      %v3850 = vpack.c.b16 %v2847, %v2846
      %v3851 = vpack.c.b16 %v2849, %v2848
      %v3852 = vpack.c.b16 %v2851, %v2850
      %v3853 = vpack.c.b16 %v2853, %v2852
      %v3854 = vpack.c.b16 %v2855, %v2854
      %v3855 = vpack.c.b16 %v2857, %v2856
      %v3856 = vpack.c.b16 %v2859, %v2858
      %v3857 = vpack.c.b16 %v2861, %v2860
      %v3858 = vpack.c.b16 %v2863, %v2862
      %v3859 = vpack.c.b16 %v2865, %v2864
      %v3860 = vpack.c.b16 %v2867, %v2866
      %v3861 = vpack.c.b16 %v2869, %v2868
      %v3862 = vpack.c.b16 %v2871, %v2870
      %v3863 = vpack.c.b16 %v2873, %v2872
      %v3864 = vpack.c.b16 %v2875, %v2874
      %v3865 = vpack.c.b16 %v2877, %v2876
      %v3866 = vpack.c.b16 %v2879, %v2878
      %v3867 = vpack.c.b16 %v2881, %v2880
      %v3868 = vpack.c.b16 %v2883, %v2882
      %v3869 = vpack.c.b16 %v2885, %v2884
      %v3870 = vpack.c.b16 %v2887, %v2886
      %v3871 = vpack.c.b16 %v2889, %v2888
      %v3872 = vpack.c.b16 %v2891, %v2890
      %v3873 = vpack.c.b16 %v2893, %v2892
      %v3874 = vpack.c.b16 %v2895, %v2894
      %v3875 = vpack.c.b16 %v2897, %v2896
      %v3876 = vpack.c.b16 %v2899, %v2898
      %v3877 = vpack.c.b16 %v2901, %v2900
      %v3878 = vpack.c.b16 %v2903, %v2902
      %v3879 = vpack.c.b16 %v2905, %v2904
      %v3880 = vpack.c.b16 %v2907, %v2906
      %v3881 = vpack.c.b16 %v2909, %v2908
      %v3882 = vpack.c.b16 %v2911, %v2910
      %v3883 = vpack.c.b16 %v2913, %v2912
      %v3884 = vpack.c.b16 %v2915, %v2914
      %v3885 = vpack.c.b16 %v2917, %v2916
      %v3886 = vpack.c.b16 %v2919, %v2918
      %v3887 = vpack.c.b16 %v2921, %v2920
      %v3888 = vpack.c.b16 %v2923, %v2922
      %v3889 = vpack.c.b16 %v2925, %v2924
      %v3890 = vpack.c.b16 %v2927, %v2926
      %v3891 = vpack.c.b16 %v2929, %v2928
      %v3892 = vpack.c.b16 %v2931, %v2930
      %v3893 = vpack.c.b16 %v2933, %v2932
      %v3894 = vpack.c.b16 %v2935, %v2934
      %v3895 = vpack.c.b16 %v2937, %v2936
      %v3896 = vpack.c.b16 %v2939, %v2938
      %v3897 = vpack.c.b16 %v2941, %v2940
      %v3898 = vpack.c.b16 %v2943, %v2942
      %v3899 = vpack.c.b16 %v2945, %v2944
      %v3900 = vpack.c.b16 %v2947, %v2946
      %v3901 = vpack.c.b16 %v2949, %v2948
      %v3902 = vpack.c.b16 %v2951, %v2950
      %v3903 = vpack.c.b16 %v2953, %v2952
      %v3904 = vpack.c.b16 %v2955, %v2954
      %v3905 = vpack.c.b16 %v2957, %v2956
      %v3906 = vpack.c.b16 %v2959, %v2958
      %v3907 = vpack.c.b16 %v2961, %v2960
      %v3908 = vpack.c.b16 %v2963, %v2962
      %v3909 = vpack.c.b16 %v2965, %v2964
      %v3910 = vpack.c.b16 %v2967, %v2966
      %v3911 = vpack.c.b16 %v2969, %v2968
      %v3912 = vpack.c.b16 %v2971, %v2970
      %v3913 = vpack.c.b16 %v2973, %v2972
      %v3914 = vpack.c.b16 %v2975, %v2974
      %v3915 = vpack.c.b16 %v2977, %v2976
      %v3916 = vpack.c.b16 %v2979, %v2978
      %v3917 = vpack.c.b16 %v2981, %v2980
      %v3918 = vpack.c.b16 %v2983, %v2982
      %v3919 = vpack.c.b16 %v2985, %v2984
      %v3920 = vpack.c.b16 %v2987, %v2986
      %v3921 = vpack.c.b16 %v2989, %v2988
      %v3922 = vpack.c.b16 %v2991, %v2990
      %v3923 = vpack.c.b16 %v2993, %v2992
      %v3924 = vpack.c.b16 %v2995, %v2994
      %v3925 = vpack.c.b16 %v2997, %v2996
      %v3926 = vpack.c.b16 %v2999, %v2998
      %v3927 = vpack.c.b16 %v3001, %v3000
      %v3928 = vpack.c.b16 %v3003, %v3002
      %v3929 = vpack.c.b16 %v3005, %v3004
      %v3930 = vpack.c.b16 %v3007, %v3006
      %v3931 = vpack.c.b16 %v3009, %v3008
      %v3932 = vpack.c.b16 %v3011, %v3010
      %v3933 = vpack.c.b16 %v3013, %v3012
      %v3934 = vpack.c.b16 %v3015, %v3014
      %v3935 = vpack.c.b16 %v3017, %v3016
      %v3936 = vpack.c.b16 %v3019, %v3018
      %v3937 = vpack.c.b16 %v3021, %v3020
      %v3938 = vpack.c.b16 %v3023, %v3022
      %v3939 = vpack.c.b16 %v3025, %v3024
      %v3940 = vpack.c.b16 %v3027, %v3026
      %v3941 = vpack.c.b16 %v3029, %v3028
      %v3942 = vpack.c.b16 %v3031, %v3030
      %v3943 = vpack.c.b16 %v3033, %v3032
      %v3944 = vpack.c.b16 %v3035, %v3034
      %v3945 = vpack.c.b16 %v3037, %v3036
      %v3946 = vpack.c.b16 %v3039, %v3038
      %v3947 = vpack.c.b16 %v3041, %v3040
      %v3948 = vpack.c.b16 %v3043, %v3042
      %v3949 = vpack.c.b16 %v3045, %v3044
      %v3950 = vpack.c.b16 %v3047, %v3046
      %v3951 = vpack.c.b16 %v3049, %v3048
      %v3952 = vpack.c.b16 %v3051, %v3050
      %v3953 = vpack.c.b16 %v3053, %v3052
      %v3954 = vpack.c.b16 %v3055, %v3054
      %v3955 = vpack.c.b16 %v3057, %v3056
      %v3956 = vpack.c.b16 %v3059, %v3058
      %v3957 = vpack.c.b16 %v3061, %v3060
      %v3958 = vpack.c.b16 %v3063, %v3062
      %v3959 = vpack.c.b16 %v3065, %v3064
      %v3960 = vpack.c.b16 %v3067, %v3066
      %v3961 = vpack.c.b16 %v3069, %v3068
      %v3962 = vpack.c.b16 %v3071, %v3070
      %v3963 = vpack.c.b16 %v3073, %v3072
      %v3964 = vpack.c.b16 %v3075, %v3074
      %v3965 = vpack.c.b16 %v3077, %v3076
      %v3966 = vpack.c.b16 %v3079, %v3078
      %v3967 = vpack.c.b16 %v3081, %v3080
      %v3968 = vpack.c.b16 %v3083, %v3082
      %v3969 = vpack.c.b16 %v3085, %v3084
      %v3970 = vpack.c.b16 %v3087, %v3086
      %v3971 = vpack.c.b16 %v3089, %v3088
      %v3972 = vpack.c.b16 %v3091, %v3090
      %v3973 = vpack.c.b16 %v3093, %v3092
      %v3974 = vpack.c.b16 %v3095, %v3094
      %v3975 = vpack.c.b16 %v3097, %v3096
      %v3976 = vpack.c.b16 %v3099, %v3098
      %v3977 = vpack.c.b16 %v3101, %v3100
      %v3978 = vpack.c.b16 %v3103, %v3102
      %v3979 = vpack.c.b16 %v3105, %v3104
      %v3980 = vpack.c.b16 %v3107, %v3106
      %v3981 = vpack.c.b16 %v3109, %v3108
      %v3982 = vpack.c.b16 %v3111, %v3110
      %v3983 = vpack.c.b16 %v3113, %v3112
      %v3984 = vpack.c.b16 %v3115, %v3114
      %v3985 = vpack.c.b16 %v3117, %v3116
      %v3986 = vpack.c.b16 %v3119, %v3118
      %v3987 = vpack.c.b16 %v3121, %v3120
      %v3988 = vpack.c.b16 %v3123, %v3122
      %v3989 = vpack.c.b16 %v3125, %v3124
      %v3990 = vpack.c.b16 %v3127, %v3126
      %v3991 = vpack.c.b16 %v3129, %v3128
      %v3992 = vpack.c.b16 %v3131, %v3130
      %v3993 = vpack.c.b16 %v3133, %v3132
      %v3994 = vpack.c.b16 %v3135, %v3134
      %v3995 = vpack.c.b16 %v3137, %v3136
      %v3996 = vpack.c.b16 %v3139, %v3138
      %v3997 = vpack.c.b16 %v3141, %v3140
      %v3998 = vpack.c.b16 %v3143, %v3142
      %v3999 = vpack.c.b16 %v3145, %v3144
      %v4000 = vpack.c.b16 %v3147, %v3146
      %v4001 = vpack.c.b16 %v3149, %v3148
      %v4002 = vpack.c.b16 %v3151, %v3150
      %v4003 = vpack.c.b16 %v3153, %v3152
      %v4004 = vpack.c.b16 %v3155, %v3154
      %v4005 = vpack.c.b16 %v3157, %v3156
      %v4006 = vpack.c.b16 %v3159, %v3158
      %v4007 = vpack.c.b16 %v3161, %v3160
      %v4008 = vpack.c.b16 %v3163, %v3162
      %v4009 = vpack.c.b16 %v3165, %v3164
      %v4010 = vpack.c.b16 %v3167, %v3166
      %v4011 = vpack.c.b16 %v3169, %v3168
      %v4012 = vpack.c.b16 %v3171, %v3170
      %v4013 = vpack.c.b16 %v3173, %v3172
      %v4014 = vpack.c.b16 %v3175, %v3174
      %v4015 = vpack.c.b16 %v3177, %v3176
      %v4016 = vpack.c.b16 %v3179, %v3178
      %v4017 = vpack.c.b16 %v3181, %v3180
      %v4018 = vpack.c.b16 %v3183, %v3182
      %v4019 = vpack.c.b16 %v3185, %v3184
      %v4020 = vpack.c.b16 %v3187, %v3186
      %v4021 = vpack.c.b16 %v3189, %v3188
      %v4022 = vpack.c.b16 %v3191, %v3190
      %v4023 = vpack.c.b16 %v3193, %v3192
      %v4024 = vpack.c.b16 %v3195, %v3194
      %v4025 = vpack.c.b16 %v3197, %v3196
      %v4026 = vpack.c.b16 %v3199, %v3198
      %v4027 = vpack.c.b16 %v3201, %v3200
      %v4028 = vpack.c.b16 %v3203, %v3202
      %v4029 = vpack.c.b16 %v3205, %v3204
      %v4030 = vpack.c.b16 %v3207, %v3206
      %v4031 = vpack.c.b16 %v3209, %v3208
      %v4032 = vpack.c.b16 %v3211, %v3210
      %v4033 = vpack.c.b16 %v3213, %v3212
      %v4034 = vpack.c.b16 %v3215, %v3214
      %v4035 = vpack.c.b16 %v3217, %v3216
      %v4036 = vpack.c.b16 %v3219, %v3218
      %v4037 = vpack.c.b16 %v3221, %v3220
      %v4038 = vpack.c.b16 %v3223, %v3222
      %v4039 = vpack.c.b16 %v3225, %v3224
      %v4040 = vpack.c.b16 %v3227, %v3226
      %v4041 = vpack.c.b16 %v3229, %v3228
      %v4042 = vpack.c.b16 %v3231, %v3230
      %v4043 = vpack.c.b16 %v3233, %v3232
      %v4044 = vpack.c.b16 %v3235, %v3234
      %v4045 = vpack.c.b16 %v3237, %v3236
      %v4046 = vpack.c.b16 %v3239, %v3238
      %v4047 = vpack.c.b16 %v3241, %v3240
      %v4048 = vpack.c.b16 %v3243, %v3242
      %v4049 = vpack.c.b16 %v3245, %v3244
      %v4050 = vpack.c.b16 %v3247, %v3246
      %v4051 = vpack.c.b16 %v3249, %v3248
      %v4052 = vpack.c.b16 %v3251, %v3250
      %v4053 = vpack.c.b16 %v3253, %v3252
      %v4054 = vpack.c.b16 %v3255, %v3254
      %v4055 = vpack.c.b16 %v3257, %v3256
      %v4056 = vpack.c.b16 %v3259, %v3258
      %v4057 = vpack.c.b16 %v3261, %v3260
      %v4058 = vpack.c.b16 %v3263, %v3262
      %v4059 = vpack.c.b16 %v3265, %v3264
      %v4060 = vpack.c.b16 %v3267, %v3266
      %v4061 = vpack.c.b16 %v3269, %v3268
      %v4062 = vpack.c.b16 %v3271, %v3270
      %v4063 = vpack.c.b16 %v3273, %v3272
      %v4064 = vpack.c.b16 %v3275, %v3274
      %v4065 = vpack.c.b16 %v3277, %v3276
      %v4066 = vpack.c.b16 %v3279, %v3278
      %v4067 = vpack.c.b16 %v3281, %v3280
      %v4068 = vpack.c.b16 %v3283, %v3282
      %v4069 = vpack.c.b16 %v3285, %v3284
      %v4070 = vpack.c.b16 %v3287, %v3286
      %v4071 = vpack.c.b16 %v3289, %v3288
      %v4072 = vpack.c.b16 %v3291, %v3290
      %v4073 = vpack.c.b16 %v3293, %v3292
      %v4074 = vpack.c.b16 %v3295, %v3294
      %v4075 = vpack.c.b16 %v3297, %v3296
      %v4076 = vpack.c.b16 %v3299, %v3298
      %v4077 = vpack.c.b16 %v3301, %v3300
      %v4078 = vpack.c.b16 %v3303, %v3302
      %v4079 = vpack.c.b16 %v3305, %v3304
      %v4080 = vpack.c.b16 %v3307, %v3306
      %v4081 = vpack.c.b16 %v3309, %v3308
      %v4082 = vpack.c.b16 %v3311, %v3310
      %v4083 = vpack.c.b16 %v3313, %v3312
      %v4084 = vpack.c.b16 %v3315, %v3314
      %v4085 = vpack.c.b16 %v3317, %v3316
      %v4086 = vpack.c.b16 %v3319, %v3318
      %v4087 = vpack.c.b16 %v3321, %v3320
      %v4088 = vpack.c.b16 %v3323, %v3322
      %v4089 = vpack.c.b16 %v3325, %v3324
      %v4090 = vpack.c.b16 %v3327, %v3326
      %v4091 = vpack.c.b16 %v3329, %v3328
      %v4092 = vpack.c.b16 %v3331, %v3330
      %v4093 = vpack.c.b16 %v3333, %v3332
      %v4094 = vpack.c.b16 %v3335, %v3334
      %v4095 = vpack.c.b16 %v3337, %v3336
      %v4096 = vpack.c.b16 %v3339, %v3338
      %v4097 = vpack.c.b16 %v3341, %v3340
      %v4098 = vpack.c.b16 %v3343, %v3342
      %v4099 = vpack.c.b16 %v3345, %v3344
      %v4100 = vpack.c.b16 %v3347, %v3346
      %v4101 = vpack.c.b16 %v3349, %v3348
      %v4102 = vpack.c.b16 %v3351, %v3350
      %v4103 = vpack.c.b16 %v3353, %v3352
      %v4104 = vpack.c.b16 %v3355, %v3354
      %v4105 = vpack.c.b16 %v3357, %v3356
      %v4106 = vpack.c.b16 %v3359, %v3358
      %v4107 = vpack.c.b16 %v3361, %v3360
      %v4108 = vpack.c.b16 %v3363, %v3362
      %v4109 = vpack.c.b16 %v3365, %v3364
      %v4110 = vpack.c.b16 %v3367, %v3366
      %v4111 = vpack.c.b16 %v3369, %v3368
      %v4112 = vpack.c.b16 %v3371, %v3370
      %v4113 = vpack.c.b16 %v3373, %v3372
      %v4114 = vpack.c.b16 %v3375, %v3374
      %v4115 = vpack.c.b16 %v3377, %v3376
      %v4116 = vpack.c.b16 %v3379, %v3378
      %v4117 = vpack.c.b16 %v3381, %v3380
      %v4118 = vpack.c.b16 %v3383, %v3382
      %v4119 = vpack.c.b16 %v3385, %v3384
      %v4120 = vpack.c.b16 %v3387, %v3386
      %v4121 = vpack.c.b16 %v3389, %v3388
      %v4122 = vpack.c.b16 %v3391, %v3390
      %v4123 = vpack.c.b16 %v3393, %v3392
      %v4124 = vpack.c.b16 %v3395, %v3394
      %v4125 = vpack.c.b16 %v3397, %v3396
      %v4126 = vpack.c.b16 %v3399, %v3398
      %v4127 = vpack.c.b16 %v3401, %v3400
      %v4128 = vpack.c.b16 %v3403, %v3402
      %v4129 = vpack.c.b16 %v3405, %v3404
      %v4130 = vpack.c.b16 %v3407, %v3406
      %v4131 = vpack.c.b16 %v3409, %v3408
      %v4132 = vpack.c.b16 %v3411, %v3410
      %v4133 = vpack.c.b16 %v3413, %v3412
      %v4134 = vpack.c.b16 %v3415, %v3414
      %v4135 = vpack.c.b16 %v3417, %v3416
      %v4136 = vpack.c.b16 %v3419, %v3418
      %v4137 = vpack.c.b16 %v3421, %v3420
      %v4138 = vpack.c.b16 %v3423, %v3422
      %v4139 = vpack.c.b16 %v3425, %v3424
      %v4140 = vpack.c.b16 %v3427, %v3426
      %v4141 = vpack.c.b16 %v3429, %v3428
      %v4142 = vpack.c.b16 %v3431, %v3430
      %v4143 = vpack.c.b16 %v3433, %v3432
      %v4144 = vpack.c.b16 %v3435, %v3434
      %v4145 = vpack.c.b16 %v3437, %v3436
      %v4146 = vpack.c.b16 %v3439, %v3438
      %v4147 = vpack.c.b16 %v3441, %v3440
      %v4148 = vpack.c.b16 %v3443, %v3442
      %v4149 = vpack.c.b16 %v3445, %v3444
      %v4150 = vpack.c.b16 %v3447, %v3446
      %v4151 = vpack.c.b16 %v3449, %v3448
      %v4152 = vpack.c.b16 %v3451, %v3450
      %v4153 = vpack.c.b16 %v3453, %v3452
      %v4154 = vpack.c.b16 %v3455, %v3454
      %v4155 = vpack.c.b16 %v3457, %v3456
      %v4156 = vpack.c.b16 %v3459, %v3458
      %v4157 = vpack.c.b16 %v3461, %v3460
      %v4158 = vpack.c.b16 %v3463, %v3462
      %v4159 = vpack.c.b16 %v3465, %v3464
      %v4160 = vpack.c.b16 %v3467, %v3466
      %v4161 = vpack.c.b16 %v3469, %v3468
      %v4162 = vpack.c.b16 %v3471, %v3470
      %v4163 = vpack.c.b16 %v3473, %v3472
      %v4164 = vpack.c.b16 %v3475, %v3474
      %v4165 = vpack.c.b16 %v3477, %v3476
      %v4166 = vpack.c.b16 %v3479, %v3478
      %v4167 = vpack.c.b16 %v3481, %v3480
      %v4168 = vpack.c.b16 %v3483, %v3482
      %v4169 = vpack.c.b16 %v3485, %v3484
      %v4170 = vpack.c.b16 %v3487, %v3486
      %v4171 = vpack.c.b16 %v3489, %v3488
      %v4172 = vpack.c.b16 %v3491, %v3490
      %v4173 = vpack.c.b16 %v3493, %v3492
      %v4174 = vpack.c.b16 %v3495, %v3494
      %v4175 = vpack.c.b16 %v3497, %v3496
      %v4176 = vpack.c.b16 %v3499, %v3498
      %v4177 = vpack.c.b16 %v3501, %v3500
      %v4178 = vpack.c.b16 %v3503, %v3502
      %v4179 = vpack.c.b16 %v3505, %v3504
      %v4180 = vpack.c.b16 %v3507, %v3506
      %v4181 = vpack.c.b16 %v3509, %v3508
      %v4182 = vpack.c.b16 %v3511, %v3510
      %v4183 = vpack.c.b16 %v3513, %v3512
      %v4184 = vpack.c.b16 %v3515, %v3514
      %v4185 = vpack.c.b16 %v3517, %v3516
      %v4186 = vpack.c.b16 %v3519, %v3518
      %v4187 = vpack.c.b16 %v3521, %v3520
      %v4188 = vpack.c.b16 %v3523, %v3522
      %v4189 = vpack.c.b16 %v3525, %v3524
      %v4190 = vpack.c.b16 %v3527, %v3526
      %v4191 = vpack.c.b16 %v3529, %v3528
      %v4192 = vpack.c.b16 %v3531, %v3530
      %v4193 = vpack.c.b16 %v3533, %v3532
      %v4194 = vpack.c.b16 %v3535, %v3534
      %v4195 = vpack.c.b16 %v3537, %v3536
      %v4196 = vpack.c.b16 %v3539, %v3538
      %v4197 = vpack.c.b16 %v3541, %v3540
      %v4198 = vpack.c.b16 %v3543, %v3542
      %v4199 = vpack.c.b16 %v3545, %v3544
      %v4200 = vpack.c.b16 %v3547, %v3546
      %v4201 = vpack.c.b16 %v3549, %v3548
      %v4202 = vpack.c.b16 %v3551, %v3550
      %v4203 = vpack.c.b16 %v3553, %v3552
      %v4204 = vpack.c.b16 %v3555, %v3554
      %v4205 = vpack.c.b16 %v3557, %v3556
      %v4206 = vpack.c.b16 %v3559, %v3558
      %v4207 = vpack.c.b16 %v3561, %v3560
      %v4208 = vpack.c.b16 %v3563, %v3562
      %v4209 = vpack.c.b16 %v3565, %v3564
      %v4210 = vpack.c.b16 %v3567, %v3566
      %v4211 = vpack.c.b16 %v3569, %v3568
      %v4212 = vpack.c.b16 %v3571, %v3570
      %v4213 = vpack.c.b16 %v3573, %v3572
      %v4214 = vpack.c.b16 %v3575, %v3574
      %v4215 = vpack.c.b16 %v3577, %v3576
      %v4216 = vpack.c.b16 %v3579, %v3578
      %v4217 = vpack.c.b16 %v3581, %v3580
      %v4218 = vpack.c.b16 %v3583, %v3582
      %v4219 = vpack.c.b16 %v3585, %v3584
      %v4220 = vpack.c.b16 %v3587, %v3586
      %v4221 = vpack.c.b16 %v3589, %v3588
      %v4222 = vpack.c.b16 %v3591, %v3590
      %v4223 = vpack.c.b16 %v3593, %v3592
      %v4224 = vpack.c.b16 %v3595, %v3594
      %v4225 = vpack.c.b16 %v3597, %v3596
      %v4226 = vpack.c.b16 %v3599, %v3598
      %v4227 = vpack.c.b16 %v3601, %v3600
      %v4228 = vpack.c.b16 %v3603, %v3602
      %v4229 = vpack.c.b16 %v3605, %v3604
      %v4230 = vpack.c.b16 %v3607, %v3606
      %v4231 = vpack.c.b16 %v3609, %v3608
      %v4232 = vpack.c.b16 %v3611, %v3610
      %v4233 = vpack.c.b16 %v3613, %v3612
      %v4234 = vpack.c.b16 %v3615, %v3614
      %v4235 = vpack.c.b16 %v3617, %v3616
      %v4236 = vpack.c.b16 %v3619, %v3618
      %v4237 = vpack.c.b16 %v3621, %v3620
      %v4238 = vpack.c.b16 %v3623, %v3622
      %v4239 = vpack.c.b16 %v3625, %v3624
      %v4240 = vpack.c.b16 %v3627, %v3626
      %v4241 = vpack.c.b16 %v3629, %v3628
      %v4242 = vpack.c.b16 %v3631, %v3630
      %v4243 = vpack.c.b16 %v3633, %v3632
      %v4244 = vpack.c.b16 %v3635, %v3634
      %v4245 = vpack.c.b16 %v3637, %v3636
      %v4246 = vpack.c.b16 %v3639, %v3638
      %v4247 = vpack.c.b16 %v3641, %v3640
      %v4248 = vpack.c.b16 %v3643, %v3642
      %v4249 = vpack.c.b16 %v3645, %v3644
      %v4250 = vpack.c.b16 %v3647, %v3646
      %v4251 = vpack.c.b16 %v3649, %v3648
      %v4252 = vpack.c.b16 %v3651, %v3650
      %v4253 = vpack.c.b16 %v3653, %v3652
      %v4254 = vpack.c.b16 %v3655, %v3654
      %v4255 = vpack.c.b16 %v3657, %v3656
      %v4256 = vpack.c.b16 %v3659, %v3658
      %v4257 = vpack.c.b16 %v3661, %v3660
      %v4258 = vpack.c.b16 %v3663, %v3662
      %v4259 = vpack.c.b16 %v3665, %v3664
      %v4260 = vpack.c.b16 %v3667, %v3666
      %v4261 = vpack.c.b16 %v3669, %v3668
      %v4262 = vpack.c.b16 %v3671, %v3670
      %v4263 = vpack.c.b16 %v3673, %v3672
      %v4264 = vpack.c.b16 %v3675, %v3674
      %v4265 = vpack.c.b16 %v3677, %v3676
      %v4266 = vpack.c.b16 %v3679, %v3678
      %v4267 = vpack.c.b16 %v3681, %v3680
      %v4268 = vpack.c.b16 %v3683, %v3682
      %v4269 = vpack.c.b16 %v3685, %v3684
      %v4270 = vpack.c.b16 %v3687, %v3686
      %v4271 = vpack.c.b16 %v3689, %v3688
      %v4272 = vpack.c.b16 %v3691, %v3690
      %v4273 = vpack.c.b16 %v3693, %v3692
      %v4274 = vpack.c.b16 %v3695, %v3694
      %v4275 = vpack.c.b16 %v3697, %v3696
      %v4276 = vpack.c.b16 %v3699, %v3698
      %v4277 = vpack.c.b16 %v3701, %v3700
      %v4278 = vpack.c.b16 %v3703, %v3702
      %v4279 = vpack.c.b16 %v3705, %v3704
      %v4280 = vpack.c.b16 %v3707, %v3706
      %v4281 = vpack.c.b16 %v3709, %v3708
      %v4282 = vpack.c.b16 %v3711, %v3710
      %v4283 = vpack.c.b16 %v3713, %v3712
      %v4284 = vpack.c.b16 %v3715, %v3714
      %v4285 = vpack.c.b16 %v3717, %v3716
      %v4286 = vpack.c.b16 %v3719, %v3718
      %v4287 = vpack.c.b16 %v3721, %v3720
      %v4288 = vpack.c.b16 %v3723, %v3722
      %v4289 = vpack.c.b16 %v3725, %v3724
      %v4290 = vpack.c.b16 %v3727, %v3726
      %v4291 = vpack.c.b16 %v3729, %v3728
      %v4292 = vpack.c.b16 %v3731, %v3730
      %v4293 = vpack.c.b16 %v3733, %v3732
      %v4294 = vpack.c.b16 %v3735, %v3734
      %v4295 = vpack.c.b16 %v3737, %v3736
      %v4296 = vpack.c.b16 %v3739, %v3738
      %v4297 = vpack.c.b16 %v3741, %v3740
      %v4298 = vpack.c.b16 %v3743, %v3742
      %v4299 = vpack.c.b16 %v3745, %v3744
      %v4300 = vpack.c.b16 %v3747, %v3746
      %v4301 = vpack.c.b16 %v3749, %v3748
      %v4302 = vpack.c.b16 %v3751, %v3750
      %v4303 = vpack.c.b16 %v3753, %v3752
      %v4304 = vpack.c.b16 %v3755, %v3754
      %v4305 = vpack.c.b16 %v3757, %v3756
      %v4306 = vpack.c.b16 %v3759, %v3758
      %v4307 = vpack.c.b16 %v3761, %v3760
      %v4308 = vpack.c.b16 %v3763, %v3762
      %v4309 = vpack.c.b16 %v3765, %v3764
      %v4310 = vpack.c.b16 %v3767, %v3766
      %v4311 = vpack.c.b16 %v3769, %v3768
      %v4312 = vpack.c.b16 %v3771, %v3770
      %v4313 = vpack.c.b16 %v3773, %v3772
      %v4314 = vpack.c.b16 %v3775, %v3774
      %v4315 = vpack.c.b16 %v3777, %v3776
      %v4316 = vpack.c.b16 %v3779, %v3778
      %v4317 = vpack.c.b16 %v3781, %v3780
      %v4318 = vpack.c.b16 %v3783, %v3782
      %v4319 = vpack.c.b16 %v3785, %v3784
      %v4320 = vpack.c.b16 %v3787, %v3786
      %v4321 = vpack.c.b16 %v3789, %v3788
      %v4322 = vpack.c.b16 %v3791, %v3790
      %v4323 = vpack.c.b16 %v3793, %v3792
      %v4324 = vpack.c.b16 %v3795, %v3794
      %v4325 = vpack.c.b16 %v3797, %v3796
      %v4326 = vpack.c.b16 %v3799, %v3798
      %v4327 = vpack.c.b16 %v3801, %v3800
      %v4328 = vpack.c.b16 %v3803, %v3802
      %v4329 = vpack.c.b16 %v3805, %v3804
      %v4330 = vpack.c.b16 %v3807, %v3806
      %v4331 = vpack.c.b16 %v3809, %v3808
      %v4332 = vpack.c.b16 %v3811, %v3810
      %v4333 = vpack.c.b16 %v3813, %v3812
      %v4334 = vpack.c.b16 %v3815, %v3814
      %v4335 = vpack.c.b16 %v3817, %v3816
      %v4336 = vpack.c.b16 %v3819, %v3818
      %v4337 = vpack.c.b16 %v3821, %v3820
      %v4338 = vpack.c.b16 %v3823, %v3822
      %v4339 = vpack.c.b16 %v3825, %v3824
      %v4340 = vpack.c.b16 %v3827, %v3826
      %v4341 = vpack.c.b16 %v3829, %v3828
      %4854 = vmatprep.subr.bf16.mxu0 0
      %4855 = vmatpush1.bf16.msra.mxu0 %v3837
      %4856 = vmatprep.subr.bf16.mxu0 0
      %4857 = vmatpush1.bf16.msra.mxu0 %v3836
      %4858 = vmatprep.subr.bf16.mxu0 0
      %4859 = vmatpush1.bf16.msra.mxu0 %v3835
      %4860 = vmatprep.subr.bf16.mxu0 0
      %4861 = vmatpush1.bf16.msra.mxu0 %v3834
      %4862 = vmatprep.subr.bf16.mxu0 0
      %4863 = vmatpush1.bf16.msra.mxu0 %v3833
      %4864 = vmatprep.subr.bf16.mxu0 0
      %4865 = vmatpush1.bf16.msra.mxu0 %v3832
      %4866 = vmatprep.subr.bf16.mxu0 0
      %4867 = vmatpush1.bf16.msra.mxu0 %v3831
      %4868 = vmatprep.subr.bf16.mxu0 0
      %4869 = vmatpush1.bf16.msra.mxu0 %v3830
      %4870 = vmatprep.subr.bf16.mxu0 0
      %4871 = vmatpush2.bf16.msra.mxu0 %v3845
      %4872 = vmatprep.subr.bf16.mxu0 0
      %4873 = vmatpush2.bf16.msra.mxu0 %v3844
      %4874 = vmatprep.subr.bf16.mxu0 0
      %4875 = vmatpush2.bf16.msra.mxu0 %v3843
      %4876 = vmatprep.subr.bf16.mxu0 0
      %4877 = vmatpush2.bf16.msra.mxu0 %v3842
      %4878 = vmatprep.subr.bf16.mxu0 0
      %4879 = vmatpush2.bf16.msra.mxu0 %v3841
      %4880 = vmatprep.subr.bf16.mxu0 0
      %4881 = vmatpush2.bf16.msra.mxu0 %v3840
      %4882 = vmatprep.subr.bf16.mxu0 0
      %4883 = vmatpush2.bf16.msra.mxu0 %v3839
      %4884 = vmatprep.subr.bf16.mxu0 0
      %4885 = vmatpush2.bf16.msra.mxu0 %v3838
      %4886 = vmatprep.mubr.bf16.mxu0 %v1363
      %4887 = vmatmul.mubr.bf16.gmra.mxu0 %v1349
      %v4888 = vpop.f32.mrf.mxu0
      %v4889 = vadd.f32 0.0, %v4888
      %v4890 = vpop.f32.mrf.mxu0
      %v4891 = vpop.f32.mrf.mxu0
      %v4892 = vpop.f32.mrf.mxu0
      %4893 = vdwg.mxu0
      %4894 = vmatprep.subr.bf16.mxu0 0
      %4895 = vmatpush1.bf16.msra.mxu0 %v3853
      %4896 = vmatprep.subr.bf16.mxu0 0
      %4897 = vmatpush1.bf16.msra.mxu0 %v3852
      %4898 = vmatprep.subr.bf16.mxu0 0
      %4899 = vmatpush1.bf16.msra.mxu0 %v3851
      %4900 = vmatprep.subr.bf16.mxu0 0
      %4901 = vmatpush1.bf16.msra.mxu0 %v3850
      %4902 = vmatprep.subr.bf16.mxu0 0
      %4903 = vmatpush1.bf16.msra.mxu0 %v3849
      %4904 = vmatprep.subr.bf16.mxu0 0
      %4905 = vmatpush1.bf16.msra.mxu0 %v3848
      %4906 = vmatprep.subr.bf16.mxu0 0
      %4907 = vmatpush1.bf16.msra.mxu0 %v3847
      %4908 = vmatprep.subr.bf16.mxu0 0
      %4909 = vmatpush1.bf16.msra.mxu0 %v3846
      %4910 = vmatprep.subr.bf16.mxu0 0
      %4911 = vmatpush2.bf16.msra.mxu0 %v3861
      %4912 = vmatprep.subr.bf16.mxu0 0
      %4913 = vmatpush2.bf16.msra.mxu0 %v3860
      %4914 = vmatprep.subr.bf16.mxu0 0
      %4915 = vmatpush2.bf16.msra.mxu0 %v3859
      %4916 = vmatprep.subr.bf16.mxu0 0
      %4917 = vmatpush2.bf16.msra.mxu0 %v3858
      %4918 = vmatprep.subr.bf16.mxu0 0
      %4919 = vmatpush2.bf16.msra.mxu0 %v3857
      %4920 = vmatprep.subr.bf16.mxu0 0
      %4921 = vmatpush2.bf16.msra.mxu0 %v3856
      %4922 = vmatprep.subr.bf16.mxu0 0
      %4923 = vmatpush2.bf16.msra.mxu0 %v3855
      %4924 = vmatprep.subr.bf16.mxu0 0
      %4925 = vmatpush2.bf16.msra.mxu0 %v3854
      %4926 = vmatprep.mubr.bf16.mxu0 %v1373
      %4927 = vmatmul.mubr.bf16.gmra.mxu0 %v1371
      %v4928 = vpop.f32.mrf.mxu0
      %v4929 = vadd.f32 %v4889, %v4928
      %v4930 = vpop.f32.mrf.mxu0
      %v4931 = vpop.f32.mrf.mxu0
      %v4932 = vpop.f32.mrf.mxu0
      %4933 = vdwg.mxu0
      %4934 = vmatprep.subr.bf16.mxu0 0
      %4935 = vmatpush1.bf16.msra.mxu0 %v3869
      %4936 = vmatprep.subr.bf16.mxu0 0
      %4937 = vmatpush1.bf16.msra.mxu0 %v3868
      %4938 = vmatprep.subr.bf16.mxu0 0
      %4939 = vmatpush1.bf16.msra.mxu0 %v3867
      %4940 = vmatprep.subr.bf16.mxu0 0
      %4941 = vmatpush1.bf16.msra.mxu0 %v3866
      %4942 = vmatprep.subr.bf16.mxu0 0
      %4943 = vmatpush1.bf16.msra.mxu0 %v3865
      %4944 = vmatprep.subr.bf16.mxu0 0
      %4945 = vmatpush1.bf16.msra.mxu0 %v3864
      %4946 = vmatprep.subr.bf16.mxu0 0
      %4947 = vmatpush1.bf16.msra.mxu0 %v3863
      %4948 = vmatprep.subr.bf16.mxu0 0
      %4949 = vmatpush1.bf16.msra.mxu0 %v3862
      %4950 = vmatprep.subr.bf16.mxu0 0
      %4951 = vmatpush2.bf16.msra.mxu0 %v3877
      %4952 = vmatprep.subr.bf16.mxu0 0
      %4953 = vmatpush2.bf16.msra.mxu0 %v3876
      %4954 = vmatprep.subr.bf16.mxu0 0
      %4955 = vmatpush2.bf16.msra.mxu0 %v3875
      %4956 = vmatprep.subr.bf16.mxu0 0
      %4957 = vmatpush2.bf16.msra.mxu0 %v3874
      %4958 = vmatprep.subr.bf16.mxu0 0
      %4959 = vmatpush2.bf16.msra.mxu0 %v3873
      %4960 = vmatprep.subr.bf16.mxu0 0
      %4961 = vmatpush2.bf16.msra.mxu0 %v3872
      %4962 = vmatprep.subr.bf16.mxu0 0
      %4963 = vmatpush2.bf16.msra.mxu0 %v3871
      %4964 = vmatprep.subr.bf16.mxu0 0
      %4965 = vmatpush2.bf16.msra.mxu0 %v3870
      %4966 = vmatprep.mubr.bf16.mxu0 %v1370
      %4967 = vmatmul.mubr.bf16.gmra.mxu0 %v1356
      %v4968 = vpop.f32.mrf.mxu0
      %v4969 = vadd.f32 %v4929, %v4968
      %v4970 = vpop.f32.mrf.mxu0
      %v4971 = vpop.f32.mrf.mxu0
      %v4972 = vpop.f32.mrf.mxu0
      %4973 = vdwg.mxu0
      %4974 = vmatprep.subr.bf16.mxu0 0
      %4975 = vmatpush1.bf16.msra.mxu0 %v3885
      %4976 = vmatprep.subr.bf16.mxu0 0
      %4977 = vmatpush1.bf16.msra.mxu0 %v3884
      %4978 = vmatprep.subr.bf16.mxu0 0
      %4979 = vmatpush1.bf16.msra.mxu0 %v3883
      %4980 = vmatprep.subr.bf16.mxu0 0
      %4981 = vmatpush1.bf16.msra.mxu0 %v3882
      %4982 = vmatprep.subr.bf16.mxu0 0
      %4983 = vmatpush1.bf16.msra.mxu0 %v3881
      %4984 = vmatprep.subr.bf16.mxu0 0
      %4985 = vmatpush1.bf16.msra.mxu0 %v3880
      %4986 = vmatprep.subr.bf16.mxu0 0
      %4987 = vmatpush1.bf16.msra.mxu0 %v3879
      %4988 = vmatprep.subr.bf16.mxu0 0
      %4989 = vmatpush1.bf16.msra.mxu0 %v3878
      %4990 = vmatprep.subr.bf16.mxu0 0
      %4991 = vmatpush2.bf16.msra.mxu0 %v3893
      %4992 = vmatprep.subr.bf16.mxu0 0
      %4993 = vmatpush2.bf16.msra.mxu0 %v3892
      %4994 = vmatprep.subr.bf16.mxu0 0
      %4995 = vmatpush2.bf16.msra.mxu0 %v3891
      %4996 = vmatprep.subr.bf16.mxu0 0
      %4997 = vmatpush2.bf16.msra.mxu0 %v3890
      %4998 = vmatprep.subr.bf16.mxu0 0
      %4999 = vmatpush2.bf16.msra.mxu0 %v3889
      %5000 = vmatprep.subr.bf16.mxu0 0
      %5001 = vmatpush2.bf16.msra.mxu0 %v3888
      %5002 = vmatprep.subr.bf16.mxu0 0
      %5003 = vmatpush2.bf16.msra.mxu0 %v3887
      %5004 = vmatprep.subr.bf16.mxu0 0
      %5005 = vmatpush2.bf16.msra.mxu0 %v3886
      %5006 = vmatprep.mubr.bf16.mxu0 %v1374
      %5007 = vmatmul.mubr.bf16.gmra.mxu0 %v1372
      %v5008 = vpop.f32.mrf.mxu0
      %v5009 = vadd.f32 %v4969, %v5008
      %v5010 = vpop.f32.mrf.mxu0
      %v5011 = vpop.f32.mrf.mxu0
      %v5012 = vpop.f32.mrf.mxu0
      %5013 = vdwg.mxu0
      %5014 = vmatprep.subr.bf16.mxu0 0
      %5015 = vmatpush1.bf16.msra.mxu0 %v3901
      %5016 = vmatprep.subr.bf16.mxu0 0
      %5017 = vmatpush1.bf16.msra.mxu0 %v3900
      %5018 = vmatprep.subr.bf16.mxu0 0
      %5019 = vmatpush1.bf16.msra.mxu0 %v3899
      %5020 = vmatprep.subr.bf16.mxu0 0
      %5021 = vmatpush1.bf16.msra.mxu0 %v3898
      %5022 = vmatprep.subr.bf16.mxu0 0
      %5023 = vmatpush1.bf16.msra.mxu0 %v3897
      %5024 = vmatprep.subr.bf16.mxu0 0
      %5025 = vmatpush1.bf16.msra.mxu0 %v3896
      %5026 = vmatprep.subr.bf16.mxu0 0
      %5027 = vmatpush1.bf16.msra.mxu0 %v3895
      %5028 = vmatprep.subr.bf16.mxu0 0
      %5029 = vmatpush1.bf16.msra.mxu0 %v3894
      %5030 = vmatprep.subr.bf16.mxu0 0
      %5031 = vmatpush2.bf16.msra.mxu0 %v3909
      %5032 = vmatprep.subr.bf16.mxu0 0
      %5033 = vmatpush2.bf16.msra.mxu0 %v3908
      %5034 = vmatprep.subr.bf16.mxu0 0
      %5035 = vmatpush2.bf16.msra.mxu0 %v3907
      %5036 = vmatprep.subr.bf16.mxu0 0
      %5037 = vmatpush2.bf16.msra.mxu0 %v3906
      %5038 = vmatprep.subr.bf16.mxu0 0
      %5039 = vmatpush2.bf16.msra.mxu0 %v3905
      %5040 = vmatprep.subr.bf16.mxu0 0
      %5041 = vmatpush2.bf16.msra.mxu0 %v3904
      %5042 = vmatprep.subr.bf16.mxu0 0
      %5043 = vmatpush2.bf16.msra.mxu0 %v3903
      %5044 = vmatprep.subr.bf16.mxu0 0
      %5045 = vmatpush2.bf16.msra.mxu0 %v3902
      %5046 = vmatprep.mubr.bf16.mxu0 %v1412
      %5047 = vmatmul.mubr.bf16.gmra.mxu0 %v1398
      %v5048 = vpop.f32.mrf.mxu0
      %v5049 = vadd.f32 %v5009, %v5048
      %v5050 = vpop.f32.mrf.mxu0
      %v5051 = vpop.f32.mrf.mxu0
      %v5052 = vpop.f32.mrf.mxu0
      %5053 = vdwg.mxu0
      %5054 = vmatprep.subr.bf16.mxu0 0
      %5055 = vmatpush1.bf16.msra.mxu0 %v3917
      %5056 = vmatprep.subr.bf16.mxu0 0
      %5057 = vmatpush1.bf16.msra.mxu0 %v3916
      %5058 = vmatprep.subr.bf16.mxu0 0
      %5059 = vmatpush1.bf16.msra.mxu0 %v3915
      %5060 = vmatprep.subr.bf16.mxu0 0
      %5061 = vmatpush1.bf16.msra.mxu0 %v3914
      %5062 = vmatprep.subr.bf16.mxu0 0
      %5063 = vmatpush1.bf16.msra.mxu0 %v3913
      %5064 = vmatprep.subr.bf16.mxu0 0
      %5065 = vmatpush1.bf16.msra.mxu0 %v3912
      %5066 = vmatprep.subr.bf16.mxu0 0
      %5067 = vmatpush1.bf16.msra.mxu0 %v3911
      %5068 = vmatprep.subr.bf16.mxu0 0
      %5069 = vmatpush1.bf16.msra.mxu0 %v3910
      %5070 = vmatprep.subr.bf16.mxu0 0
      %5071 = vmatpush2.bf16.msra.mxu0 %v3925
      %5072 = vmatprep.subr.bf16.mxu0 0
      %5073 = vmatpush2.bf16.msra.mxu0 %v3924
      %5074 = vmatprep.subr.bf16.mxu0 0
      %5075 = vmatpush2.bf16.msra.mxu0 %v3923
      %5076 = vmatprep.subr.bf16.mxu0 0
      %5077 = vmatpush2.bf16.msra.mxu0 %v3922
      %5078 = vmatprep.subr.bf16.mxu0 0
      %5079 = vmatpush2.bf16.msra.mxu0 %v3921
      %5080 = vmatprep.subr.bf16.mxu0 0
      %5081 = vmatpush2.bf16.msra.mxu0 %v3920
      %5082 = vmatprep.subr.bf16.mxu0 0
      %5083 = vmatpush2.bf16.msra.mxu0 %v3919
      %5084 = vmatprep.subr.bf16.mxu0 0
      %5085 = vmatpush2.bf16.msra.mxu0 %v3918
      %5086 = vmatprep.mubr.bf16.mxu0 %v1422
      %5087 = vmatmul.mubr.bf16.gmra.mxu0 %v1420
      %v5088 = vpop.f32.mrf.mxu0
      %v5089 = vadd.f32 %v5049, %v5088
      %v5090 = vpop.f32.mrf.mxu0
      %v5091 = vpop.f32.mrf.mxu0
      %v5092 = vpop.f32.mrf.mxu0
      %5093 = vdwg.mxu0
      %5094 = vmatprep.subr.bf16.mxu0 0
      %5095 = vmatpush1.bf16.msra.mxu0 %v3933
      %5096 = vmatprep.subr.bf16.mxu0 0
      %5097 = vmatpush1.bf16.msra.mxu0 %v3932
      %5098 = vmatprep.subr.bf16.mxu0 0
      %5099 = vmatpush1.bf16.msra.mxu0 %v3931
      %5100 = vmatprep.subr.bf16.mxu0 0
      %5101 = vmatpush1.bf16.msra.mxu0 %v3930
      %5102 = vmatprep.subr.bf16.mxu0 0
      %5103 = vmatpush1.bf16.msra.mxu0 %v3929
      %5104 = vmatprep.subr.bf16.mxu0 0
      %5105 = vmatpush1.bf16.msra.mxu0 %v3928
      %5106 = vmatprep.subr.bf16.mxu0 0
      %5107 = vmatpush1.bf16.msra.mxu0 %v3927
      %5108 = vmatprep.subr.bf16.mxu0 0
      %5109 = vmatpush1.bf16.msra.mxu0 %v3926
      %5110 = vmatprep.subr.bf16.mxu0 0
      %5111 = vmatpush2.bf16.msra.mxu0 %v3941
      %5112 = vmatprep.subr.bf16.mxu0 0
      %5113 = vmatpush2.bf16.msra.mxu0 %v3940
      %5114 = vmatprep.subr.bf16.mxu0 0
      %5115 = vmatpush2.bf16.msra.mxu0 %v3939
      %5116 = vmatprep.subr.bf16.mxu0 0
      %5117 = vmatpush2.bf16.msra.mxu0 %v3938
      %5118 = vmatprep.subr.bf16.mxu0 0
      %5119 = vmatpush2.bf16.msra.mxu0 %v3937
      %5120 = vmatprep.subr.bf16.mxu0 0
      %5121 = vmatpush2.bf16.msra.mxu0 %v3936
      %5122 = vmatprep.subr.bf16.mxu0 0
      %5123 = vmatpush2.bf16.msra.mxu0 %v3935
      %5124 = vmatprep.subr.bf16.mxu0 0
      %5125 = vmatpush2.bf16.msra.mxu0 %v3934
      %5126 = vmatprep.mubr.bf16.mxu0 %v1419
      %5127 = vmatmul.mubr.bf16.gmra.mxu0 %v1405
      %v5128 = vpop.f32.mrf.mxu0
      %v5129 = vadd.f32 %v5089, %v5128
      %v5130 = vpop.f32.mrf.mxu0
      %v5131 = vpop.f32.mrf.mxu0
      %v5132 = vpop.f32.mrf.mxu0
      %5133 = vdwg.mxu0
      %5134 = vmatprep.subr.bf16.mxu0 0
      %5135 = vmatpush1.bf16.msra.mxu0 %v3949
      %5136 = vmatprep.subr.bf16.mxu0 0
      %5137 = vmatpush1.bf16.msra.mxu0 %v3948
      %5138 = vmatprep.subr.bf16.mxu0 0
      %5139 = vmatpush1.bf16.msra.mxu0 %v3947
      %5140 = vmatprep.subr.bf16.mxu0 0
      %5141 = vmatpush1.bf16.msra.mxu0 %v3946
      %5142 = vmatprep.subr.bf16.mxu0 0
      %5143 = vmatpush1.bf16.msra.mxu0 %v3945
      %5144 = vmatprep.subr.bf16.mxu0 0
      %5145 = vmatpush1.bf16.msra.mxu0 %v3944
      %5146 = vmatprep.subr.bf16.mxu0 0
      %5147 = vmatpush1.bf16.msra.mxu0 %v3943
      %5148 = vmatprep.subr.bf16.mxu0 0
      %5149 = vmatpush1.bf16.msra.mxu0 %v3942
      %5150 = vmatprep.subr.bf16.mxu0 0
      %5151 = vmatpush2.bf16.msra.mxu0 %v3957
      %5152 = vmatprep.subr.bf16.mxu0 0
      %5153 = vmatpush2.bf16.msra.mxu0 %v3956
      %5154 = vmatprep.subr.bf16.mxu0 0
      %5155 = vmatpush2.bf16.msra.mxu0 %v3955
      %5156 = vmatprep.subr.bf16.mxu0 0
      %5157 = vmatpush2.bf16.msra.mxu0 %v3954
      %5158 = vmatprep.subr.bf16.mxu0 0
      %5159 = vmatpush2.bf16.msra.mxu0 %v3953
      %5160 = vmatprep.subr.bf16.mxu0 0
      %5161 = vmatpush2.bf16.msra.mxu0 %v3952
      %5162 = vmatprep.subr.bf16.mxu0 0
      %5163 = vmatpush2.bf16.msra.mxu0 %v3951
      %5164 = vmatprep.subr.bf16.mxu0 0
      %5165 = vmatpush2.bf16.msra.mxu0 %v3950
      %5166 = vmatprep.mubr.bf16.mxu0 %v1423
      %5167 = vmatmul.mubr.bf16.gmra.mxu0 %v1421
      %v5168 = vpop.f32.mrf.mxu0
      %v5169 = vadd.f32 %v5129, %v5168
      %v5170 = vpop.f32.mrf.mxu0
      %v5171 = vpop.f32.mrf.mxu0
      %v5172 = vpop.f32.mrf.mxu0
      %5173 = vdwg.mxu0
      %5174 = vmatprep.subr.bf16.mxu0 0
      %5175 = vmatpush1.bf16.msra.mxu0 %v3965
      %5176 = vmatprep.subr.bf16.mxu0 0
      %5177 = vmatpush1.bf16.msra.mxu0 %v3964
      %5178 = vmatprep.subr.bf16.mxu0 0
      %5179 = vmatpush1.bf16.msra.mxu0 %v3963
      %5180 = vmatprep.subr.bf16.mxu0 0
      %5181 = vmatpush1.bf16.msra.mxu0 %v3962
      %5182 = vmatprep.subr.bf16.mxu0 0
      %5183 = vmatpush1.bf16.msra.mxu0 %v3961
      %5184 = vmatprep.subr.bf16.mxu0 0
      %5185 = vmatpush1.bf16.msra.mxu0 %v3960
      %5186 = vmatprep.subr.bf16.mxu0 0
      %5187 = vmatpush1.bf16.msra.mxu0 %v3959
      %5188 = vmatprep.subr.bf16.mxu0 0
      %5189 = vmatpush1.bf16.msra.mxu0 %v3958
      %5190 = vmatprep.subr.bf16.mxu0 0
      %5191 = vmatpush2.bf16.msra.mxu0 %v3973
      %5192 = vmatprep.subr.bf16.mxu0 0
      %5193 = vmatpush2.bf16.msra.mxu0 %v3972
      %5194 = vmatprep.subr.bf16.mxu0 0
      %5195 = vmatpush2.bf16.msra.mxu0 %v3971
      %5196 = vmatprep.subr.bf16.mxu0 0
      %5197 = vmatpush2.bf16.msra.mxu0 %v3970
      %5198 = vmatprep.subr.bf16.mxu0 0
      %5199 = vmatpush2.bf16.msra.mxu0 %v3969
      %5200 = vmatprep.subr.bf16.mxu0 0
      %5201 = vmatpush2.bf16.msra.mxu0 %v3968
      %5202 = vmatprep.subr.bf16.mxu0 0
      %5203 = vmatpush2.bf16.msra.mxu0 %v3967
      %5204 = vmatprep.subr.bf16.mxu0 0
      %5205 = vmatpush2.bf16.msra.mxu0 %v3966
      %5206 = vmatprep.mubr.bf16.mxu0 %v1461
      %5207 = vmatmul.mubr.bf16.gmra.mxu0 %v1447
      %v5208 = vpop.f32.mrf.mxu0
      %v5209 = vadd.f32 %v5169, %v5208
      %v5210 = vpop.f32.mrf.mxu0
      %v5211 = vpop.f32.mrf.mxu0
      %v5212 = vpop.f32.mrf.mxu0
      %5213 = vdwg.mxu0
      %5214 = vmatprep.subr.bf16.mxu0 0
      %5215 = vmatpush1.bf16.msra.mxu0 %v3981
      %5216 = vmatprep.subr.bf16.mxu0 0
      %5217 = vmatpush1.bf16.msra.mxu0 %v3980
      %5218 = vmatprep.subr.bf16.mxu0 0
      %5219 = vmatpush1.bf16.msra.mxu0 %v3979
      %5220 = vmatprep.subr.bf16.mxu0 0
      %5221 = vmatpush1.bf16.msra.mxu0 %v3978
      %5222 = vmatprep.subr.bf16.mxu0 0
      %5223 = vmatpush1.bf16.msra.mxu0 %v3977
      %5224 = vmatprep.subr.bf16.mxu0 0
      %5225 = vmatpush1.bf16.msra.mxu0 %v3976
      %5226 = vmatprep.subr.bf16.mxu0 0
      %5227 = vmatpush1.bf16.msra.mxu0 %v3975
      %5228 = vmatprep.subr.bf16.mxu0 0
      %5229 = vmatpush1.bf16.msra.mxu0 %v3974
      %5230 = vmatprep.subr.bf16.mxu0 0
      %5231 = vmatpush2.bf16.msra.mxu0 %v3989
      %5232 = vmatprep.subr.bf16.mxu0 0
      %5233 = vmatpush2.bf16.msra.mxu0 %v3988
      %5234 = vmatprep.subr.bf16.mxu0 0
      %5235 = vmatpush2.bf16.msra.mxu0 %v3987
      %5236 = vmatprep.subr.bf16.mxu0 0
      %5237 = vmatpush2.bf16.msra.mxu0 %v3986
      %5238 = vmatprep.subr.bf16.mxu0 0
      %5239 = vmatpush2.bf16.msra.mxu0 %v3985
      %5240 = vmatprep.subr.bf16.mxu0 0
      %5241 = vmatpush2.bf16.msra.mxu0 %v3984
      %5242 = vmatprep.subr.bf16.mxu0 0
      %5243 = vmatpush2.bf16.msra.mxu0 %v3983
      %5244 = vmatprep.subr.bf16.mxu0 0
      %5245 = vmatpush2.bf16.msra.mxu0 %v3982
      %5246 = vmatprep.mubr.bf16.mxu0 %v1471
      %5247 = vmatmul.mubr.bf16.gmra.mxu0 %v1469
      %v5248 = vpop.f32.mrf.mxu0
      %v5249 = vadd.f32 %v5209, %v5248
      %v5250 = vpop.f32.mrf.mxu0
      %v5251 = vpop.f32.mrf.mxu0
      %v5252 = vpop.f32.mrf.mxu0
      %5253 = vdwg.mxu0
      %5254 = vmatprep.subr.bf16.mxu0 0
      %5255 = vmatpush1.bf16.msra.mxu0 %v3997
      %5256 = vmatprep.subr.bf16.mxu0 0
      %5257 = vmatpush1.bf16.msra.mxu0 %v3996
      %5258 = vmatprep.subr.bf16.mxu0 0
      %5259 = vmatpush1.bf16.msra.mxu0 %v3995
      %5260 = vmatprep.subr.bf16.mxu0 0
      %5261 = vmatpush1.bf16.msra.mxu0 %v3994
      %5262 = vmatprep.subr.bf16.mxu0 0
      %5263 = vmatpush1.bf16.msra.mxu0 %v3993
      %5264 = vmatprep.subr.bf16.mxu0 0
      %5265 = vmatpush1.bf16.msra.mxu0 %v3992
      %5266 = vmatprep.subr.bf16.mxu0 0
      %5267 = vmatpush1.bf16.msra.mxu0 %v3991
      %5268 = vmatprep.subr.bf16.mxu0 0
      %5269 = vmatpush1.bf16.msra.mxu0 %v3990
      %5270 = vmatprep.subr.bf16.mxu0 0
      %5271 = vmatpush2.bf16.msra.mxu0 %v4005
      %5272 = vmatprep.subr.bf16.mxu0 0
      %5273 = vmatpush2.bf16.msra.mxu0 %v4004
      %5274 = vmatprep.subr.bf16.mxu0 0
      %5275 = vmatpush2.bf16.msra.mxu0 %v4003
      %5276 = vmatprep.subr.bf16.mxu0 0
      %5277 = vmatpush2.bf16.msra.mxu0 %v4002
      %5278 = vmatprep.subr.bf16.mxu0 0
      %5279 = vmatpush2.bf16.msra.mxu0 %v4001
      %5280 = vmatprep.subr.bf16.mxu0 0
      %5281 = vmatpush2.bf16.msra.mxu0 %v4000
      %5282 = vmatprep.subr.bf16.mxu0 0
      %5283 = vmatpush2.bf16.msra.mxu0 %v3999
      %5284 = vmatprep.subr.bf16.mxu0 0
      %5285 = vmatpush2.bf16.msra.mxu0 %v3998
      %5286 = vmatprep.mubr.bf16.mxu0 %v1468
      %5287 = vmatmul.mubr.bf16.gmra.mxu0 %v1454
      %v5288 = vpop.f32.mrf.mxu0
      %v5289 = vadd.f32 %v5249, %v5288
      %v5290 = vpop.f32.mrf.mxu0
      %v5291 = vpop.f32.mrf.mxu0
      %v5292 = vpop.f32.mrf.mxu0
      %5293 = vdwg.mxu0
      %5294 = vmatprep.subr.bf16.mxu0 0
      %5295 = vmatpush1.bf16.msra.mxu0 %v4013
      %5296 = vmatprep.subr.bf16.mxu0 0
      %5297 = vmatpush1.bf16.msra.mxu0 %v4012
      %5298 = vmatprep.subr.bf16.mxu0 0
      %5299 = vmatpush1.bf16.msra.mxu0 %v4011
      %5300 = vmatprep.subr.bf16.mxu0 0
      %5301 = vmatpush1.bf16.msra.mxu0 %v4010
      %5302 = vmatprep.subr.bf16.mxu0 0
      %5303 = vmatpush1.bf16.msra.mxu0 %v4009
      %5304 = vmatprep.subr.bf16.mxu0 0
      %5305 = vmatpush1.bf16.msra.mxu0 %v4008
      %5306 = vmatprep.subr.bf16.mxu0 0
      %5307 = vmatpush1.bf16.msra.mxu0 %v4007
      %5308 = vmatprep.subr.bf16.mxu0 0
      %5309 = vmatpush1.bf16.msra.mxu0 %v4006
      %5310 = vmatprep.subr.bf16.mxu0 0
      %5311 = vmatpush2.bf16.msra.mxu0 %v4021
      %5312 = vmatprep.subr.bf16.mxu0 0
      %5313 = vmatpush2.bf16.msra.mxu0 %v4020
      %5314 = vmatprep.subr.bf16.mxu0 0
      %5315 = vmatpush2.bf16.msra.mxu0 %v4019
      %5316 = vmatprep.subr.bf16.mxu0 0
      %5317 = vmatpush2.bf16.msra.mxu0 %v4018
      %5318 = vmatprep.subr.bf16.mxu0 0
      %5319 = vmatpush2.bf16.msra.mxu0 %v4017
      %5320 = vmatprep.subr.bf16.mxu0 0
      %5321 = vmatpush2.bf16.msra.mxu0 %v4016
      %5322 = vmatprep.subr.bf16.mxu0 0
      %5323 = vmatpush2.bf16.msra.mxu0 %v4015
      %5324 = vmatprep.subr.bf16.mxu0 0
      %5325 = vmatpush2.bf16.msra.mxu0 %v4014
      %5326 = vmatprep.mubr.bf16.mxu0 %v1472
      %5327 = vmatmul.mubr.bf16.gmra.mxu0 %v1470
      %v5328 = vpop.f32.mrf.mxu0
      %v5329 = vadd.f32 %v5289, %v5328
      %v5330 = vpop.f32.mrf.mxu0
      %v5331 = vpop.f32.mrf.mxu0
      %v5332 = vpop.f32.mrf.mxu0
      %5333 = vdwg.mxu0
      %5334 = vmatprep.subr.bf16.mxu0 0
      %5335 = vmatpush1.bf16.msra.mxu0 %v4029
      %5336 = vmatprep.subr.bf16.mxu0 0
      %5337 = vmatpush1.bf16.msra.mxu0 %v4028
      %5338 = vmatprep.subr.bf16.mxu0 0
      %5339 = vmatpush1.bf16.msra.mxu0 %v4027
      %5340 = vmatprep.subr.bf16.mxu0 0
      %5341 = vmatpush1.bf16.msra.mxu0 %v4026
      %5342 = vmatprep.subr.bf16.mxu0 0
      %5343 = vmatpush1.bf16.msra.mxu0 %v4025
      %5344 = vmatprep.subr.bf16.mxu0 0
      %5345 = vmatpush1.bf16.msra.mxu0 %v4024
      %5346 = vmatprep.subr.bf16.mxu0 0
      %5347 = vmatpush1.bf16.msra.mxu0 %v4023
      %5348 = vmatprep.subr.bf16.mxu0 0
      %5349 = vmatpush1.bf16.msra.mxu0 %v4022
      %5350 = vmatprep.subr.bf16.mxu0 0
      %5351 = vmatpush2.bf16.msra.mxu0 %v4037
      %5352 = vmatprep.subr.bf16.mxu0 0
      %5353 = vmatpush2.bf16.msra.mxu0 %v4036
      %5354 = vmatprep.subr.bf16.mxu0 0
      %5355 = vmatpush2.bf16.msra.mxu0 %v4035
      %5356 = vmatprep.subr.bf16.mxu0 0
      %5357 = vmatpush2.bf16.msra.mxu0 %v4034
      %5358 = vmatprep.subr.bf16.mxu0 0
      %5359 = vmatpush2.bf16.msra.mxu0 %v4033
      %5360 = vmatprep.subr.bf16.mxu0 0
      %5361 = vmatpush2.bf16.msra.mxu0 %v4032
      %5362 = vmatprep.subr.bf16.mxu0 0
      %5363 = vmatpush2.bf16.msra.mxu0 %v4031
      %5364 = vmatprep.subr.bf16.mxu0 0
      %5365 = vmatpush2.bf16.msra.mxu0 %v4030
      %5366 = vmatprep.mubr.bf16.mxu0 %v1510
      %5367 = vmatmul.mubr.bf16.gmra.mxu0 %v1496
      %v5368 = vpop.f32.mrf.mxu0
      %v5369 = vadd.f32 %v5329, %v5368
      %v5370 = vpop.f32.mrf.mxu0
      %v5371 = vpop.f32.mrf.mxu0
      %v5372 = vpop.f32.mrf.mxu0
      %5373 = vdwg.mxu0
      %5374 = vmatprep.subr.bf16.mxu0 0
      %5375 = vmatpush1.bf16.msra.mxu0 %v4045
      %5376 = vmatprep.subr.bf16.mxu0 0
      %5377 = vmatpush1.bf16.msra.mxu0 %v4044
      %5378 = vmatprep.subr.bf16.mxu0 0
      %5379 = vmatpush1.bf16.msra.mxu0 %v4043
      %5380 = vmatprep.subr.bf16.mxu0 0
      %5381 = vmatpush1.bf16.msra.mxu0 %v4042
      %5382 = vmatprep.subr.bf16.mxu0 0
      %5383 = vmatpush1.bf16.msra.mxu0 %v4041
      %5384 = vmatprep.subr.bf16.mxu0 0
      %5385 = vmatpush1.bf16.msra.mxu0 %v4040
      %5386 = vmatprep.subr.bf16.mxu0 0
      %5387 = vmatpush1.bf16.msra.mxu0 %v4039
      %5388 = vmatprep.subr.bf16.mxu0 0
      %5389 = vmatpush1.bf16.msra.mxu0 %v4038
      %5390 = vmatprep.subr.bf16.mxu0 0
      %5391 = vmatpush2.bf16.msra.mxu0 %v4053
      %5392 = vmatprep.subr.bf16.mxu0 0
      %5393 = vmatpush2.bf16.msra.mxu0 %v4052
      %5394 = vmatprep.subr.bf16.mxu0 0
      %5395 = vmatpush2.bf16.msra.mxu0 %v4051
      %5396 = vmatprep.subr.bf16.mxu0 0
      %5397 = vmatpush2.bf16.msra.mxu0 %v4050
      %5398 = vmatprep.subr.bf16.mxu0 0
      %5399 = vmatpush2.bf16.msra.mxu0 %v4049
      %5400 = vmatprep.subr.bf16.mxu0 0
      %5401 = vmatpush2.bf16.msra.mxu0 %v4048
      %5402 = vmatprep.subr.bf16.mxu0 0
      %5403 = vmatpush2.bf16.msra.mxu0 %v4047
      %5404 = vmatprep.subr.bf16.mxu0 0
      %5405 = vmatpush2.bf16.msra.mxu0 %v4046
      %5406 = vmatprep.mubr.bf16.mxu0 %v1520
      %5407 = vmatmul.mubr.bf16.gmra.mxu0 %v1518
      %v5408 = vpop.f32.mrf.mxu0
      %v5409 = vadd.f32 %v5369, %v5408
      %v5410 = vpop.f32.mrf.mxu0
      %v5411 = vpop.f32.mrf.mxu0
      %v5412 = vpop.f32.mrf.mxu0
      %5413 = vdwg.mxu0
      %5414 = vmatprep.subr.bf16.mxu0 0
      %5415 = vmatpush1.bf16.msra.mxu0 %v4061
      %5416 = vmatprep.subr.bf16.mxu0 0
      %5417 = vmatpush1.bf16.msra.mxu0 %v4060
      %5418 = vmatprep.subr.bf16.mxu0 0
      %5419 = vmatpush1.bf16.msra.mxu0 %v4059
      %5420 = vmatprep.subr.bf16.mxu0 0
      %5421 = vmatpush1.bf16.msra.mxu0 %v4058
      %5422 = vmatprep.subr.bf16.mxu0 0
      %5423 = vmatpush1.bf16.msra.mxu0 %v4057
      %5424 = vmatprep.subr.bf16.mxu0 0
      %5425 = vmatpush1.bf16.msra.mxu0 %v4056
      %5426 = vmatprep.subr.bf16.mxu0 0
      %5427 = vmatpush1.bf16.msra.mxu0 %v4055
      %5428 = vmatprep.subr.bf16.mxu0 0
      %5429 = vmatpush1.bf16.msra.mxu0 %v4054
      %5430 = vmatprep.subr.bf16.mxu0 0
      %5431 = vmatpush2.bf16.msra.mxu0 %v4069
      %5432 = vmatprep.subr.bf16.mxu0 0
      %5433 = vmatpush2.bf16.msra.mxu0 %v4068
      %5434 = vmatprep.subr.bf16.mxu0 0
      %5435 = vmatpush2.bf16.msra.mxu0 %v4067
      %5436 = vmatprep.subr.bf16.mxu0 0
      %5437 = vmatpush2.bf16.msra.mxu0 %v4066
      %5438 = vmatprep.subr.bf16.mxu0 0
      %5439 = vmatpush2.bf16.msra.mxu0 %v4065
      %5440 = vmatprep.subr.bf16.mxu0 0
      %5441 = vmatpush2.bf16.msra.mxu0 %v4064
      %5442 = vmatprep.subr.bf16.mxu0 0
      %5443 = vmatpush2.bf16.msra.mxu0 %v4063
      %5444 = vmatprep.subr.bf16.mxu0 0
      %5445 = vmatpush2.bf16.msra.mxu0 %v4062
      %5446 = vmatprep.mubr.bf16.mxu0 %v1517
      %5447 = vmatmul.mubr.bf16.gmra.mxu0 %v1503
      %v5448 = vpop.f32.mrf.mxu0
      %v5449 = vadd.f32 %v5409, %v5448
      %v5450 = vpop.f32.mrf.mxu0
      %v5451 = vpop.f32.mrf.mxu0
      %v5452 = vpop.f32.mrf.mxu0
      %5453 = vdwg.mxu0
      %5454 = vmatprep.subr.bf16.mxu0 0
      %5455 = vmatpush1.bf16.msra.mxu0 %v4077
      %5456 = vmatprep.subr.bf16.mxu0 0
      %5457 = vmatpush1.bf16.msra.mxu0 %v4076
      %5458 = vmatprep.subr.bf16.mxu0 0
      %5459 = vmatpush1.bf16.msra.mxu0 %v4075
      %5460 = vmatprep.subr.bf16.mxu0 0
      %5461 = vmatpush1.bf16.msra.mxu0 %v4074
      %5462 = vmatprep.subr.bf16.mxu0 0
      %5463 = vmatpush1.bf16.msra.mxu0 %v4073
      %5464 = vmatprep.subr.bf16.mxu0 0
      %5465 = vmatpush1.bf16.msra.mxu0 %v4072
      %5466 = vmatprep.subr.bf16.mxu0 0
      %5467 = vmatpush1.bf16.msra.mxu0 %v4071
      %5468 = vmatprep.subr.bf16.mxu0 0
      %5469 = vmatpush1.bf16.msra.mxu0 %v4070
      %5470 = vmatprep.subr.bf16.mxu0 0
      %5471 = vmatpush2.bf16.msra.mxu0 %v4085
      %5472 = vmatprep.subr.bf16.mxu0 0
      %5473 = vmatpush2.bf16.msra.mxu0 %v4084
      %5474 = vmatprep.subr.bf16.mxu0 0
      %5475 = vmatpush2.bf16.msra.mxu0 %v4083
      %5476 = vmatprep.subr.bf16.mxu0 0
      %5477 = vmatpush2.bf16.msra.mxu0 %v4082
      %5478 = vmatprep.subr.bf16.mxu0 0
      %5479 = vmatpush2.bf16.msra.mxu0 %v4081
      %5480 = vmatprep.subr.bf16.mxu0 0
      %5481 = vmatpush2.bf16.msra.mxu0 %v4080
      %5482 = vmatprep.subr.bf16.mxu0 0
      %5483 = vmatpush2.bf16.msra.mxu0 %v4079
      %5484 = vmatprep.subr.bf16.mxu0 0
      %5485 = vmatpush2.bf16.msra.mxu0 %v4078
      %5486 = vmatprep.mubr.bf16.mxu0 %v1521
      %5487 = vmatmul.mubr.bf16.gmra.mxu0 %v1519
      %v5488 = vpop.f32.mrf.mxu0
      %v5489 = vadd.f32 %v5449, %v5488
      %v5490 = vpop.f32.mrf.mxu0
      %v5491 = vpop.f32.mrf.mxu0
      %v5492 = vpop.f32.mrf.mxu0
      %5493 = vdwg.mxu0
      %5494 = vmatprep.subr.bf16.mxu0 0
      %5495 = vmatpush1.bf16.msra.mxu0 %v4093
      %5496 = vmatprep.subr.bf16.mxu0 0
      %5497 = vmatpush1.bf16.msra.mxu0 %v4092
      %5498 = vmatprep.subr.bf16.mxu0 0
      %5499 = vmatpush1.bf16.msra.mxu0 %v4091
      %5500 = vmatprep.subr.bf16.mxu0 0
      %5501 = vmatpush1.bf16.msra.mxu0 %v4090
      %5502 = vmatprep.subr.bf16.mxu0 0
      %5503 = vmatpush1.bf16.msra.mxu0 %v4089
      %5504 = vmatprep.subr.bf16.mxu0 0
      %5505 = vmatpush1.bf16.msra.mxu0 %v4088
      %5506 = vmatprep.subr.bf16.mxu0 0
      %5507 = vmatpush1.bf16.msra.mxu0 %v4087
      %5508 = vmatprep.subr.bf16.mxu0 0
      %5509 = vmatpush1.bf16.msra.mxu0 %v4086
      %5510 = vmatprep.subr.bf16.mxu0 0
      %5511 = vmatpush2.bf16.msra.mxu0 %v4101
      %5512 = vmatprep.subr.bf16.mxu0 0
      %5513 = vmatpush2.bf16.msra.mxu0 %v4100
      %5514 = vmatprep.subr.bf16.mxu0 0
      %5515 = vmatpush2.bf16.msra.mxu0 %v4099
      %5516 = vmatprep.subr.bf16.mxu0 0
      %5517 = vmatpush2.bf16.msra.mxu0 %v4098
      %5518 = vmatprep.subr.bf16.mxu0 0
      %5519 = vmatpush2.bf16.msra.mxu0 %v4097
      %5520 = vmatprep.subr.bf16.mxu0 0
      %5521 = vmatpush2.bf16.msra.mxu0 %v4096
      %5522 = vmatprep.subr.bf16.mxu0 0
      %5523 = vmatpush2.bf16.msra.mxu0 %v4095
      %5524 = vmatprep.subr.bf16.mxu0 0
      %5525 = vmatpush2.bf16.msra.mxu0 %v4094
      %5526 = vmatprep.mubr.bf16.mxu0 %v1559
      %5527 = vmatmul.mubr.bf16.gmra.mxu0 %v1545
      %v5528 = vpop.f32.mrf.mxu0
      %v5529 = vadd.f32 %v5489, %v5528
      %v5530 = vpop.f32.mrf.mxu0
      %v5531 = vpop.f32.mrf.mxu0
      %v5532 = vpop.f32.mrf.mxu0
      %5533 = vdwg.mxu0
      %5534 = vmatprep.subr.bf16.mxu0 0
      %5535 = vmatpush1.bf16.msra.mxu0 %v4109
      %5536 = vmatprep.subr.bf16.mxu0 0
      %5537 = vmatpush1.bf16.msra.mxu0 %v4108
      %5538 = vmatprep.subr.bf16.mxu0 0
      %5539 = vmatpush1.bf16.msra.mxu0 %v4107
      %5540 = vmatprep.subr.bf16.mxu0 0
      %5541 = vmatpush1.bf16.msra.mxu0 %v4106
      %5542 = vmatprep.subr.bf16.mxu0 0
      %5543 = vmatpush1.bf16.msra.mxu0 %v4105
      %5544 = vmatprep.subr.bf16.mxu0 0
      %5545 = vmatpush1.bf16.msra.mxu0 %v4104
      %5546 = vmatprep.subr.bf16.mxu0 0
      %5547 = vmatpush1.bf16.msra.mxu0 %v4103
      %5548 = vmatprep.subr.bf16.mxu0 0
      %5549 = vmatpush1.bf16.msra.mxu0 %v4102
      %5550 = vmatprep.subr.bf16.mxu0 0
      %5551 = vmatpush2.bf16.msra.mxu0 %v4117
      %5552 = vmatprep.subr.bf16.mxu0 0
      %5553 = vmatpush2.bf16.msra.mxu0 %v4116
      %5554 = vmatprep.subr.bf16.mxu0 0
      %5555 = vmatpush2.bf16.msra.mxu0 %v4115
      %5556 = vmatprep.subr.bf16.mxu0 0
      %5557 = vmatpush2.bf16.msra.mxu0 %v4114
      %5558 = vmatprep.subr.bf16.mxu0 0
      %5559 = vmatpush2.bf16.msra.mxu0 %v4113
      %5560 = vmatprep.subr.bf16.mxu0 0
      %5561 = vmatpush2.bf16.msra.mxu0 %v4112
      %5562 = vmatprep.subr.bf16.mxu0 0
      %5563 = vmatpush2.bf16.msra.mxu0 %v4111
      %5564 = vmatprep.subr.bf16.mxu0 0
      %5565 = vmatpush2.bf16.msra.mxu0 %v4110
      %5566 = vmatprep.mubr.bf16.mxu0 %v1569
      %5567 = vmatmul.mubr.bf16.gmra.mxu0 %v1567
      %v5568 = vpop.f32.mrf.mxu0
      %v5569 = vadd.f32 %v5529, %v5568
      %v5570 = vpop.f32.mrf.mxu0
      %v5571 = vpop.f32.mrf.mxu0
      %v5572 = vpop.f32.mrf.mxu0
      %5573 = vdwg.mxu0
      %5574 = vmatprep.subr.bf16.mxu0 0
      %5575 = vmatpush1.bf16.msra.mxu0 %v4125
      %5576 = vmatprep.subr.bf16.mxu0 0
      %5577 = vmatpush1.bf16.msra.mxu0 %v4124
      %5578 = vmatprep.subr.bf16.mxu0 0
      %5579 = vmatpush1.bf16.msra.mxu0 %v4123
      %5580 = vmatprep.subr.bf16.mxu0 0
      %5581 = vmatpush1.bf16.msra.mxu0 %v4122
      %5582 = vmatprep.subr.bf16.mxu0 0
      %5583 = vmatpush1.bf16.msra.mxu0 %v4121
      %5584 = vmatprep.subr.bf16.mxu0 0
      %5585 = vmatpush1.bf16.msra.mxu0 %v4120
      %5586 = vmatprep.subr.bf16.mxu0 0
      %5587 = vmatpush1.bf16.msra.mxu0 %v4119
      %5588 = vmatprep.subr.bf16.mxu0 0
      %5589 = vmatpush1.bf16.msra.mxu0 %v4118
      %5590 = vmatprep.subr.bf16.mxu0 0
      %5591 = vmatpush2.bf16.msra.mxu0 %v4133
      %5592 = vmatprep.subr.bf16.mxu0 0
      %5593 = vmatpush2.bf16.msra.mxu0 %v4132
      %5594 = vmatprep.subr.bf16.mxu0 0
      %5595 = vmatpush2.bf16.msra.mxu0 %v4131
      %5596 = vmatprep.subr.bf16.mxu0 0
      %5597 = vmatpush2.bf16.msra.mxu0 %v4130
      %5598 = vmatprep.subr.bf16.mxu0 0
      %5599 = vmatpush2.bf16.msra.mxu0 %v4129
      %5600 = vmatprep.subr.bf16.mxu0 0
      %5601 = vmatpush2.bf16.msra.mxu0 %v4128
      %5602 = vmatprep.subr.bf16.mxu0 0
      %5603 = vmatpush2.bf16.msra.mxu0 %v4127
      %5604 = vmatprep.subr.bf16.mxu0 0
      %5605 = vmatpush2.bf16.msra.mxu0 %v4126
      %5606 = vmatprep.mubr.bf16.mxu0 %v1566
      %5607 = vmatmul.mubr.bf16.gmra.mxu0 %v1552
      %v5608 = vpop.f32.mrf.mxu0
      %v5609 = vadd.f32 %v5569, %v5608
      %v5610 = vpop.f32.mrf.mxu0
      %v5611 = vpop.f32.mrf.mxu0
      %v5612 = vpop.f32.mrf.mxu0
      %5613 = vdwg.mxu0
      %5614 = vmatprep.subr.bf16.mxu0 0
      %5615 = vmatpush1.bf16.msra.mxu0 %v4141
      %5616 = vmatprep.subr.bf16.mxu0 0
      %5617 = vmatpush1.bf16.msra.mxu0 %v4140
      %5618 = vmatprep.subr.bf16.mxu0 0
      %5619 = vmatpush1.bf16.msra.mxu0 %v4139
      %5620 = vmatprep.subr.bf16.mxu0 0
      %5621 = vmatpush1.bf16.msra.mxu0 %v4138
      %5622 = vmatprep.subr.bf16.mxu0 0
      %5623 = vmatpush1.bf16.msra.mxu0 %v4137
      %5624 = vmatprep.subr.bf16.mxu0 0
      %5625 = vmatpush1.bf16.msra.mxu0 %v4136
      %5626 = vmatprep.subr.bf16.mxu0 0
      %5627 = vmatpush1.bf16.msra.mxu0 %v4135
      %5628 = vmatprep.subr.bf16.mxu0 0
      %5629 = vmatpush1.bf16.msra.mxu0 %v4134
      %5630 = vmatprep.subr.bf16.mxu0 0
      %5631 = vmatpush2.bf16.msra.mxu0 %v4149
      %5632 = vmatprep.subr.bf16.mxu0 0
      %5633 = vmatpush2.bf16.msra.mxu0 %v4148
      %5634 = vmatprep.subr.bf16.mxu0 0
      %5635 = vmatpush2.bf16.msra.mxu0 %v4147
      %5636 = vmatprep.subr.bf16.mxu0 0
      %5637 = vmatpush2.bf16.msra.mxu0 %v4146
      %5638 = vmatprep.subr.bf16.mxu0 0
      %5639 = vmatpush2.bf16.msra.mxu0 %v4145
      %5640 = vmatprep.subr.bf16.mxu0 0
      %5641 = vmatpush2.bf16.msra.mxu0 %v4144
      %5642 = vmatprep.subr.bf16.mxu0 0
      %5643 = vmatpush2.bf16.msra.mxu0 %v4143
      %5644 = vmatprep.subr.bf16.mxu0 0
      %5645 = vmatpush2.bf16.msra.mxu0 %v4142
      %5646 = vmatprep.mubr.bf16.mxu0 %v1570
      %5647 = vmatmul.mubr.bf16.gmra.mxu0 %v1568
      %v5648 = vpop.f32.mrf.mxu0
      %v5649 = vadd.f32 %v5609, %v5648
      %v5650 = vpop.f32.mrf.mxu0
      %v5651 = vpop.f32.mrf.mxu0
      %v5652 = vpop.f32.mrf.mxu0
      %5653 = vdwg.mxu0
      %5654 = vmatprep.subr.bf16.mxu0 0
      %5655 = vmatpush1.bf16.msra.mxu0 %v4157
      %5656 = vmatprep.subr.bf16.mxu0 0
      %5657 = vmatpush1.bf16.msra.mxu0 %v4156
      %5658 = vmatprep.subr.bf16.mxu0 0
      %5659 = vmatpush1.bf16.msra.mxu0 %v4155
      %5660 = vmatprep.subr.bf16.mxu0 0
      %5661 = vmatpush1.bf16.msra.mxu0 %v4154
      %5662 = vmatprep.subr.bf16.mxu0 0
      %5663 = vmatpush1.bf16.msra.mxu0 %v4153
      %5664 = vmatprep.subr.bf16.mxu0 0
      %5665 = vmatpush1.bf16.msra.mxu0 %v4152
      %5666 = vmatprep.subr.bf16.mxu0 0
      %5667 = vmatpush1.bf16.msra.mxu0 %v4151
      %5668 = vmatprep.subr.bf16.mxu0 0
      %5669 = vmatpush1.bf16.msra.mxu0 %v4150
      %5670 = vmatprep.subr.bf16.mxu0 0
      %5671 = vmatpush2.bf16.msra.mxu0 %v4165
      %5672 = vmatprep.subr.bf16.mxu0 0
      %5673 = vmatpush2.bf16.msra.mxu0 %v4164
      %5674 = vmatprep.subr.bf16.mxu0 0
      %5675 = vmatpush2.bf16.msra.mxu0 %v4163
      %5676 = vmatprep.subr.bf16.mxu0 0
      %5677 = vmatpush2.bf16.msra.mxu0 %v4162
      %5678 = vmatprep.subr.bf16.mxu0 0
      %5679 = vmatpush2.bf16.msra.mxu0 %v4161
      %5680 = vmatprep.subr.bf16.mxu0 0
      %5681 = vmatpush2.bf16.msra.mxu0 %v4160
      %5682 = vmatprep.subr.bf16.mxu0 0
      %5683 = vmatpush2.bf16.msra.mxu0 %v4159
      %5684 = vmatprep.subr.bf16.mxu0 0
      %5685 = vmatpush2.bf16.msra.mxu0 %v4158
      %5686 = vmatprep.mubr.bf16.mxu0 %v1608
      %5687 = vmatmul.mubr.bf16.gmra.mxu0 %v1594
      %v5688 = vpop.f32.mrf.mxu0
      %v5689 = vadd.f32 %v5649, %v5688
      %v5690 = vpop.f32.mrf.mxu0
      %v5691 = vpop.f32.mrf.mxu0
      %v5692 = vpop.f32.mrf.mxu0
      %5693 = vdwg.mxu0
      %5694 = vmatprep.subr.bf16.mxu0 0
      %5695 = vmatpush1.bf16.msra.mxu0 %v4173
      %5696 = vmatprep.subr.bf16.mxu0 0
      %5697 = vmatpush1.bf16.msra.mxu0 %v4172
      %5698 = vmatprep.subr.bf16.mxu0 0
      %5699 = vmatpush1.bf16.msra.mxu0 %v4171
      %5700 = vmatprep.subr.bf16.mxu0 0
      %5701 = vmatpush1.bf16.msra.mxu0 %v4170
      %5702 = vmatprep.subr.bf16.mxu0 0
      %5703 = vmatpush1.bf16.msra.mxu0 %v4169
      %5704 = vmatprep.subr.bf16.mxu0 0
      %5705 = vmatpush1.bf16.msra.mxu0 %v4168
      %5706 = vmatprep.subr.bf16.mxu0 0
      %5707 = vmatpush1.bf16.msra.mxu0 %v4167
      %5708 = vmatprep.subr.bf16.mxu0 0
      %5709 = vmatpush1.bf16.msra.mxu0 %v4166
      %5710 = vmatprep.subr.bf16.mxu0 0
      %5711 = vmatpush2.bf16.msra.mxu0 %v4181
      %5712 = vmatprep.subr.bf16.mxu0 0
      %5713 = vmatpush2.bf16.msra.mxu0 %v4180
      %5714 = vmatprep.subr.bf16.mxu0 0
      %5715 = vmatpush2.bf16.msra.mxu0 %v4179
      %5716 = vmatprep.subr.bf16.mxu0 0
      %5717 = vmatpush2.bf16.msra.mxu0 %v4178
      %5718 = vmatprep.subr.bf16.mxu0 0
      %5719 = vmatpush2.bf16.msra.mxu0 %v4177
      %5720 = vmatprep.subr.bf16.mxu0 0
      %5721 = vmatpush2.bf16.msra.mxu0 %v4176
      %5722 = vmatprep.subr.bf16.mxu0 0
      %5723 = vmatpush2.bf16.msra.mxu0 %v4175
      %5724 = vmatprep.subr.bf16.mxu0 0
      %5725 = vmatpush2.bf16.msra.mxu0 %v4174
      %5726 = vmatprep.mubr.bf16.mxu0 %v1618
      %5727 = vmatmul.mubr.bf16.gmra.mxu0 %v1616
      %v5728 = vpop.f32.mrf.mxu0
      %v5729 = vadd.f32 %v5689, %v5728
      %v5730 = vpop.f32.mrf.mxu0
      %v5731 = vpop.f32.mrf.mxu0
      %v5732 = vpop.f32.mrf.mxu0
      %5733 = vdwg.mxu0
      %5734 = vmatprep.subr.bf16.mxu0 0
      %5735 = vmatpush1.bf16.msra.mxu0 %v4189
      %5736 = vmatprep.subr.bf16.mxu0 0
      %5737 = vmatpush1.bf16.msra.mxu0 %v4188
      %5738 = vmatprep.subr.bf16.mxu0 0
      %5739 = vmatpush1.bf16.msra.mxu0 %v4187
      %5740 = vmatprep.subr.bf16.mxu0 0
      %5741 = vmatpush1.bf16.msra.mxu0 %v4186
      %5742 = vmatprep.subr.bf16.mxu0 0
      %5743 = vmatpush1.bf16.msra.mxu0 %v4185
      %5744 = vmatprep.subr.bf16.mxu0 0
      %5745 = vmatpush1.bf16.msra.mxu0 %v4184
      %5746 = vmatprep.subr.bf16.mxu0 0
      %5747 = vmatpush1.bf16.msra.mxu0 %v4183
      %5748 = vmatprep.subr.bf16.mxu0 0
      %5749 = vmatpush1.bf16.msra.mxu0 %v4182
      %5750 = vmatprep.subr.bf16.mxu0 0
      %5751 = vmatpush2.bf16.msra.mxu0 %v4197
      %5752 = vmatprep.subr.bf16.mxu0 0
      %5753 = vmatpush2.bf16.msra.mxu0 %v4196
      %5754 = vmatprep.subr.bf16.mxu0 0
      %5755 = vmatpush2.bf16.msra.mxu0 %v4195
      %5756 = vmatprep.subr.bf16.mxu0 0
      %5757 = vmatpush2.bf16.msra.mxu0 %v4194
      %5758 = vmatprep.subr.bf16.mxu0 0
      %5759 = vmatpush2.bf16.msra.mxu0 %v4193
      %5760 = vmatprep.subr.bf16.mxu0 0
      %5761 = vmatpush2.bf16.msra.mxu0 %v4192
      %5762 = vmatprep.subr.bf16.mxu0 0
      %5763 = vmatpush2.bf16.msra.mxu0 %v4191
      %5764 = vmatprep.subr.bf16.mxu0 0
      %5765 = vmatpush2.bf16.msra.mxu0 %v4190
      %5766 = vmatprep.mubr.bf16.mxu0 %v1615
      %5767 = vmatmul.mubr.bf16.gmra.mxu0 %v1601
      %v5768 = vpop.f32.mrf.mxu0
      %v5769 = vadd.f32 %v5729, %v5768
      %v5770 = vpop.f32.mrf.mxu0
      %v5771 = vpop.f32.mrf.mxu0
      %v5772 = vpop.f32.mrf.mxu0
      %5773 = vdwg.mxu0
      %5774 = vmatprep.subr.bf16.mxu0 0
      %5775 = vmatpush1.bf16.msra.mxu0 %v4205
      %5776 = vmatprep.subr.bf16.mxu0 0
      %5777 = vmatpush1.bf16.msra.mxu0 %v4204
      %5778 = vmatprep.subr.bf16.mxu0 0
      %5779 = vmatpush1.bf16.msra.mxu0 %v4203
      %5780 = vmatprep.subr.bf16.mxu0 0
      %5781 = vmatpush1.bf16.msra.mxu0 %v4202
      %5782 = vmatprep.subr.bf16.mxu0 0
      %5783 = vmatpush1.bf16.msra.mxu0 %v4201
      %5784 = vmatprep.subr.bf16.mxu0 0
      %5785 = vmatpush1.bf16.msra.mxu0 %v4200
      %5786 = vmatprep.subr.bf16.mxu0 0
      %5787 = vmatpush1.bf16.msra.mxu0 %v4199
      %5788 = vmatprep.subr.bf16.mxu0 0
      %5789 = vmatpush1.bf16.msra.mxu0 %v4198
      %5790 = vmatprep.subr.bf16.mxu0 0
      %5791 = vmatpush2.bf16.msra.mxu0 %v4213
      %5792 = vmatprep.subr.bf16.mxu0 0
      %5793 = vmatpush2.bf16.msra.mxu0 %v4212
      %5794 = vmatprep.subr.bf16.mxu0 0
      %5795 = vmatpush2.bf16.msra.mxu0 %v4211
      %5796 = vmatprep.subr.bf16.mxu0 0
      %5797 = vmatpush2.bf16.msra.mxu0 %v4210
      %5798 = vmatprep.subr.bf16.mxu0 0
      %5799 = vmatpush2.bf16.msra.mxu0 %v4209
      %5800 = vmatprep.subr.bf16.mxu0 0
      %5801 = vmatpush2.bf16.msra.mxu0 %v4208
      %5802 = vmatprep.subr.bf16.mxu0 0
      %5803 = vmatpush2.bf16.msra.mxu0 %v4207
      %5804 = vmatprep.subr.bf16.mxu0 0
      %5805 = vmatpush2.bf16.msra.mxu0 %v4206
      %5806 = vmatprep.mubr.bf16.mxu0 %v1619
      %5807 = vmatmul.mubr.bf16.gmra.mxu0 %v1617
      %v5808 = vpop.f32.mrf.mxu0
      %v5809 = vadd.f32 %v5769, %v5808
      %v5810 = vpop.f32.mrf.mxu0
      %v5811 = vpop.f32.mrf.mxu0
      %v5812 = vpop.f32.mrf.mxu0
      %5813 = vdwg.mxu0
      %5814 = vmatprep.subr.bf16.mxu0 0
      %5815 = vmatpush1.bf16.msra.mxu0 %v4221
      %5816 = vmatprep.subr.bf16.mxu0 0
      %5817 = vmatpush1.bf16.msra.mxu0 %v4220
      %5818 = vmatprep.subr.bf16.mxu0 0
      %5819 = vmatpush1.bf16.msra.mxu0 %v4219
      %5820 = vmatprep.subr.bf16.mxu0 0
      %5821 = vmatpush1.bf16.msra.mxu0 %v4218
      %5822 = vmatprep.subr.bf16.mxu0 0
      %5823 = vmatpush1.bf16.msra.mxu0 %v4217
      %5824 = vmatprep.subr.bf16.mxu0 0
      %5825 = vmatpush1.bf16.msra.mxu0 %v4216
      %5826 = vmatprep.subr.bf16.mxu0 0
      %5827 = vmatpush1.bf16.msra.mxu0 %v4215
      %5828 = vmatprep.subr.bf16.mxu0 0
      %5829 = vmatpush1.bf16.msra.mxu0 %v4214
      %5830 = vmatprep.subr.bf16.mxu0 0
      %5831 = vmatpush2.bf16.msra.mxu0 %v4229
      %5832 = vmatprep.subr.bf16.mxu0 0
      %5833 = vmatpush2.bf16.msra.mxu0 %v4228
      %5834 = vmatprep.subr.bf16.mxu0 0
      %5835 = vmatpush2.bf16.msra.mxu0 %v4227
      %5836 = vmatprep.subr.bf16.mxu0 0
      %5837 = vmatpush2.bf16.msra.mxu0 %v4226
      %5838 = vmatprep.subr.bf16.mxu0 0
      %5839 = vmatpush2.bf16.msra.mxu0 %v4225
      %5840 = vmatprep.subr.bf16.mxu0 0
      %5841 = vmatpush2.bf16.msra.mxu0 %v4224
      %5842 = vmatprep.subr.bf16.mxu0 0
      %5843 = vmatpush2.bf16.msra.mxu0 %v4223
      %5844 = vmatprep.subr.bf16.mxu0 0
      %5845 = vmatpush2.bf16.msra.mxu0 %v4222
      %5846 = vmatprep.mubr.bf16.mxu0 %v1657
      %5847 = vmatmul.mubr.bf16.gmra.mxu0 %v1643
      %v5848 = vpop.f32.mrf.mxu0
      %v5849 = vadd.f32 %v5809, %v5848
      %v5850 = vpop.f32.mrf.mxu0
      %v5851 = vpop.f32.mrf.mxu0
      %v5852 = vpop.f32.mrf.mxu0
      %5853 = vdwg.mxu0
      %5854 = vmatprep.subr.bf16.mxu0 0
      %5855 = vmatpush1.bf16.msra.mxu0 %v4237
      %5856 = vmatprep.subr.bf16.mxu0 0
      %5857 = vmatpush1.bf16.msra.mxu0 %v4236
      %5858 = vmatprep.subr.bf16.mxu0 0
      %5859 = vmatpush1.bf16.msra.mxu0 %v4235
      %5860 = vmatprep.subr.bf16.mxu0 0
      %5861 = vmatpush1.bf16.msra.mxu0 %v4234
      %5862 = vmatprep.subr.bf16.mxu0 0
      %5863 = vmatpush1.bf16.msra.mxu0 %v4233
      %5864 = vmatprep.subr.bf16.mxu0 0
      %5865 = vmatpush1.bf16.msra.mxu0 %v4232
      %5866 = vmatprep.subr.bf16.mxu0 0
      %5867 = vmatpush1.bf16.msra.mxu0 %v4231
      %5868 = vmatprep.subr.bf16.mxu0 0
      %5869 = vmatpush1.bf16.msra.mxu0 %v4230
      %5870 = vmatprep.subr.bf16.mxu0 0
      %5871 = vmatpush2.bf16.msra.mxu0 %v4245
      %5872 = vmatprep.subr.bf16.mxu0 0
      %5873 = vmatpush2.bf16.msra.mxu0 %v4244
      %5874 = vmatprep.subr.bf16.mxu0 0
      %5875 = vmatpush2.bf16.msra.mxu0 %v4243
      %5876 = vmatprep.subr.bf16.mxu0 0
      %5877 = vmatpush2.bf16.msra.mxu0 %v4242
      %5878 = vmatprep.subr.bf16.mxu0 0
      %5879 = vmatpush2.bf16.msra.mxu0 %v4241
      %5880 = vmatprep.subr.bf16.mxu0 0
      %5881 = vmatpush2.bf16.msra.mxu0 %v4240
      %5882 = vmatprep.subr.bf16.mxu0 0
      %5883 = vmatpush2.bf16.msra.mxu0 %v4239
      %5884 = vmatprep.subr.bf16.mxu0 0
      %5885 = vmatpush2.bf16.msra.mxu0 %v4238
      %5886 = vmatprep.mubr.bf16.mxu0 %v1667
      %5887 = vmatmul.mubr.bf16.gmra.mxu0 %v1665
      %v5888 = vpop.f32.mrf.mxu0
      %v5889 = vadd.f32 %v5849, %v5888
      %v5890 = vpop.f32.mrf.mxu0
      %v5891 = vpop.f32.mrf.mxu0
      %v5892 = vpop.f32.mrf.mxu0
      %5893 = vdwg.mxu0
      %5894 = vmatprep.subr.bf16.mxu0 0
      %5895 = vmatpush1.bf16.msra.mxu0 %v4253
      %5896 = vmatprep.subr.bf16.mxu0 0
      %5897 = vmatpush1.bf16.msra.mxu0 %v4252
      %5898 = vmatprep.subr.bf16.mxu0 0
      %5899 = vmatpush1.bf16.msra.mxu0 %v4251
      %5900 = vmatprep.subr.bf16.mxu0 0
      %5901 = vmatpush1.bf16.msra.mxu0 %v4250
      %5902 = vmatprep.subr.bf16.mxu0 0
      %5903 = vmatpush1.bf16.msra.mxu0 %v4249
      %5904 = vmatprep.subr.bf16.mxu0 0
      %5905 = vmatpush1.bf16.msra.mxu0 %v4248
      %5906 = vmatprep.subr.bf16.mxu0 0
      %5907 = vmatpush1.bf16.msra.mxu0 %v4247
      %5908 = vmatprep.subr.bf16.mxu0 0
      %5909 = vmatpush1.bf16.msra.mxu0 %v4246
      %5910 = vmatprep.subr.bf16.mxu0 0
      %5911 = vmatpush2.bf16.msra.mxu0 %v4261
      %5912 = vmatprep.subr.bf16.mxu0 0
      %5913 = vmatpush2.bf16.msra.mxu0 %v4260
      %5914 = vmatprep.subr.bf16.mxu0 0
      %5915 = vmatpush2.bf16.msra.mxu0 %v4259
      %5916 = vmatprep.subr.bf16.mxu0 0
      %5917 = vmatpush2.bf16.msra.mxu0 %v4258
      %5918 = vmatprep.subr.bf16.mxu0 0
      %5919 = vmatpush2.bf16.msra.mxu0 %v4257
      %5920 = vmatprep.subr.bf16.mxu0 0
      %5921 = vmatpush2.bf16.msra.mxu0 %v4256
      %5922 = vmatprep.subr.bf16.mxu0 0
      %5923 = vmatpush2.bf16.msra.mxu0 %v4255
      %5924 = vmatprep.subr.bf16.mxu0 0
      %5925 = vmatpush2.bf16.msra.mxu0 %v4254
      %5926 = vmatprep.mubr.bf16.mxu0 %v1664
      %5927 = vmatmul.mubr.bf16.gmra.mxu0 %v1650
      %v5928 = vpop.f32.mrf.mxu0
      %v5929 = vadd.f32 %v5889, %v5928
      %v5930 = vpop.f32.mrf.mxu0
      %v5931 = vpop.f32.mrf.mxu0
      %v5932 = vpop.f32.mrf.mxu0
      %5933 = vdwg.mxu0
      %5934 = vmatprep.subr.bf16.mxu0 0
      %5935 = vmatpush1.bf16.msra.mxu0 %v4269
      %5936 = vmatprep.subr.bf16.mxu0 0
      %5937 = vmatpush1.bf16.msra.mxu0 %v4268
      %5938 = vmatprep.subr.bf16.mxu0 0
      %5939 = vmatpush1.bf16.msra.mxu0 %v4267
      %5940 = vmatprep.subr.bf16.mxu0 0
      %5941 = vmatpush1.bf16.msra.mxu0 %v4266
      %5942 = vmatprep.subr.bf16.mxu0 0
      %5943 = vmatpush1.bf16.msra.mxu0 %v4265
      %5944 = vmatprep.subr.bf16.mxu0 0
      %5945 = vmatpush1.bf16.msra.mxu0 %v4264
      %5946 = vmatprep.subr.bf16.mxu0 0
      %5947 = vmatpush1.bf16.msra.mxu0 %v4263
      %5948 = vmatprep.subr.bf16.mxu0 0
      %5949 = vmatpush1.bf16.msra.mxu0 %v4262
      %5950 = vmatprep.subr.bf16.mxu0 0
      %5951 = vmatpush2.bf16.msra.mxu0 %v4277
      %5952 = vmatprep.subr.bf16.mxu0 0
      %5953 = vmatpush2.bf16.msra.mxu0 %v4276
      %5954 = vmatprep.subr.bf16.mxu0 0
      %5955 = vmatpush2.bf16.msra.mxu0 %v4275
      %5956 = vmatprep.subr.bf16.mxu0 0
      %5957 = vmatpush2.bf16.msra.mxu0 %v4274
      %5958 = vmatprep.subr.bf16.mxu0 0
      %5959 = vmatpush2.bf16.msra.mxu0 %v4273
      %5960 = vmatprep.subr.bf16.mxu0 0
      %5961 = vmatpush2.bf16.msra.mxu0 %v4272
      %5962 = vmatprep.subr.bf16.mxu0 0
      %5963 = vmatpush2.bf16.msra.mxu0 %v4271
      %5964 = vmatprep.subr.bf16.mxu0 0
      %5965 = vmatpush2.bf16.msra.mxu0 %v4270
      %5966 = vmatprep.mubr.bf16.mxu0 %v1668
      %5967 = vmatmul.mubr.bf16.gmra.mxu0 %v1666
      %v5968 = vpop.f32.mrf.mxu0
      %v5969 = vadd.f32 %v5929, %v5968
      %v5970 = vpop.f32.mrf.mxu0
      %v5971 = vpop.f32.mrf.mxu0
      %v5972 = vpop.f32.mrf.mxu0
      %5973 = vdwg.mxu0
      %5974 = vmatprep.subr.bf16.mxu0 0
      %5975 = vmatpush1.bf16.msra.mxu0 %v4285
      %5976 = vmatprep.subr.bf16.mxu0 0
      %5977 = vmatpush1.bf16.msra.mxu0 %v4284
      %5978 = vmatprep.subr.bf16.mxu0 0
      %5979 = vmatpush1.bf16.msra.mxu0 %v4283
      %5980 = vmatprep.subr.bf16.mxu0 0
      %5981 = vmatpush1.bf16.msra.mxu0 %v4282
      %5982 = vmatprep.subr.bf16.mxu0 0
      %5983 = vmatpush1.bf16.msra.mxu0 %v4281
      %5984 = vmatprep.subr.bf16.mxu0 0
      %5985 = vmatpush1.bf16.msra.mxu0 %v4280
      %5986 = vmatprep.subr.bf16.mxu0 0
      %5987 = vmatpush1.bf16.msra.mxu0 %v4279
      %5988 = vmatprep.subr.bf16.mxu0 0
      %5989 = vmatpush1.bf16.msra.mxu0 %v4278
      %5990 = vmatprep.subr.bf16.mxu0 0
      %5991 = vmatpush2.bf16.msra.mxu0 %v4293
      %5992 = vmatprep.subr.bf16.mxu0 0
      %5993 = vmatpush2.bf16.msra.mxu0 %v4292
      %5994 = vmatprep.subr.bf16.mxu0 0
      %5995 = vmatpush2.bf16.msra.mxu0 %v4291
      %5996 = vmatprep.subr.bf16.mxu0 0
      %5997 = vmatpush2.bf16.msra.mxu0 %v4290
      %5998 = vmatprep.subr.bf16.mxu0 0
      %5999 = vmatpush2.bf16.msra.mxu0 %v4289
      %6000 = vmatprep.subr.bf16.mxu0 0
      %6001 = vmatpush2.bf16.msra.mxu0 %v4288
      %6002 = vmatprep.subr.bf16.mxu0 0
      %6003 = vmatpush2.bf16.msra.mxu0 %v4287
      %6004 = vmatprep.subr.bf16.mxu0 0
      %6005 = vmatpush2.bf16.msra.mxu0 %v4286
      %6006 = vmatprep.mubr.bf16.mxu0 %v1706
      %6007 = vmatmul.mubr.bf16.gmra.mxu0 %v1692
      %v6008 = vpop.f32.mrf.mxu0
      %v6009 = vadd.f32 %v5969, %v6008
      %v6010 = vpop.f32.mrf.mxu0
      %v6011 = vpop.f32.mrf.mxu0
      %v6012 = vpop.f32.mrf.mxu0
      %6013 = vdwg.mxu0
      %6014 = vmatprep.subr.bf16.mxu0 0
      %6015 = vmatpush1.bf16.msra.mxu0 %v4301
      %6016 = vmatprep.subr.bf16.mxu0 0
      %6017 = vmatpush1.bf16.msra.mxu0 %v4300
      %6018 = vmatprep.subr.bf16.mxu0 0
      %6019 = vmatpush1.bf16.msra.mxu0 %v4299
      %6020 = vmatprep.subr.bf16.mxu0 0
      %6021 = vmatpush1.bf16.msra.mxu0 %v4298
      %6022 = vmatprep.subr.bf16.mxu0 0
      %6023 = vmatpush1.bf16.msra.mxu0 %v4297
      %6024 = vmatprep.subr.bf16.mxu0 0
      %6025 = vmatpush1.bf16.msra.mxu0 %v4296
      %6026 = vmatprep.subr.bf16.mxu0 0
      %6027 = vmatpush1.bf16.msra.mxu0 %v4295
      %6028 = vmatprep.subr.bf16.mxu0 0
      %6029 = vmatpush1.bf16.msra.mxu0 %v4294
      %6030 = vmatprep.subr.bf16.mxu0 0
      %6031 = vmatpush2.bf16.msra.mxu0 %v4309
      %6032 = vmatprep.subr.bf16.mxu0 0
      %6033 = vmatpush2.bf16.msra.mxu0 %v4308
      %6034 = vmatprep.subr.bf16.mxu0 0
      %6035 = vmatpush2.bf16.msra.mxu0 %v4307
      %6036 = vmatprep.subr.bf16.mxu0 0
      %6037 = vmatpush2.bf16.msra.mxu0 %v4306
      %6038 = vmatprep.subr.bf16.mxu0 0
      %6039 = vmatpush2.bf16.msra.mxu0 %v4305
      %6040 = vmatprep.subr.bf16.mxu0 0
      %6041 = vmatpush2.bf16.msra.mxu0 %v4304
      %6042 = vmatprep.subr.bf16.mxu0 0
      %6043 = vmatpush2.bf16.msra.mxu0 %v4303
      %6044 = vmatprep.subr.bf16.mxu0 0
      %6045 = vmatpush2.bf16.msra.mxu0 %v4302
      %6046 = vmatprep.mubr.bf16.mxu0 %v1716
      %6047 = vmatmul.mubr.bf16.gmra.mxu0 %v1714
      %v6048 = vpop.f32.mrf.mxu0
      %v6049 = vadd.f32 %v6009, %v6048
      %v6050 = vpop.f32.mrf.mxu0
      %v6051 = vpop.f32.mrf.mxu0
      %v6052 = vpop.f32.mrf.mxu0
      %6053 = vdwg.mxu0
      %6054 = vmatprep.subr.bf16.mxu0 0
      %6055 = vmatpush1.bf16.msra.mxu0 %v4317
      %6056 = vmatprep.subr.bf16.mxu0 0
      %6057 = vmatpush1.bf16.msra.mxu0 %v4316
      %6058 = vmatprep.subr.bf16.mxu0 0
      %6059 = vmatpush1.bf16.msra.mxu0 %v4315
      %6060 = vmatprep.subr.bf16.mxu0 0
      %6061 = vmatpush1.bf16.msra.mxu0 %v4314
      %6062 = vmatprep.subr.bf16.mxu0 0
      %6063 = vmatpush1.bf16.msra.mxu0 %v4313
      %6064 = vmatprep.subr.bf16.mxu0 0
      %6065 = vmatpush1.bf16.msra.mxu0 %v4312
      %6066 = vmatprep.subr.bf16.mxu0 0
      %6067 = vmatpush1.bf16.msra.mxu0 %v4311
      %6068 = vmatprep.subr.bf16.mxu0 0
      %6069 = vmatpush1.bf16.msra.mxu0 %v4310
      %6070 = vmatprep.subr.bf16.mxu0 0
      %6071 = vmatpush2.bf16.msra.mxu0 %v4325
      %6072 = vmatprep.subr.bf16.mxu0 0
      %6073 = vmatpush2.bf16.msra.mxu0 %v4324
      %6074 = vmatprep.subr.bf16.mxu0 0
      %6075 = vmatpush2.bf16.msra.mxu0 %v4323
      %6076 = vmatprep.subr.bf16.mxu0 0
      %6077 = vmatpush2.bf16.msra.mxu0 %v4322
      %6078 = vmatprep.subr.bf16.mxu0 0
      %6079 = vmatpush2.bf16.msra.mxu0 %v4321
      %6080 = vmatprep.subr.bf16.mxu0 0
      %6081 = vmatpush2.bf16.msra.mxu0 %v4320
      %6082 = vmatprep.subr.bf16.mxu0 0
      %6083 = vmatpush2.bf16.msra.mxu0 %v4319
      %6084 = vmatprep.subr.bf16.mxu0 0
      %6085 = vmatpush2.bf16.msra.mxu0 %v4318
      %6086 = vmatprep.mubr.bf16.mxu0 %v1713
      %6087 = vmatmul.mubr.bf16.gmra.mxu0 %v1699
      %v6088 = vpop.f32.mrf.mxu0
      %v6089 = vadd.f32 %v6049, %v6088
      %v6090 = vpop.f32.mrf.mxu0
      %v6091 = vpop.f32.mrf.mxu0
      %v6092 = vpop.f32.mrf.mxu0
      %6093 = vdwg.mxu0
      %6094 = vmatprep.subr.bf16.mxu0 0
      %6095 = vmatpush1.bf16.msra.mxu0 %v4333
      %6096 = vmatprep.subr.bf16.mxu0 0
      %6097 = vmatpush1.bf16.msra.mxu0 %v4332
      %6098 = vmatprep.subr.bf16.mxu0 0
      %6099 = vmatpush1.bf16.msra.mxu0 %v4331
      %6100 = vmatprep.subr.bf16.mxu0 0
      %6101 = vmatpush1.bf16.msra.mxu0 %v4330
      %6102 = vmatprep.subr.bf16.mxu0 0
      %6103 = vmatpush1.bf16.msra.mxu0 %v4329
      %6104 = vmatprep.subr.bf16.mxu0 0
      %6105 = vmatpush1.bf16.msra.mxu0 %v4328
      %6106 = vmatprep.subr.bf16.mxu0 0
      %6107 = vmatpush1.bf16.msra.mxu0 %v4327
      %6108 = vmatprep.subr.bf16.mxu0 0
      %6109 = vmatpush1.bf16.msra.mxu0 %v4326
      %6110 = vmatprep.subr.bf16.mxu0 0
      %6111 = vmatpush2.bf16.msra.mxu0 %v4341
      %6112 = vmatprep.subr.bf16.mxu0 0
      %6113 = vmatpush2.bf16.msra.mxu0 %v4340
      %6114 = vmatprep.subr.bf16.mxu0 0
      %6115 = vmatpush2.bf16.msra.mxu0 %v4339
      %6116 = vmatprep.subr.bf16.mxu0 0
      %6117 = vmatpush2.bf16.msra.mxu0 %v4338
      %6118 = vmatprep.subr.bf16.mxu0 0
      %6119 = vmatpush2.bf16.msra.mxu0 %v4337
      %6120 = vmatprep.subr.bf16.mxu0 0
      %6121 = vmatpush2.bf16.msra.mxu0 %v4336
      %6122 = vmatprep.subr.bf16.mxu0 0
      %6123 = vmatpush2.bf16.msra.mxu0 %v4335
      %6124 = vmatprep.subr.bf16.mxu0 0
      %6125 = vmatpush2.bf16.msra.mxu0 %v4334
      %6126 = vmatprep.mubr.bf16.mxu0 %v1717
      %6127 = vmatmul.mubr.bf16.gmra.mxu0 %v1715
      %v6128 = vpop.f32.mrf.mxu0
      %v6129 = vadd.f32 %v6089, %v6128
      %v6130 = vpop.f32.mrf.mxu0
      %v6131 = vpop.f32.mrf.mxu0
      %v6132 = vpop.f32.mrf.mxu0
      %6133 = vdwg.mxu0
      %v6134 = vadd.f32 %v285, %v6129
      %6135 = vst [vmem:[#allocation2] sm:$0x3] %v6134
      %p6136 = scmp.eq.s32.totalorder %s20, 1
      // Predicated region
      $region41: #{waste_classifier_forward.5} parent=35 // pred_check
        %p6137 = pneg %p6136
      $region42: #{waste_classifier_forward.5} parent=35 // pred_check_branch
        %6139 = sbr.rel (%p6137) target = $region44
      $region43: #{waste_classifier_forward.5} parent=35 // pred_region
        %v6140 = vld [vmem:[#allocation2] sm:$0x3]
        %v6141 = vld [vmem:[%s268] sm:$0x1]
        %v6143 = vlaneseq
        %v6144 = vshrl.u32 %v6143, 7
        %v6145 = vsub.s32 0, %v6144
        %v6146 = vrot.slane %v6141, %v6145
        %v6148 = vadd.f32 %v6140, %v6146
        %v6149 = vmax.f32 %v6148, 0.0
        %v6150 = vld [vmem:[%s273] sm:$0xff]
        %v6151 = vld [vmem:[%s273 + $0x8] sm:$0xff]
        %v6152 = vld [vmem:[%s273 + $0x10] sm:$0xff]
        %v6153 = vld [vmem:[%s273 + $0x18] sm:$0xff]
        %v6154 = vld [vmem:[%s273 + $0x20] sm:$0xff]
        %v6155 = vld [vmem:[%s273 + $0x28] sm:$0xff]
        %v6156 = vld [vmem:[%s273 + $0x30] sm:$0xff]
        %v6157 = vld [vmem:[%s273 + $0x38] sm:$0xff]
        %v6158 = vld [vmem:[%s273 + $0x40] sm:$0xff]
        %v6159 = vld [vmem:[%s273 + $0x48] sm:$0xff]
        %v6160 = vld [vmem:[%s273 + $0x50] sm:$0xff]
        %v6161 = vld [vmem:[%s273 + $0x58] sm:$0xff]
        %v6162 = vld [vmem:[%s273 + $0x60] sm:$0xff]
        %v6163 = vld [vmem:[%s273 + $0x68] sm:$0xff]
        %v6164 = vld [vmem:[%s273 + $0x70] sm:$0xff]
        %v6165 = vld [vmem:[%s273 + $0x78] sm:$0xff]
        %6166 = vmatprep.subr.mxu0 0.0
        %6167 = vmatpush1.msra.mxu0 %v6165
        %6168 = vmatprep.subr.mxu0 0.0
        %6169 = vmatpush1.msra.mxu0 %v6164
        %6170 = vmatprep.subr.mxu0 0.0
        %6171 = vmatpush1.msra.mxu0 %v6163
        %6172 = vmatprep.subr.mxu0 0.0
        %6173 = vmatpush1.msra.mxu0 %v6162
        %6174 = vmatprep.subr.mxu0 0.0
        %6175 = vmatpush1.msra.mxu0 %v6161
        %6176 = vmatprep.subr.mxu0 0.0
        %6177 = vmatpush1.msra.mxu0 %v6160
        %6178 = vmatprep.subr.mxu0 0.0
        %6179 = vmatpush1.msra.mxu0 %v6159
        %6180 = vmatprep.subr.mxu0 0.0
        %6181 = vmatpush1.msra.mxu0 %v6158
        %6182 = vmatprep.subr.mxu0 0.0
        %6183 = vmatpush1.msra.mxu0 %v6157
        %6184 = vmatprep.subr.mxu0 0.0
        %6185 = vmatpush1.msra.mxu0 %v6156
        %6186 = vmatprep.subr.mxu0 0.0
        %6187 = vmatpush1.msra.mxu0 %v6155
        %6188 = vmatprep.subr.mxu0 0.0
        %6189 = vmatpush1.msra.mxu0 %v6154
        %6190 = vmatprep.subr.mxu0 0.0
        %6191 = vmatpush1.msra.mxu0 %v6153
        %6192 = vmatprep.subr.mxu0 0.0
        %6193 = vmatpush1.msra.mxu0 %v6152
        %6194 = vmatprep.subr.mxu0 0.0
        %6195 = vmatpush1.msra.mxu0 %v6151
        %6196 = vmatprep.subr.mxu0 0.0
        %6197 = vmatpush1.msra.mxu0 %v6150
        %6198 = vmatprep.subr.mxu0 0.0
        %6199 = vmatpush2.msra.mxu0 0.0
        %6200 = vmatprep.subr.mxu0 0.0
        %6201 = vmatpush2.msra.mxu0 0.0
        %6202 = vmatprep.subr.mxu0 0.0
        %6203 = vmatpush2.msra.mxu0 0.0
        %6204 = vmatprep.subr.mxu0 0.0
        %6205 = vmatpush2.msra.mxu0 0.0
        %6206 = vmatprep.subr.mxu0 0.0
        %6207 = vmatpush2.msra.mxu0 0.0
        %6208 = vmatprep.subr.mxu0 0.0
        %6209 = vmatpush2.msra.mxu0 0.0
        %6210 = vmatprep.subr.mxu0 0.0
        %6211 = vmatpush2.msra.mxu0 0.0
        %6212 = vmatprep.subr.mxu0 0.0
        %6213 = vmatpush2.msra.mxu0 0.0
        %6214 = vmatprep.subr.mxu0 0.0
        %6215 = vmatpush2.msra.mxu0 0.0
        %6216 = vmatprep.subr.mxu0 0.0
        %6217 = vmatpush2.msra.mxu0 0.0
        %6218 = vmatprep.subr.mxu0 0.0
        %6219 = vmatpush2.msra.mxu0 0.0
        %6220 = vmatprep.subr.mxu0 0.0
        %6221 = vmatpush2.msra.mxu0 0.0
        %6222 = vmatprep.subr.mxu0 0.0
        %6223 = vmatpush2.msra.mxu0 0.0
        %6224 = vmatprep.subr.mxu0 0.0
        %6225 = vmatpush2.msra.mxu0 0.0
        %6226 = vmatprep.subr.mxu0 0.0
        %6227 = vmatpush2.msra.mxu0 0.0
        %6228 = vmatprep.subr.mxu0 0.0
        %6229 = vmatpush2.msra.mxu0 0.0
        %6230 = vmatprep.mubr.f32.mxu0 0.0
        %6231 = vmatmul.mubr.f32.gmra.mxu0 %v6149
        %v6232 = vpop.f32.mrf.mxu0
        %v6233 = vadd.f32 0.0, %v6232
        %v6234 = vpop.f32.mrf.mxu0
        %6235 = vdwg.mxu0
        %vm6236 = vcmask 173056
        %6237 = vst.msk [vmem:[%s278] sm:$0x3] %vm6236, %v6233
      $region44: #{waste_classifier_forward.5} parent=35 // pred_fallthru
        _
      %p6238 = scmp.lt.s32.totalorder %s19, 0
      %s6239 = scalar_select %p6238, %s19, 0
      %s6240 = smul.addr %s6239, 2
      %s6241 = scalar_lea.vmem %s4, %s6240
      // Predicated region
      $region45: #{waste_classifier_forward.5} parent=35 // pred_check
        %p6242 = pneg %p151
      $region46: #{waste_classifier_forward.5} parent=35 // pred_check_branch
        %6244 = sbr.rel (%p6242) target = $region48
      $region47: #{waste_classifier_forward.5} parent=35 // pred_region
        _
      $region48: #{waste_classifier_forward.5} parent=35 // pred_fallthru
        _
      // Predicated region
      $region49: #{waste_classifier_forward.5} parent=35 // pred_check
        %p6245 = pneg %p151
      $region50: #{waste_classifier_forward.5} parent=35 // pred_check_branch
        %6247 = sbr.rel (%p6245) target = $region52
      $region51: #{waste_classifier_forward.5} parent=35 // pred_region
        %p6248 = scmp.lt.s32.totalorder %s19, 0
        %s6249 = scalar_select %p6248, %s19, 0
        %s6250 = smul.addr %s6249, 2
        %s6251 = scalar_lea.vmem %s4, %s6250
      $region52: #{waste_classifier_forward.5} parent=35 // pred_fallthru
        _
    $region36: #{waste_classifier_forward.5} parent=5 // pred_fallthru
      _
    %p6252 = scmp.le.s32.totalorder 2, %s10
    // Predicated region
    $region53: #{waste_classifier_forward.5} parent=5 // pred_check
      %p6253 = pneg %p6252
    $region54: #{waste_classifier_forward.5} parent=5 // pred_check_branch
      %6255 = sbr.rel (%p6253) target = $region56
    $region55: #{waste_classifier_forward.5} parent=5 // pred_region
      %s6256 = ssub.s32 %s10, 2
    $region56: #{waste_classifier_forward.5} parent=5 // pred_fallthru
      _
  $region6: #{waste_classifier_forward.5} parent=0 // loop_footer
    %s14 = sadd.s32 1, %s10
  $region7: #{waste_classifier_forward.5} parent=0 // loop_footer_branch
    %9 = sbr.rel target = $region3
  $region8: #{waste_classifier_forward.5} parent=0 // loop_exit
    _

</llo_original>
